<compile_context>
chip_gen: v7x
topology: tpu7x:2x2x1
jax: 0.10.0
libtpu: 0.0.40
codegen_flags: <defaults>
</compile_context>

<pallas_src>
import functools

import jax
import jax.numpy as jnp
import numpy as np
from jax.experimental import pallas as pl
from jax.experimental.pallas import tpu as pltpu


def _window_attn_kernel(x_ref, wqkv_ref, bqkv_ref, bias_ref, *rest,
                        num_heads, scale, nW):
    """One grid step == BW consecutive windows along the B_ axis.

    x_ref:    (BW, N, C)        input windows (compute dtype: bf16 or f32)
    wqkv_ref: (C, 3C)           bqkv_ref: (1, 3C) f32
    bias_ref: (H, N, N) f32     relative position bias (VMEM resident)
    mask_ref: (nW, N, N) f32    optional additive 0/-100 mask (VMEM resident)
    wproj_ref:(C, C)            bproj_ref:(1, C) f32
    o_ref:    (BW, N, C)
    """
    if nW is None:
        mask_ref = None
        wproj_ref, bproj_ref, o_ref = rest
    else:
        mask_ref, wproj_ref, bproj_ref, o_ref = rest

    bw, n, c = x_ref.shape
    hd = c // num_heads
    cdt = x_ref.dtype                       # compute dtype for MXU operands

    # --- QKV projection: fold the window axis into M (one big MXU matmul). ---
    x2 = x_ref[...].reshape(bw * n, c)
    qkv = jnp.dot(x2, wqkv_ref[...], preferred_element_type=jnp.float32)
    qkv = qkv + bqkv_ref[0]                 # (BW*N, 3C), f32

    mask = mask_ref[...] if mask_ref is not None else None     # (nW, N, N)

    head_outs = []
    for h in range(num_heads):
        # Static lane-offset slices of the fused QKV activation.
        q = (qkv[:, h * hd:(h + 1) * hd] * scale).astype(cdt)
        k = qkv[:, c + h * hd: c + (h + 1) * hd].astype(cdt)
        v = qkv[:, 2 * c + h * hd: 2 * c + (h + 1) * hd].astype(cdt)
        q = q.reshape(bw, n, hd)
        k = k.reshape(bw, n, hd)
        v = v.reshape(bw, n, hd)

        # Scores for all BW windows of this head at once (batched on MXU).
        attn = jnp.einsum('bnd,bmd->bnm', q, k,
                          preferred_element_type=jnp.float32)   # (BW, N, N)
        attn = attn + bias_ref[h][None]
        if mask is not None:
            # Window b uses mask[b % nW]; BW is always a multiple of nW, so the
            # block-local pattern is static.
            attn = attn.reshape(bw // nW, nW, n, n) + mask[None]
            attn = attn.reshape(bw, n, n)

        # Numerically-stable softmax in f32 (attn_drop is identity, p=0.0).
        attn = attn - jnp.max(attn, axis=-1, keepdims=True)
        p = jnp.exp(attn)
        p = p * pl.reciprocal(jnp.sum(p, axis=-1, keepdims=True), approx=True)

        head_outs.append(
            jnp.einsum('bnm,bmd->bnd', p.astype(cdt), v,
                       preferred_element_type=jnp.float32))      # (BW, N, hd)

    y = jnp.concatenate(head_outs, axis=-1)                      # (BW, N, C) f32

    # --- Output projection, again with BW folded into M. ---
    out = jnp.dot(y.reshape(bw * n, c).astype(cdt), wproj_ref[...],
                  preferred_element_type=jnp.float32) + bproj_ref[0]
    # proj_drop is identity (p=0.0 / eval mode).
    o_ref[...] = out.reshape(bw, n, c).astype(o_ref.dtype)


def _choose_block_windows(B_, N, step, max_rows=1024):
    """Largest BW (multiple of `step`, divisor of B_) with BW*N <= max_rows,
    preferring a choice that leaves a grid of length >= 2 (megacore / v7x)."""
    cands = [bw for bw in range(step, B_ + 1, step)
             if B_ % bw == 0 and (bw * N <= max_rows or bw == step)]
    if not cands:
        cands = [step]
    multi = [bw for bw in cands if B_ // bw >= 2]
    return max(multi) if multi else max(cands)


def window_attention(x, wqkv, bqkv, wproj, bproj, rel_pos_bias, num_heads,
                     mask=None, block_windows=None):
    """Pallas WindowAttention forward.

    x:            (B_, N, C)
    wqkv:         (C, 3C)   bqkv: (3C,)
    wproj:        (C, C)    bproj: (C,)
    rel_pos_bias: (H, N, N) relative position bias (already gathered/permuted)
    mask:         optional (nW, N, N) additive (0 / -inf style) mask
    """
    B_, N, C = x.shape
    H = num_heads
    assert C % H == 0
    head_dim = C // H
    scale = head_dim ** (-0.5)

    # MXU operands share the input dtype (bf16 fast path); bias math stays f32.
    wqkv = wqkv.astype(x.dtype)
    wproj = wproj.astype(x.dtype)
    bqkv2 = bqkv.reshape(1, 3 * C).astype(jnp.float32)
    bproj2 = bproj.reshape(1, C).astype(jnp.float32)
    rel_pos_bias = rel_pos_bias.astype(jnp.float32)

    if mask is not None:
        nW = mask.shape[0]
        assert B_ % nW == 0, "B_ must be a multiple of num_windows"
        mask = mask.astype(jnp.float32)
        step = nW
    else:
        nW = None
        step = 1

    BW = block_windows if block_windows is not None else \
        _choose_block_windows(B_, N, step)
    assert B_ % BW == 0 and BW % step == 0

    kernel = functools.partial(_window_attn_kernel, num_heads=H, scale=scale,
                               nW=nW)

    # Weights / bias / mask use constant index_maps -> stay VMEM-resident
    # (DMA'd once), instead of streaming a (B_, H, N, N) bias from HBM.
    in_specs = [
        pl.BlockSpec((BW, N, C), lambda b: (b, 0, 0)),
        pl.BlockSpec((C, 3 * C), lambda b: (0, 0)),
        pl.BlockSpec((1, 3 * C), lambda b: (0, 0)),
        pl.BlockSpec((H, N, N), lambda b: (0, 0, 0)),
    ]
    inputs = [x, wqkv, bqkv2, rel_pos_bias]
    if mask is not None:
        in_specs.append(pl.BlockSpec((nW, N, N), lambda b: (0, 0, 0)))
        inputs.append(mask)
    in_specs += [
        pl.BlockSpec((C, C), lambda b: (0, 0)),
        pl.BlockSpec((1, C), lambda b: (0, 0)),
    ]
    inputs += [wproj, bproj2]

    return pl.pallas_call(
        kernel,
        out_shape=jax.ShapeDtypeStruct((B_, N, C), x.dtype),
        grid_spec=pltpu.PrefetchScalarGridSpec(
            num_scalar_prefetch=0,
            grid=(B_ // BW,),
            in_specs=in_specs,
            out_specs=pl.BlockSpec((BW, N, C), lambda b: (b, 0, 0)),
        ),
        compiler_params=pltpu.CompilerParams(
            dimension_semantics=("parallel",),
            vmem_limit_bytes=32 * 1024 * 1024,
        ),
    )(*inputs)


def make_relative_position_index(window_size):
    """Same construction as the PyTorch module (numpy, host-side glue)."""
    Wh, Ww = window_size
    coords_h = np.arange(Wh)
    coords_w = np.arange(Ww)
    coords = np.stack(np.meshgrid(coords_h, coords_w, indexing="ij"))   # (2, Wh, Ww)
    coords_flatten = coords.reshape(2, -1)                              # (2, Wh*Ww)
    relative_coords = coords_flatten[:, :, None] - coords_flatten[:, None, :]
    relative_coords = relative_coords.transpose(1, 2, 0).copy()         # (N, N, 2)
    relative_coords[:, :, 0] += Wh - 1
    relative_coords[:, :, 1] += Ww - 1
    relative_coords[:, :, 0] *= 2 * Ww - 1
    return relative_coords.sum(-1)                                      # (N, N)


def reference_window_attention(x, wqkv, bqkv, wproj, bproj, rel_pos_bias,
                               num_heads, mask=None):
    """Pure-JAX f32 reference mirroring the PyTorch forward (for validation)."""
    B_, N, C = x.shape
    H = num_heads
    hd = C // H
    scale = hd ** (-0.5)
    x = x.astype(jnp.float32)
    qkv = x @ wqkv + bqkv                                               # (B_, N, 3C)
    qkv = qkv.reshape(B_, N, 3, H, hd).transpose(2, 0, 3, 1, 4)
    q, k, v = qkv[0], qkv[1], qkv[2]                                    # (B_, H, N, hd)
    q = q * scale
    attn = jnp.einsum("bhnd,bhmd->bhnm", q, k)
    attn = attn + rel_pos_bias[None]
    if mask is not None:
        nW = mask.shape[0]
        attn = attn.reshape(B_ // nW, nW, H, N, N) + mask[None, :, None]
        attn = attn.reshape(B_, H, N, N)
    attn = jax.nn.softmax(attn, axis=-1)
    out = jnp.einsum("bhnm,bhmd->bhnd", attn, v)
    out = out.transpose(0, 2, 1, 3).reshape(B_, N, C)
    return out @ wproj + bproj


if __name__ == "__main__":
    # Small, deterministic config (N=64, C=128 keeps the output lane-dense).
    dim = 128
    window_size = (8, 8)
    num_heads = 4
    Wh, Ww = window_size
    N = Wh * Ww
    nW = 2          # number of distinct windows (for the mask path)
    B = 4           # batch
    B_ = B * nW     # num_windows * batch

    key = jax.random.PRNGKey(0)
    k_tbl, k_x, k_wqkv, k_bqkv, k_wproj, k_bproj = jax.random.split(key, 6)

    # Parameters (deterministic synthetic init; Linear weights stored (in, out)).
    # trunc_normal_(std=0.02) approximated by normal * 0.02.
    rel_pos_table = jax.random.normal(
        k_tbl, ((2 * Wh - 1) * (2 * Ww - 1), num_heads), jnp.float32) * 0.02
    wqkv = jax.random.normal(k_wqkv, (dim, 3 * dim), jnp.float32) * 0.05
    bqkv = jax.random.normal(k_bqkv, (3 * dim,), jnp.float32) * 0.05
    wproj = jax.random.normal(k_wproj, (dim, dim), jnp.float32) * 0.05
    bproj = jax.random.normal(k_bproj, (dim,), jnp.float32) * 0.05

    # Relative position bias: gather + permute (one-time glue, plain JAX).
    rel_pos_index = jnp.asarray(make_relative_position_index(window_size))
    rel_pos_bias = rel_pos_table[rel_pos_index.reshape(-1)]             # (N*N, H)
    rel_pos_bias = rel_pos_bias.reshape(N, N, num_heads).transpose(2, 0, 1)  # (H, N, N)

    # Input.
    x = jax.random.normal(k_x, (B_, N, dim), jnp.float32)

    # Shifted-window style mask (0 / -100.0 additive), deterministic pattern.
    mask_np = np.zeros((nW, N, N), np.float32)
    mask_np[1, : N // 2, N // 2:] = -100.0
    mask_np[1, N // 2:, : N // 2] = -100.0
    mask = jnp.asarray(mask_np)

    # ---- f32, mask=None path ----
    out0 = jax.block_until_ready(
        window_attention(x, wqkv, bqkv, wproj, bproj, rel_pos_bias,
                         num_heads, mask=None))
    ref0 = reference_window_attention(x, wqkv, bqkv, wproj, bproj,
                                      rel_pos_bias, num_heads, mask=None)
    np.testing.assert_allclose(np.asarray(out0), np.asarray(ref0),
                               rtol=5e-3, atol=5e-3)

    # ---- f32, mask path ----
    out1 = jax.block_until_ready(
        window_attention(x, wqkv, bqkv, wproj, bproj, rel_pos_bias,
                         num_heads, mask=mask))
    ref1 = reference_window_attention(x, wqkv, bqkv, wproj, bproj,
                                      rel_pos_bias, num_heads, mask=mask)
    np.testing.assert_allclose(np.asarray(out1), np.asarray(ref1),
                               rtol=5e-3, atol=5e-3)

    # ---- bf16 fast path (bf16 MXU operands, f32 accumulation/softmax) ----
    out2 = jax.block_until_ready(
        window_attention(x.astype(jnp.bfloat16), wqkv, bqkv, wproj, bproj,
                         rel_pos_bias, num_heads, mask=mask))
    np.testing.assert_allclose(np.asarray(out2, dtype=np.float32),
                               np.asarray(ref1), rtol=5e-2, atol=5e-2)

    print("KERNEL_OK")
</pallas_src>

<mosaic_0001>
module attributes {stable_mosaic.version = 11 : i64} {
  func.func @_window_attn_kernel(%arg0: i32, %arg1: memref<4x64x128xf32, #tpu.memory_space<vmem>>, %arg2: memref<128x384xf32, #tpu.memory_space<vmem>>, %arg3: memref<1x384xf32, #tpu.memory_space<vmem>>, %arg4: memref<4x64x64xf32, #tpu.memory_space<vmem>>, %arg5: memref<128x128xf32, #tpu.memory_space<vmem>>, %arg6: memref<1x128xf32, #tpu.memory_space<vmem>>, %arg7: memref<4x64x128xf32, #tpu.memory_space<vmem>>) attributes {dimension_semantics = [#tpu.dimension_semantics<parallel>], iteration_bounds = array<i64: 2>, scalar_prefetch = 0 : i64, scratch_operands = 0 : i64, tpu.core_type = #tpu.core_type<tc>, window_params = [{transform_indices = @transform_0, window_bounds = array<i64: 4, 64, 128>}, {pipeline_mode = #tpu.pipeline_mode<synchronous>, transform_indices = @transform_1, window_bounds = array<i64: 128, 384>}, {pipeline_mode = #tpu.pipeline_mode<synchronous>, transform_indices = @transform_2, window_bounds = array<i64: 1, 384>}, {pipeline_mode = #tpu.pipeline_mode<synchronous>, transform_indices = @transform_3, window_bounds = array<i64: 4, 64, 64>}, {pipeline_mode = #tpu.pipeline_mode<synchronous>, transform_indices = @transform_4, window_bounds = array<i64: 128, 128>}, {pipeline_mode = #tpu.pipeline_mode<synchronous>, transform_indices = @transform_5, window_bounds = array<i64: 1, 128>}, {transform_indices = @transform_6, window_bounds = array<i64: 4, 64, 128>}]} {
    %c0 = arith.constant 0 : index
    %c0_0 = arith.constant 0 : index
    %c0_1 = arith.constant 0 : index
    %0 = vector.load %arg1[%c0, %c0_0, %c0_1] : memref<4x64x128xf32, #tpu.memory_space<vmem>>, vector<4x64x128xf32>
    %1 = vector.shape_cast %0 : vector<4x64x128xf32> to vector<256x128xf32>
    %c0_2 = arith.constant 0 : index
    %c0_3 = arith.constant 0 : index
    %2 = vector.load %arg2[%c0_2, %c0_3] : memref<128x384xf32, #tpu.memory_space<vmem>>, vector<128x384xf32>
    %cst = arith.constant dense<0.000000e+00> : vector<256x384xf32>
    %3 = tpu.matmul %1, %2, %cst {dimension_numbers = #tpu.dot_dimension_numbers<[1], [0], [0], [1], [0, 0, 1, 1], [], []>} : vector<256x128xf32>, vector<128x384xf32>, vector<256x384xf32> -> vector<256x384xf32>
    %c0_4 = arith.constant 0 : index
    %c0_5 = arith.constant 0 : index
    %4 = vector.load %arg3[%c0_4, %c0_5] : memref<1x384xf32, #tpu.memory_space<vmem>>, vector<1x384xf32>
    %5 = vector.shape_cast %4 : vector<1x384xf32> to vector<384xf32>
    %6 = vector.shape_cast %5 : vector<384xf32> to vector<1x384xf32>
    %7 = vector.broadcast %6 : vector<1x384xf32> to vector<256x384xf32>
    %8 = arith.addf %3, %7 : vector<256x384xf32>
    %9 = vector.extract_strided_slice %8 {offsets = [0, 0], sizes = [256, 32], strides = [1, 1]} : vector<256x384xf32> to vector<256x32xf32>
    %cst_6 = arith.constant 0.176776692 : f32
    %10 = vector.broadcast %cst_6 : f32 to vector<256x32xf32>
    %11 = arith.mulf %9, %10 : vector<256x32xf32>
    %12 = vector.extract_strided_slice %8 {offsets = [0, 128], sizes = [256, 32], strides = [1, 1]} : vector<256x384xf32> to vector<256x32xf32>
    %13 = vector.extract_strided_slice %8 {offsets = [0, 256], sizes = [256, 32], strides = [1, 1]} : vector<256x384xf32> to vector<256x32xf32>
    %14 = vector.shape_cast %11 : vector<256x32xf32> to vector<4x64x32xf32>
    %15 = vector.shape_cast %12 : vector<256x32xf32> to vector<4x64x32xf32>
    %16 = vector.shape_cast %13 : vector<256x32xf32> to vector<4x64x32xf32>
    "tpu.trace_start"() <{level = 10 : i32, message = "bnd,bmd->bnm"}> : () -> ()
    %cst_7 = arith.constant dense<0.000000e+00> : vector<4x64x64xf32>
    %17 = tpu.matmul %14, %15, %cst_7 {dimension_numbers = #tpu.dot_dimension_numbers<[2], [2], [1], [1], [0, 0, 0, 1, 1, 1], [0], [0]>} : vector<4x64x32xf32>, vector<4x64x32xf32>, vector<4x64x64xf32> -> vector<4x64x64xf32>
    "tpu.trace_stop"() : () -> ()
    %c0_8 = arith.constant 0 : index
    %c0_9 = arith.constant 0 : index
    %c0_10 = arith.constant 0 : index
    %18 = vector.load %arg4[%c0_8, %c0_9, %c0_10] : memref<4x64x64xf32, #tpu.memory_space<vmem>>, vector<1x64x64xf32>
    %19 = vector.shape_cast %18 : vector<1x64x64xf32> to vector<64x64xf32>
    %20 = vector.shape_cast %19 : vector<64x64xf32> to vector<1x64x64xf32>
    %21 = vector.broadcast %20 : vector<1x64x64xf32> to vector<4x64x64xf32>
    %22 = arith.addf %17, %21 : vector<4x64x64xf32>
    %cst_11 = arith.constant dense<0xFF800000> : vector<4x64xf32>
    %23 = vector.multi_reduction <maximumf>, %22, %cst_11 [2] : vector<4x64x64xf32> to vector<4x64xf32>
    %24 = vector.shape_cast %23 : vector<4x64xf32> to vector<4x64x1xf32>
    %25 = vector.broadcast %24 : vector<4x64x1xf32> to vector<4x64x64xf32>
    %26 = arith.subf %22, %25 : vector<4x64x64xf32>
    %27 = math.exp %26 : vector<4x64x64xf32>
    %cst_12 = arith.constant dense<0.000000e+00> : vector<4x64xf32>
    %28 = vector.multi_reduction <add>, %27, %cst_12 [2] : vector<4x64x64xf32> to vector<4x64xf32>
    %29 = vector.shape_cast %28 : vector<4x64xf32> to vector<4x64x1xf32>
    %30 = tpu.reciprocal %29 {approx = true} : vector<4x64x1xf32> -> vector<4x64x1xf32>
    %31 = vector.broadcast %30 : vector<4x64x1xf32> to vector<4x64x64xf32>
    %32 = arith.mulf %27, %31 : vector<4x64x64xf32>
    "tpu.trace_start"() <{level = 10 : i32, message = "bnm,bmd->bnd"}> : () -> ()
    %cst_13 = arith.constant dense<0.000000e+00> : vector<4x64x32xf32>
    %33 = tpu.matmul %32, %16, %cst_13 {dimension_numbers = #tpu.dot_dimension_numbers<[2], [1], [1], [2], [0, 0, 0, 1, 1, 2], [0], [0]>} : vector<4x64x64xf32>, vector<4x64x32xf32>, vector<4x64x32xf32> -> vector<4x64x32xf32>
    "tpu.trace_stop"() : () -> ()
    %34 = vector.extract_strided_slice %8 {offsets = [0, 32], sizes = [256, 32], strides = [1, 1]} : vector<256x384xf32> to vector<256x32xf32>
    %cst_14 = arith.constant 0.176776692 : f32
    %35 = vector.broadcast %cst_14 : f32 to vector<256x32xf32>
    %36 = arith.mulf %34, %35 : vector<256x32xf32>
    %37 = vector.extract_strided_slice %8 {offsets = [0, 160], sizes = [256, 32], strides = [1, 1]} : vector<256x384xf32> to vector<256x32xf32>
    %38 = vector.extract_strided_slice %8 {offsets = [0, 288], sizes = [256, 32], strides = [1, 1]} : vector<256x384xf32> to vector<256x32xf32>
    %39 = vector.shape_cast %36 : vector<256x32xf32> to vector<4x64x32xf32>
    %40 = vector.shape_cast %37 : vector<256x32xf32> to vector<4x64x32xf32>
    %41 = vector.shape_cast %38 : vector<256x32xf32> to vector<4x64x32xf32>
    "tpu.trace_start"() <{level = 10 : i32, message = "bnd,bmd->bnm"}> : () -> ()
    %cst_15 = arith.constant dense<0.000000e+00> : vector<4x64x64xf32>
    %42 = tpu.matmul %39, %40, %cst_15 {dimension_numbers = #tpu.dot_dimension_numbers<[2], [2], [1], [1], [0, 0, 0, 1, 1, 1], [0], [0]>} : vector<4x64x32xf32>, vector<4x64x32xf32>, vector<4x64x64xf32> -> vector<4x64x64xf32>
    "tpu.trace_stop"() : () -> ()
    %c1 = arith.constant 1 : index
    %c0_16 = arith.constant 0 : index
    %c0_17 = arith.constant 0 : index
    %43 = vector.load %arg4[%c1, %c0_16, %c0_17] : memref<4x64x64xf32, #tpu.memory_space<vmem>>, vector<1x64x64xf32>
    %44 = vector.shape_cast %43 : vector<1x64x64xf32> to vector<64x64xf32>
    %45 = vector.shape_cast %44 : vector<64x64xf32> to vector<1x64x64xf32>
    %46 = vector.broadcast %45 : vector<1x64x64xf32> to vector<4x64x64xf32>
    %47 = arith.addf %42, %46 : vector<4x64x64xf32>
    %cst_18 = arith.constant dense<0xFF800000> : vector<4x64xf32>
    %48 = vector.multi_reduction <maximumf>, %47, %cst_18 [2] : vector<4x64x64xf32> to vector<4x64xf32>
    %49 = vector.shape_cast %48 : vector<4x64xf32> to vector<4x64x1xf32>
    %50 = vector.broadcast %49 : vector<4x64x1xf32> to vector<4x64x64xf32>
    %51 = arith.subf %47, %50 : vector<4x64x64xf32>
    %52 = math.exp %51 : vector<4x64x64xf32>
    %cst_19 = arith.constant dense<0.000000e+00> : vector<4x64xf32>
    %53 = vector.multi_reduction <add>, %52, %cst_19 [2] : vector<4x64x64xf32> to vector<4x64xf32>
    %54 = vector.shape_cast %53 : vector<4x64xf32> to vector<4x64x1xf32>
    %55 = tpu.reciprocal %54 {approx = true} : vector<4x64x1xf32> -> vector<4x64x1xf32>
    %56 = vector.broadcast %55 : vector<4x64x1xf32> to vector<4x64x64xf32>
    %57 = arith.mulf %52, %56 : vector<4x64x64xf32>
    "tpu.trace_start"() <{level = 10 : i32, message = "bnm,bmd->bnd"}> : () -> ()
    %cst_20 = arith.constant dense<0.000000e+00> : vector<4x64x32xf32>
    %58 = tpu.matmul %57, %41, %cst_20 {dimension_numbers = #tpu.dot_dimension_numbers<[2], [1], [1], [2], [0, 0, 0, 1, 1, 2], [0], [0]>} : vector<4x64x64xf32>, vector<4x64x32xf32>, vector<4x64x32xf32> -> vector<4x64x32xf32>
    "tpu.trace_stop"() : () -> ()
    %59 = vector.extract_strided_slice %8 {offsets = [0, 64], sizes = [256, 32], strides = [1, 1]} : vector<256x384xf32> to vector<256x32xf32>
    %cst_21 = arith.constant 0.176776692 : f32
    %60 = vector.broadcast %cst_21 : f32 to vector<256x32xf32>
    %61 = arith.mulf %59, %60 : vector<256x32xf32>
    %62 = vector.extract_strided_slice %8 {offsets = [0, 192], sizes = [256, 32], strides = [1, 1]} : vector<256x384xf32> to vector<256x32xf32>
    %63 = vector.extract_strided_slice %8 {offsets = [0, 320], sizes = [256, 32], strides = [1, 1]} : vector<256x384xf32> to vector<256x32xf32>
    %64 = vector.shape_cast %61 : vector<256x32xf32> to vector<4x64x32xf32>
    %65 = vector.shape_cast %62 : vector<256x32xf32> to vector<4x64x32xf32>
    %66 = vector.shape_cast %63 : vector<256x32xf32> to vector<4x64x32xf32>
    "tpu.trace_start"() <{level = 10 : i32, message = "bnd,bmd->bnm"}> : () -> ()
    %cst_22 = arith.constant dense<0.000000e+00> : vector<4x64x64xf32>
    %67 = tpu.matmul %64, %65, %cst_22 {dimension_numbers = #tpu.dot_dimension_numbers<[2], [2], [1], [1], [0, 0, 0, 1, 1, 1], [0], [0]>} : vector<4x64x32xf32>, vector<4x64x32xf32>, vector<4x64x64xf32> -> vector<4x64x64xf32>
    "tpu.trace_stop"() : () -> ()
    %c2 = arith.constant 2 : index
    %c0_23 = arith.constant 0 : index
    %c0_24 = arith.constant 0 : index
    %68 = vector.load %arg4[%c2, %c0_23, %c0_24] : memref<4x64x64xf32, #tpu.memory_space<vmem>>, vector<1x64x64xf32>
    %69 = vector.shape_cast %68 : vector<1x64x64xf32> to vector<64x64xf32>
    %70 = vector.shape_cast %69 : vector<64x64xf32> to vector<1x64x64xf32>
    %71 = vector.broadcast %70 : vector<1x64x64xf32> to vector<4x64x64xf32>
    %72 = arith.addf %67, %71 : vector<4x64x64xf32>
    %cst_25 = arith.constant dense<0xFF800000> : vector<4x64xf32>
    %73 = vector.multi_reduction <maximumf>, %72, %cst_25 [2] : vector<4x64x64xf32> to vector<4x64xf32>
    %74 = vector.shape_cast %73 : vector<4x64xf32> to vector<4x64x1xf32>
    %75 = vector.broadcast %74 : vector<4x64x1xf32> to vector<4x64x64xf32>
    %76 = arith.subf %72, %75 : vector<4x64x64xf32>
    %77 = math.exp %76 : vector<4x64x64xf32>
    %cst_26 = arith.constant dense<0.000000e+00> : vector<4x64xf32>
    %78 = vector.multi_reduction <add>, %77, %cst_26 [2] : vector<4x64x64xf32> to vector<4x64xf32>
    %79 = vector.shape_cast %78 : vector<4x64xf32> to vector<4x64x1xf32>
    %80 = tpu.reciprocal %79 {approx = true} : vector<4x64x1xf32> -> vector<4x64x1xf32>
    %81 = vector.broadcast %80 : vector<4x64x1xf32> to vector<4x64x64xf32>
    %82 = arith.mulf %77, %81 : vector<4x64x64xf32>
    "tpu.trace_start"() <{level = 10 : i32, message = "bnm,bmd->bnd"}> : () -> ()
    %cst_27 = arith.constant dense<0.000000e+00> : vector<4x64x32xf32>
    %83 = tpu.matmul %82, %66, %cst_27 {dimension_numbers = #tpu.dot_dimension_numbers<[2], [1], [1], [2], [0, 0, 0, 1, 1, 2], [0], [0]>} : vector<4x64x64xf32>, vector<4x64x32xf32>, vector<4x64x32xf32> -> vector<4x64x32xf32>
    "tpu.trace_stop"() : () -> ()
    %84 = vector.extract_strided_slice %8 {offsets = [0, 96], sizes = [256, 32], strides = [1, 1]} : vector<256x384xf32> to vector<256x32xf32>
    %cst_28 = arith.constant 0.176776692 : f32
    %85 = vector.broadcast %cst_28 : f32 to vector<256x32xf32>
    %86 = arith.mulf %84, %85 : vector<256x32xf32>
    %87 = vector.extract_strided_slice %8 {offsets = [0, 224], sizes = [256, 32], strides = [1, 1]} : vector<256x384xf32> to vector<256x32xf32>
    %88 = vector.extract_strided_slice %8 {offsets = [0, 352], sizes = [256, 32], strides = [1, 1]} : vector<256x384xf32> to vector<256x32xf32>
    %89 = vector.shape_cast %86 : vector<256x32xf32> to vector<4x64x32xf32>
    %90 = vector.shape_cast %87 : vector<256x32xf32> to vector<4x64x32xf32>
    %91 = vector.shape_cast %88 : vector<256x32xf32> to vector<4x64x32xf32>
    "tpu.trace_start"() <{level = 10 : i32, message = "bnd,bmd->bnm"}> : () -> ()
    %cst_29 = arith.constant dense<0.000000e+00> : vector<4x64x64xf32>
    %92 = tpu.matmul %89, %90, %cst_29 {dimension_numbers = #tpu.dot_dimension_numbers<[2], [2], [1], [1], [0, 0, 0, 1, 1, 1], [0], [0]>} : vector<4x64x32xf32>, vector<4x64x32xf32>, vector<4x64x64xf32> -> vector<4x64x64xf32>
    "tpu.trace_stop"() : () -> ()
    %c3 = arith.constant 3 : index
    %c0_30 = arith.constant 0 : index
    %c0_31 = arith.constant 0 : index
    %93 = vector.load %arg4[%c3, %c0_30, %c0_31] : memref<4x64x64xf32, #tpu.memory_space<vmem>>, vector<1x64x64xf32>
    %94 = vector.shape_cast %93 : vector<1x64x64xf32> to vector<64x64xf32>
    %95 = vector.shape_cast %94 : vector<64x64xf32> to vector<1x64x64xf32>
    %96 = vector.broadcast %95 : vector<1x64x64xf32> to vector<4x64x64xf32>
    %97 = arith.addf %92, %96 : vector<4x64x64xf32>
    %cst_32 = arith.constant dense<0xFF800000> : vector<4x64xf32>
    %98 = vector.multi_reduction <maximumf>, %97, %cst_32 [2] : vector<4x64x64xf32> to vector<4x64xf32>
    %99 = vector.shape_cast %98 : vector<4x64xf32> to vector<4x64x1xf32>
    %100 = vector.broadcast %99 : vector<4x64x1xf32> to vector<4x64x64xf32>
    %101 = arith.subf %97, %100 : vector<4x64x64xf32>
    %102 = math.exp %101 : vector<4x64x64xf32>
    %cst_33 = arith.constant dense<0.000000e+00> : vector<4x64xf32>
    %103 = vector.multi_reduction <add>, %102, %cst_33 [2] : vector<4x64x64xf32> to vector<4x64xf32>
    %104 = vector.shape_cast %103 : vector<4x64xf32> to vector<4x64x1xf32>
    %105 = tpu.reciprocal %104 {approx = true} : vector<4x64x1xf32> -> vector<4x64x1xf32>
    %106 = vector.broadcast %105 : vector<4x64x1xf32> to vector<4x64x64xf32>
    %107 = arith.mulf %102, %106 : vector<4x64x64xf32>
    "tpu.trace_start"() <{level = 10 : i32, message = "bnm,bmd->bnd"}> : () -> ()
    %cst_34 = arith.constant dense<0.000000e+00> : vector<4x64x32xf32>
    %108 = tpu.matmul %107, %91, %cst_34 {dimension_numbers = #tpu.dot_dimension_numbers<[2], [1], [1], [2], [0, 0, 0, 1, 1, 2], [0], [0]>} : vector<4x64x64xf32>, vector<4x64x32xf32>, vector<4x64x32xf32> -> vector<4x64x32xf32>
    "tpu.trace_stop"() : () -> ()
    %109 = tpu.concatenate %33, %58, %83, %108 in 2 : vector<4x64x32xf32>, vector<4x64x32xf32>, vector<4x64x32xf32>, vector<4x64x32xf32> -> vector<4x64x128xf32>
    %110 = vector.shape_cast %109 : vector<4x64x128xf32> to vector<256x128xf32>
    %c0_35 = arith.constant 0 : index
    %c0_36 = arith.constant 0 : index
    %111 = vector.load %arg5[%c0_35, %c0_36] : memref<128x128xf32, #tpu.memory_space<vmem>>, vector<128x128xf32>
    %cst_37 = arith.constant dense<0.000000e+00> : vector<256x128xf32>
    %112 = tpu.matmul %110, %111, %cst_37 {dimension_numbers = #tpu.dot_dimension_numbers<[1], [0], [0], [1], [0, 0, 1, 1], [], []>} : vector<256x128xf32>, vector<128x128xf32>, vector<256x128xf32> -> vector<256x128xf32>
    %c0_38 = arith.constant 0 : index
    %c0_39 = arith.constant 0 : index
    %113 = vector.load %arg6[%c0_38, %c0_39] : memref<1x128xf32, #tpu.memory_space<vmem>>, vector<1x128xf32>
    %114 = vector.shape_cast %113 : vector<1x128xf32> to vector<128xf32>
    %115 = vector.shape_cast %114 : vector<128xf32> to vector<1x128xf32>
    %116 = vector.broadcast %115 : vector<1x128xf32> to vector<256x128xf32>
    %117 = arith.addf %112, %116 : vector<256x128xf32>
    %118 = vector.shape_cast %117 : vector<256x128xf32> to vector<4x64x128xf32>
    %c0_40 = arith.constant 0 : index
    %c0_41 = arith.constant 0 : index
    %c0_42 = arith.constant 0 : index
    %119 = vector.load %arg7[%c0_40, %c0_41, %c0_42] : memref<4x64x128xf32, #tpu.memory_space<vmem>>, vector<4x64x128xf32>
    tpu.vector_store %arg7[%c0_40, %c0_41, %c0_42], %118 {strides = array<i32>} : memref<4x64x128xf32, #tpu.memory_space<vmem>>, vector<4x64x128xf32>,
    return
  }
  func.func @transform_0(%arg0: i32) -> (i32, i32, i32) {
    %c0_i32 = arith.constant 0 : i32
    %c0_i32_0 = arith.constant 0 : i32
    %c0_i32_1 = arith.constant 0 : i32
    return %arg0, %c0_i32, %c0_i32_0 : i32, i32, i32
  }
  func.func @transform_1(%arg0: i32) -> (i32, i32) {
    %c0_i32 = arith.constant 0 : i32
    %c0_i32_0 = arith.constant 0 : i32
    %c0_i32_1 = arith.constant 0 : i32
    return %c0_i32, %c0_i32_0 : i32, i32
  }
  func.func @transform_2(%arg0: i32) -> (i32, i32) {
    %c0_i32 = arith.constant 0 : i32
    %c0_i32_0 = arith.constant 0 : i32
    %c0_i32_1 = arith.constant 0 : i32
    return %c0_i32, %c0_i32_0 : i32, i32
  }
  func.func @transform_3(%arg0: i32) -> (i32, i32, i32) {
    %c0_i32 = arith.constant 0 : i32
    %c0_i32_0 = arith.constant 0 : i32
    %c0_i32_1 = arith.constant 0 : i32
    %c0_i32_2 = arith.constant 0 : i32
    return %c0_i32, %c0_i32_0, %c0_i32_1 : i32, i32, i32
  }
  func.func @transform_4(%arg0: i32) -> (i32, i32) {
    %c0_i32 = arith.constant 0 : i32
    %c0_i32_0 = arith.constant 0 : i32
    %c0_i32_1 = arith.constant 0 : i32
    return %c0_i32, %c0_i32_0 : i32, i32
  }
  func.func @transform_5(%arg0: i32) -> (i32, i32) {
    %c0_i32 = arith.constant 0 : i32
    %c0_i32_0 = arith.constant 0 : i32
    %c0_i32_1 = arith.constant 0 : i32
    return %c0_i32, %c0_i32_0 : i32, i32
  }
  func.func @transform_6(%arg0: i32) -> (i32, i32, i32) {
    %c0_i32 = arith.constant 0 : i32
    %c0_i32_0 = arith.constant 0 : i32
    %c0_i32_1 = arith.constant 0 : i32
    return %arg0, %c0_i32, %c0_i32_0 : i32, i32, i32
  }
}

</mosaic_0001>

<llo_original>
// kernel: tpu_custom_call.1
$region0: #{tpu_custom_call.1}
  #allocation0 [shape = 'u32[]', space=smem, size = 0x4, offset = 0x4, fixed_abs, tag = 'smem constant byte address 0x4 - core index']
  #allocation1 [shape = 'u32[144,128]{1,0:T(1,128)}', space=vmem, size = 0x12000, scoped, tag = 'internal scratch']
  %s0 = inlined_call_operand.hbm [shape: f32[8,64,128], index: 0, kind: input, shape index: {}]
  %s1 = inlined_call_operand.hbm [shape: f32[128,384], index: 1, kind: input, shape index: {}]
  %s2 = inlined_call_operand.vmem [shape: f32[1,384], index: 2, kind: input, shape index: {}]
  %s3 = inlined_call_operand.hbm [shape: f32[4,64,64], index: 3, kind: input, shape index: {}]
  %s4 = inlined_call_operand.hbm [shape: f32[128,128], index: 4, kind: input, shape index: {}]
  %s5 = inlined_call_operand.vmem [shape: f32[1,128], index: 5, kind: input, shape index: {}]
  %s6 = inlined_call_operand.hbm [shape: f32[8,64,128], index: 6, kind: output, shape index: {}]
  %s7 = sld [smem:[#allocation0]]
  $region73: #{tpu_custom_call.1} parent=0
    _
  %s9 = ssub.s32 1, %s7
  %s10 = scalar_select 0, %s9, %s7
  $region1: #{tpu_custom_call.1} parent=0
    #allocation2 [shape = 'u8[262144]{0}', space=vmem, size = 0x40000, scoped, tag = 'input window, operand 0']
    #allocation3 [shape = 's32[2]{0}', space=sflag, size = 0x8, scoped, tag = 'scoped memory for tpu_custom_call.1']
    #allocation4 [shape = 's32[2]{0}', space=sflag, size = 0x8, scoped, tag = 'scoped memory for tpu_custom_call.1']
    #allocation5 [shape = 'u8[196608]{0}', space=vmem, size = 0x30000, scoped, tag = 'input window, operand 1, single buffered']
    #allocation6 [shape = 's32[1]{0}', space=sflag, size = 0x4, scoped, tag = 'scoped memory for tpu_custom_call.1']
    #allocation7 [shape = 'u8[131072]{0}', space=vmem, size = 0x20000, scoped, tag = 'input window, operand 3, single buffered']
    #allocation8 [shape = 'u8[65536]{0}', space=vmem, size = 0x10000, scoped, tag = 'input window, operand 4, single buffered']
    #allocation9 [shape = 's32[1]{0}', space=sflag, size = 0x4, scoped, tag = 'scoped memory for tpu_custom_call.1']
    #allocation10 [shape = 'u8[262144]{0}', space=vmem, size = 0x40000, scoped, tag = 'output window, operand 0']
    %11 = vsyncpa [#allocation3], 0
    %s12 = scalar_lea.sflag [#allocation3], 1
    %13 = vsyncpa %s12, 0
    %14 = vsyncpa [#allocation6], 0
    %15 = vsyncpa [#allocation9], 0
    %16 = vsyncpa [#allocation4], 0
    %s17 = scalar_lea.sflag [#allocation4], 1
    %18 = vsyncpa %s17, 0
    loop: start=0, step=1, limit=4
    $region2: #{tpu_custom_call.1} parent=1 // loop_pre_header
      _
    $region3: #{tpu_custom_call.1} parent=1 // loop_header
      %s20 = sphi 0, %s24
      %p21 = scmp.ge.s32.totalorder %s20, 4
      %s30 = sphi 0, %s32
      %s33 = sphi 0, %s30
      %s34 = sphi 0, %s33
      %s50 = sphi 0, %s34
      %s54 = sphi 0, %s54
      %s56 = sphi 0, %s54
      %s57 = sphi 0, %s56
      %s71 = sphi 0, %s57
      %s75 = sphi 0, %s75
      %s77 = sphi 0, %s75
      %s78 = sphi 0, %s77
      %s92 = sphi 0, %s78
      %s96 = sphi 0, %s96
      %s98 = sphi 0, %s96
      %s99 = sphi 0, %s98
      %s113 = sphi 0, %s99
      %s117 = sphi 0, %s117
      %s119 = sphi 0, %s117
      %s120 = sphi 0, %s119
      %s134 = sphi 0, %s120
      %s138 = sphi 0, %s138
      %s140 = sphi 0, %s138
      %s141 = sphi 0, %s140
      %s155 = sphi 0, %s141
      %s161 = sphi 0, %s163
      %s164 = sphi 0, %s161
      %s165 = sphi 0, %s164
      %s181 = sphi 0, %s165
    $region4: #{tpu_custom_call.1} parent=1 // loop_header_branch
      %23 = sbr.rel (%p21) target = $region8
    $region5: #{tpu_custom_call.1} parent=1 // loop_body
      %s25 = ssub.s32 %s20, 1
      %s26 = ssub.s32 %s20, 2
      %s27 = sadd.s32 %s20, 1
      %s28 = ssub.s32 %s20, %s27
      %p29 = scmp.eq.s32.totalorder %s28, 0
      %s31 = sadd.s32 %s30, 1
      %s32 = scalar_select %p29, %s30, %s31
      %p35 = pneg %p29
      %p36 = scmp.eq.s32.totalorder %s20, 1
      %p37 = por %p35, %p36
      %p38 = scmp.ne.s32.totalorder %s30, %s33
      %p39 = scmp.eq.s32.totalorder %s20, 0
      %p40 = por %p38, %p39
      %p41 = scmp.ne.s32.totalorder %s30, %s33
      %p42 = scmp.eq.s32.totalorder %s25, 1
      %p43 = por %p41, %p42
      %p44 = scmp.ne.s32.totalorder %s33, %s34
      %p45 = scmp.eq.s32.totalorder %s25, 0
      %p46 = por %p44, %p45
      %p47 = scmp.ne.s32.totalorder %s33, %s34
      %p48 = scmp.eq.s32.totalorder %s26, 1
      %p49 = por %p47, %p48
      %p51 = scmp.ne.s32.totalorder %s34, %s50
      %p52 = scmp.eq.s32.totalorder %s26, 0
      %p53 = por %p51, %p52
      %s55 = sadd.s32 %s54, 1
      %p58 = scmp.eq.s32.totalorder %s20, 1
      %p59 = scmp.ne.s32.totalorder %s54, %s56
      %p60 = scmp.eq.s32.totalorder %s20, 0
      %p61 = por %p59, %p60
      %p62 = scmp.ne.s32.totalorder %s54, %s56
      %p63 = scmp.eq.s32.totalorder %s25, 1
      %p64 = por %p62, %p63
      %p65 = scmp.ne.s32.totalorder %s56, %s57
      %p66 = scmp.eq.s32.totalorder %s25, 0
      %p67 = por %p65, %p66
      %p68 = scmp.ne.s32.totalorder %s56, %s57
      %p69 = scmp.eq.s32.totalorder %s26, 1
      %p70 = por %p68, %p69
      %p72 = scmp.ne.s32.totalorder %s57, %s71
      %p73 = scmp.eq.s32.totalorder %s26, 0
      %p74 = por %p72, %p73
      %s76 = sadd.s32 %s75, 1
      %p79 = scmp.eq.s32.totalorder %s20, 1
      %p80 = scmp.ne.s32.totalorder %s75, %s77
      %p81 = scmp.eq.s32.totalorder %s20, 0
      %p82 = por %p80, %p81
      %p83 = scmp.ne.s32.totalorder %s75, %s77
      %p84 = scmp.eq.s32.totalorder %s25, 1
      %p85 = por %p83, %p84
      %p86 = scmp.ne.s32.totalorder %s77, %s78
      %p87 = scmp.eq.s32.totalorder %s25, 0
      %p88 = por %p86, %p87
      %p89 = scmp.ne.s32.totalorder %s77, %s78
      %p90 = scmp.eq.s32.totalorder %s26, 1
      %p91 = por %p89, %p90
      %p93 = scmp.ne.s32.totalorder %s78, %s92
      %p94 = scmp.eq.s32.totalorder %s26, 0
      %p95 = por %p93, %p94
      %s97 = sadd.s32 %s96, 1
      %p100 = scmp.eq.s32.totalorder %s20, 1
      %p101 = scmp.ne.s32.totalorder %s96, %s98
      %p102 = scmp.eq.s32.totalorder %s20, 0
      %p103 = por %p101, %p102
      %p104 = scmp.ne.s32.totalorder %s96, %s98
      %p105 = scmp.eq.s32.totalorder %s25, 1
      %p106 = por %p104, %p105
      %p107 = scmp.ne.s32.totalorder %s98, %s99
      %p108 = scmp.eq.s32.totalorder %s25, 0
      %p109 = por %p107, %p108
      %p110 = scmp.ne.s32.totalorder %s98, %s99
      %p111 = scmp.eq.s32.totalorder %s26, 1
      %p112 = por %p110, %p111
      %p114 = scmp.ne.s32.totalorder %s99, %s113
      %p115 = scmp.eq.s32.totalorder %s26, 0
      %p116 = por %p114, %p115
      %s118 = sadd.s32 %s117, 1
      %p121 = scmp.eq.s32.totalorder %s20, 1
      %p122 = scmp.ne.s32.totalorder %s117, %s119
      %p123 = scmp.eq.s32.totalorder %s20, 0
      %p124 = por %p122, %p123
      %p125 = scmp.ne.s32.totalorder %s117, %s119
      %p126 = scmp.eq.s32.totalorder %s25, 1
      %p127 = por %p125, %p126
      %p128 = scmp.ne.s32.totalorder %s119, %s120
      %p129 = scmp.eq.s32.totalorder %s25, 0
      %p130 = por %p128, %p129
      %p131 = scmp.ne.s32.totalorder %s119, %s120
      %p132 = scmp.eq.s32.totalorder %s26, 1
      %p133 = por %p131, %p132
      %p135 = scmp.ne.s32.totalorder %s120, %s134
      %p136 = scmp.eq.s32.totalorder %s26, 0
      %p137 = por %p135, %p136
      %s139 = sadd.s32 %s138, 1
      %p142 = scmp.eq.s32.totalorder %s20, 1
      %p143 = scmp.ne.s32.totalorder %s138, %s140
      %p144 = scmp.eq.s32.totalorder %s20, 0
      %p145 = por %p143, %p144
      %p146 = scmp.ne.s32.totalorder %s138, %s140
      %p147 = scmp.eq.s32.totalorder %s25, 1
      %p148 = por %p146, %p147
      %p149 = scmp.ne.s32.totalorder %s140, %s141
      %p150 = scmp.eq.s32.totalorder %s25, 0
      %p151 = por %p149, %p150
      %p152 = scmp.ne.s32.totalorder %s140, %s141
      %p153 = scmp.eq.s32.totalorder %s26, 1
      %p154 = por %p152, %p153
      %p156 = scmp.ne.s32.totalorder %s141, %s155
      %p157 = scmp.eq.s32.totalorder %s26, 0
      %p158 = por %p156, %p157
      %s159 = ssub.s32 %s20, %s27
      %p160 = scmp.eq.s32.totalorder %s159, 0
      %s162 = sadd.s32 %s161, 1
      %s163 = scalar_select %p160, %s161, %s162
      %p166 = pneg %p160
      %p167 = scmp.eq.s32.totalorder %s20, 1
      %p168 = por %p166, %p167
      %p169 = scmp.ne.s32.totalorder %s161, %s164
      %p170 = scmp.eq.s32.totalorder %s20, 0
      %p171 = por %p169, %p170
      %p172 = scmp.ne.s32.totalorder %s161, %s164
      %p173 = scmp.eq.s32.totalorder %s25, 1
      %p174 = por %p172, %p173
      %p175 = scmp.ne.s32.totalorder %s164, %s165
      %p176 = scmp.eq.s32.totalorder %s25, 0
      %p177 = por %p175, %p176
      %p178 = scmp.ne.s32.totalorder %s164, %s165
      %p179 = scmp.eq.s32.totalorder %s26, 1
      %p180 = por %p178, %p179
      %p182 = scmp.ne.s32.totalorder %s165, %s181
      %p183 = scmp.eq.s32.totalorder %s26, 0
      %p184 = por %p182, %p183
      %p185 = scmp.le.s32.totalorder 1, %s20
      %p186 = scmp.lt.s32.totalorder %s20, 3
      %p187 = pnand %p185, %p186
      %p188 = pneg %p187
      // Predicated region
      $region9: #{tpu_custom_call.1} parent=5 // pred_check
        _
      $region10: #{tpu_custom_call.1} parent=5 // pred_check_branch
        %190 = sbr.rel (%p187) target = $region12
      $region11: #{tpu_custom_call.1} parent=5 // pred_region
        %s191 = ssub.s32 %s20, 1
        // Predicated region
        $region13: #{tpu_custom_call.1} parent=11 // pred_check
          %p192 = pneg %p67
        $region14: #{tpu_custom_call.1} parent=11 // pred_check_branch
          %194 = sbr.rel (%p192) target = $region16
        $region15: #{tpu_custom_call.1} parent=11 // pred_region
          %s196 = ssub.s32 6144, 6144
          %197 = vsyncadd [#allocation6], %s196
          %s198 = sshll.u32 [#allocation5], 4
          %s199 = int_to_ptr.vmem [resolvable:$true] %s198
          %204 = dma.hbm_to_vmem [thread:$0]  %s1, 6144, %s199, [#allocation6], 384, 384, 24
        $region16: #{tpu_custom_call.1} parent=11 // pred_fallthru
          _
        // Predicated region
        $region17: #{tpu_custom_call.1} parent=11 // pred_check
          %p205 = pneg %p88
        $region18: #{tpu_custom_call.1} parent=11 // pred_check_branch
          %207 = sbr.rel (%p205) target = $region20
        $region19: #{tpu_custom_call.1} parent=11 // pred_region
          _
        $region20: #{tpu_custom_call.1} parent=11 // pred_fallthru
          _
        // Predicated region
        $region21: #{tpu_custom_call.1} parent=11 // pred_check
          %p208 = pneg %p109
        $region22: #{tpu_custom_call.1} parent=11 // pred_check_branch
          %210 = sbr.rel (%p208) target = $region24
        $region23: #{tpu_custom_call.1} parent=11 // pred_region
          %s212 = ssub.s32 4096, 4096
          %213 = vsyncadd [#allocation6], %s212
          %s214 = sshll.u32 [#allocation7], 4
          %s215 = int_to_ptr.vmem [resolvable:$true] %s214
          %220 = dma.hbm_to_vmem [thread:$0]  %s3, 4096, %s215, [#allocation6], 128, 128, 8
        $region24: #{tpu_custom_call.1} parent=11 // pred_fallthru
          _
        // Predicated region
        $region25: #{tpu_custom_call.1} parent=11 // pred_check
          %p221 = pneg %p130
        $region26: #{tpu_custom_call.1} parent=11 // pred_check_branch
          %223 = sbr.rel (%p221) target = $region28
        $region27: #{tpu_custom_call.1} parent=11 // pred_region
          %s225 = ssub.s32 2048, 2048
          %226 = vsyncadd [#allocation9], %s225
          %s227 = sshll.u32 [#allocation8], 4
          %s228 = int_to_ptr.vmem [resolvable:$true] %s227
          %233 = dma.hbm_to_vmem [thread:$0]  %s4, 2048, %s228, [#allocation9], 128, 128, 8
        $region28: #{tpu_custom_call.1} parent=11 // pred_fallthru
          _
        // Predicated region
        $region29: #{tpu_custom_call.1} parent=11 // pred_check
          %p234 = pneg %p151
        $region30: #{tpu_custom_call.1} parent=11 // pred_check_branch
          %236 = sbr.rel (%p234) target = $region32
        $region31: #{tpu_custom_call.1} parent=11 // pred_region
          _
        $region32: #{tpu_custom_call.1} parent=11 // pred_fallthru
          _
      $region12: #{tpu_custom_call.1} parent=5 // pred_fallthru
        _
      %p237 = scmp.lt.s32.totalorder %s20, 2
      // Predicated region
      $region33: #{tpu_custom_call.1} parent=5 // pred_check
        %p238 = pneg %p237
      $region34: #{tpu_custom_call.1} parent=5 // pred_check_branch
        %240 = sbr.rel (%p238) target = $region36
      $region35: #{tpu_custom_call.1} parent=5 // pred_region
        // Predicated region
        $region37: #{tpu_custom_call.1} parent=35 // pred_check
          %p241 = pneg %p40
        $region38: #{tpu_custom_call.1} parent=35 // pred_check_branch
          %243 = sbr.rel (%p241) target = $region40
        $region39: #{tpu_custom_call.1} parent=35 // pred_region
          %s244 = sand.u32 %s30, 1
          %s245 = scalar_lea.sflag [#allocation3], %s244
          %s246 = sand.u32 %s30, 1
          %s247 = smul.addr %s246, 256
          %s248 = scalar_lea.vmem [#allocation2], %s247
          %s249 = smul.u32 4, %s20
          %s251 = ssub.s32 4096, 4096
          %252 = vsyncadd %s245, %s251
          %s253 = smul.addr %s249, 8
          %s254 = smul.addr %s253, 128
          %s255 = scalar_lea.hbm %s0, %s254
          %s256 = sshll.u32 %s248, 4
          %s257 = int_to_ptr.vmem [resolvable:$true] %s256
          %262 = dma.hbm_to_vmem [thread:$0]  %s255, 4096, %s257, %s245, 128, 128, 8
        $region40: #{tpu_custom_call.1} parent=35 // pred_fallthru
          _
      $region36: #{tpu_custom_call.1} parent=5 // pred_fallthru
        _
      %p263 = scmp.le.s32.totalorder 1, %s20
      %p264 = scmp.lt.s32.totalorder %s20, 3
      %p265 = pnand %p263, %p264
      %p266 = pneg %p265
      // Predicated region
      $region41: #{tpu_custom_call.1} parent=5 // pred_check
        _
      $region42: #{tpu_custom_call.1} parent=5 // pred_check_branch
        %268 = sbr.rel (%p265) target = $region44
      $region43: #{tpu_custom_call.1} parent=5 // pred_region
        %s269 = ssub.s32 %s20, 1
        %s270 = sand.u32 %s33, 1
        %s271 = scalar_lea.sflag [#allocation3], %s270
        %s272 = sand.u32 %s33, 1
        %s273 = smul.addr %s272, 256
        %s274 = scalar_lea.vmem [#allocation2], %s273
        // Predicated region
        $region45: #{tpu_custom_call.1} parent=43 // pred_check
          %p275 = pneg %p46
        $region46: #{tpu_custom_call.1} parent=43 // pred_check_branch
          %277 = sbr.rel (%p275) target = $region48
        $region47: #{tpu_custom_call.1} parent=43 // pred_region
          %278 = dma.done %s271, 4096
        $region48: #{tpu_custom_call.1} parent=43 // pred_fallthru
          _
        // Predicated region
        $region49: #{tpu_custom_call.1} parent=43 // pred_check
          %p279 = pneg %p67
        $region50: #{tpu_custom_call.1} parent=43 // pred_check_branch
          %281 = sbr.rel (%p279) target = $region52
        $region51: #{tpu_custom_call.1} parent=43 // pred_region
          %282 = dma.done [#allocation6], 6144
        $region52: #{tpu_custom_call.1} parent=43 // pred_fallthru
          _
        // Predicated region
        $region53: #{tpu_custom_call.1} parent=43 // pred_check
          %p283 = pneg %p109
        $region54: #{tpu_custom_call.1} parent=43 // pred_check_branch
          %285 = sbr.rel (%p283) target = $region56
        $region55: #{tpu_custom_call.1} parent=43 // pred_region
          %286 = dma.done [#allocation6], 4096
        $region56: #{tpu_custom_call.1} parent=43 // pred_fallthru
          _
        // Predicated region
        $region57: #{tpu_custom_call.1} parent=43 // pred_check
          %p287 = pneg %p130
        $region58: #{tpu_custom_call.1} parent=43 // pred_check_branch
          %289 = sbr.rel (%p287) target = $region60
        $region59: #{tpu_custom_call.1} parent=43 // pred_region
          %290 = dma.done [#allocation9], 2048
        $region60: #{tpu_custom_call.1} parent=43 // pred_fallthru
          _
        %s291 = sand.u32 %s33, 1
        %s292 = scalar_lea.sflag [#allocation3], %s291
        %s293 = sand.u32 %s33, 1
        %s294 = smul.addr %s293, 256
        %s295 = scalar_lea.vmem [#allocation2], %s294
        %p296 = pneg %p46
        %p297 = pneg %p43
        %p298 = pneg %p67
        %p299 = pneg %p64
        %p300 = pneg %p88
        %p301 = pneg %p85
        %p302 = pneg %p109
        %p303 = pneg %p106
        %p304 = pneg %p130
        %p305 = pneg %p127
        %p306 = pneg %p151
        %p307 = pneg %p148
        %p308 = pneg %p177
        %p309 = pneg %p174
        %s310 = sand.u32 %s164, 1
        %s311 = scalar_lea.sflag [#allocation4], %s310
        %s312 = sand.u32 %s164, 1
        %s313 = smul.addr %s312, 256
        %s314 = scalar_lea.vmem [#allocation10], %s313
        %s315 = smul.u32 4, %s25
        %s316 = smul.u32 4, %s25
        %v317 = vld [vmem:[%s274] sm:$0xff]
        %v318 = vld [vmem:[%s274 + $0x8] sm:$0xff]
        %v319 = vld [vmem:[%s274 + $0x10] sm:$0xff]
        %v320 = vld [vmem:[%s274 + $0x18] sm:$0xff]
        %v321 = vld [vmem:[%s274 + $0x20] sm:$0xff]
        %v322 = vld [vmem:[%s274 + $0x28] sm:$0xff]
        %v323 = vld [vmem:[%s274 + $0x30] sm:$0xff]
        %v324 = vld [vmem:[%s274 + $0x38] sm:$0xff]
        %v325 = vld [vmem:[%s274 + $0x40] sm:$0xff]
        %v326 = vld [vmem:[%s274 + $0x48] sm:$0xff]
        %v327 = vld [vmem:[%s274 + $0x50] sm:$0xff]
        %v328 = vld [vmem:[%s274 + $0x58] sm:$0xff]
        %v329 = vld [vmem:[%s274 + $0x60] sm:$0xff]
        %v330 = vld [vmem:[%s274 + $0x68] sm:$0xff]
        %v331 = vld [vmem:[%s274 + $0x70] sm:$0xff]
        %v332 = vld [vmem:[%s274 + $0x78] sm:$0xff]
        %v333 = vld [vmem:[%s274 + $0x80] sm:$0xff]
        %v334 = vld [vmem:[%s274 + $0x88] sm:$0xff]
        %v335 = vld [vmem:[%s274 + $0x90] sm:$0xff]
        %v336 = vld [vmem:[%s274 + $0x98] sm:$0xff]
        %v337 = vld [vmem:[%s274 + $0xa0] sm:$0xff]
        %v338 = vld [vmem:[%s274 + $0xa8] sm:$0xff]
        %v339 = vld [vmem:[%s274 + $0xb0] sm:$0xff]
        %v340 = vld [vmem:[%s274 + $0xb8] sm:$0xff]
        %v341 = vld [vmem:[%s274 + $0xc0] sm:$0xff]
        %v342 = vld [vmem:[%s274 + $0xc8] sm:$0xff]
        %v343 = vld [vmem:[%s274 + $0xd0] sm:$0xff]
        %v344 = vld [vmem:[%s274 + $0xd8] sm:$0xff]
        %v345 = vld [vmem:[%s274 + $0xe0] sm:$0xff]
        %v346 = vld [vmem:[%s274 + $0xe8] sm:$0xff]
        %v347 = vld [vmem:[%s274 + $0xf0] sm:$0xff]
        %v348 = vld [vmem:[%s274 + $0xf8] sm:$0xff]
        %v349 = vld [vmem:[#allocation5] sm:$0xff]
        %v350 = vld [vmem:[#allocation5 + $0x8] sm:$0xff]
        %v351 = vld [vmem:[#allocation5 + $0x10] sm:$0xff]
        %v352 = vld [vmem:[#allocation5 + $0x18] sm:$0xff]
        %v353 = vld [vmem:[#allocation5 + $0x20] sm:$0xff]
        %v354 = vld [vmem:[#allocation5 + $0x28] sm:$0xff]
        %v355 = vld [vmem:[#allocation5 + $0x30] sm:$0xff]
        %v356 = vld [vmem:[#allocation5 + $0x38] sm:$0xff]
        %v357 = vld [vmem:[#allocation5 + $0x40] sm:$0xff]
        %v358 = vld [vmem:[#allocation5 + $0x48] sm:$0xff]
        %v359 = vld [vmem:[#allocation5 + $0x50] sm:$0xff]
        %v360 = vld [vmem:[#allocation5 + $0x58] sm:$0xff]
        %v361 = vld [vmem:[#allocation5 + $0x60] sm:$0xff]
        %v362 = vld [vmem:[#allocation5 + $0x68] sm:$0xff]
        %v363 = vld [vmem:[#allocation5 + $0x70] sm:$0xff]
        %v364 = vld [vmem:[#allocation5 + $0x78] sm:$0xff]
        %v365 = vld [vmem:[#allocation5 + $0x80] sm:$0xff]
        %v366 = vld [vmem:[#allocation5 + $0x88] sm:$0xff]
        %v367 = vld [vmem:[#allocation5 + $0x90] sm:$0xff]
        %v368 = vld [vmem:[#allocation5 + $0x98] sm:$0xff]
        %v369 = vld [vmem:[#allocation5 + $0xa0] sm:$0xff]
        %v370 = vld [vmem:[#allocation5 + $0xa8] sm:$0xff]
        %v371 = vld [vmem:[#allocation5 + $0xb0] sm:$0xff]
        %v372 = vld [vmem:[#allocation5 + $0xb8] sm:$0xff]
        %v373 = vld [vmem:[#allocation5 + $0xc0] sm:$0xff]
        %v374 = vld [vmem:[#allocation5 + $0xc8] sm:$0xff]
        %v375 = vld [vmem:[#allocation5 + $0xd0] sm:$0xff]
        %v376 = vld [vmem:[#allocation5 + $0xd8] sm:$0xff]
        %v377 = vld [vmem:[#allocation5 + $0xe0] sm:$0xff]
        %v378 = vld [vmem:[#allocation5 + $0xe8] sm:$0xff]
        %v379 = vld [vmem:[#allocation5 + $0xf0] sm:$0xff]
        %v380 = vld [vmem:[#allocation5 + $0xf8] sm:$0xff]
        %v381 = vld [vmem:[#allocation5 + $0x100] sm:$0xff]
        %v382 = vld [vmem:[#allocation5 + $0x108] sm:$0xff]
        %v383 = vld [vmem:[#allocation5 + $0x110] sm:$0xff]
        %v384 = vld [vmem:[#allocation5 + $0x118] sm:$0xff]
        %v385 = vld [vmem:[#allocation5 + $0x120] sm:$0xff]
        %v386 = vld [vmem:[#allocation5 + $0x128] sm:$0xff]
        %v387 = vld [vmem:[#allocation5 + $0x130] sm:$0xff]
        %v388 = vld [vmem:[#allocation5 + $0x138] sm:$0xff]
        %v389 = vld [vmem:[#allocation5 + $0x140] sm:$0xff]
        %v390 = vld [vmem:[#allocation5 + $0x148] sm:$0xff]
        %v391 = vld [vmem:[#allocation5 + $0x150] sm:$0xff]
        %v392 = vld [vmem:[#allocation5 + $0x158] sm:$0xff]
        %v393 = vld [vmem:[#allocation5 + $0x160] sm:$0xff]
        %v394 = vld [vmem:[#allocation5 + $0x168] sm:$0xff]
        %v395 = vld [vmem:[#allocation5 + $0x170] sm:$0xff]
        %v396 = vld [vmem:[#allocation5 + $0x178] sm:$0xff]
        %v397 = vld [vmem:[%s2] sm:$0x7]
        %v399 = vlaneseq
        %v400 = vshrl.u32 %v399, 7
        %v401 = vsub.s32 0, %v400
        %v402 = vrot.slane %v397, %v401
        %v403 = vlaneseq
        %v404 = vshrl.u32 %v403, 7
        %v405 = vsub.s32 1, %v404
        %v406 = vrot.slane %v397, %v405
        %v407 = vlaneseq
        %v408 = vshrl.u32 %v407, 7
        %v409 = vsub.s32 2, %v408
        %v410 = vrot.slane %v397, %v409
        %414 = vmatprep.subr.mxu0 %v350
        %415 = vmatpush1.msra.mxu0 %v349
        %416 = vmatprep.subr.mxu0 %v353
        %417 = vmatpush1.msra.mxu0 %v352
        %418 = vmatprep.subr.mxu0 %v356
        %419 = vmatpush1.msra.mxu0 %v355
        %420 = vmatprep.subr.mxu0 %v359
        %421 = vmatpush1.msra.mxu0 %v358
        %422 = vmatprep.subr.mxu0 %v362
        %423 = vmatpush1.msra.mxu0 %v361
        %424 = vmatprep.subr.mxu0 %v365
        %425 = vmatpush1.msra.mxu0 %v364
        %426 = vmatprep.subr.mxu0 %v368
        %427 = vmatpush1.msra.mxu0 %v367
        %428 = vmatprep.subr.mxu0 %v371
        %429 = vmatpush1.msra.mxu0 %v370
        %430 = vmatprep.subr.mxu0 %v374
        %431 = vmatpush1.msra.mxu0 %v373
        %432 = vmatprep.subr.mxu0 %v377
        %433 = vmatpush1.msra.mxu0 %v376
        %434 = vmatprep.subr.mxu0 %v380
        %435 = vmatpush1.msra.mxu0 %v379
        %436 = vmatprep.subr.mxu0 %v383
        %437 = vmatpush1.msra.mxu0 %v382
        %438 = vmatprep.subr.mxu0 %v386
        %439 = vmatpush1.msra.mxu0 %v385
        %440 = vmatprep.subr.mxu0 %v389
        %441 = vmatpush1.msra.mxu0 %v388
        %442 = vmatprep.subr.mxu0 %v392
        %443 = vmatpush1.msra.mxu0 %v391
        %444 = vmatprep.subr.mxu0 %v395
        %445 = vmatpush1.msra.mxu0 %v394
        %446 = vmatprep.subr.mxu0 0.0
        %447 = vmatpush1.msra.mxu0 0.0
        %448 = vmatprep.subr.mxu0 0.0
        %449 = vmatpush1.msra.mxu0 0.0
        %450 = vmatprep.subr.mxu0 0.0
        %451 = vmatpush1.msra.mxu0 0.0
        %452 = vmatprep.subr.mxu0 0.0
        %453 = vmatpush1.msra.mxu0 0.0
        %454 = vmatprep.subr.mxu0 0.0
        %455 = vmatpush1.msra.mxu0 0.0
        %456 = vmatprep.subr.mxu0 0.0
        %457 = vmatpush1.msra.mxu0 0.0
        %458 = vmatprep.subr.mxu0 0.0
        %459 = vmatpush1.msra.mxu0 0.0
        %460 = vmatprep.subr.mxu0 0.0
        %461 = vmatpush1.msra.mxu0 0.0
        %462 = vmatprep.subr.mxu0 0.0
        %463 = vmatpush1.msra.mxu0 0.0
        %464 = vmatprep.subr.mxu0 0.0
        %465 = vmatpush1.msra.mxu0 0.0
        %466 = vmatprep.subr.mxu0 0.0
        %467 = vmatpush1.msra.mxu0 0.0
        %468 = vmatprep.subr.mxu0 0.0
        %469 = vmatpush1.msra.mxu0 0.0
        %470 = vmatprep.subr.mxu0 0.0
        %471 = vmatpush1.msra.mxu0 0.0
        %472 = vmatprep.subr.mxu0 0.0
        %473 = vmatpush1.msra.mxu0 0.0
        %474 = vmatprep.subr.mxu0 0.0
        %475 = vmatpush1.msra.mxu0 0.0
        %476 = vmatprep.subr.mxu0 0.0
        %477 = vmatpush1.msra.mxu0 0.0
        %478 = vmatprep.mubr.f32.mxu0 0.0
        %479 = vmatmul.mubr.f32.gmra.mrb[0].mxu0 %v317
        %v480 = vpop.f32.mrb[0].mxu0
        %v481 = vadd.f32 %v402, %v480
        %v482 = vpop.f32.mrb[0].mxu0
        %v483 = vadd.f32 %v406, %v482
        %484 = vmatprep.mubr.f32.mxu0 0.0
        %485 = vmatmul.mubr.f32.gmra.mrb[0].mxu0 %v318
        %v486 = vpop.f32.mrb[0].mxu0
        %v487 = vadd.f32 %v402, %v486
        %v488 = vpop.f32.mrb[0].mxu0
        %v489 = vadd.f32 %v406, %v488
        %490 = vmatprep.mubr.f32.mxu0 0.0
        %491 = vmatmul.mubr.f32.gmra.mrb[0].mxu0 %v319
        %v492 = vpop.f32.mrb[0].mxu0
        %v493 = vadd.f32 %v402, %v492
        %v494 = vpop.f32.mrb[0].mxu0
        %v495 = vadd.f32 %v406, %v494
        %496 = vmatprep.mubr.f32.mxu0 0.0
        %497 = vmatmul.mubr.f32.gmra.mrb[0].mxu0 %v320
        %v498 = vpop.f32.mrb[0].mxu0
        %v499 = vadd.f32 %v402, %v498
        %v500 = vpop.f32.mrb[0].mxu0
        %v501 = vadd.f32 %v406, %v500
        %502 = vmatprep.mubr.f32.mxu0 0.0
        %503 = vmatmul.mubr.f32.gmra.mrb[0].mxu0 %v321
        %v504 = vpop.f32.mrb[0].mxu0
        %v505 = vadd.f32 %v402, %v504
        %v506 = vpop.f32.mrb[0].mxu0
        %v507 = vadd.f32 %v406, %v506
        %508 = vmatprep.mubr.f32.mxu0 0.0
        %509 = vmatmul.mubr.f32.gmra.mrb[0].mxu0 %v322
        %v510 = vpop.f32.mrb[0].mxu0
        %v511 = vadd.f32 %v402, %v510
        %v512 = vpop.f32.mrb[0].mxu0
        %v513 = vadd.f32 %v406, %v512
        %514 = vmatprep.mubr.f32.mxu0 0.0
        %515 = vmatmul.mubr.f32.gmra.mrb[0].mxu0 %v323
        %v516 = vpop.f32.mrb[0].mxu0
        %v517 = vadd.f32 %v402, %v516
        %v518 = vpop.f32.mrb[0].mxu0
        %v519 = vadd.f32 %v406, %v518
        %520 = vmatprep.mubr.f32.mxu0 0.0
        %521 = vmatmul.mubr.f32.gmra.mrb[0].mxu0 %v324
        %v522 = vpop.f32.mrb[0].mxu0
        %v523 = vadd.f32 %v402, %v522
        %v524 = vpop.f32.mrb[0].mxu0
        %v525 = vadd.f32 %v406, %v524
        %526 = vmatprep.mubr.f32.mxu0 0.0
        %527 = vmatmul.mubr.f32.gmra.mrb[0].mxu0 %v325
        %v528 = vpop.f32.mrb[0].mxu0
        %v529 = vadd.f32 %v402, %v528
        %v530 = vpop.f32.mrb[0].mxu0
        %v531 = vadd.f32 %v406, %v530
        %532 = vmatprep.mubr.f32.mxu0 0.0
        %533 = vmatmul.mubr.f32.gmra.mrb[0].mxu0 %v326
        %v534 = vpop.f32.mrb[0].mxu0
        %v535 = vadd.f32 %v402, %v534
        %v536 = vpop.f32.mrb[0].mxu0
        %v537 = vadd.f32 %v406, %v536
        %538 = vmatprep.mubr.f32.mxu0 0.0
        %539 = vmatmul.mubr.f32.gmra.mrb[0].mxu0 %v327
        %v540 = vpop.f32.mrb[0].mxu0
        %v541 = vadd.f32 %v402, %v540
        %v542 = vpop.f32.mrb[0].mxu0
        %v543 = vadd.f32 %v406, %v542
        %544 = vmatprep.mubr.f32.mxu0 0.0
        %545 = vmatmul.mubr.f32.gmra.mrb[0].mxu0 %v328
        %v546 = vpop.f32.mrb[0].mxu0
        %v547 = vadd.f32 %v402, %v546
        %v548 = vpop.f32.mrb[0].mxu0
        %v549 = vadd.f32 %v406, %v548
        %550 = vmatprep.mubr.f32.mxu0 0.0
        %551 = vmatmul.mubr.f32.gmra.mrb[0].mxu0 %v329
        %v552 = vpop.f32.mrb[0].mxu0
        %v553 = vadd.f32 %v402, %v552
        %v554 = vpop.f32.mrb[0].mxu0
        %v555 = vadd.f32 %v406, %v554
        %556 = vmatprep.mubr.f32.mxu0 0.0
        %557 = vmatmul.mubr.f32.gmra.mrb[0].mxu0 %v330
        %v558 = vpop.f32.mrb[0].mxu0
        %v559 = vadd.f32 %v402, %v558
        %v560 = vpop.f32.mrb[0].mxu0
        %v561 = vadd.f32 %v406, %v560
        %562 = vmatprep.mubr.f32.mxu0 0.0
        %563 = vmatmul.mubr.f32.gmra.mrb[0].mxu0 %v331
        %v564 = vpop.f32.mrb[0].mxu0
        %v565 = vadd.f32 %v402, %v564
        %v566 = vpop.f32.mrb[0].mxu0
        %v567 = vadd.f32 %v406, %v566
        %568 = vmatprep.mubr.f32.mxu0 0.0
        %569 = vmatmul.mubr.f32.gmra.mrb[0].mxu0 %v332
        %v570 = vpop.f32.mrb[0].mxu0
        %v571 = vadd.f32 %v402, %v570
        %v572 = vpop.f32.mrb[0].mxu0
        %v573 = vadd.f32 %v406, %v572
        %574 = vmatprep.mubr.f32.mxu0 0.0
        %575 = vmatmul.mubr.f32.gmra.mrb[0].mxu0 %v333
        %v576 = vpop.f32.mrb[0].mxu0
        %v577 = vadd.f32 %v402, %v576
        %v578 = vpop.f32.mrb[0].mxu0
        %v579 = vadd.f32 %v406, %v578
        %580 = vmatprep.mubr.f32.mxu0 0.0
        %581 = vmatmul.mubr.f32.gmra.mrb[0].mxu0 %v334
        %v582 = vpop.f32.mrb[0].mxu0
        %v583 = vadd.f32 %v402, %v582
        %v584 = vpop.f32.mrb[0].mxu0
        %v585 = vadd.f32 %v406, %v584
        %586 = vmatprep.mubr.f32.mxu0 0.0
        %587 = vmatmul.mubr.f32.gmra.mrb[0].mxu0 %v335
        %v588 = vpop.f32.mrb[0].mxu0
        %v589 = vadd.f32 %v402, %v588
        %v590 = vpop.f32.mrb[0].mxu0
        %v591 = vadd.f32 %v406, %v590
        %592 = vmatprep.mubr.f32.mxu0 0.0
        %593 = vmatmul.mubr.f32.gmra.mrb[0].mxu0 %v336
        %v594 = vpop.f32.mrb[0].mxu0
        %v595 = vadd.f32 %v402, %v594
        %v596 = vpop.f32.mrb[0].mxu0
        %v597 = vadd.f32 %v406, %v596
        %598 = vmatprep.mubr.f32.mxu0 0.0
        %599 = vmatmul.mubr.f32.gmra.mrb[0].mxu0 %v337
        %v600 = vpop.f32.mrb[0].mxu0
        %v601 = vadd.f32 %v402, %v600
        %v602 = vpop.f32.mrb[0].mxu0
        %v603 = vadd.f32 %v406, %v602
        %604 = vmatprep.mubr.f32.mxu0 0.0
        %605 = vmatmul.mubr.f32.gmra.mrb[0].mxu0 %v338
        %v606 = vpop.f32.mrb[0].mxu0
        %v607 = vadd.f32 %v402, %v606
        %v608 = vpop.f32.mrb[0].mxu0
        %v609 = vadd.f32 %v406, %v608
        %610 = vmatprep.mubr.f32.mxu0 0.0
        %611 = vmatmul.mubr.f32.gmra.mrb[0].mxu0 %v339
        %v612 = vpop.f32.mrb[0].mxu0
        %v613 = vadd.f32 %v402, %v612
        %v614 = vpop.f32.mrb[0].mxu0
        %v615 = vadd.f32 %v406, %v614
        %616 = vmatprep.mubr.f32.mxu0 0.0
        %617 = vmatmul.mubr.f32.gmra.mrb[0].mxu0 %v340
        %v618 = vpop.f32.mrb[0].mxu0
        %v619 = vadd.f32 %v402, %v618
        %v620 = vpop.f32.mrb[0].mxu0
        %v621 = vadd.f32 %v406, %v620
        %622 = vmatprep.mubr.f32.mxu0 0.0
        %623 = vmatmul.mubr.f32.gmra.mrb[0].mxu0 %v341
        %v624 = vpop.f32.mrb[0].mxu0
        %v625 = vadd.f32 %v402, %v624
        %v626 = vpop.f32.mrb[0].mxu0
        %v627 = vadd.f32 %v406, %v626
        %628 = vmatprep.mubr.f32.mxu0 0.0
        %629 = vmatmul.mubr.f32.gmra.mrb[0].mxu0 %v342
        %v630 = vpop.f32.mrb[0].mxu0
        %v631 = vadd.f32 %v402, %v630
        %v632 = vpop.f32.mrb[0].mxu0
        %v633 = vadd.f32 %v406, %v632
        %634 = vmatprep.mubr.f32.mxu0 0.0
        %635 = vmatmul.mubr.f32.gmra.mrb[0].mxu0 %v343
        %v636 = vpop.f32.mrb[0].mxu0
        %v637 = vadd.f32 %v402, %v636
        %v638 = vpop.f32.mrb[0].mxu0
        %v639 = vadd.f32 %v406, %v638
        %640 = vmatprep.mubr.f32.mxu0 0.0
        %641 = vmatmul.mubr.f32.gmra.mrb[0].mxu0 %v344
        %v642 = vpop.f32.mrb[0].mxu0
        %v643 = vadd.f32 %v402, %v642
        %v644 = vpop.f32.mrb[0].mxu0
        %v645 = vadd.f32 %v406, %v644
        %646 = vmatprep.mubr.f32.mxu0 0.0
        %647 = vmatmul.mubr.f32.gmra.mrb[0].mxu0 %v345
        %v648 = vpop.f32.mrb[0].mxu0
        %v649 = vadd.f32 %v402, %v648
        %v650 = vpop.f32.mrb[0].mxu0
        %v651 = vadd.f32 %v406, %v650
        %652 = vmatprep.mubr.f32.mxu0 0.0
        %653 = vmatmul.mubr.f32.gmra.mrb[0].mxu0 %v346
        %v654 = vpop.f32.mrb[0].mxu0
        %v655 = vadd.f32 %v402, %v654
        %v656 = vpop.f32.mrb[0].mxu0
        %v657 = vadd.f32 %v406, %v656
        %658 = vmatprep.mubr.f32.mxu0 0.0
        %659 = vmatmul.mubr.f32.gmra.mrb[0].mxu0 %v347
        %v660 = vpop.f32.mrb[0].mxu0
        %v661 = vadd.f32 %v402, %v660
        %v662 = vpop.f32.mrb[0].mxu0
        %v663 = vadd.f32 %v406, %v662
        %664 = vmatprep.mubr.f32.mxu0 0.0
        %665 = vmatmul.mubr.f32.gmra.mrb[0].mxu0 %v348
        %v666 = vpop.f32.mrb[0].mxu0
        %v667 = vadd.f32 %v402, %v666
        %v668 = vpop.f32.mrb[0].mxu0
        %v669 = vadd.f32 %v406, %v668
        %670 = vdwg.mxu0
        %671 = vmatprep.subr.mxu0 0.0
        %672 = vmatpush1.msra.mxu0 %v351
        %673 = vmatprep.subr.mxu0 0.0
        %674 = vmatpush1.msra.mxu0 %v354
        %675 = vmatprep.subr.mxu0 0.0
        %676 = vmatpush1.msra.mxu0 %v357
        %677 = vmatprep.subr.mxu0 0.0
        %678 = vmatpush1.msra.mxu0 %v360
        %679 = vmatprep.subr.mxu0 0.0
        %680 = vmatpush1.msra.mxu0 %v363
        %681 = vmatprep.subr.mxu0 0.0
        %682 = vmatpush1.msra.mxu0 %v366
        %683 = vmatprep.subr.mxu0 0.0
        %684 = vmatpush1.msra.mxu0 %v369
        %685 = vmatprep.subr.mxu0 0.0
        %686 = vmatpush1.msra.mxu0 %v372
        %687 = vmatprep.subr.mxu0 0.0
        %688 = vmatpush1.msra.mxu0 %v375
        %689 = vmatprep.subr.mxu0 0.0
        %690 = vmatpush1.msra.mxu0 %v378
        %691 = vmatprep.subr.mxu0 0.0
        %692 = vmatpush1.msra.mxu0 %v381
        %693 = vmatprep.subr.mxu0 0.0
        %694 = vmatpush1.msra.mxu0 %v384
        %695 = vmatprep.subr.mxu0 0.0
        %696 = vmatpush1.msra.mxu0 %v387
        %697 = vmatprep.subr.mxu0 0.0
        %698 = vmatpush1.msra.mxu0 %v390
        %699 = vmatprep.subr.mxu0 0.0
        %700 = vmatpush1.msra.mxu0 %v393
        %701 = vmatprep.subr.mxu0 0.0
        %702 = vmatpush1.msra.mxu0 %v396
        %703 = vmatprep.subr.mxu0 0.0
        %704 = vmatpush1.msra.mxu0 0.0
        %705 = vmatprep.subr.mxu0 0.0
        %706 = vmatpush1.msra.mxu0 0.0
        %707 = vmatprep.subr.mxu0 0.0
        %708 = vmatpush1.msra.mxu0 0.0
        %709 = vmatprep.subr.mxu0 0.0
        %710 = vmatpush1.msra.mxu0 0.0
        %711 = vmatprep.subr.mxu0 0.0
        %712 = vmatpush1.msra.mxu0 0.0
        %713 = vmatprep.subr.mxu0 0.0
        %714 = vmatpush1.msra.mxu0 0.0
        %715 = vmatprep.subr.mxu0 0.0
        %716 = vmatpush1.msra.mxu0 0.0
        %717 = vmatprep.subr.mxu0 0.0
        %718 = vmatpush1.msra.mxu0 0.0
        %719 = vmatprep.subr.mxu0 0.0
        %720 = vmatpush1.msra.mxu0 0.0
        %721 = vmatprep.subr.mxu0 0.0
        %722 = vmatpush1.msra.mxu0 0.0
        %723 = vmatprep.subr.mxu0 0.0
        %724 = vmatpush1.msra.mxu0 0.0
        %725 = vmatprep.subr.mxu0 0.0
        %726 = vmatpush1.msra.mxu0 0.0
        %727 = vmatprep.subr.mxu0 0.0
        %728 = vmatpush1.msra.mxu0 0.0
        %729 = vmatprep.subr.mxu0 0.0
        %730 = vmatpush1.msra.mxu0 0.0
        %731 = vmatprep.subr.mxu0 0.0
        %732 = vmatpush1.msra.mxu0 0.0
        %733 = vmatprep.subr.mxu0 0.0
        %734 = vmatpush1.msra.mxu0 0.0
        %735 = vmatprep.mubr.f32.mxu0 0.0
        %736 = vmatmul.mubr.f32.gmra.mrb[0].mxu0 %v317
        %v737 = vpop.f32.mrb[0].mxu0
        %v738 = vadd.f32 %v410, %v737
        %v739 = vpop.f32.mrb[0].mxu0
        %740 = vmatprep.mubr.f32.mxu0 0.0
        %741 = vmatmul.mubr.f32.gmra.mrb[0].mxu0 %v318
        %v742 = vpop.f32.mrb[0].mxu0
        %v743 = vadd.f32 %v410, %v742
        %v744 = vpop.f32.mrb[0].mxu0
        %745 = vmatprep.mubr.f32.mxu0 0.0
        %746 = vmatmul.mubr.f32.gmra.mrb[0].mxu0 %v319
        %v747 = vpop.f32.mrb[0].mxu0
        %v748 = vadd.f32 %v410, %v747
        %v749 = vpop.f32.mrb[0].mxu0
        %750 = vmatprep.mubr.f32.mxu0 0.0
        %751 = vmatmul.mubr.f32.gmra.mrb[0].mxu0 %v320
        %v752 = vpop.f32.mrb[0].mxu0
        %v753 = vadd.f32 %v410, %v752
        %v754 = vpop.f32.mrb[0].mxu0
        %755 = vmatprep.mubr.f32.mxu0 0.0
        %756 = vmatmul.mubr.f32.gmra.mrb[0].mxu0 %v321
        %v757 = vpop.f32.mrb[0].mxu0
        %v758 = vadd.f32 %v410, %v757
        %v759 = vpop.f32.mrb[0].mxu0
        %760 = vmatprep.mubr.f32.mxu0 0.0
        %761 = vmatmul.mubr.f32.gmra.mrb[0].mxu0 %v322
        %v762 = vpop.f32.mrb[0].mxu0
        %v763 = vadd.f32 %v410, %v762
        %v764 = vpop.f32.mrb[0].mxu0
        %765 = vmatprep.mubr.f32.mxu0 0.0
        %766 = vmatmul.mubr.f32.gmra.mrb[0].mxu0 %v323
        %v767 = vpop.f32.mrb[0].mxu0
        %v768 = vadd.f32 %v410, %v767
        %v769 = vpop.f32.mrb[0].mxu0
        %770 = vmatprep.mubr.f32.mxu0 0.0
        %771 = vmatmul.mubr.f32.gmra.mrb[0].mxu0 %v324
        %v772 = vpop.f32.mrb[0].mxu0
        %v773 = vadd.f32 %v410, %v772
        %v774 = vpop.f32.mrb[0].mxu0
        %775 = vmatprep.mubr.f32.mxu0 0.0
        %776 = vmatmul.mubr.f32.gmra.mrb[0].mxu0 %v325
        %v777 = vpop.f32.mrb[0].mxu0
        %v778 = vadd.f32 %v410, %v777
        %v779 = vpop.f32.mrb[0].mxu0
        %780 = vmatprep.mubr.f32.mxu0 0.0
        %781 = vmatmul.mubr.f32.gmra.mrb[0].mxu0 %v326
        %v782 = vpop.f32.mrb[0].mxu0
        %v783 = vadd.f32 %v410, %v782
        %v784 = vpop.f32.mrb[0].mxu0
        %785 = vmatprep.mubr.f32.mxu0 0.0
        %786 = vmatmul.mubr.f32.gmra.mrb[0].mxu0 %v327
        %v787 = vpop.f32.mrb[0].mxu0
        %v788 = vadd.f32 %v410, %v787
        %v789 = vpop.f32.mrb[0].mxu0
        %790 = vmatprep.mubr.f32.mxu0 0.0
        %791 = vmatmul.mubr.f32.gmra.mrb[0].mxu0 %v328
        %v792 = vpop.f32.mrb[0].mxu0
        %v793 = vadd.f32 %v410, %v792
        %v794 = vpop.f32.mrb[0].mxu0
        %795 = vmatprep.mubr.f32.mxu0 0.0
        %796 = vmatmul.mubr.f32.gmra.mrb[0].mxu0 %v329
        %v797 = vpop.f32.mrb[0].mxu0
        %v798 = vadd.f32 %v410, %v797
        %v799 = vpop.f32.mrb[0].mxu0
        %800 = vmatprep.mubr.f32.mxu0 0.0
        %801 = vmatmul.mubr.f32.gmra.mrb[0].mxu0 %v330
        %v802 = vpop.f32.mrb[0].mxu0
        %v803 = vadd.f32 %v410, %v802
        %v804 = vpop.f32.mrb[0].mxu0
        %805 = vmatprep.mubr.f32.mxu0 0.0
        %806 = vmatmul.mubr.f32.gmra.mrb[0].mxu0 %v331
        %v807 = vpop.f32.mrb[0].mxu0
        %v808 = vadd.f32 %v410, %v807
        %v809 = vpop.f32.mrb[0].mxu0
        %810 = vmatprep.mubr.f32.mxu0 0.0
        %811 = vmatmul.mubr.f32.gmra.mrb[0].mxu0 %v332
        %v812 = vpop.f32.mrb[0].mxu0
        %v813 = vadd.f32 %v410, %v812
        %v814 = vpop.f32.mrb[0].mxu0
        %815 = vmatprep.mubr.f32.mxu0 0.0
        %816 = vmatmul.mubr.f32.gmra.mrb[0].mxu0 %v333
        %v817 = vpop.f32.mrb[0].mxu0
        %v818 = vadd.f32 %v410, %v817
        %v819 = vpop.f32.mrb[0].mxu0
        %820 = vmatprep.mubr.f32.mxu0 0.0
        %821 = vmatmul.mubr.f32.gmra.mrb[0].mxu0 %v334
        %v822 = vpop.f32.mrb[0].mxu0
        %v823 = vadd.f32 %v410, %v822
        %v824 = vpop.f32.mrb[0].mxu0
        %825 = vmatprep.mubr.f32.mxu0 0.0
        %826 = vmatmul.mubr.f32.gmra.mrb[0].mxu0 %v335
        %v827 = vpop.f32.mrb[0].mxu0
        %v828 = vadd.f32 %v410, %v827
        %v829 = vpop.f32.mrb[0].mxu0
        %830 = vmatprep.mubr.f32.mxu0 0.0
        %831 = vmatmul.mubr.f32.gmra.mrb[0].mxu0 %v336
        %v832 = vpop.f32.mrb[0].mxu0
        %v833 = vadd.f32 %v410, %v832
        %v834 = vpop.f32.mrb[0].mxu0
        %835 = vmatprep.mubr.f32.mxu0 0.0
        %836 = vmatmul.mubr.f32.gmra.mrb[0].mxu0 %v337
        %v837 = vpop.f32.mrb[0].mxu0
        %v838 = vadd.f32 %v410, %v837
        %v839 = vpop.f32.mrb[0].mxu0
        %840 = vmatprep.mubr.f32.mxu0 0.0
        %841 = vmatmul.mubr.f32.gmra.mrb[0].mxu0 %v338
        %v842 = vpop.f32.mrb[0].mxu0
        %v843 = vadd.f32 %v410, %v842
        %v844 = vpop.f32.mrb[0].mxu0
        %845 = vmatprep.mubr.f32.mxu0 0.0
        %846 = vmatmul.mubr.f32.gmra.mrb[0].mxu0 %v339
        %v847 = vpop.f32.mrb[0].mxu0
        %v848 = vadd.f32 %v410, %v847
        %v849 = vpop.f32.mrb[0].mxu0
        %850 = vmatprep.mubr.f32.mxu0 0.0
        %851 = vmatmul.mubr.f32.gmra.mrb[0].mxu0 %v340
        %v852 = vpop.f32.mrb[0].mxu0
        %v853 = vadd.f32 %v410, %v852
        %v854 = vpop.f32.mrb[0].mxu0
        %855 = vmatprep.mubr.f32.mxu0 0.0
        %856 = vmatmul.mubr.f32.gmra.mrb[0].mxu0 %v341
        %v857 = vpop.f32.mrb[0].mxu0
        %v858 = vadd.f32 %v410, %v857
        %v859 = vpop.f32.mrb[0].mxu0
        %860 = vmatprep.mubr.f32.mxu0 0.0
        %861 = vmatmul.mubr.f32.gmra.mrb[0].mxu0 %v342
        %v862 = vpop.f32.mrb[0].mxu0
        %v863 = vadd.f32 %v410, %v862
        %v864 = vpop.f32.mrb[0].mxu0
        %865 = vmatprep.mubr.f32.mxu0 0.0
        %866 = vmatmul.mubr.f32.gmra.mrb[0].mxu0 %v343
        %v867 = vpop.f32.mrb[0].mxu0
        %v868 = vadd.f32 %v410, %v867
        %v869 = vpop.f32.mrb[0].mxu0
        %870 = vmatprep.mubr.f32.mxu0 0.0
        %871 = vmatmul.mubr.f32.gmra.mrb[0].mxu0 %v344
        %v872 = vpop.f32.mrb[0].mxu0
        %v873 = vadd.f32 %v410, %v872
        %v874 = vpop.f32.mrb[0].mxu0
        %875 = vmatprep.mubr.f32.mxu0 0.0
        %876 = vmatmul.mubr.f32.gmra.mrb[0].mxu0 %v345
        %v877 = vpop.f32.mrb[0].mxu0
        %v878 = vadd.f32 %v410, %v877
        %v879 = vpop.f32.mrb[0].mxu0
        %880 = vmatprep.mubr.f32.mxu0 0.0
        %881 = vmatmul.mubr.f32.gmra.mrb[0].mxu0 %v346
        %v882 = vpop.f32.mrb[0].mxu0
        %v883 = vadd.f32 %v410, %v882
        %v884 = vpop.f32.mrb[0].mxu0
        %885 = vmatprep.mubr.f32.mxu0 0.0
        %886 = vmatmul.mubr.f32.gmra.mrb[0].mxu0 %v347
        %v887 = vpop.f32.mrb[0].mxu0
        %v888 = vadd.f32 %v410, %v887
        %v889 = vpop.f32.mrb[0].mxu0
        %890 = vmatprep.mubr.f32.mxu0 0.0
        %891 = vmatmul.mubr.f32.gmra.mrb[0].mxu0 %v348
        %v892 = vpop.f32.mrb[0].mxu0
        %v893 = vadd.f32 %v410, %v892
        %v894 = vpop.f32.mrb[0].mxu0
        %895 = vdwg.mxu0
        %v896 = vmul.f32 %v481, 0.17677669
        %v897 = vmul.f32 %v487, 0.17677669
        %v898 = vmul.f32 %v493, 0.17677669
        %v899 = vmul.f32 %v499, 0.17677669
        %v900 = vmul.f32 %v505, 0.17677669
        %v901 = vmul.f32 %v511, 0.17677669
        %v902 = vmul.f32 %v517, 0.17677669
        %v903 = vmul.f32 %v523, 0.17677669
        %v904 = vmul.f32 %v529, 0.17677669
        %v905 = vmul.f32 %v535, 0.17677669
        %v906 = vmul.f32 %v541, 0.17677669
        %v907 = vmul.f32 %v547, 0.17677669
        %v908 = vmul.f32 %v553, 0.17677669
        %v909 = vmul.f32 %v559, 0.17677669
        %v910 = vmul.f32 %v565, 0.17677669
        %v911 = vmul.f32 %v571, 0.17677669
        %v912 = vmul.f32 %v577, 0.17677669
        %v913 = vmul.f32 %v583, 0.17677669
        %v914 = vmul.f32 %v589, 0.17677669
        %v915 = vmul.f32 %v595, 0.17677669
        %v916 = vmul.f32 %v601, 0.17677669
        %v917 = vmul.f32 %v607, 0.17677669
        %v918 = vmul.f32 %v613, 0.17677669
        %v919 = vmul.f32 %v619, 0.17677669
        %v920 = vmul.f32 %v625, 0.17677669
        %v921 = vmul.f32 %v631, 0.17677669
        %v922 = vmul.f32 %v637, 0.17677669
        %v923 = vmul.f32 %v643, 0.17677669
        %v924 = vmul.f32 %v649, 0.17677669
        %v925 = vmul.f32 %v655, 0.17677669
        %v926 = vmul.f32 %v661, 0.17677669
        %v927 = vmul.f32 %v667, 0.17677669
        %v928 = vld [vmem:[#allocation7] sm:$0xff]
        %v929 = vld [vmem:[#allocation7 + $0x8] sm:$0xff]
        %v930 = vld [vmem:[#allocation7 + $0x10] sm:$0xff]
        %v931 = vld [vmem:[#allocation7 + $0x18] sm:$0xff]
        %v932 = vld [vmem:[#allocation7 + $0x20] sm:$0xff]
        %v933 = vld [vmem:[#allocation7 + $0x28] sm:$0xff]
        %v934 = vld [vmem:[#allocation7 + $0x30] sm:$0xff]
        %v935 = vld [vmem:[#allocation7 + $0x38] sm:$0xff]
        %vm936 = vcmask 261120
        %v938 = vsel %vm936, %v896, 0
        %v941 = vsel %vm936, %v897, 0
        %v944 = vsel %vm936, %v898, 0
        %v947 = vsel %vm936, %v899, 0
        %v950 = vsel %vm936, %v900, 0
        %v953 = vsel %vm936, %v901, 0
        %v956 = vsel %vm936, %v902, 0
        %v959 = vsel %vm936, %v903, 0
        %v962 = vsel %vm936, %v483, 0
        %v965 = vsel %vm936, %v489, 0
        %v968 = vsel %vm936, %v495, 0
        %v971 = vsel %vm936, %v501, 0
        %v974 = vsel %vm936, %v507, 0
        %v977 = vsel %vm936, %v513, 0
        %v980 = vsel %vm936, %v519, 0
        %v983 = vsel %vm936, %v525, 0
        %985 = vmatprep.subr.mxu0 0.0
        %986 = vmatpush1.xpose.msra.mxu0 %v962
        %987 = vmatprep.subr.mxu0 0.0
        %988 = vmatpush1.xpose.msra.mxu0 %v965
        %989 = vmatprep.subr.mxu0 0.0
        %990 = vmatpush1.xpose.msra.mxu0 %v968
        %991 = vmatprep.subr.mxu0 0.0
        %992 = vmatpush1.xpose.msra.mxu0 %v971
        %993 = vmatprep.subr.mxu0 0.0
        %994 = vmatpush1.xpose.msra.mxu0 %v974
        %995 = vmatprep.subr.mxu0 0.0
        %996 = vmatpush1.xpose.msra.mxu0 %v977
        %997 = vmatprep.subr.mxu0 0.0
        %998 = vmatpush1.xpose.msra.mxu0 %v980
        %999 = vmatprep.subr.mxu0 0.0
        %1000 = vmatpush1.xpose.msra.mxu0 %v983
        %1001 = vmatprep.subr.mxu0 0.0
        %1002 = vmatpush1.xpose.msra.mxu0 0.0
        %1003 = vmatprep.subr.mxu0 0.0
        %1004 = vmatpush1.xpose.msra.mxu0 0.0
        %1005 = vmatprep.subr.mxu0 0.0
        %1006 = vmatpush1.xpose.msra.mxu0 0.0
        %1007 = vmatprep.subr.mxu0 0.0
        %1008 = vmatpush1.xpose.msra.mxu0 0.0
        %1009 = vmatprep.subr.mxu0 0.0
        %1010 = vmatpush1.xpose.msra.mxu0 0.0
        %1011 = vmatprep.subr.mxu0 0.0
        %1012 = vmatpush1.xpose.msra.mxu0 0.0
        %1013 = vmatprep.subr.mxu0 0.0
        %1014 = vmatpush1.xpose.msra.mxu0 0.0
        %1015 = vmatprep.subr.mxu0 0.0
        %1016 = vmatpush1.xpose.msra.mxu0 0.0
        %1017 = vmatprep.subr.mxu0 0.0
        %1018 = vmatpush1.xpose.msra.mxu0 0.0
        %1019 = vmatprep.subr.mxu0 0.0
        %1020 = vmatpush1.xpose.msra.mxu0 0.0
        %1021 = vmatprep.subr.mxu0 0.0
        %1022 = vmatpush1.xpose.msra.mxu0 0.0
        %1023 = vmatprep.subr.mxu0 0.0
        %1024 = vmatpush1.xpose.msra.mxu0 0.0
        %1025 = vmatprep.subr.mxu0 0.0
        %1026 = vmatpush1.xpose.msra.mxu0 0.0
        %1027 = vmatprep.subr.mxu0 0.0
        %1028 = vmatpush1.xpose.msra.mxu0 0.0
        %1029 = vmatprep.subr.mxu0 0.0
        %1030 = vmatpush1.xpose.msra.mxu0 0.0
        %1031 = vmatprep.subr.mxu0 0.0
        %1032 = vmatpush1.xpose.msra.mxu0 0.0
        %1033 = vmatprep.subr.mxu0 0.0
        %1034 = vmatpush1.xpose.msra.mxu0 0.0
        %1035 = vmatprep.subr.mxu0 0.0
        %1036 = vmatpush1.xpose.msra.mxu0 0.0
        %1037 = vmatprep.subr.mxu0 0.0
        %1038 = vmatpush1.xpose.msra.mxu0 0.0
        %1039 = vmatprep.subr.mxu0 0.0
        %1040 = vmatpush1.xpose.msra.mxu0 0.0
        %1041 = vmatprep.subr.mxu0 0.0
        %1042 = vmatpush1.xpose.msra.mxu0 0.0
        %1043 = vmatprep.subr.mxu0 0.0
        %1044 = vmatpush1.xpose.msra.mxu0 0.0
        %1045 = vmatprep.subr.mxu0 0.0
        %1046 = vmatpush1.xpose.msra.mxu0 0.0
        %1047 = vmatprep.subr.mxu0 0.0
        %1048 = vmatpush1.xpose.msra.mxu0 0.0
        %1049 = vmatprep.mubr.f32.mxu0 0.0
        %1050 = vmatmul.mubr.f32.gmra.mrb[0].mxu0 %v938
        %v1051 = vpop.f32.mrb[0].mxu0
        %v1052 = vadd.f32 %v928, %v1051
        %v1053 = vpop.f32.mrb[0].mxu0
        %1054 = vmatprep.mubr.f32.mxu0 0.0
        %1055 = vmatmul.mubr.f32.gmra.mrb[0].mxu0 %v941
        %v1056 = vpop.f32.mrb[0].mxu0
        %v1057 = vadd.f32 %v929, %v1056
        %v1058 = vpop.f32.mrb[0].mxu0
        %1059 = vmatprep.mubr.f32.mxu0 0.0
        %1060 = vmatmul.mubr.f32.gmra.mrb[0].mxu0 %v944
        %v1061 = vpop.f32.mrb[0].mxu0
        %v1062 = vadd.f32 %v930, %v1061
        %v1063 = vpop.f32.mrb[0].mxu0
        %1064 = vmatprep.mubr.f32.mxu0 0.0
        %1065 = vmatmul.mubr.f32.gmra.mrb[0].mxu0 %v947
        %v1066 = vpop.f32.mrb[0].mxu0
        %v1067 = vadd.f32 %v931, %v1066
        %v1068 = vpop.f32.mrb[0].mxu0
        %1069 = vmatprep.mubr.f32.mxu0 0.0
        %1070 = vmatmul.mubr.f32.gmra.mrb[0].mxu0 %v950
        %v1071 = vpop.f32.mrb[0].mxu0
        %v1072 = vadd.f32 %v932, %v1071
        %v1073 = vpop.f32.mrb[0].mxu0
        %1074 = vmatprep.mubr.f32.mxu0 0.0
        %1075 = vmatmul.mubr.f32.gmra.mrb[0].mxu0 %v953
        %v1076 = vpop.f32.mrb[0].mxu0
        %v1077 = vadd.f32 %v933, %v1076
        %v1078 = vpop.f32.mrb[0].mxu0
        %1079 = vmatprep.mubr.f32.mxu0 0.0
        %1080 = vmatmul.mubr.f32.gmra.mrb[0].mxu0 %v956
        %v1081 = vpop.f32.mrb[0].mxu0
        %v1082 = vadd.f32 %v934, %v1081
        %v1083 = vpop.f32.mrb[0].mxu0
        %1084 = vmatprep.mubr.f32.mxu0 0.0
        %1085 = vmatmul.mubr.f32.gmra.mrb[0].mxu0 %v959
        %v1086 = vpop.f32.mrb[0].mxu0
        %v1087 = vadd.f32 %v935, %v1086
        %v1088 = vpop.f32.mrb[0].mxu0
        %1089 = vdwg.mxu0
        %v1091 = vsel %vm936, %v904, 0
        %v1094 = vsel %vm936, %v905, 0
        %v1097 = vsel %vm936, %v906, 0
        %v1100 = vsel %vm936, %v907, 0
        %v1103 = vsel %vm936, %v908, 0
        %v1106 = vsel %vm936, %v909, 0
        %v1109 = vsel %vm936, %v910, 0
        %v1112 = vsel %vm936, %v911, 0
        %v1115 = vsel %vm936, %v531, 0
        %v1118 = vsel %vm936, %v537, 0
        %v1121 = vsel %vm936, %v543, 0
        %v1124 = vsel %vm936, %v549, 0
        %v1127 = vsel %vm936, %v555, 0
        %v1130 = vsel %vm936, %v561, 0
        %v1133 = vsel %vm936, %v567, 0
        %v1136 = vsel %vm936, %v573, 0
        %1138 = vmatprep.subr.mxu0 0.0
        %1139 = vmatpush1.xpose.msra.mxu0 %v1115
        %1140 = vmatprep.subr.mxu0 0.0
        %1141 = vmatpush1.xpose.msra.mxu0 %v1118
        %1142 = vmatprep.subr.mxu0 0.0
        %1143 = vmatpush1.xpose.msra.mxu0 %v1121
        %1144 = vmatprep.subr.mxu0 0.0
        %1145 = vmatpush1.xpose.msra.mxu0 %v1124
        %1146 = vmatprep.subr.mxu0 0.0
        %1147 = vmatpush1.xpose.msra.mxu0 %v1127
        %1148 = vmatprep.subr.mxu0 0.0
        %1149 = vmatpush1.xpose.msra.mxu0 %v1130
        %1150 = vmatprep.subr.mxu0 0.0
        %1151 = vmatpush1.xpose.msra.mxu0 %v1133
        %1152 = vmatprep.subr.mxu0 0.0
        %1153 = vmatpush1.xpose.msra.mxu0 %v1136
        %1154 = vmatprep.subr.mxu0 0.0
        %1155 = vmatpush1.xpose.msra.mxu0 0.0
        %1156 = vmatprep.subr.mxu0 0.0
        %1157 = vmatpush1.xpose.msra.mxu0 0.0
        %1158 = vmatprep.subr.mxu0 0.0
        %1159 = vmatpush1.xpose.msra.mxu0 0.0
        %1160 = vmatprep.subr.mxu0 0.0
        %1161 = vmatpush1.xpose.msra.mxu0 0.0
        %1162 = vmatprep.subr.mxu0 0.0
        %1163 = vmatpush1.xpose.msra.mxu0 0.0
        %1164 = vmatprep.subr.mxu0 0.0
        %1165 = vmatpush1.xpose.msra.mxu0 0.0
        %1166 = vmatprep.subr.mxu0 0.0
        %1167 = vmatpush1.xpose.msra.mxu0 0.0
        %1168 = vmatprep.subr.mxu0 0.0
        %1169 = vmatpush1.xpose.msra.mxu0 0.0
        %1170 = vmatprep.subr.mxu0 0.0
        %1171 = vmatpush1.xpose.msra.mxu0 0.0
        %1172 = vmatprep.subr.mxu0 0.0
        %1173 = vmatpush1.xpose.msra.mxu0 0.0
        %1174 = vmatprep.subr.mxu0 0.0
        %1175 = vmatpush1.xpose.msra.mxu0 0.0
        %1176 = vmatprep.subr.mxu0 0.0
        %1177 = vmatpush1.xpose.msra.mxu0 0.0
        %1178 = vmatprep.subr.mxu0 0.0
        %1179 = vmatpush1.xpose.msra.mxu0 0.0
        %1180 = vmatprep.subr.mxu0 0.0
        %1181 = vmatpush1.xpose.msra.mxu0 0.0
        %1182 = vmatprep.subr.mxu0 0.0
        %1183 = vmatpush1.xpose.msra.mxu0 0.0
        %1184 = vmatprep.subr.mxu0 0.0
        %1185 = vmatpush1.xpose.msra.mxu0 0.0
        %1186 = vmatprep.subr.mxu0 0.0
        %1187 = vmatpush1.xpose.msra.mxu0 0.0
        %1188 = vmatprep.subr.mxu0 0.0
        %1189 = vmatpush1.xpose.msra.mxu0 0.0
        %1190 = vmatprep.subr.mxu0 0.0
        %1191 = vmatpush1.xpose.msra.mxu0 0.0
        %1192 = vmatprep.subr.mxu0 0.0
        %1193 = vmatpush1.xpose.msra.mxu0 0.0
        %1194 = vmatprep.subr.mxu0 0.0
        %1195 = vmatpush1.xpose.msra.mxu0 0.0
        %1196 = vmatprep.subr.mxu0 0.0
        %1197 = vmatpush1.xpose.msra.mxu0 0.0
        %1198 = vmatprep.subr.mxu0 0.0
        %1199 = vmatpush1.xpose.msra.mxu0 0.0
        %1200 = vmatprep.subr.mxu0 0.0
        %1201 = vmatpush1.xpose.msra.mxu0 0.0
        %1202 = vmatprep.mubr.f32.mxu0 0.0
        %1203 = vmatmul.mubr.f32.gmra.mrb[0].mxu0 %v1091
        %v1204 = vpop.f32.mrb[0].mxu0
        %v1205 = vadd.f32 %v928, %v1204
        %v1206 = vpop.f32.mrb[0].mxu0
        %1207 = vmatprep.mubr.f32.mxu0 0.0
        %1208 = vmatmul.mubr.f32.gmra.mrb[0].mxu0 %v1094
        %v1209 = vpop.f32.mrb[0].mxu0
        %v1210 = vadd.f32 %v929, %v1209
        %v1211 = vpop.f32.mrb[0].mxu0
        %1212 = vmatprep.mubr.f32.mxu0 0.0
        %1213 = vmatmul.mubr.f32.gmra.mrb[0].mxu0 %v1097
        %v1214 = vpop.f32.mrb[0].mxu0
        %v1215 = vadd.f32 %v930, %v1214
        %v1216 = vpop.f32.mrb[0].mxu0
        %1217 = vmatprep.mubr.f32.mxu0 0.0
        %1218 = vmatmul.mubr.f32.gmra.mrb[0].mxu0 %v1100
        %v1219 = vpop.f32.mrb[0].mxu0
        %v1220 = vadd.f32 %v931, %v1219
        %v1221 = vpop.f32.mrb[0].mxu0
        %1222 = vmatprep.mubr.f32.mxu0 0.0
        %1223 = vmatmul.mubr.f32.gmra.mrb[0].mxu0 %v1103
        %v1224 = vpop.f32.mrb[0].mxu0
        %v1225 = vadd.f32 %v932, %v1224
        %v1226 = vpop.f32.mrb[0].mxu0
        %1227 = vmatprep.mubr.f32.mxu0 0.0
        %1228 = vmatmul.mubr.f32.gmra.mrb[0].mxu0 %v1106
        %v1229 = vpop.f32.mrb[0].mxu0
        %v1230 = vadd.f32 %v933, %v1229
        %v1231 = vpop.f32.mrb[0].mxu0
        %1232 = vmatprep.mubr.f32.mxu0 0.0
        %1233 = vmatmul.mubr.f32.gmra.mrb[0].mxu0 %v1109
        %v1234 = vpop.f32.mrb[0].mxu0
        %v1235 = vadd.f32 %v934, %v1234
        %v1236 = vpop.f32.mrb[0].mxu0
        %1237 = vmatprep.mubr.f32.mxu0 0.0
        %1238 = vmatmul.mubr.f32.gmra.mrb[0].mxu0 %v1112
        %v1239 = vpop.f32.mrb[0].mxu0
        %v1240 = vadd.f32 %v935, %v1239
        %v1241 = vpop.f32.mrb[0].mxu0
        %1242 = vdwg.mxu0
        %v1244 = vsel %vm936, %v912, 0
        %v1247 = vsel %vm936, %v913, 0
        %v1250 = vsel %vm936, %v914, 0
        %v1253 = vsel %vm936, %v915, 0
        %v1256 = vsel %vm936, %v916, 0
        %v1259 = vsel %vm936, %v917, 0
        %v1262 = vsel %vm936, %v918, 0
        %v1265 = vsel %vm936, %v919, 0
        %v1268 = vsel %vm936, %v579, 0
        %v1271 = vsel %vm936, %v585, 0
        %v1274 = vsel %vm936, %v591, 0
        %v1277 = vsel %vm936, %v597, 0
        %v1280 = vsel %vm936, %v603, 0
        %v1283 = vsel %vm936, %v609, 0
        %v1286 = vsel %vm936, %v615, 0
        %v1289 = vsel %vm936, %v621, 0
        %1291 = vmatprep.subr.mxu0 0.0
        %1292 = vmatpush1.xpose.msra.mxu0 %v1268
        %1293 = vmatprep.subr.mxu0 0.0
        %1294 = vmatpush1.xpose.msra.mxu0 %v1271
        %1295 = vmatprep.subr.mxu0 0.0
        %1296 = vmatpush1.xpose.msra.mxu0 %v1274
        %1297 = vmatprep.subr.mxu0 0.0
        %1298 = vmatpush1.xpose.msra.mxu0 %v1277
        %1299 = vmatprep.subr.mxu0 0.0
        %1300 = vmatpush1.xpose.msra.mxu0 %v1280
        %1301 = vmatprep.subr.mxu0 0.0
        %1302 = vmatpush1.xpose.msra.mxu0 %v1283
        %1303 = vmatprep.subr.mxu0 0.0
        %1304 = vmatpush1.xpose.msra.mxu0 %v1286
        %1305 = vmatprep.subr.mxu0 0.0
        %1306 = vmatpush1.xpose.msra.mxu0 %v1289
        %1307 = vmatprep.subr.mxu0 0.0
        %1308 = vmatpush1.xpose.msra.mxu0 0.0
        %1309 = vmatprep.subr.mxu0 0.0
        %1310 = vmatpush1.xpose.msra.mxu0 0.0
        %1311 = vmatprep.subr.mxu0 0.0
        %1312 = vmatpush1.xpose.msra.mxu0 0.0
        %1313 = vmatprep.subr.mxu0 0.0
        %1314 = vmatpush1.xpose.msra.mxu0 0.0
        %1315 = vmatprep.subr.mxu0 0.0
        %1316 = vmatpush1.xpose.msra.mxu0 0.0
        %1317 = vmatprep.subr.mxu0 0.0
        %1318 = vmatpush1.xpose.msra.mxu0 0.0
        %1319 = vmatprep.subr.mxu0 0.0
        %1320 = vmatpush1.xpose.msra.mxu0 0.0
        %1321 = vmatprep.subr.mxu0 0.0
        %1322 = vmatpush1.xpose.msra.mxu0 0.0
        %1323 = vmatprep.subr.mxu0 0.0
        %1324 = vmatpush1.xpose.msra.mxu0 0.0
        %1325 = vmatprep.subr.mxu0 0.0
        %1326 = vmatpush1.xpose.msra.mxu0 0.0
        %1327 = vmatprep.subr.mxu0 0.0
        %1328 = vmatpush1.xpose.msra.mxu0 0.0
        %1329 = vmatprep.subr.mxu0 0.0
        %1330 = vmatpush1.xpose.msra.mxu0 0.0
        %1331 = vmatprep.subr.mxu0 0.0
        %1332 = vmatpush1.xpose.msra.mxu0 0.0
        %1333 = vmatprep.subr.mxu0 0.0
        %1334 = vmatpush1.xpose.msra.mxu0 0.0
        %1335 = vmatprep.subr.mxu0 0.0
        %1336 = vmatpush1.xpose.msra.mxu0 0.0
        %1337 = vmatprep.subr.mxu0 0.0
        %1338 = vmatpush1.xpose.msra.mxu0 0.0
        %1339 = vmatprep.subr.mxu0 0.0
        %1340 = vmatpush1.xpose.msra.mxu0 0.0
        %1341 = vmatprep.subr.mxu0 0.0
        %1342 = vmatpush1.xpose.msra.mxu0 0.0
        %1343 = vmatprep.subr.mxu0 0.0
        %1344 = vmatpush1.xpose.msra.mxu0 0.0
        %1345 = vmatprep.subr.mxu0 0.0
        %1346 = vmatpush1.xpose.msra.mxu0 0.0
        %1347 = vmatprep.subr.mxu0 0.0
        %1348 = vmatpush1.xpose.msra.mxu0 0.0
        %1349 = vmatprep.subr.mxu0 0.0
        %1350 = vmatpush1.xpose.msra.mxu0 0.0
        %1351 = vmatprep.subr.mxu0 0.0
        %1352 = vmatpush1.xpose.msra.mxu0 0.0
        %1353 = vmatprep.subr.mxu0 0.0
        %1354 = vmatpush1.xpose.msra.mxu0 0.0
        %1355 = vmatprep.mubr.f32.mxu0 0.0
        %1356 = vmatmul.mubr.f32.gmra.mrb[0].mxu0 %v1244
        %v1357 = vpop.f32.mrb[0].mxu0
        %v1358 = vadd.f32 %v928, %v1357
        %v1359 = vpop.f32.mrb[0].mxu0
        %1360 = vmatprep.mubr.f32.mxu0 0.0
        %1361 = vmatmul.mubr.f32.gmra.mrb[0].mxu0 %v1247
        %v1362 = vpop.f32.mrb[0].mxu0
        %v1363 = vadd.f32 %v929, %v1362
        %v1364 = vpop.f32.mrb[0].mxu0
        %1365 = vmatprep.mubr.f32.mxu0 0.0
        %1366 = vmatmul.mubr.f32.gmra.mrb[0].mxu0 %v1250
        %v1367 = vpop.f32.mrb[0].mxu0
        %v1368 = vadd.f32 %v930, %v1367
        %v1369 = vpop.f32.mrb[0].mxu0
        %1370 = vmatprep.mubr.f32.mxu0 0.0
        %1371 = vmatmul.mubr.f32.gmra.mrb[0].mxu0 %v1253
        %v1372 = vpop.f32.mrb[0].mxu0
        %v1373 = vadd.f32 %v931, %v1372
        %v1374 = vpop.f32.mrb[0].mxu0
        %1375 = vmatprep.mubr.f32.mxu0 0.0
        %1376 = vmatmul.mubr.f32.gmra.mrb[0].mxu0 %v1256
        %v1377 = vpop.f32.mrb[0].mxu0
        %v1378 = vadd.f32 %v932, %v1377
        %v1379 = vpop.f32.mrb[0].mxu0
        %1380 = vmatprep.mubr.f32.mxu0 0.0
        %1381 = vmatmul.mubr.f32.gmra.mrb[0].mxu0 %v1259
        %v1382 = vpop.f32.mrb[0].mxu0
        %v1383 = vadd.f32 %v933, %v1382
        %v1384 = vpop.f32.mrb[0].mxu0
        %1385 = vmatprep.mubr.f32.mxu0 0.0
        %1386 = vmatmul.mubr.f32.gmra.mrb[0].mxu0 %v1262
        %v1387 = vpop.f32.mrb[0].mxu0
        %v1388 = vadd.f32 %v934, %v1387
        %v1389 = vpop.f32.mrb[0].mxu0
        %1390 = vmatprep.mubr.f32.mxu0 0.0
        %1391 = vmatmul.mubr.f32.gmra.mrb[0].mxu0 %v1265
        %v1392 = vpop.f32.mrb[0].mxu0
        %v1393 = vadd.f32 %v935, %v1392
        %v1394 = vpop.f32.mrb[0].mxu0
        %1395 = vdwg.mxu0
        %v1397 = vsel %vm936, %v920, 0
        %v1400 = vsel %vm936, %v921, 0
        %v1403 = vsel %vm936, %v922, 0
        %v1406 = vsel %vm936, %v923, 0
        %v1409 = vsel %vm936, %v924, 0
        %v1412 = vsel %vm936, %v925, 0
        %v1415 = vsel %vm936, %v926, 0
        %v1418 = vsel %vm936, %v927, 0
        %v1421 = vsel %vm936, %v627, 0
        %v1424 = vsel %vm936, %v633, 0
        %v1427 = vsel %vm936, %v639, 0
        %v1430 = vsel %vm936, %v645, 0
        %v1433 = vsel %vm936, %v651, 0
        %v1436 = vsel %vm936, %v657, 0
        %v1439 = vsel %vm936, %v663, 0
        %v1442 = vsel %vm936, %v669, 0
        %1444 = vmatprep.subr.mxu0 0.0
        %1445 = vmatpush1.xpose.msra.mxu0 %v1421
        %1446 = vmatprep.subr.mxu0 0.0
        %1447 = vmatpush1.xpose.msra.mxu0 %v1424
        %1448 = vmatprep.subr.mxu0 0.0
        %1449 = vmatpush1.xpose.msra.mxu0 %v1427
        %1450 = vmatprep.subr.mxu0 0.0
        %1451 = vmatpush1.xpose.msra.mxu0 %v1430
        %1452 = vmatprep.subr.mxu0 0.0
        %1453 = vmatpush1.xpose.msra.mxu0 %v1433
        %1454 = vmatprep.subr.mxu0 0.0
        %1455 = vmatpush1.xpose.msra.mxu0 %v1436
        %1456 = vmatprep.subr.mxu0 0.0
        %1457 = vmatpush1.xpose.msra.mxu0 %v1439
        %1458 = vmatprep.subr.mxu0 0.0
        %1459 = vmatpush1.xpose.msra.mxu0 %v1442
        %1460 = vmatprep.subr.mxu0 0.0
        %1461 = vmatpush1.xpose.msra.mxu0 0.0
        %1462 = vmatprep.subr.mxu0 0.0
        %1463 = vmatpush1.xpose.msra.mxu0 0.0
        %1464 = vmatprep.subr.mxu0 0.0
        %1465 = vmatpush1.xpose.msra.mxu0 0.0
        %1466 = vmatprep.subr.mxu0 0.0
        %1467 = vmatpush1.xpose.msra.mxu0 0.0
        %1468 = vmatprep.subr.mxu0 0.0
        %1469 = vmatpush1.xpose.msra.mxu0 0.0
        %1470 = vmatprep.subr.mxu0 0.0
        %1471 = vmatpush1.xpose.msra.mxu0 0.0
        %1472 = vmatprep.subr.mxu0 0.0
        %1473 = vmatpush1.xpose.msra.mxu0 0.0
        %1474 = vmatprep.subr.mxu0 0.0
        %1475 = vmatpush1.xpose.msra.mxu0 0.0
        %1476 = vmatprep.subr.mxu0 0.0
        %1477 = vmatpush1.xpose.msra.mxu0 0.0
        %1478 = vmatprep.subr.mxu0 0.0
        %1479 = vmatpush1.xpose.msra.mxu0 0.0
        %1480 = vmatprep.subr.mxu0 0.0
        %1481 = vmatpush1.xpose.msra.mxu0 0.0
        %1482 = vmatprep.subr.mxu0 0.0
        %1483 = vmatpush1.xpose.msra.mxu0 0.0
        %1484 = vmatprep.subr.mxu0 0.0
        %1485 = vmatpush1.xpose.msra.mxu0 0.0
        %1486 = vmatprep.subr.mxu0 0.0
        %1487 = vmatpush1.xpose.msra.mxu0 0.0
        %1488 = vmatprep.subr.mxu0 0.0
        %1489 = vmatpush1.xpose.msra.mxu0 0.0
        %1490 = vmatprep.subr.mxu0 0.0
        %1491 = vmatpush1.xpose.msra.mxu0 0.0
        %1492 = vmatprep.subr.mxu0 0.0
        %1493 = vmatpush1.xpose.msra.mxu0 0.0
        %1494 = vmatprep.subr.mxu0 0.0
        %1495 = vmatpush1.xpose.msra.mxu0 0.0
        %1496 = vmatprep.subr.mxu0 0.0
        %1497 = vmatpush1.xpose.msra.mxu0 0.0
        %1498 = vmatprep.subr.mxu0 0.0
        %1499 = vmatpush1.xpose.msra.mxu0 0.0
        %1500 = vmatprep.subr.mxu0 0.0
        %1501 = vmatpush1.xpose.msra.mxu0 0.0
        %1502 = vmatprep.subr.mxu0 0.0
        %1503 = vmatpush1.xpose.msra.mxu0 0.0
        %1504 = vmatprep.subr.mxu0 0.0
        %1505 = vmatpush1.xpose.msra.mxu0 0.0
        %1506 = vmatprep.subr.mxu0 0.0
        %1507 = vmatpush1.xpose.msra.mxu0 0.0
        %1508 = vmatprep.mubr.f32.mxu0 0.0
        %1509 = vmatmul.mubr.f32.gmra.mrb[0].mxu0 %v1397
        %v1510 = vpop.f32.mrb[0].mxu0
        %v1511 = vadd.f32 %v928, %v1510
        %v1512 = vpop.f32.mrb[0].mxu0
        %1513 = vmatprep.mubr.f32.mxu0 0.0
        %1514 = vmatmul.mubr.f32.gmra.mrb[0].mxu0 %v1400
        %v1515 = vpop.f32.mrb[0].mxu0
        %v1516 = vadd.f32 %v929, %v1515
        %v1517 = vpop.f32.mrb[0].mxu0
        %1518 = vmatprep.mubr.f32.mxu0 0.0
        %1519 = vmatmul.mubr.f32.gmra.mrb[0].mxu0 %v1403
        %v1520 = vpop.f32.mrb[0].mxu0
        %v1521 = vadd.f32 %v930, %v1520
        %v1522 = vpop.f32.mrb[0].mxu0
        %1523 = vmatprep.mubr.f32.mxu0 0.0
        %1524 = vmatmul.mubr.f32.gmra.mrb[0].mxu0 %v1406
        %v1525 = vpop.f32.mrb[0].mxu0
        %v1526 = vadd.f32 %v931, %v1525
        %v1527 = vpop.f32.mrb[0].mxu0
        %1528 = vmatprep.mubr.f32.mxu0 0.0
        %1529 = vmatmul.mubr.f32.gmra.mrb[0].mxu0 %v1409
        %v1530 = vpop.f32.mrb[0].mxu0
        %v1531 = vadd.f32 %v932, %v1530
        %v1532 = vpop.f32.mrb[0].mxu0
        %1533 = vmatprep.mubr.f32.mxu0 0.0
        %1534 = vmatmul.mubr.f32.gmra.mrb[0].mxu0 %v1412
        %v1535 = vpop.f32.mrb[0].mxu0
        %v1536 = vadd.f32 %v933, %v1535
        %v1537 = vpop.f32.mrb[0].mxu0
        %1538 = vmatprep.mubr.f32.mxu0 0.0
        %1539 = vmatmul.mubr.f32.gmra.mrb[0].mxu0 %v1415
        %v1540 = vpop.f32.mrb[0].mxu0
        %v1541 = vadd.f32 %v934, %v1540
        %v1542 = vpop.f32.mrb[0].mxu0
        %1543 = vmatprep.mubr.f32.mxu0 0.0
        %1544 = vmatmul.mubr.f32.gmra.mrb[0].mxu0 %v1418
        %v1545 = vpop.f32.mrb[0].mxu0
        %v1546 = vadd.f32 %v935, %v1545
        %v1547 = vpop.f32.mrb[0].mxu0
        %1548 = vdwg.mxu0
        %vm1549 = vcmask 523264
        %v1550 = vsel %vm1549, %v1052, -inf
        %1551 = vmax.xlane.f32.xlu0 %v1550
        %v1552 = vpop.xlane.xlu0 %1551
        %v1553 = vsel %vm1549, %v1057, -inf
        %1554 = vmax.xlane.f32.xlu0 %v1553
        %v1555 = vpop.xlane.xlu0 %1554
        %v1556 = vsel %vm1549, %v1062, -inf
        %1557 = vmax.xlane.f32.xlu0 %v1556
        %v1558 = vpop.xlane.xlu0 %1557
        %v1559 = vsel %vm1549, %v1067, -inf
        %1560 = vmax.xlane.f32.xlu0 %v1559
        %v1561 = vpop.xlane.xlu0 %1560
        %v1562 = vsel %vm1549, %v1072, -inf
        %1563 = vmax.xlane.f32.xlu0 %v1562
        %v1564 = vpop.xlane.xlu0 %1563
        %v1565 = vsel %vm1549, %v1077, -inf
        %1566 = vmax.xlane.f32.xlu0 %v1565
        %v1567 = vpop.xlane.xlu0 %1566
        %v1568 = vsel %vm1549, %v1082, -inf
        %1569 = vmax.xlane.f32.xlu0 %v1568
        %v1570 = vpop.xlane.xlu0 %1569
        %v1571 = vsel %vm1549, %v1087, -inf
        %1572 = vmax.xlane.f32.xlu0 %v1571
        %v1573 = vpop.xlane.xlu0 %1572
        %v1574 = vsel %vm1549, %v1205, -inf
        %1575 = vmax.xlane.f32.xlu0 %v1574
        %v1576 = vpop.xlane.xlu0 %1575
        %v1577 = vsel %vm1549, %v1210, -inf
        %1578 = vmax.xlane.f32.xlu0 %v1577
        %v1579 = vpop.xlane.xlu0 %1578
        %v1580 = vsel %vm1549, %v1215, -inf
        %1581 = vmax.xlane.f32.xlu0 %v1580
        %v1582 = vpop.xlane.xlu0 %1581
        %v1583 = vsel %vm1549, %v1220, -inf
        %1584 = vmax.xlane.f32.xlu0 %v1583
        %v1585 = vpop.xlane.xlu0 %1584
        %v1586 = vsel %vm1549, %v1225, -inf
        %1587 = vmax.xlane.f32.xlu0 %v1586
        %v1588 = vpop.xlane.xlu0 %1587
        %v1589 = vsel %vm1549, %v1230, -inf
        %1590 = vmax.xlane.f32.xlu0 %v1589
        %v1591 = vpop.xlane.xlu0 %1590
        %v1592 = vsel %vm1549, %v1235, -inf
        %1593 = vmax.xlane.f32.xlu0 %v1592
        %v1594 = vpop.xlane.xlu0 %1593
        %v1595 = vsel %vm1549, %v1240, -inf
        %1596 = vmax.xlane.f32.xlu0 %v1595
        %v1597 = vpop.xlane.xlu0 %1596
        %v1598 = vsel %vm1549, %v1358, -inf
        %1599 = vmax.xlane.f32.xlu0 %v1598
        %v1600 = vpop.xlane.xlu0 %1599
        %v1601 = vsel %vm1549, %v1363, -inf
        %1602 = vmax.xlane.f32.xlu0 %v1601
        %v1603 = vpop.xlane.xlu0 %1602
        %v1604 = vsel %vm1549, %v1368, -inf
        %1605 = vmax.xlane.f32.xlu0 %v1604
        %v1606 = vpop.xlane.xlu0 %1605
        %v1607 = vsel %vm1549, %v1373, -inf
        %1608 = vmax.xlane.f32.xlu0 %v1607
        %v1609 = vpop.xlane.xlu0 %1608
        %v1610 = vsel %vm1549, %v1378, -inf
        %1611 = vmax.xlane.f32.xlu0 %v1610
        %v1612 = vpop.xlane.xlu0 %1611
        %v1613 = vsel %vm1549, %v1383, -inf
        %1614 = vmax.xlane.f32.xlu0 %v1613
        %v1615 = vpop.xlane.xlu0 %1614
        %v1616 = vsel %vm1549, %v1388, -inf
        %1617 = vmax.xlane.f32.xlu0 %v1616
        %v1618 = vpop.xlane.xlu0 %1617
        %v1619 = vsel %vm1549, %v1393, -inf
        %1620 = vmax.xlane.f32.xlu0 %v1619
        %v1621 = vpop.xlane.xlu0 %1620
        %v1622 = vsel %vm1549, %v1511, -inf
        %1623 = vmax.xlane.f32.xlu0 %v1622
        %v1624 = vpop.xlane.xlu0 %1623
        %v1625 = vsel %vm1549, %v1516, -inf
        %1626 = vmax.xlane.f32.xlu0 %v1625
        %v1627 = vpop.xlane.xlu0 %1626
        %v1628 = vsel %vm1549, %v1521, -inf
        %1629 = vmax.xlane.f32.xlu0 %v1628
        %v1630 = vpop.xlane.xlu0 %1629
        %v1631 = vsel %vm1549, %v1526, -inf
        %1632 = vmax.xlane.f32.xlu0 %v1631
        %v1633 = vpop.xlane.xlu0 %1632
        %v1634 = vsel %vm1549, %v1531, -inf
        %1635 = vmax.xlane.f32.xlu0 %v1634
        %v1636 = vpop.xlane.xlu0 %1635
        %v1637 = vsel %vm1549, %v1536, -inf
        %1638 = vmax.xlane.f32.xlu0 %v1637
        %v1639 = vpop.xlane.xlu0 %1638
        %v1640 = vsel %vm1549, %v1541, -inf
        %1641 = vmax.xlane.f32.xlu0 %v1640
        %v1642 = vpop.xlane.xlu0 %1641
        %v1643 = vsel %vm1549, %v1546, -inf
        %1644 = vmax.xlane.f32.xlu0 %v1643
        %v1645 = vpop.xlane.xlu0 %1644
        %v1646 = vsub.f32 %v1052, %v1552
        %v1647 = vsub.f32 %v1057, %v1555
        %v1648 = vsub.f32 %v1062, %v1558
        %v1649 = vsub.f32 %v1067, %v1561
        %v1650 = vsub.f32 %v1072, %v1564
        %v1651 = vsub.f32 %v1077, %v1567
        %v1652 = vsub.f32 %v1082, %v1570
        %v1653 = vsub.f32 %v1087, %v1573
        %v1654 = vsub.f32 %v1205, %v1576
        %v1655 = vsub.f32 %v1210, %v1579
        %v1656 = vsub.f32 %v1215, %v1582
        %v1657 = vsub.f32 %v1220, %v1585
        %v1658 = vsub.f32 %v1225, %v1588
        %v1659 = vsub.f32 %v1230, %v1591
        %v1660 = vsub.f32 %v1235, %v1594
        %v1661 = vsub.f32 %v1240, %v1597
        %v1662 = vsub.f32 %v1358, %v1600
        %v1663 = vsub.f32 %v1363, %v1603
        %v1664 = vsub.f32 %v1368, %v1606
        %v1665 = vsub.f32 %v1373, %v1609
        %v1666 = vsub.f32 %v1378, %v1612
        %v1667 = vsub.f32 %v1383, %v1615
        %v1668 = vsub.f32 %v1388, %v1618
        %v1669 = vsub.f32 %v1393, %v1621
        %v1670 = vsub.f32 %v1511, %v1624
        %v1671 = vsub.f32 %v1516, %v1627
        %v1672 = vsub.f32 %v1521, %v1630
        %v1673 = vsub.f32 %v1526, %v1633
        %v1674 = vsub.f32 %v1531, %v1636
        %v1675 = vsub.f32 %v1536, %v1639
        %v1676 = vsub.f32 %v1541, %v1642
        %v1677 = vsub.f32 %v1546, %v1645
        %v1678 = vmul.f32 %v1646, 1.442695
        %v1679 = vpow.pop %v1678
        %v1680 = vmul.f32 %v1647, 1.442695
        %v1681 = vpow.pop %v1680
        %v1682 = vmul.f32 %v1648, 1.442695
        %v1683 = vpow.pop %v1682
        %v1684 = vmul.f32 %v1649, 1.442695
        %v1685 = vpow.pop %v1684
        %v1686 = vmul.f32 %v1650, 1.442695
        %v1687 = vpow.pop %v1686
        %v1688 = vmul.f32 %v1651, 1.442695
        %v1689 = vpow.pop %v1688
        %v1690 = vmul.f32 %v1652, 1.442695
        %v1691 = vpow.pop %v1690
        %v1692 = vmul.f32 %v1653, 1.442695
        %v1693 = vpow.pop %v1692
        %v1694 = vmul.f32 %v1654, 1.442695
        %v1695 = vpow.pop %v1694
        %v1696 = vmul.f32 %v1655, 1.442695
        %v1697 = vpow.pop %v1696
        %v1698 = vmul.f32 %v1656, 1.442695
        %v1699 = vpow.pop %v1698
        %v1700 = vmul.f32 %v1657, 1.442695
        %v1701 = vpow.pop %v1700
        %v1702 = vmul.f32 %v1658, 1.442695
        %v1703 = vpow.pop %v1702
        %v1704 = vmul.f32 %v1659, 1.442695
        %v1705 = vpow.pop %v1704
        %v1706 = vmul.f32 %v1660, 1.442695
        %v1707 = vpow.pop %v1706
        %v1708 = vmul.f32 %v1661, 1.442695
        %v1709 = vpow.pop %v1708
        %v1710 = vmul.f32 %v1662, 1.442695
        %v1711 = vpow.pop %v1710
        %v1712 = vmul.f32 %v1663, 1.442695
        %v1713 = vpow.pop %v1712
        %v1714 = vmul.f32 %v1664, 1.442695
        %v1715 = vpow.pop %v1714
        %v1716 = vmul.f32 %v1665, 1.442695
        %v1717 = vpow.pop %v1716
        %v1718 = vmul.f32 %v1666, 1.442695
        %v1719 = vpow.pop %v1718
        %v1720 = vmul.f32 %v1667, 1.442695
        %v1721 = vpow.pop %v1720
        %v1722 = vmul.f32 %v1668, 1.442695
        %v1723 = vpow.pop %v1722
        %v1724 = vmul.f32 %v1669, 1.442695
        %v1725 = vpow.pop %v1724
        %v1726 = vmul.f32 %v1670, 1.442695
        %v1727 = vpow.pop %v1726
        %v1728 = vmul.f32 %v1671, 1.442695
        %v1729 = vpow.pop %v1728
        %v1730 = vmul.f32 %v1672, 1.442695
        %v1731 = vpow.pop %v1730
        %v1732 = vmul.f32 %v1673, 1.442695
        %v1733 = vpow.pop %v1732
        %v1734 = vmul.f32 %v1674, 1.442695
        %v1735 = vpow.pop %v1734
        %v1736 = vmul.f32 %v1675, 1.442695
        %v1737 = vpow.pop %v1736
        %v1738 = vmul.f32 %v1676, 1.442695
        %v1739 = vpow.pop %v1738
        %v1740 = vmul.f32 %v1677, 1.442695
        %v1741 = vpow.pop %v1740
        %v1742 = vsel %vm1549, %v1679, 0.0
        %1743 = vadd.xlane.f32.xlu0 %v1742
        %v1744 = vpop.xlane.xlu0 %1743
        %v1745 = vsel %vm1549, %v1681, 0.0
        %1746 = vadd.xlane.f32.xlu0 %v1745
        %v1747 = vpop.xlane.xlu0 %1746
        %v1748 = vsel %vm1549, %v1683, 0.0
        %1749 = vadd.xlane.f32.xlu0 %v1748
        %v1750 = vpop.xlane.xlu0 %1749
        %v1751 = vsel %vm1549, %v1685, 0.0
        %1752 = vadd.xlane.f32.xlu0 %v1751
        %v1753 = vpop.xlane.xlu0 %1752
        %v1754 = vsel %vm1549, %v1687, 0.0
        %1755 = vadd.xlane.f32.xlu0 %v1754
        %v1756 = vpop.xlane.xlu0 %1755
        %v1757 = vsel %vm1549, %v1689, 0.0
        %1758 = vadd.xlane.f32.xlu0 %v1757
        %v1759 = vpop.xlane.xlu0 %1758
        %v1760 = vsel %vm1549, %v1691, 0.0
        %1761 = vadd.xlane.f32.xlu0 %v1760
        %v1762 = vpop.xlane.xlu0 %1761
        %v1763 = vsel %vm1549, %v1693, 0.0
        %1764 = vadd.xlane.f32.xlu0 %v1763
        %v1765 = vpop.xlane.xlu0 %1764
        %v1766 = vsel %vm1549, %v1695, 0.0
        %1767 = vadd.xlane.f32.xlu0 %v1766
        %v1768 = vpop.xlane.xlu0 %1767
        %v1769 = vsel %vm1549, %v1697, 0.0
        %1770 = vadd.xlane.f32.xlu0 %v1769
        %v1771 = vpop.xlane.xlu0 %1770
        %v1772 = vsel %vm1549, %v1699, 0.0
        %1773 = vadd.xlane.f32.xlu0 %v1772
        %v1774 = vpop.xlane.xlu0 %1773
        %v1775 = vsel %vm1549, %v1701, 0.0
        %1776 = vadd.xlane.f32.xlu0 %v1775
        %v1777 = vpop.xlane.xlu0 %1776
        %v1778 = vsel %vm1549, %v1703, 0.0
        %1779 = vadd.xlane.f32.xlu0 %v1778
        %v1780 = vpop.xlane.xlu0 %1779
        %v1781 = vsel %vm1549, %v1705, 0.0
        %1782 = vadd.xlane.f32.xlu0 %v1781
        %v1783 = vpop.xlane.xlu0 %1782
        %v1784 = vsel %vm1549, %v1707, 0.0
        %1785 = vadd.xlane.f32.xlu0 %v1784
        %v1786 = vpop.xlane.xlu0 %1785
        %v1787 = vsel %vm1549, %v1709, 0.0
        %1788 = vadd.xlane.f32.xlu0 %v1787
        %v1789 = vpop.xlane.xlu0 %1788
        %v1790 = vsel %vm1549, %v1711, 0.0
        %1791 = vadd.xlane.f32.xlu0 %v1790
        %v1792 = vpop.xlane.xlu0 %1791
        %v1793 = vsel %vm1549, %v1713, 0.0
        %1794 = vadd.xlane.f32.xlu0 %v1793
        %v1795 = vpop.xlane.xlu0 %1794
        %v1796 = vsel %vm1549, %v1715, 0.0
        %1797 = vadd.xlane.f32.xlu0 %v1796
        %v1798 = vpop.xlane.xlu0 %1797
        %v1799 = vsel %vm1549, %v1717, 0.0
        %1800 = vadd.xlane.f32.xlu0 %v1799
        %v1801 = vpop.xlane.xlu0 %1800
        %v1802 = vsel %vm1549, %v1719, 0.0
        %1803 = vadd.xlane.f32.xlu0 %v1802
        %v1804 = vpop.xlane.xlu0 %1803
        %v1805 = vsel %vm1549, %v1721, 0.0
        %1806 = vadd.xlane.f32.xlu0 %v1805
        %v1807 = vpop.xlane.xlu0 %1806
        %v1808 = vsel %vm1549, %v1723, 0.0
        %1809 = vadd.xlane.f32.xlu0 %v1808
        %v1810 = vpop.xlane.xlu0 %1809
        %v1811 = vsel %vm1549, %v1725, 0.0
        %1812 = vadd.xlane.f32.xlu0 %v1811
        %v1813 = vpop.xlane.xlu0 %1812
        %v1814 = vsel %vm1549, %v1727, 0.0
        %1815 = vadd.xlane.f32.xlu0 %v1814
        %v1816 = vpop.xlane.xlu0 %1815
        %v1817 = vsel %vm1549, %v1729, 0.0
        %1818 = vadd.xlane.f32.xlu0 %v1817
        %v1819 = vpop.xlane.xlu0 %1818
        %v1820 = vsel %vm1549, %v1731, 0.0
        %1821 = vadd.xlane.f32.xlu0 %v1820
        %v1822 = vpop.xlane.xlu0 %1821
        %v1823 = vsel %vm1549, %v1733, 0.0
        %1824 = vadd.xlane.f32.xlu0 %v1823
        %v1825 = vpop.xlane.xlu0 %1824
        %v1826 = vsel %vm1549, %v1735, 0.0
        %1827 = vadd.xlane.f32.xlu0 %v1826
        %v1828 = vpop.xlane.xlu0 %1827
        %v1829 = vsel %vm1549, %v1737, 0.0
        %1830 = vadd.xlane.f32.xlu0 %v1829
        %v1831 = vpop.xlane.xlu0 %1830
        %v1832 = vsel %vm1549, %v1739, 0.0
        %1833 = vadd.xlane.f32.xlu0 %v1832
        %v1834 = vpop.xlane.xlu0 %1833
        %v1835 = vsel %vm1549, %v1741, 0.0
        %1836 = vadd.xlane.f32.xlu0 %v1835
        %v1837 = vpop.xlane.xlu0 %1836
        %v1838 = vrcp.pop %v1744
        %v1839 = vrcp.pop %v1747
        %v1840 = vrcp.pop %v1750
        %v1841 = vrcp.pop %v1753
        %v1842 = vrcp.pop %v1756
        %v1843 = vrcp.pop %v1759
        %v1844 = vrcp.pop %v1762
        %v1845 = vrcp.pop %v1765
        %v1846 = vrcp.pop %v1768
        %v1847 = vrcp.pop %v1771
        %v1848 = vrcp.pop %v1774
        %v1849 = vrcp.pop %v1777
        %v1850 = vrcp.pop %v1780
        %v1851 = vrcp.pop %v1783
        %v1852 = vrcp.pop %v1786
        %v1853 = vrcp.pop %v1789
        %v1854 = vrcp.pop %v1792
        %v1855 = vrcp.pop %v1795
        %v1856 = vrcp.pop %v1798
        %v1857 = vrcp.pop %v1801
        %v1858 = vrcp.pop %v1804
        %v1859 = vrcp.pop %v1807
        %v1860 = vrcp.pop %v1810
        %v1861 = vrcp.pop %v1813
        %v1862 = vrcp.pop %v1816
        %v1863 = vrcp.pop %v1819
        %v1864 = vrcp.pop %v1822
        %v1865 = vrcp.pop %v1825
        %v1866 = vrcp.pop %v1828
        %v1867 = vrcp.pop %v1831
        %v1868 = vrcp.pop %v1834
        %v1869 = vrcp.pop %v1837
        %v1870 = vmul.f32 %v1679, %v1838
        %v1871 = vmul.f32 %v1681, %v1839
        %v1872 = vmul.f32 %v1683, %v1840
        %v1873 = vmul.f32 %v1685, %v1841
        %v1874 = vmul.f32 %v1687, %v1842
        %v1875 = vmul.f32 %v1689, %v1843
        %v1876 = vmul.f32 %v1691, %v1844
        %v1877 = vmul.f32 %v1693, %v1845
        %v1878 = vmul.f32 %v1695, %v1846
        %v1879 = vmul.f32 %v1697, %v1847
        %v1880 = vmul.f32 %v1699, %v1848
        %v1881 = vmul.f32 %v1701, %v1849
        %v1882 = vmul.f32 %v1703, %v1850
        %v1883 = vmul.f32 %v1705, %v1851
        %v1884 = vmul.f32 %v1707, %v1852
        %v1885 = vmul.f32 %v1709, %v1853
        %v1886 = vmul.f32 %v1711, %v1854
        %v1887 = vmul.f32 %v1713, %v1855
        %v1888 = vmul.f32 %v1715, %v1856
        %v1889 = vmul.f32 %v1717, %v1857
        %v1890 = vmul.f32 %v1719, %v1858
        %v1891 = vmul.f32 %v1721, %v1859
        %v1892 = vmul.f32 %v1723, %v1860
        %v1893 = vmul.f32 %v1725, %v1861
        %v1894 = vmul.f32 %v1727, %v1862
        %v1895 = vmul.f32 %v1729, %v1863
        %v1896 = vmul.f32 %v1731, %v1864
        %v1897 = vmul.f32 %v1733, %v1865
        %v1898 = vmul.f32 %v1735, %v1866
        %v1899 = vmul.f32 %v1737, %v1867
        %v1900 = vmul.f32 %v1739, %v1868
        %v1901 = vmul.f32 %v1741, %v1869
        %v1903 = vsel %vm1549, %v1870, 0
        %v1906 = vsel %vm1549, %v1871, 0
        %v1909 = vsel %vm1549, %v1872, 0
        %v1912 = vsel %vm1549, %v1873, 0
        %v1915 = vsel %vm1549, %v1874, 0
        %v1918 = vsel %vm1549, %v1875, 0
        %v1921 = vsel %vm1549, %v1876, 0
        %v1924 = vsel %vm1549, %v1877, 0
        %1926 = vmatprep.subr.mxu0 0.0
        %1927 = vmatpush1.msra.mxu0 %v738
        %1928 = vmatprep.subr.mxu0 0.0
        %1929 = vmatpush1.msra.mxu0 %v743
        %1930 = vmatprep.subr.mxu0 0.0
        %1931 = vmatpush1.msra.mxu0 %v748
        %1932 = vmatprep.subr.mxu0 0.0
        %1933 = vmatpush1.msra.mxu0 %v753
        %1934 = vmatprep.subr.mxu0 0.0
        %1935 = vmatpush1.msra.mxu0 %v758
        %1936 = vmatprep.subr.mxu0 0.0
        %1937 = vmatpush1.msra.mxu0 %v763
        %1938 = vmatprep.subr.mxu0 0.0
        %1939 = vmatpush1.msra.mxu0 %v768
        %1940 = vmatprep.subr.mxu0 0.0
        %1941 = vmatpush1.msra.mxu0 %v773
        %1942 = vmatprep.subr.mxu0 0.0
        %1943 = vmatpush1.msra.mxu0 0.0
        %1944 = vmatprep.subr.mxu0 0.0
        %1945 = vmatpush1.msra.mxu0 0.0
        %1946 = vmatprep.subr.mxu0 0.0
        %1947 = vmatpush1.msra.mxu0 0.0
        %1948 = vmatprep.subr.mxu0 0.0
        %1949 = vmatpush1.msra.mxu0 0.0
        %1950 = vmatprep.subr.mxu0 0.0
        %1951 = vmatpush1.msra.mxu0 0.0
        %1952 = vmatprep.subr.mxu0 0.0
        %1953 = vmatpush1.msra.mxu0 0.0
        %1954 = vmatprep.subr.mxu0 0.0
        %1955 = vmatpush1.msra.mxu0 0.0
        %1956 = vmatprep.subr.mxu0 0.0
        %1957 = vmatpush1.msra.mxu0 0.0
        %1958 = vmatprep.subr.mxu0 0.0
        %1959 = vmatpush1.msra.mxu0 0.0
        %1960 = vmatprep.subr.mxu0 0.0
        %1961 = vmatpush1.msra.mxu0 0.0
        %1962 = vmatprep.subr.mxu0 0.0
        %1963 = vmatpush1.msra.mxu0 0.0
        %1964 = vmatprep.subr.mxu0 0.0
        %1965 = vmatpush1.msra.mxu0 0.0
        %1966 = vmatprep.subr.mxu0 0.0
        %1967 = vmatpush1.msra.mxu0 0.0
        %1968 = vmatprep.subr.mxu0 0.0
        %1969 = vmatpush1.msra.mxu0 0.0
        %1970 = vmatprep.subr.mxu0 0.0
        %1971 = vmatpush1.msra.mxu0 0.0
        %1972 = vmatprep.subr.mxu0 0.0
        %1973 = vmatpush1.msra.mxu0 0.0
        %1974 = vmatprep.subr.mxu0 0.0
        %1975 = vmatpush1.msra.mxu0 0.0
        %1976 = vmatprep.subr.mxu0 0.0
        %1977 = vmatpush1.msra.mxu0 0.0
        %1978 = vmatprep.subr.mxu0 0.0
        %1979 = vmatpush1.msra.mxu0 0.0
        %1980 = vmatprep.subr.mxu0 0.0
        %1981 = vmatpush1.msra.mxu0 0.0
        %1982 = vmatprep.subr.mxu0 0.0
        %1983 = vmatpush1.msra.mxu0 0.0
        %1984 = vmatprep.subr.mxu0 0.0
        %1985 = vmatpush1.msra.mxu0 0.0
        %1986 = vmatprep.subr.mxu0 0.0
        %1987 = vmatpush1.msra.mxu0 0.0
        %1988 = vmatprep.subr.mxu0 0.0
        %1989 = vmatpush1.msra.mxu0 0.0
        %1990 = vmatprep.mubr.f32.mxu0 0.0
        %1991 = vmatmul.mubr.f32.gmra.mrb[0].mxu0 %v1903
        %v1992 = vpop.f32.mrb[0].mxu0
        %v1993 = vadd.f32 0.0, %v1992
        %v1994 = vpop.f32.mrb[0].mxu0
        %1995 = vmatprep.mubr.f32.mxu0 0.0
        %1996 = vmatmul.mubr.f32.gmra.mrb[0].mxu0 %v1906
        %v1997 = vpop.f32.mrb[0].mxu0
        %v1998 = vadd.f32 0.0, %v1997
        %v1999 = vpop.f32.mrb[0].mxu0
        %2000 = vmatprep.mubr.f32.mxu0 0.0
        %2001 = vmatmul.mubr.f32.gmra.mrb[0].mxu0 %v1909
        %v2002 = vpop.f32.mrb[0].mxu0
        %v2003 = vadd.f32 0.0, %v2002
        %v2004 = vpop.f32.mrb[0].mxu0
        %2005 = vmatprep.mubr.f32.mxu0 0.0
        %2006 = vmatmul.mubr.f32.gmra.mrb[0].mxu0 %v1912
        %v2007 = vpop.f32.mrb[0].mxu0
        %v2008 = vadd.f32 0.0, %v2007
        %v2009 = vpop.f32.mrb[0].mxu0
        %2010 = vmatprep.mubr.f32.mxu0 0.0
        %2011 = vmatmul.mubr.f32.gmra.mrb[0].mxu0 %v1915
        %v2012 = vpop.f32.mrb[0].mxu0
        %v2013 = vadd.f32 0.0, %v2012
        %v2014 = vpop.f32.mrb[0].mxu0
        %2015 = vmatprep.mubr.f32.mxu0 0.0
        %2016 = vmatmul.mubr.f32.gmra.mrb[0].mxu0 %v1918
        %v2017 = vpop.f32.mrb[0].mxu0
        %v2018 = vadd.f32 0.0, %v2017
        %v2019 = vpop.f32.mrb[0].mxu0
        %2020 = vmatprep.mubr.f32.mxu0 0.0
        %2021 = vmatmul.mubr.f32.gmra.mrb[0].mxu0 %v1921
        %v2022 = vpop.f32.mrb[0].mxu0
        %v2023 = vadd.f32 0.0, %v2022
        %v2024 = vpop.f32.mrb[0].mxu0
        %2025 = vmatprep.mubr.f32.mxu0 0.0
        %2026 = vmatmul.mubr.f32.gmra.mrb[0].mxu0 %v1924
        %v2027 = vpop.f32.mrb[0].mxu0
        %v2028 = vadd.f32 0.0, %v2027
        %v2029 = vpop.f32.mrb[0].mxu0
        %2030 = vdwg.mxu0
        %v2032 = vsel %vm1549, %v1878, 0
        %v2035 = vsel %vm1549, %v1879, 0
        %v2038 = vsel %vm1549, %v1880, 0
        %v2041 = vsel %vm1549, %v1881, 0
        %v2044 = vsel %vm1549, %v1882, 0
        %v2047 = vsel %vm1549, %v1883, 0
        %v2050 = vsel %vm1549, %v1884, 0
        %v2053 = vsel %vm1549, %v1885, 0
        %2055 = vmatprep.subr.mxu0 0.0
        %2056 = vmatpush1.msra.mxu0 %v778
        %2057 = vmatprep.subr.mxu0 0.0
        %2058 = vmatpush1.msra.mxu0 %v783
        %2059 = vmatprep.subr.mxu0 0.0
        %2060 = vmatpush1.msra.mxu0 %v788
        %2061 = vmatprep.subr.mxu0 0.0
        %2062 = vmatpush1.msra.mxu0 %v793
        %2063 = vmatprep.subr.mxu0 0.0
        %2064 = vmatpush1.msra.mxu0 %v798
        %2065 = vmatprep.subr.mxu0 0.0
        %2066 = vmatpush1.msra.mxu0 %v803
        %2067 = vmatprep.subr.mxu0 0.0
        %2068 = vmatpush1.msra.mxu0 %v808
        %2069 = vmatprep.subr.mxu0 0.0
        %2070 = vmatpush1.msra.mxu0 %v813
        %2071 = vmatprep.subr.mxu0 0.0
        %2072 = vmatpush1.msra.mxu0 0.0
        %2073 = vmatprep.subr.mxu0 0.0
        %2074 = vmatpush1.msra.mxu0 0.0
        %2075 = vmatprep.subr.mxu0 0.0
        %2076 = vmatpush1.msra.mxu0 0.0
        %2077 = vmatprep.subr.mxu0 0.0
        %2078 = vmatpush1.msra.mxu0 0.0
        %2079 = vmatprep.subr.mxu0 0.0
        %2080 = vmatpush1.msra.mxu0 0.0
        %2081 = vmatprep.subr.mxu0 0.0
        %2082 = vmatpush1.msra.mxu0 0.0
        %2083 = vmatprep.subr.mxu0 0.0
        %2084 = vmatpush1.msra.mxu0 0.0
        %2085 = vmatprep.subr.mxu0 0.0
        %2086 = vmatpush1.msra.mxu0 0.0
        %2087 = vmatprep.subr.mxu0 0.0
        %2088 = vmatpush1.msra.mxu0 0.0
        %2089 = vmatprep.subr.mxu0 0.0
        %2090 = vmatpush1.msra.mxu0 0.0
        %2091 = vmatprep.subr.mxu0 0.0
        %2092 = vmatpush1.msra.mxu0 0.0
        %2093 = vmatprep.subr.mxu0 0.0
        %2094 = vmatpush1.msra.mxu0 0.0
        %2095 = vmatprep.subr.mxu0 0.0
        %2096 = vmatpush1.msra.mxu0 0.0
        %2097 = vmatprep.subr.mxu0 0.0
        %2098 = vmatpush1.msra.mxu0 0.0
        %2099 = vmatprep.subr.mxu0 0.0
        %2100 = vmatpush1.msra.mxu0 0.0
        %2101 = vmatprep.subr.mxu0 0.0
        %2102 = vmatpush1.msra.mxu0 0.0
        %2103 = vmatprep.subr.mxu0 0.0
        %2104 = vmatpush1.msra.mxu0 0.0
        %2105 = vmatprep.subr.mxu0 0.0
        %2106 = vmatpush1.msra.mxu0 0.0
        %2107 = vmatprep.subr.mxu0 0.0
        %2108 = vmatpush1.msra.mxu0 0.0
        %2109 = vmatprep.subr.mxu0 0.0
        %2110 = vmatpush1.msra.mxu0 0.0
        %2111 = vmatprep.subr.mxu0 0.0
        %2112 = vmatpush1.msra.mxu0 0.0
        %2113 = vmatprep.subr.mxu0 0.0
        %2114 = vmatpush1.msra.mxu0 0.0
        %2115 = vmatprep.subr.mxu0 0.0
        %2116 = vmatpush1.msra.mxu0 0.0
        %2117 = vmatprep.subr.mxu0 0.0
        %2118 = vmatpush1.msra.mxu0 0.0
        %2119 = vmatprep.mubr.f32.mxu0 0.0
        %2120 = vmatmul.mubr.f32.gmra.mrb[0].mxu0 %v2032
        %v2121 = vpop.f32.mrb[0].mxu0
        %v2122 = vadd.f32 0.0, %v2121
        %v2123 = vpop.f32.mrb[0].mxu0
        %2124 = vmatprep.mubr.f32.mxu0 0.0
        %2125 = vmatmul.mubr.f32.gmra.mrb[0].mxu0 %v2035
        %v2126 = vpop.f32.mrb[0].mxu0
        %v2127 = vadd.f32 0.0, %v2126
        %v2128 = vpop.f32.mrb[0].mxu0
        %2129 = vmatprep.mubr.f32.mxu0 0.0
        %2130 = vmatmul.mubr.f32.gmra.mrb[0].mxu0 %v2038
        %v2131 = vpop.f32.mrb[0].mxu0
        %v2132 = vadd.f32 0.0, %v2131
        %v2133 = vpop.f32.mrb[0].mxu0
        %2134 = vmatprep.mubr.f32.mxu0 0.0
        %2135 = vmatmul.mubr.f32.gmra.mrb[0].mxu0 %v2041
        %v2136 = vpop.f32.mrb[0].mxu0
        %v2137 = vadd.f32 0.0, %v2136
        %v2138 = vpop.f32.mrb[0].mxu0
        %2139 = vmatprep.mubr.f32.mxu0 0.0
        %2140 = vmatmul.mubr.f32.gmra.mrb[0].mxu0 %v2044
        %v2141 = vpop.f32.mrb[0].mxu0
        %v2142 = vadd.f32 0.0, %v2141
        %v2143 = vpop.f32.mrb[0].mxu0
        %2144 = vmatprep.mubr.f32.mxu0 0.0
        %2145 = vmatmul.mubr.f32.gmra.mrb[0].mxu0 %v2047
        %v2146 = vpop.f32.mrb[0].mxu0
        %v2147 = vadd.f32 0.0, %v2146
        %v2148 = vpop.f32.mrb[0].mxu0
        %2149 = vmatprep.mubr.f32.mxu0 0.0
        %2150 = vmatmul.mubr.f32.gmra.mrb[0].mxu0 %v2050
        %v2151 = vpop.f32.mrb[0].mxu0
        %v2152 = vadd.f32 0.0, %v2151
        %v2153 = vpop.f32.mrb[0].mxu0
        %2154 = vmatprep.mubr.f32.mxu0 0.0
        %2155 = vmatmul.mubr.f32.gmra.mrb[0].mxu0 %v2053
        %v2156 = vpop.f32.mrb[0].mxu0
        %v2157 = vadd.f32 0.0, %v2156
        %v2158 = vpop.f32.mrb[0].mxu0
        %2159 = vdwg.mxu0
        %v2161 = vsel %vm1549, %v1886, 0
        %v2164 = vsel %vm1549, %v1887, 0
        %v2167 = vsel %vm1549, %v1888, 0
        %v2170 = vsel %vm1549, %v1889, 0
        %v2173 = vsel %vm1549, %v1890, 0
        %v2176 = vsel %vm1549, %v1891, 0
        %v2179 = vsel %vm1549, %v1892, 0
        %v2182 = vsel %vm1549, %v1893, 0
        %2184 = vmatprep.subr.mxu0 0.0
        %2185 = vmatpush1.msra.mxu0 %v818
        %2186 = vmatprep.subr.mxu0 0.0
        %2187 = vmatpush1.msra.mxu0 %v823
        %2188 = vmatprep.subr.mxu0 0.0
        %2189 = vmatpush1.msra.mxu0 %v828
        %2190 = vmatprep.subr.mxu0 0.0
        %2191 = vmatpush1.msra.mxu0 %v833
        %2192 = vmatprep.subr.mxu0 0.0
        %2193 = vmatpush1.msra.mxu0 %v838
        %2194 = vmatprep.subr.mxu0 0.0
        %2195 = vmatpush1.msra.mxu0 %v843
        %2196 = vmatprep.subr.mxu0 0.0
        %2197 = vmatpush1.msra.mxu0 %v848
        %2198 = vmatprep.subr.mxu0 0.0
        %2199 = vmatpush1.msra.mxu0 %v853
        %2200 = vmatprep.subr.mxu0 0.0
        %2201 = vmatpush1.msra.mxu0 0.0
        %2202 = vmatprep.subr.mxu0 0.0
        %2203 = vmatpush1.msra.mxu0 0.0
        %2204 = vmatprep.subr.mxu0 0.0
        %2205 = vmatpush1.msra.mxu0 0.0
        %2206 = vmatprep.subr.mxu0 0.0
        %2207 = vmatpush1.msra.mxu0 0.0
        %2208 = vmatprep.subr.mxu0 0.0
        %2209 = vmatpush1.msra.mxu0 0.0
        %2210 = vmatprep.subr.mxu0 0.0
        %2211 = vmatpush1.msra.mxu0 0.0
        %2212 = vmatprep.subr.mxu0 0.0
        %2213 = vmatpush1.msra.mxu0 0.0
        %2214 = vmatprep.subr.mxu0 0.0
        %2215 = vmatpush1.msra.mxu0 0.0
        %2216 = vmatprep.subr.mxu0 0.0
        %2217 = vmatpush1.msra.mxu0 0.0
        %2218 = vmatprep.subr.mxu0 0.0
        %2219 = vmatpush1.msra.mxu0 0.0
        %2220 = vmatprep.subr.mxu0 0.0
        %2221 = vmatpush1.msra.mxu0 0.0
        %2222 = vmatprep.subr.mxu0 0.0
        %2223 = vmatpush1.msra.mxu0 0.0
        %2224 = vmatprep.subr.mxu0 0.0
        %2225 = vmatpush1.msra.mxu0 0.0
        %2226 = vmatprep.subr.mxu0 0.0
        %2227 = vmatpush1.msra.mxu0 0.0
        %2228 = vmatprep.subr.mxu0 0.0
        %2229 = vmatpush1.msra.mxu0 0.0
        %2230 = vmatprep.subr.mxu0 0.0
        %2231 = vmatpush1.msra.mxu0 0.0
        %2232 = vmatprep.subr.mxu0 0.0
        %2233 = vmatpush1.msra.mxu0 0.0
        %2234 = vmatprep.subr.mxu0 0.0
        %2235 = vmatpush1.msra.mxu0 0.0
        %2236 = vmatprep.subr.mxu0 0.0
        %2237 = vmatpush1.msra.mxu0 0.0
        %2238 = vmatprep.subr.mxu0 0.0
        %2239 = vmatpush1.msra.mxu0 0.0
        %2240 = vmatprep.subr.mxu0 0.0
        %2241 = vmatpush1.msra.mxu0 0.0
        %2242 = vmatprep.subr.mxu0 0.0
        %2243 = vmatpush1.msra.mxu0 0.0
        %2244 = vmatprep.subr.mxu0 0.0
        %2245 = vmatpush1.msra.mxu0 0.0
        %2246 = vmatprep.subr.mxu0 0.0
        %2247 = vmatpush1.msra.mxu0 0.0
        %2248 = vmatprep.mubr.f32.mxu0 0.0
        %2249 = vmatmul.mubr.f32.gmra.mrb[0].mxu0 %v2161
        %v2250 = vpop.f32.mrb[0].mxu0
        %v2251 = vadd.f32 0.0, %v2250
        %v2252 = vpop.f32.mrb[0].mxu0
        %2253 = vmatprep.mubr.f32.mxu0 0.0
        %2254 = vmatmul.mubr.f32.gmra.mrb[0].mxu0 %v2164
        %v2255 = vpop.f32.mrb[0].mxu0
        %v2256 = vadd.f32 0.0, %v2255
        %v2257 = vpop.f32.mrb[0].mxu0
        %2258 = vmatprep.mubr.f32.mxu0 0.0
        %2259 = vmatmul.mubr.f32.gmra.mrb[0].mxu0 %v2167
        %v2260 = vpop.f32.mrb[0].mxu0
        %v2261 = vadd.f32 0.0, %v2260
        %v2262 = vpop.f32.mrb[0].mxu0
        %2263 = vmatprep.mubr.f32.mxu0 0.0
        %2264 = vmatmul.mubr.f32.gmra.mrb[0].mxu0 %v2170
        %v2265 = vpop.f32.mrb[0].mxu0
        %v2266 = vadd.f32 0.0, %v2265
        %v2267 = vpop.f32.mrb[0].mxu0
        %2268 = vmatprep.mubr.f32.mxu0 0.0
        %2269 = vmatmul.mubr.f32.gmra.mrb[0].mxu0 %v2173
        %v2270 = vpop.f32.mrb[0].mxu0
        %v2271 = vadd.f32 0.0, %v2270
        %v2272 = vpop.f32.mrb[0].mxu0
        %2273 = vmatprep.mubr.f32.mxu0 0.0
        %2274 = vmatmul.mubr.f32.gmra.mrb[0].mxu0 %v2176
        %v2275 = vpop.f32.mrb[0].mxu0
        %v2276 = vadd.f32 0.0, %v2275
        %v2277 = vpop.f32.mrb[0].mxu0
        %2278 = vmatprep.mubr.f32.mxu0 0.0
        %2279 = vmatmul.mubr.f32.gmra.mrb[0].mxu0 %v2179
        %v2280 = vpop.f32.mrb[0].mxu0
        %v2281 = vadd.f32 0.0, %v2280
        %v2282 = vpop.f32.mrb[0].mxu0
        %2283 = vmatprep.mubr.f32.mxu0 0.0
        %2284 = vmatmul.mubr.f32.gmra.mrb[0].mxu0 %v2182
        %v2285 = vpop.f32.mrb[0].mxu0
        %v2286 = vadd.f32 0.0, %v2285
        %v2287 = vpop.f32.mrb[0].mxu0
        %2288 = vdwg.mxu0
        %v2290 = vsel %vm1549, %v1894, 0
        %v2293 = vsel %vm1549, %v1895, 0
        %v2296 = vsel %vm1549, %v1896, 0
        %v2299 = vsel %vm1549, %v1897, 0
        %v2302 = vsel %vm1549, %v1898, 0
        %v2305 = vsel %vm1549, %v1899, 0
        %v2308 = vsel %vm1549, %v1900, 0
        %v2311 = vsel %vm1549, %v1901, 0
        %2313 = vmatprep.subr.mxu0 0.0
        %2314 = vmatpush1.msra.mxu0 %v858
        %2315 = vmatprep.subr.mxu0 0.0
        %2316 = vmatpush1.msra.mxu0 %v863
        %2317 = vmatprep.subr.mxu0 0.0
        %2318 = vmatpush1.msra.mxu0 %v868
        %2319 = vmatprep.subr.mxu0 0.0
        %2320 = vmatpush1.msra.mxu0 %v873
        %2321 = vmatprep.subr.mxu0 0.0
        %2322 = vmatpush1.msra.mxu0 %v878
        %2323 = vmatprep.subr.mxu0 0.0
        %2324 = vmatpush1.msra.mxu0 %v883
        %2325 = vmatprep.subr.mxu0 0.0
        %2326 = vmatpush1.msra.mxu0 %v888
        %2327 = vmatprep.subr.mxu0 0.0
        %2328 = vmatpush1.msra.mxu0 %v893
        %2329 = vmatprep.subr.mxu0 0.0
        %2330 = vmatpush1.msra.mxu0 0.0
        %2331 = vmatprep.subr.mxu0 0.0
        %2332 = vmatpush1.msra.mxu0 0.0
        %2333 = vmatprep.subr.mxu0 0.0
        %2334 = vmatpush1.msra.mxu0 0.0
        %2335 = vmatprep.subr.mxu0 0.0
        %2336 = vmatpush1.msra.mxu0 0.0
        %2337 = vmatprep.subr.mxu0 0.0
        %2338 = vmatpush1.msra.mxu0 0.0
        %2339 = vmatprep.subr.mxu0 0.0
        %2340 = vmatpush1.msra.mxu0 0.0
        %2341 = vmatprep.subr.mxu0 0.0
        %2342 = vmatpush1.msra.mxu0 0.0
        %2343 = vmatprep.subr.mxu0 0.0
        %2344 = vmatpush1.msra.mxu0 0.0
        %2345 = vmatprep.subr.mxu0 0.0
        %2346 = vmatpush1.msra.mxu0 0.0
        %2347 = vmatprep.subr.mxu0 0.0
        %2348 = vmatpush1.msra.mxu0 0.0
        %2349 = vmatprep.subr.mxu0 0.0
        %2350 = vmatpush1.msra.mxu0 0.0
        %2351 = vmatprep.subr.mxu0 0.0
        %2352 = vmatpush1.msra.mxu0 0.0
        %2353 = vmatprep.subr.mxu0 0.0
        %2354 = vmatpush1.msra.mxu0 0.0
        %2355 = vmatprep.subr.mxu0 0.0
        %2356 = vmatpush1.msra.mxu0 0.0
        %2357 = vmatprep.subr.mxu0 0.0
        %2358 = vmatpush1.msra.mxu0 0.0
        %2359 = vmatprep.subr.mxu0 0.0
        %2360 = vmatpush1.msra.mxu0 0.0
        %2361 = vmatprep.subr.mxu0 0.0
        %2362 = vmatpush1.msra.mxu0 0.0
        %2363 = vmatprep.subr.mxu0 0.0
        %2364 = vmatpush1.msra.mxu0 0.0
        %2365 = vmatprep.subr.mxu0 0.0
        %2366 = vmatpush1.msra.mxu0 0.0
        %2367 = vmatprep.subr.mxu0 0.0
        %2368 = vmatpush1.msra.mxu0 0.0
        %2369 = vmatprep.subr.mxu0 0.0
        %2370 = vmatpush1.msra.mxu0 0.0
        %2371 = vmatprep.subr.mxu0 0.0
        %2372 = vmatpush1.msra.mxu0 0.0
        %2373 = vmatprep.subr.mxu0 0.0
        %2374 = vmatpush1.msra.mxu0 0.0
        %2375 = vmatprep.subr.mxu0 0.0
        %2376 = vmatpush1.msra.mxu0 0.0
        %2377 = vmatprep.mubr.f32.mxu0 0.0
        %2378 = vmatmul.mubr.f32.gmra.mrb[0].mxu0 %v2290
        %v2379 = vpop.f32.mrb[0].mxu0
        %v2380 = vadd.f32 0.0, %v2379
        %v2381 = vpop.f32.mrb[0].mxu0
        %2382 = vmatprep.mubr.f32.mxu0 0.0
        %2383 = vmatmul.mubr.f32.gmra.mrb[0].mxu0 %v2293
        %v2384 = vpop.f32.mrb[0].mxu0
        %v2385 = vadd.f32 0.0, %v2384
        %v2386 = vpop.f32.mrb[0].mxu0
        %2387 = vmatprep.mubr.f32.mxu0 0.0
        %2388 = vmatmul.mubr.f32.gmra.mrb[0].mxu0 %v2296
        %v2389 = vpop.f32.mrb[0].mxu0
        %v2390 = vadd.f32 0.0, %v2389
        %v2391 = vpop.f32.mrb[0].mxu0
        %2392 = vmatprep.mubr.f32.mxu0 0.0
        %2393 = vmatmul.mubr.f32.gmra.mrb[0].mxu0 %v2299
        %v2394 = vpop.f32.mrb[0].mxu0
        %v2395 = vadd.f32 0.0, %v2394
        %v2396 = vpop.f32.mrb[0].mxu0
        %2397 = vmatprep.mubr.f32.mxu0 0.0
        %2398 = vmatmul.mubr.f32.gmra.mrb[0].mxu0 %v2302
        %v2399 = vpop.f32.mrb[0].mxu0
        %v2400 = vadd.f32 0.0, %v2399
        %v2401 = vpop.f32.mrb[0].mxu0
        %2402 = vmatprep.mubr.f32.mxu0 0.0
        %2403 = vmatmul.mubr.f32.gmra.mrb[0].mxu0 %v2305
        %v2404 = vpop.f32.mrb[0].mxu0
        %v2405 = vadd.f32 0.0, %v2404
        %v2406 = vpop.f32.mrb[0].mxu0
        %2407 = vmatprep.mubr.f32.mxu0 0.0
        %2408 = vmatmul.mubr.f32.gmra.mrb[0].mxu0 %v2308
        %v2409 = vpop.f32.mrb[0].mxu0
        %v2410 = vadd.f32 0.0, %v2409
        %v2411 = vpop.f32.mrb[0].mxu0
        %2412 = vmatprep.mubr.f32.mxu0 0.0
        %2413 = vmatmul.mubr.f32.gmra.mrb[0].mxu0 %v2311
        %v2414 = vpop.f32.mrb[0].mxu0
        %v2415 = vadd.f32 0.0, %v2414
        %v2416 = vpop.f32.mrb[0].mxu0
        %2417 = vdwg.mxu0
        %s2418 = scalar_lea.vmem [#allocation7], 64
        %v2419 = vld [vmem:[%s2418] sm:$0xff]
        %v2420 = vld [vmem:[%s2418 + $0x8] sm:$0xff]
        %v2421 = vld [vmem:[%s2418 + $0x10] sm:$0xff]
        %v2422 = vld [vmem:[%s2418 + $0x18] sm:$0xff]
        %v2423 = vld [vmem:[%s2418 + $0x20] sm:$0xff]
        %v2424 = vld [vmem:[%s2418 + $0x28] sm:$0xff]
        %v2425 = vld [vmem:[%s2418 + $0x30] sm:$0xff]
        %v2426 = vld [vmem:[%s2418 + $0x38] sm:$0xff]
        %2427 = vrot.lane.b32.xlu0 %v896, 96
        %v2428 = vpop.permute.xlu0 %2427
        %2429 = vrot.lane.b32.xlu0 %v897, 96
        %v2430 = vpop.permute.xlu0 %2429
        %2431 = vrot.lane.b32.xlu0 %v898, 96
        %v2432 = vpop.permute.xlu0 %2431
        %2433 = vrot.lane.b32.xlu0 %v899, 96
        %v2434 = vpop.permute.xlu0 %2433
        %2435 = vrot.lane.b32.xlu0 %v900, 96
        %v2436 = vpop.permute.xlu0 %2435
        %2437 = vrot.lane.b32.xlu0 %v901, 96
        %v2438 = vpop.permute.xlu0 %2437
        %2439 = vrot.lane.b32.xlu0 %v902, 96
        %v2440 = vpop.permute.xlu0 %2439
        %2441 = vrot.lane.b32.xlu0 %v903, 96
        %v2442 = vpop.permute.xlu0 %2441
        %2443 = vrot.lane.b32.xlu0 %v483, 96
        %v2444 = vpop.permute.xlu0 %2443
        %2445 = vrot.lane.b32.xlu0 %v489, 96
        %v2446 = vpop.permute.xlu0 %2445
        %2447 = vrot.lane.b32.xlu0 %v495, 96
        %v2448 = vpop.permute.xlu0 %2447
        %2449 = vrot.lane.b32.xlu0 %v501, 96
        %v2450 = vpop.permute.xlu0 %2449
        %2451 = vrot.lane.b32.xlu0 %v507, 96
        %v2452 = vpop.permute.xlu0 %2451
        %2453 = vrot.lane.b32.xlu0 %v513, 96
        %v2454 = vpop.permute.xlu0 %2453
        %2455 = vrot.lane.b32.xlu0 %v519, 96
        %v2456 = vpop.permute.xlu0 %2455
        %2457 = vrot.lane.b32.xlu0 %v525, 96
        %v2458 = vpop.permute.xlu0 %2457
        %v2459 = vsel %vm936, %v2428, 0
        %v2461 = vsel %vm936, %v2430, 0
        %v2463 = vsel %vm936, %v2432, 0
        %v2465 = vsel %vm936, %v2434, 0
        %v2467 = vsel %vm936, %v2436, 0
        %v2469 = vsel %vm936, %v2438, 0
        %v2471 = vsel %vm936, %v2440, 0
        %v2473 = vsel %vm936, %v2442, 0
        %v2475 = vsel %vm936, %v2444, 0
        %v2477 = vsel %vm936, %v2446, 0
        %v2479 = vsel %vm936, %v2448, 0
        %v2481 = vsel %vm936, %v2450, 0
        %v2483 = vsel %vm936, %v2452, 0
        %v2485 = vsel %vm936, %v2454, 0
        %v2487 = vsel %vm936, %v2456, 0
        %v2489 = vsel %vm936, %v2458, 0
        %2491 = vmatprep.subr.mxu0 0.0
        %2492 = vmatpush1.xpose.msra.mxu0 %v2475
        %2493 = vmatprep.subr.mxu0 0.0
        %2494 = vmatpush1.xpose.msra.mxu0 %v2477
        %2495 = vmatprep.subr.mxu0 0.0
        %2496 = vmatpush1.xpose.msra.mxu0 %v2479
        %2497 = vmatprep.subr.mxu0 0.0
        %2498 = vmatpush1.xpose.msra.mxu0 %v2481
        %2499 = vmatprep.subr.mxu0 0.0
        %2500 = vmatpush1.xpose.msra.mxu0 %v2483
        %2501 = vmatprep.subr.mxu0 0.0
        %2502 = vmatpush1.xpose.msra.mxu0 %v2485
        %2503 = vmatprep.subr.mxu0 0.0
        %2504 = vmatpush1.xpose.msra.mxu0 %v2487
        %2505 = vmatprep.subr.mxu0 0.0
        %2506 = vmatpush1.xpose.msra.mxu0 %v2489
        %2507 = vmatprep.subr.mxu0 0.0
        %2508 = vmatpush1.xpose.msra.mxu0 0.0
        %2509 = vmatprep.subr.mxu0 0.0
        %2510 = vmatpush1.xpose.msra.mxu0 0.0
        %2511 = vmatprep.subr.mxu0 0.0
        %2512 = vmatpush1.xpose.msra.mxu0 0.0
        %2513 = vmatprep.subr.mxu0 0.0
        %2514 = vmatpush1.xpose.msra.mxu0 0.0
        %2515 = vmatprep.subr.mxu0 0.0
        %2516 = vmatpush1.xpose.msra.mxu0 0.0
        %2517 = vmatprep.subr.mxu0 0.0
        %2518 = vmatpush1.xpose.msra.mxu0 0.0
        %2519 = vmatprep.subr.mxu0 0.0
        %2520 = vmatpush1.xpose.msra.mxu0 0.0
        %2521 = vmatprep.subr.mxu0 0.0
        %2522 = vmatpush1.xpose.msra.mxu0 0.0
        %2523 = vmatprep.subr.mxu0 0.0
        %2524 = vmatpush1.xpose.msra.mxu0 0.0
        %2525 = vmatprep.subr.mxu0 0.0
        %2526 = vmatpush1.xpose.msra.mxu0 0.0
        %2527 = vmatprep.subr.mxu0 0.0
        %2528 = vmatpush1.xpose.msra.mxu0 0.0
        %2529 = vmatprep.subr.mxu0 0.0
        %2530 = vmatpush1.xpose.msra.mxu0 0.0
        %2531 = vmatprep.subr.mxu0 0.0
        %2532 = vmatpush1.xpose.msra.mxu0 0.0
        %2533 = vmatprep.subr.mxu0 0.0
        %2534 = vmatpush1.xpose.msra.mxu0 0.0
        %2535 = vmatprep.subr.mxu0 0.0
        %2536 = vmatpush1.xpose.msra.mxu0 0.0
        %2537 = vmatprep.subr.mxu0 0.0
        %2538 = vmatpush1.xpose.msra.mxu0 0.0
        %2539 = vmatprep.subr.mxu0 0.0
        %2540 = vmatpush1.xpose.msra.mxu0 0.0
        %2541 = vmatprep.subr.mxu0 0.0
        %2542 = vmatpush1.xpose.msra.mxu0 0.0
        %2543 = vmatprep.subr.mxu0 0.0
        %2544 = vmatpush1.xpose.msra.mxu0 0.0
        %2545 = vmatprep.subr.mxu0 0.0
        %2546 = vmatpush1.xpose.msra.mxu0 0.0
        %2547 = vmatprep.subr.mxu0 0.0
        %2548 = vmatpush1.xpose.msra.mxu0 0.0
        %2549 = vmatprep.subr.mxu0 0.0
        %2550 = vmatpush1.xpose.msra.mxu0 0.0
        %2551 = vmatprep.subr.mxu0 0.0
        %2552 = vmatpush1.xpose.msra.mxu0 0.0
        %2553 = vmatprep.subr.mxu0 0.0
        %2554 = vmatpush1.xpose.msra.mxu0 0.0
        %2555 = vmatprep.mubr.f32.mxu0 0.0
        %2556 = vmatmul.mubr.f32.gmra.mrb[0].mxu0 %v2459
        %v2557 = vpop.f32.mrb[0].mxu0
        %v2558 = vadd.f32 %v2419, %v2557
        %v2559 = vpop.f32.mrb[0].mxu0
        %2560 = vmatprep.mubr.f32.mxu0 0.0
        %2561 = vmatmul.mubr.f32.gmra.mrb[0].mxu0 %v2461
        %v2562 = vpop.f32.mrb[0].mxu0
        %v2563 = vadd.f32 %v2420, %v2562
        %v2564 = vpop.f32.mrb[0].mxu0
        %2565 = vmatprep.mubr.f32.mxu0 0.0
        %2566 = vmatmul.mubr.f32.gmra.mrb[0].mxu0 %v2463
        %v2567 = vpop.f32.mrb[0].mxu0
        %v2568 = vadd.f32 %v2421, %v2567
        %v2569 = vpop.f32.mrb[0].mxu0
        %2570 = vmatprep.mubr.f32.mxu0 0.0
        %2571 = vmatmul.mubr.f32.gmra.mrb[0].mxu0 %v2465
        %v2572 = vpop.f32.mrb[0].mxu0
        %v2573 = vadd.f32 %v2422, %v2572
        %v2574 = vpop.f32.mrb[0].mxu0
        %2575 = vmatprep.mubr.f32.mxu0 0.0
        %2576 = vmatmul.mubr.f32.gmra.mrb[0].mxu0 %v2467
        %v2577 = vpop.f32.mrb[0].mxu0
        %v2578 = vadd.f32 %v2423, %v2577
        %v2579 = vpop.f32.mrb[0].mxu0
        %2580 = vmatprep.mubr.f32.mxu0 0.0
        %2581 = vmatmul.mubr.f32.gmra.mrb[0].mxu0 %v2469
        %v2582 = vpop.f32.mrb[0].mxu0
        %v2583 = vadd.f32 %v2424, %v2582
        %v2584 = vpop.f32.mrb[0].mxu0
        %2585 = vmatprep.mubr.f32.mxu0 0.0
        %2586 = vmatmul.mubr.f32.gmra.mrb[0].mxu0 %v2471
        %v2587 = vpop.f32.mrb[0].mxu0
        %v2588 = vadd.f32 %v2425, %v2587
        %v2589 = vpop.f32.mrb[0].mxu0
        %2590 = vmatprep.mubr.f32.mxu0 0.0
        %2591 = vmatmul.mubr.f32.gmra.mrb[0].mxu0 %v2473
        %v2592 = vpop.f32.mrb[0].mxu0
        %v2593 = vadd.f32 %v2426, %v2592
        %v2594 = vpop.f32.mrb[0].mxu0
        %2595 = vdwg.mxu0
        %2596 = vrot.lane.b32.xlu0 %v904, 96
        %v2597 = vpop.permute.xlu0 %2596
        %2598 = vrot.lane.b32.xlu0 %v905, 96
        %v2599 = vpop.permute.xlu0 %2598
        %2600 = vrot.lane.b32.xlu0 %v906, 96
        %v2601 = vpop.permute.xlu0 %2600
        %2602 = vrot.lane.b32.xlu0 %v907, 96
        %v2603 = vpop.permute.xlu0 %2602
        %2604 = vrot.lane.b32.xlu0 %v908, 96
        %v2605 = vpop.permute.xlu0 %2604
        %2606 = vrot.lane.b32.xlu0 %v909, 96
        %v2607 = vpop.permute.xlu0 %2606
        %2608 = vrot.lane.b32.xlu0 %v910, 96
        %v2609 = vpop.permute.xlu0 %2608
        %2610 = vrot.lane.b32.xlu0 %v911, 96
        %v2611 = vpop.permute.xlu0 %2610
        %2612 = vrot.lane.b32.xlu0 %v531, 96
        %v2613 = vpop.permute.xlu0 %2612
        %2614 = vrot.lane.b32.xlu0 %v537, 96
        %v2615 = vpop.permute.xlu0 %2614
        %2616 = vrot.lane.b32.xlu0 %v543, 96
        %v2617 = vpop.permute.xlu0 %2616
        %2618 = vrot.lane.b32.xlu0 %v549, 96
        %v2619 = vpop.permute.xlu0 %2618
        %2620 = vrot.lane.b32.xlu0 %v555, 96
        %v2621 = vpop.permute.xlu0 %2620
        %2622 = vrot.lane.b32.xlu0 %v561, 96
        %v2623 = vpop.permute.xlu0 %2622
        %2624 = vrot.lane.b32.xlu0 %v567, 96
        %v2625 = vpop.permute.xlu0 %2624
        %2626 = vrot.lane.b32.xlu0 %v573, 96
        %v2627 = vpop.permute.xlu0 %2626
        %v2628 = vsel %vm936, %v2597, 0
        %v2630 = vsel %vm936, %v2599, 0
        %v2632 = vsel %vm936, %v2601, 0
        %v2634 = vsel %vm936, %v2603, 0
        %v2636 = vsel %vm936, %v2605, 0
        %v2638 = vsel %vm936, %v2607, 0
        %v2640 = vsel %vm936, %v2609, 0
        %v2642 = vsel %vm936, %v2611, 0
        %v2644 = vsel %vm936, %v2613, 0
        %v2646 = vsel %vm936, %v2615, 0
        %v2648 = vsel %vm936, %v2617, 0
        %v2650 = vsel %vm936, %v2619, 0
        %v2652 = vsel %vm936, %v2621, 0
        %v2654 = vsel %vm936, %v2623, 0
        %v2656 = vsel %vm936, %v2625, 0
        %v2658 = vsel %vm936, %v2627, 0
        %2660 = vmatprep.subr.mxu0 0.0
        %2661 = vmatpush1.xpose.msra.mxu0 %v2644
        %2662 = vmatprep.subr.mxu0 0.0
        %2663 = vmatpush1.xpose.msra.mxu0 %v2646
        %2664 = vmatprep.subr.mxu0 0.0
        %2665 = vmatpush1.xpose.msra.mxu0 %v2648
        %2666 = vmatprep.subr.mxu0 0.0
        %2667 = vmatpush1.xpose.msra.mxu0 %v2650
        %2668 = vmatprep.subr.mxu0 0.0
        %2669 = vmatpush1.xpose.msra.mxu0 %v2652
        %2670 = vmatprep.subr.mxu0 0.0
        %2671 = vmatpush1.xpose.msra.mxu0 %v2654
        %2672 = vmatprep.subr.mxu0 0.0
        %2673 = vmatpush1.xpose.msra.mxu0 %v2656
        %2674 = vmatprep.subr.mxu0 0.0
        %2675 = vmatpush1.xpose.msra.mxu0 %v2658
        %2676 = vmatprep.subr.mxu0 0.0
        %2677 = vmatpush1.xpose.msra.mxu0 0.0
        %2678 = vmatprep.subr.mxu0 0.0
        %2679 = vmatpush1.xpose.msra.mxu0 0.0
        %2680 = vmatprep.subr.mxu0 0.0
        %2681 = vmatpush1.xpose.msra.mxu0 0.0
        %2682 = vmatprep.subr.mxu0 0.0
        %2683 = vmatpush1.xpose.msra.mxu0 0.0
        %2684 = vmatprep.subr.mxu0 0.0
        %2685 = vmatpush1.xpose.msra.mxu0 0.0
        %2686 = vmatprep.subr.mxu0 0.0
        %2687 = vmatpush1.xpose.msra.mxu0 0.0
        %2688 = vmatprep.subr.mxu0 0.0
        %2689 = vmatpush1.xpose.msra.mxu0 0.0
        %2690 = vmatprep.subr.mxu0 0.0
        %2691 = vmatpush1.xpose.msra.mxu0 0.0
        %2692 = vmatprep.subr.mxu0 0.0
        %2693 = vmatpush1.xpose.msra.mxu0 0.0
        %2694 = vmatprep.subr.mxu0 0.0
        %2695 = vmatpush1.xpose.msra.mxu0 0.0
        %2696 = vmatprep.subr.mxu0 0.0
        %2697 = vmatpush1.xpose.msra.mxu0 0.0
        %2698 = vmatprep.subr.mxu0 0.0
        %2699 = vmatpush1.xpose.msra.mxu0 0.0
        %2700 = vmatprep.subr.mxu0 0.0
        %2701 = vmatpush1.xpose.msra.mxu0 0.0
        %2702 = vmatprep.subr.mxu0 0.0
        %2703 = vmatpush1.xpose.msra.mxu0 0.0
        %2704 = vmatprep.subr.mxu0 0.0
        %2705 = vmatpush1.xpose.msra.mxu0 0.0
        %2706 = vmatprep.subr.mxu0 0.0
        %2707 = vmatpush1.xpose.msra.mxu0 0.0
        %2708 = vmatprep.subr.mxu0 0.0
        %2709 = vmatpush1.xpose.msra.mxu0 0.0
        %2710 = vmatprep.subr.mxu0 0.0
        %2711 = vmatpush1.xpose.msra.mxu0 0.0
        %2712 = vmatprep.subr.mxu0 0.0
        %2713 = vmatpush1.xpose.msra.mxu0 0.0
        %2714 = vmatprep.subr.mxu0 0.0
        %2715 = vmatpush1.xpose.msra.mxu0 0.0
        %2716 = vmatprep.subr.mxu0 0.0
        %2717 = vmatpush1.xpose.msra.mxu0 0.0
        %2718 = vmatprep.subr.mxu0 0.0
        %2719 = vmatpush1.xpose.msra.mxu0 0.0
        %2720 = vmatprep.subr.mxu0 0.0
        %2721 = vmatpush1.xpose.msra.mxu0 0.0
        %2722 = vmatprep.subr.mxu0 0.0
        %2723 = vmatpush1.xpose.msra.mxu0 0.0
        %2724 = vmatprep.mubr.f32.mxu0 0.0
        %2725 = vmatmul.mubr.f32.gmra.mrb[0].mxu0 %v2628
        %v2726 = vpop.f32.mrb[0].mxu0
        %v2727 = vadd.f32 %v2419, %v2726
        %v2728 = vpop.f32.mrb[0].mxu0
        %2729 = vmatprep.mubr.f32.mxu0 0.0
        %2730 = vmatmul.mubr.f32.gmra.mrb[0].mxu0 %v2630
        %v2731 = vpop.f32.mrb[0].mxu0
        %v2732 = vadd.f32 %v2420, %v2731
        %v2733 = vpop.f32.mrb[0].mxu0
        %2734 = vmatprep.mubr.f32.mxu0 0.0
        %2735 = vmatmul.mubr.f32.gmra.mrb[0].mxu0 %v2632
        %v2736 = vpop.f32.mrb[0].mxu0
        %v2737 = vadd.f32 %v2421, %v2736
        %v2738 = vpop.f32.mrb[0].mxu0
        %2739 = vmatprep.mubr.f32.mxu0 0.0
        %2740 = vmatmul.mubr.f32.gmra.mrb[0].mxu0 %v2634
        %v2741 = vpop.f32.mrb[0].mxu0
        %v2742 = vadd.f32 %v2422, %v2741
        %v2743 = vpop.f32.mrb[0].mxu0
        %2744 = vmatprep.mubr.f32.mxu0 0.0
        %2745 = vmatmul.mubr.f32.gmra.mrb[0].mxu0 %v2636
        %v2746 = vpop.f32.mrb[0].mxu0
        %v2747 = vadd.f32 %v2423, %v2746
        %v2748 = vpop.f32.mrb[0].mxu0
        %2749 = vmatprep.mubr.f32.mxu0 0.0
        %2750 = vmatmul.mubr.f32.gmra.mrb[0].mxu0 %v2638
        %v2751 = vpop.f32.mrb[0].mxu0
        %v2752 = vadd.f32 %v2424, %v2751
        %v2753 = vpop.f32.mrb[0].mxu0
        %2754 = vmatprep.mubr.f32.mxu0 0.0
        %2755 = vmatmul.mubr.f32.gmra.mrb[0].mxu0 %v2640
        %v2756 = vpop.f32.mrb[0].mxu0
        %v2757 = vadd.f32 %v2425, %v2756
        %v2758 = vpop.f32.mrb[0].mxu0
        %2759 = vmatprep.mubr.f32.mxu0 0.0
        %2760 = vmatmul.mubr.f32.gmra.mrb[0].mxu0 %v2642
        %v2761 = vpop.f32.mrb[0].mxu0
        %v2762 = vadd.f32 %v2426, %v2761
        %v2763 = vpop.f32.mrb[0].mxu0
        %2764 = vdwg.mxu0
        %2765 = vrot.lane.b32.xlu0 %v912, 96
        %v2766 = vpop.permute.xlu0 %2765
        %2767 = vrot.lane.b32.xlu0 %v913, 96
        %v2768 = vpop.permute.xlu0 %2767
        %2769 = vrot.lane.b32.xlu0 %v914, 96
        %v2770 = vpop.permute.xlu0 %2769
        %2771 = vrot.lane.b32.xlu0 %v915, 96
        %v2772 = vpop.permute.xlu0 %2771
        %2773 = vrot.lane.b32.xlu0 %v916, 96
        %v2774 = vpop.permute.xlu0 %2773
        %2775 = vrot.lane.b32.xlu0 %v917, 96
        %v2776 = vpop.permute.xlu0 %2775
        %2777 = vrot.lane.b32.xlu0 %v918, 96
        %v2778 = vpop.permute.xlu0 %2777
        %2779 = vrot.lane.b32.xlu0 %v919, 96
        %v2780 = vpop.permute.xlu0 %2779
        %2781 = vrot.lane.b32.xlu0 %v579, 96
        %v2782 = vpop.permute.xlu0 %2781
        %2783 = vrot.lane.b32.xlu0 %v585, 96
        %v2784 = vpop.permute.xlu0 %2783
        %2785 = vrot.lane.b32.xlu0 %v591, 96
        %v2786 = vpop.permute.xlu0 %2785
        %2787 = vrot.lane.b32.xlu0 %v597, 96
        %v2788 = vpop.permute.xlu0 %2787
        %2789 = vrot.lane.b32.xlu0 %v603, 96
        %v2790 = vpop.permute.xlu0 %2789
        %2791 = vrot.lane.b32.xlu0 %v609, 96
        %v2792 = vpop.permute.xlu0 %2791
        %2793 = vrot.lane.b32.xlu0 %v615, 96
        %v2794 = vpop.permute.xlu0 %2793
        %2795 = vrot.lane.b32.xlu0 %v621, 96
        %v2796 = vpop.permute.xlu0 %2795
        %v2797 = vsel %vm936, %v2766, 0
        %v2799 = vsel %vm936, %v2768, 0
        %v2801 = vsel %vm936, %v2770, 0
        %v2803 = vsel %vm936, %v2772, 0
        %v2805 = vsel %vm936, %v2774, 0
        %v2807 = vsel %vm936, %v2776, 0
        %v2809 = vsel %vm936, %v2778, 0
        %v2811 = vsel %vm936, %v2780, 0
        %v2813 = vsel %vm936, %v2782, 0
        %v2815 = vsel %vm936, %v2784, 0
        %v2817 = vsel %vm936, %v2786, 0
        %v2819 = vsel %vm936, %v2788, 0
        %v2821 = vsel %vm936, %v2790, 0
        %v2823 = vsel %vm936, %v2792, 0
        %v2825 = vsel %vm936, %v2794, 0
        %v2827 = vsel %vm936, %v2796, 0
        %2829 = vmatprep.subr.mxu0 0.0
        %2830 = vmatpush1.xpose.msra.mxu0 %v2813
        %2831 = vmatprep.subr.mxu0 0.0
        %2832 = vmatpush1.xpose.msra.mxu0 %v2815
        %2833 = vmatprep.subr.mxu0 0.0
        %2834 = vmatpush1.xpose.msra.mxu0 %v2817
        %2835 = vmatprep.subr.mxu0 0.0
        %2836 = vmatpush1.xpose.msra.mxu0 %v2819
        %2837 = vmatprep.subr.mxu0 0.0
        %2838 = vmatpush1.xpose.msra.mxu0 %v2821
        %2839 = vmatprep.subr.mxu0 0.0
        %2840 = vmatpush1.xpose.msra.mxu0 %v2823
        %2841 = vmatprep.subr.mxu0 0.0
        %2842 = vmatpush1.xpose.msra.mxu0 %v2825
        %2843 = vmatprep.subr.mxu0 0.0
        %2844 = vmatpush1.xpose.msra.mxu0 %v2827
        %2845 = vmatprep.subr.mxu0 0.0
        %2846 = vmatpush1.xpose.msra.mxu0 0.0
        %2847 = vmatprep.subr.mxu0 0.0
        %2848 = vmatpush1.xpose.msra.mxu0 0.0
        %2849 = vmatprep.subr.mxu0 0.0
        %2850 = vmatpush1.xpose.msra.mxu0 0.0
        %2851 = vmatprep.subr.mxu0 0.0
        %2852 = vmatpush1.xpose.msra.mxu0 0.0
        %2853 = vmatprep.subr.mxu0 0.0
        %2854 = vmatpush1.xpose.msra.mxu0 0.0
        %2855 = vmatprep.subr.mxu0 0.0
        %2856 = vmatpush1.xpose.msra.mxu0 0.0
        %2857 = vmatprep.subr.mxu0 0.0
        %2858 = vmatpush1.xpose.msra.mxu0 0.0
        %2859 = vmatprep.subr.mxu0 0.0
        %2860 = vmatpush1.xpose.msra.mxu0 0.0
        %2861 = vmatprep.subr.mxu0 0.0
        %2862 = vmatpush1.xpose.msra.mxu0 0.0
        %2863 = vmatprep.subr.mxu0 0.0
        %2864 = vmatpush1.xpose.msra.mxu0 0.0
        %2865 = vmatprep.subr.mxu0 0.0
        %2866 = vmatpush1.xpose.msra.mxu0 0.0
        %2867 = vmatprep.subr.mxu0 0.0
        %2868 = vmatpush1.xpose.msra.mxu0 0.0
        %2869 = vmatprep.subr.mxu0 0.0
        %2870 = vmatpush1.xpose.msra.mxu0 0.0
        %2871 = vmatprep.subr.mxu0 0.0
        %2872 = vmatpush1.xpose.msra.mxu0 0.0
        %2873 = vmatprep.subr.mxu0 0.0
        %2874 = vmatpush1.xpose.msra.mxu0 0.0
        %2875 = vmatprep.subr.mxu0 0.0
        %2876 = vmatpush1.xpose.msra.mxu0 0.0
        %2877 = vmatprep.subr.mxu0 0.0
        %2878 = vmatpush1.xpose.msra.mxu0 0.0
        %2879 = vmatprep.subr.mxu0 0.0
        %2880 = vmatpush1.xpose.msra.mxu0 0.0
        %2881 = vmatprep.subr.mxu0 0.0
        %2882 = vmatpush1.xpose.msra.mxu0 0.0
        %2883 = vmatprep.subr.mxu0 0.0
        %2884 = vmatpush1.xpose.msra.mxu0 0.0
        %2885 = vmatprep.subr.mxu0 0.0
        %2886 = vmatpush1.xpose.msra.mxu0 0.0
        %2887 = vmatprep.subr.mxu0 0.0
        %2888 = vmatpush1.xpose.msra.mxu0 0.0
        %2889 = vmatprep.subr.mxu0 0.0
        %2890 = vmatpush1.xpose.msra.mxu0 0.0
        %2891 = vmatprep.subr.mxu0 0.0
        %2892 = vmatpush1.xpose.msra.mxu0 0.0
        %2893 = vmatprep.mubr.f32.mxu0 0.0
        %2894 = vmatmul.mubr.f32.gmra.mrb[0].mxu0 %v2797
        %v2895 = vpop.f32.mrb[0].mxu0
        %v2896 = vadd.f32 %v2419, %v2895
        %v2897 = vpop.f32.mrb[0].mxu0
        %2898 = vmatprep.mubr.f32.mxu0 0.0
        %2899 = vmatmul.mubr.f32.gmra.mrb[0].mxu0 %v2799
        %v2900 = vpop.f32.mrb[0].mxu0
        %v2901 = vadd.f32 %v2420, %v2900
        %v2902 = vpop.f32.mrb[0].mxu0
        %2903 = vmatprep.mubr.f32.mxu0 0.0
        %2904 = vmatmul.mubr.f32.gmra.mrb[0].mxu0 %v2801
        %v2905 = vpop.f32.mrb[0].mxu0
        %v2906 = vadd.f32 %v2421, %v2905
        %v2907 = vpop.f32.mrb[0].mxu0
        %2908 = vmatprep.mubr.f32.mxu0 0.0
        %2909 = vmatmul.mubr.f32.gmra.mrb[0].mxu0 %v2803
        %v2910 = vpop.f32.mrb[0].mxu0
        %v2911 = vadd.f32 %v2422, %v2910
        %v2912 = vpop.f32.mrb[0].mxu0
        %2913 = vmatprep.mubr.f32.mxu0 0.0
        %2914 = vmatmul.mubr.f32.gmra.mrb[0].mxu0 %v2805
        %v2915 = vpop.f32.mrb[0].mxu0
        %v2916 = vadd.f32 %v2423, %v2915
        %v2917 = vpop.f32.mrb[0].mxu0
        %2918 = vmatprep.mubr.f32.mxu0 0.0
        %2919 = vmatmul.mubr.f32.gmra.mrb[0].mxu0 %v2807
        %v2920 = vpop.f32.mrb[0].mxu0
        %v2921 = vadd.f32 %v2424, %v2920
        %v2922 = vpop.f32.mrb[0].mxu0
        %2923 = vmatprep.mubr.f32.mxu0 0.0
        %2924 = vmatmul.mubr.f32.gmra.mrb[0].mxu0 %v2809
        %v2925 = vpop.f32.mrb[0].mxu0
        %v2926 = vadd.f32 %v2425, %v2925
        %v2927 = vpop.f32.mrb[0].mxu0
        %2928 = vmatprep.mubr.f32.mxu0 0.0
        %2929 = vmatmul.mubr.f32.gmra.mrb[0].mxu0 %v2811
        %v2930 = vpop.f32.mrb[0].mxu0
        %v2931 = vadd.f32 %v2426, %v2930
        %v2932 = vpop.f32.mrb[0].mxu0
        %2933 = vdwg.mxu0
        %2934 = vrot.lane.b32.xlu0 %v920, 96
        %v2935 = vpop.permute.xlu0 %2934
        %2936 = vrot.lane.b32.xlu0 %v921, 96
        %v2937 = vpop.permute.xlu0 %2936
        %2938 = vrot.lane.b32.xlu0 %v922, 96
        %v2939 = vpop.permute.xlu0 %2938
        %2940 = vrot.lane.b32.xlu0 %v923, 96
        %v2941 = vpop.permute.xlu0 %2940
        %2942 = vrot.lane.b32.xlu0 %v924, 96
        %v2943 = vpop.permute.xlu0 %2942
        %2944 = vrot.lane.b32.xlu0 %v925, 96
        %v2945 = vpop.permute.xlu0 %2944
        %2946 = vrot.lane.b32.xlu0 %v926, 96
        %v2947 = vpop.permute.xlu0 %2946
        %2948 = vrot.lane.b32.xlu0 %v927, 96
        %v2949 = vpop.permute.xlu0 %2948
        %2950 = vrot.lane.b32.xlu0 %v627, 96
        %v2951 = vpop.permute.xlu0 %2950
        %2952 = vrot.lane.b32.xlu0 %v633, 96
        %v2953 = vpop.permute.xlu0 %2952
        %2954 = vrot.lane.b32.xlu0 %v639, 96
        %v2955 = vpop.permute.xlu0 %2954
        %2956 = vrot.lane.b32.xlu0 %v645, 96
        %v2957 = vpop.permute.xlu0 %2956
        %2958 = vrot.lane.b32.xlu0 %v651, 96
        %v2959 = vpop.permute.xlu0 %2958
        %2960 = vrot.lane.b32.xlu0 %v657, 96
        %v2961 = vpop.permute.xlu0 %2960
        %2962 = vrot.lane.b32.xlu0 %v663, 96
        %v2963 = vpop.permute.xlu0 %2962
        %2964 = vrot.lane.b32.xlu0 %v669, 96
        %v2965 = vpop.permute.xlu0 %2964
        %v2966 = vsel %vm936, %v2935, 0
        %v2968 = vsel %vm936, %v2937, 0
        %v2970 = vsel %vm936, %v2939, 0
        %v2972 = vsel %vm936, %v2941, 0
        %v2974 = vsel %vm936, %v2943, 0
        %v2976 = vsel %vm936, %v2945, 0
        %v2978 = vsel %vm936, %v2947, 0
        %v2980 = vsel %vm936, %v2949, 0
        %v2982 = vsel %vm936, %v2951, 0
        %v2984 = vsel %vm936, %v2953, 0
        %v2986 = vsel %vm936, %v2955, 0
        %v2988 = vsel %vm936, %v2957, 0
        %v2990 = vsel %vm936, %v2959, 0
        %v2992 = vsel %vm936, %v2961, 0
        %v2994 = vsel %vm936, %v2963, 0
        %v2996 = vsel %vm936, %v2965, 0
        %2998 = vmatprep.subr.mxu0 0.0
        %2999 = vmatpush1.xpose.msra.mxu0 %v2982
        %3000 = vmatprep.subr.mxu0 0.0
        %3001 = vmatpush1.xpose.msra.mxu0 %v2984
        %3002 = vmatprep.subr.mxu0 0.0
        %3003 = vmatpush1.xpose.msra.mxu0 %v2986
        %3004 = vmatprep.subr.mxu0 0.0
        %3005 = vmatpush1.xpose.msra.mxu0 %v2988
        %3006 = vmatprep.subr.mxu0 0.0
        %3007 = vmatpush1.xpose.msra.mxu0 %v2990
        %3008 = vmatprep.subr.mxu0 0.0
        %3009 = vmatpush1.xpose.msra.mxu0 %v2992
        %3010 = vmatprep.subr.mxu0 0.0
        %3011 = vmatpush1.xpose.msra.mxu0 %v2994
        %3012 = vmatprep.subr.mxu0 0.0
        %3013 = vmatpush1.xpose.msra.mxu0 %v2996
        %3014 = vmatprep.subr.mxu0 0.0
        %3015 = vmatpush1.xpose.msra.mxu0 0.0
        %3016 = vmatprep.subr.mxu0 0.0
        %3017 = vmatpush1.xpose.msra.mxu0 0.0
        %3018 = vmatprep.subr.mxu0 0.0
        %3019 = vmatpush1.xpose.msra.mxu0 0.0
        %3020 = vmatprep.subr.mxu0 0.0
        %3021 = vmatpush1.xpose.msra.mxu0 0.0
        %3022 = vmatprep.subr.mxu0 0.0
        %3023 = vmatpush1.xpose.msra.mxu0 0.0
        %3024 = vmatprep.subr.mxu0 0.0
        %3025 = vmatpush1.xpose.msra.mxu0 0.0
        %3026 = vmatprep.subr.mxu0 0.0
        %3027 = vmatpush1.xpose.msra.mxu0 0.0
        %3028 = vmatprep.subr.mxu0 0.0
        %3029 = vmatpush1.xpose.msra.mxu0 0.0
        %3030 = vmatprep.subr.mxu0 0.0
        %3031 = vmatpush1.xpose.msra.mxu0 0.0
        %3032 = vmatprep.subr.mxu0 0.0
        %3033 = vmatpush1.xpose.msra.mxu0 0.0
        %3034 = vmatprep.subr.mxu0 0.0
        %3035 = vmatpush1.xpose.msra.mxu0 0.0
        %3036 = vmatprep.subr.mxu0 0.0
        %3037 = vmatpush1.xpose.msra.mxu0 0.0
        %3038 = vmatprep.subr.mxu0 0.0
        %3039 = vmatpush1.xpose.msra.mxu0 0.0
        %3040 = vmatprep.subr.mxu0 0.0
        %3041 = vmatpush1.xpose.msra.mxu0 0.0
        %3042 = vmatprep.subr.mxu0 0.0
        %3043 = vmatpush1.xpose.msra.mxu0 0.0
        %3044 = vmatprep.subr.mxu0 0.0
        %3045 = vmatpush1.xpose.msra.mxu0 0.0
        %3046 = vmatprep.subr.mxu0 0.0
        %3047 = vmatpush1.xpose.msra.mxu0 0.0
        %3048 = vmatprep.subr.mxu0 0.0
        %3049 = vmatpush1.xpose.msra.mxu0 0.0
        %3050 = vmatprep.subr.mxu0 0.0
        %3051 = vmatpush1.xpose.msra.mxu0 0.0
        %3052 = vmatprep.subr.mxu0 0.0
        %3053 = vmatpush1.xpose.msra.mxu0 0.0
        %3054 = vmatprep.subr.mxu0 0.0
        %3055 = vmatpush1.xpose.msra.mxu0 0.0
        %3056 = vmatprep.subr.mxu0 0.0
        %3057 = vmatpush1.xpose.msra.mxu0 0.0
        %3058 = vmatprep.subr.mxu0 0.0
        %3059 = vmatpush1.xpose.msra.mxu0 0.0
        %3060 = vmatprep.subr.mxu0 0.0
        %3061 = vmatpush1.xpose.msra.mxu0 0.0
        %3062 = vmatprep.mubr.f32.mxu0 0.0
        %3063 = vmatmul.mubr.f32.gmra.mrb[0].mxu0 %v2966
        %v3064 = vpop.f32.mrb[0].mxu0
        %v3065 = vadd.f32 %v2419, %v3064
        %v3066 = vpop.f32.mrb[0].mxu0
        %3067 = vmatprep.mubr.f32.mxu0 0.0
        %3068 = vmatmul.mubr.f32.gmra.mrb[0].mxu0 %v2968
        %v3069 = vpop.f32.mrb[0].mxu0
        %v3070 = vadd.f32 %v2420, %v3069
        %v3071 = vpop.f32.mrb[0].mxu0
        %3072 = vmatprep.mubr.f32.mxu0 0.0
        %3073 = vmatmul.mubr.f32.gmra.mrb[0].mxu0 %v2970
        %v3074 = vpop.f32.mrb[0].mxu0
        %v3075 = vadd.f32 %v2421, %v3074
        %v3076 = vpop.f32.mrb[0].mxu0
        %3077 = vmatprep.mubr.f32.mxu0 0.0
        %3078 = vmatmul.mubr.f32.gmra.mrb[0].mxu0 %v2972
        %v3079 = vpop.f32.mrb[0].mxu0
        %v3080 = vadd.f32 %v2422, %v3079
        %v3081 = vpop.f32.mrb[0].mxu0
        %3082 = vmatprep.mubr.f32.mxu0 0.0
        %3083 = vmatmul.mubr.f32.gmra.mrb[0].mxu0 %v2974
        %v3084 = vpop.f32.mrb[0].mxu0
        %v3085 = vadd.f32 %v2423, %v3084
        %v3086 = vpop.f32.mrb[0].mxu0
        %3087 = vmatprep.mubr.f32.mxu0 0.0
        %3088 = vmatmul.mubr.f32.gmra.mrb[0].mxu0 %v2976
        %v3089 = vpop.f32.mrb[0].mxu0
        %v3090 = vadd.f32 %v2424, %v3089
        %v3091 = vpop.f32.mrb[0].mxu0
        %3092 = vmatprep.mubr.f32.mxu0 0.0
        %3093 = vmatmul.mubr.f32.gmra.mrb[0].mxu0 %v2978
        %v3094 = vpop.f32.mrb[0].mxu0
        %v3095 = vadd.f32 %v2425, %v3094
        %v3096 = vpop.f32.mrb[0].mxu0
        %3097 = vmatprep.mubr.f32.mxu0 0.0
        %3098 = vmatmul.mubr.f32.gmra.mrb[0].mxu0 %v2980
        %v3099 = vpop.f32.mrb[0].mxu0
        %v3100 = vadd.f32 %v2426, %v3099
        %v3101 = vpop.f32.mrb[0].mxu0
        %3102 = vdwg.mxu0
        %v3103 = vsel %vm1549, %v2558, -inf
        %3104 = vmax.xlane.f32.xlu0 %v3103
        %v3105 = vpop.xlane.xlu0 %3104
        %v3106 = vsel %vm1549, %v2563, -inf
        %3107 = vmax.xlane.f32.xlu0 %v3106
        %v3108 = vpop.xlane.xlu0 %3107
        %v3109 = vsel %vm1549, %v2568, -inf
        %3110 = vmax.xlane.f32.xlu0 %v3109
        %v3111 = vpop.xlane.xlu0 %3110
        %v3112 = vsel %vm1549, %v2573, -inf
        %3113 = vmax.xlane.f32.xlu0 %v3112
        %v3114 = vpop.xlane.xlu0 %3113
        %v3115 = vsel %vm1549, %v2578, -inf
        %3116 = vmax.xlane.f32.xlu0 %v3115
        %v3117 = vpop.xlane.xlu0 %3116
        %v3118 = vsel %vm1549, %v2583, -inf
        %3119 = vmax.xlane.f32.xlu0 %v3118
        %v3120 = vpop.xlane.xlu0 %3119
        %v3121 = vsel %vm1549, %v2588, -inf
        %3122 = vmax.xlane.f32.xlu0 %v3121
        %v3123 = vpop.xlane.xlu0 %3122
        %v3124 = vsel %vm1549, %v2593, -inf
        %3125 = vmax.xlane.f32.xlu0 %v3124
        %v3126 = vpop.xlane.xlu0 %3125
        %v3127 = vsel %vm1549, %v2727, -inf
        %3128 = vmax.xlane.f32.xlu0 %v3127
        %v3129 = vpop.xlane.xlu0 %3128
        %v3130 = vsel %vm1549, %v2732, -inf
        %3131 = vmax.xlane.f32.xlu0 %v3130
        %v3132 = vpop.xlane.xlu0 %3131
        %v3133 = vsel %vm1549, %v2737, -inf
        %3134 = vmax.xlane.f32.xlu0 %v3133
        %v3135 = vpop.xlane.xlu0 %3134
        %v3136 = vsel %vm1549, %v2742, -inf
        %3137 = vmax.xlane.f32.xlu0 %v3136
        %v3138 = vpop.xlane.xlu0 %3137
        %v3139 = vsel %vm1549, %v2747, -inf
        %3140 = vmax.xlane.f32.xlu0 %v3139
        %v3141 = vpop.xlane.xlu0 %3140
        %v3142 = vsel %vm1549, %v2752, -inf
        %3143 = vmax.xlane.f32.xlu0 %v3142
        %v3144 = vpop.xlane.xlu0 %3143
        %v3145 = vsel %vm1549, %v2757, -inf
        %3146 = vmax.xlane.f32.xlu0 %v3145
        %v3147 = vpop.xlane.xlu0 %3146
        %v3148 = vsel %vm1549, %v2762, -inf
        %3149 = vmax.xlane.f32.xlu0 %v3148
        %v3150 = vpop.xlane.xlu0 %3149
        %v3151 = vsel %vm1549, %v2896, -inf
        %3152 = vmax.xlane.f32.xlu0 %v3151
        %v3153 = vpop.xlane.xlu0 %3152
        %v3154 = vsel %vm1549, %v2901, -inf
        %3155 = vmax.xlane.f32.xlu0 %v3154
        %v3156 = vpop.xlane.xlu0 %3155
        %v3157 = vsel %vm1549, %v2906, -inf
        %3158 = vmax.xlane.f32.xlu0 %v3157
        %v3159 = vpop.xlane.xlu0 %3158
        %v3160 = vsel %vm1549, %v2911, -inf
        %3161 = vmax.xlane.f32.xlu0 %v3160
        %v3162 = vpop.xlane.xlu0 %3161
        %v3163 = vsel %vm1549, %v2916, -inf
        %3164 = vmax.xlane.f32.xlu0 %v3163
        %v3165 = vpop.xlane.xlu0 %3164
        %v3166 = vsel %vm1549, %v2921, -inf
        %3167 = vmax.xlane.f32.xlu0 %v3166
        %v3168 = vpop.xlane.xlu0 %3167
        %v3169 = vsel %vm1549, %v2926, -inf
        %3170 = vmax.xlane.f32.xlu0 %v3169
        %v3171 = vpop.xlane.xlu0 %3170
        %v3172 = vsel %vm1549, %v2931, -inf
        %3173 = vmax.xlane.f32.xlu0 %v3172
        %v3174 = vpop.xlane.xlu0 %3173
        %v3175 = vsel %vm1549, %v3065, -inf
        %3176 = vmax.xlane.f32.xlu0 %v3175
        %v3177 = vpop.xlane.xlu0 %3176
        %v3178 = vsel %vm1549, %v3070, -inf
        %3179 = vmax.xlane.f32.xlu0 %v3178
        %v3180 = vpop.xlane.xlu0 %3179
        %v3181 = vsel %vm1549, %v3075, -inf
        %3182 = vmax.xlane.f32.xlu0 %v3181
        %v3183 = vpop.xlane.xlu0 %3182
        %v3184 = vsel %vm1549, %v3080, -inf
        %3185 = vmax.xlane.f32.xlu0 %v3184
        %v3186 = vpop.xlane.xlu0 %3185
        %v3187 = vsel %vm1549, %v3085, -inf
        %3188 = vmax.xlane.f32.xlu0 %v3187
        %v3189 = vpop.xlane.xlu0 %3188
        %v3190 = vsel %vm1549, %v3090, -inf
        %3191 = vmax.xlane.f32.xlu0 %v3190
        %v3192 = vpop.xlane.xlu0 %3191
        %v3193 = vsel %vm1549, %v3095, -inf
        %3194 = vmax.xlane.f32.xlu0 %v3193
        %v3195 = vpop.xlane.xlu0 %3194
        %v3196 = vsel %vm1549, %v3100, -inf
        %3197 = vmax.xlane.f32.xlu0 %v3196
        %v3198 = vpop.xlane.xlu0 %3197
        %v3199 = vsub.f32 %v2558, %v3105
        %v3200 = vsub.f32 %v2563, %v3108
        %v3201 = vsub.f32 %v2568, %v3111
        %v3202 = vsub.f32 %v2573, %v3114
        %v3203 = vsub.f32 %v2578, %v3117
        %v3204 = vsub.f32 %v2583, %v3120
        %v3205 = vsub.f32 %v2588, %v3123
        %v3206 = vsub.f32 %v2593, %v3126
        %v3207 = vsub.f32 %v2727, %v3129
        %v3208 = vsub.f32 %v2732, %v3132
        %v3209 = vsub.f32 %v2737, %v3135
        %v3210 = vsub.f32 %v2742, %v3138
        %v3211 = vsub.f32 %v2747, %v3141
        %v3212 = vsub.f32 %v2752, %v3144
        %v3213 = vsub.f32 %v2757, %v3147
        %v3214 = vsub.f32 %v2762, %v3150
        %v3215 = vsub.f32 %v2896, %v3153
        %v3216 = vsub.f32 %v2901, %v3156
        %v3217 = vsub.f32 %v2906, %v3159
        %v3218 = vsub.f32 %v2911, %v3162
        %v3219 = vsub.f32 %v2916, %v3165
        %v3220 = vsub.f32 %v2921, %v3168
        %v3221 = vsub.f32 %v2926, %v3171
        %v3222 = vsub.f32 %v2931, %v3174
        %v3223 = vsub.f32 %v3065, %v3177
        %v3224 = vsub.f32 %v3070, %v3180
        %v3225 = vsub.f32 %v3075, %v3183
        %v3226 = vsub.f32 %v3080, %v3186
        %v3227 = vsub.f32 %v3085, %v3189
        %v3228 = vsub.f32 %v3090, %v3192
        %v3229 = vsub.f32 %v3095, %v3195
        %v3230 = vsub.f32 %v3100, %v3198
        %v3231 = vmul.f32 %v3199, 1.442695
        %v3232 = vpow.pop %v3231
        %v3233 = vmul.f32 %v3200, 1.442695
        %v3234 = vpow.pop %v3233
        %v3235 = vmul.f32 %v3201, 1.442695
        %v3236 = vpow.pop %v3235
        %v3237 = vmul.f32 %v3202, 1.442695
        %v3238 = vpow.pop %v3237
        %v3239 = vmul.f32 %v3203, 1.442695
        %v3240 = vpow.pop %v3239
        %v3241 = vmul.f32 %v3204, 1.442695
        %v3242 = vpow.pop %v3241
        %v3243 = vmul.f32 %v3205, 1.442695
        %v3244 = vpow.pop %v3243
        %v3245 = vmul.f32 %v3206, 1.442695
        %v3246 = vpow.pop %v3245
        %v3247 = vmul.f32 %v3207, 1.442695
        %v3248 = vpow.pop %v3247
        %v3249 = vmul.f32 %v3208, 1.442695
        %v3250 = vpow.pop %v3249
        %v3251 = vmul.f32 %v3209, 1.442695
        %v3252 = vpow.pop %v3251
        %v3253 = vmul.f32 %v3210, 1.442695
        %v3254 = vpow.pop %v3253
        %v3255 = vmul.f32 %v3211, 1.442695
        %v3256 = vpow.pop %v3255
        %v3257 = vmul.f32 %v3212, 1.442695
        %v3258 = vpow.pop %v3257
        %v3259 = vmul.f32 %v3213, 1.442695
        %v3260 = vpow.pop %v3259
        %v3261 = vmul.f32 %v3214, 1.442695
        %v3262 = vpow.pop %v3261
        %v3263 = vmul.f32 %v3215, 1.442695
        %v3264 = vpow.pop %v3263
        %v3265 = vmul.f32 %v3216, 1.442695
        %v3266 = vpow.pop %v3265
        %v3267 = vmul.f32 %v3217, 1.442695
        %v3268 = vpow.pop %v3267
        %v3269 = vmul.f32 %v3218, 1.442695
        %v3270 = vpow.pop %v3269
        %v3271 = vmul.f32 %v3219, 1.442695
        %v3272 = vpow.pop %v3271
        %v3273 = vmul.f32 %v3220, 1.442695
        %v3274 = vpow.pop %v3273
        %v3275 = vmul.f32 %v3221, 1.442695
        %v3276 = vpow.pop %v3275
        %v3277 = vmul.f32 %v3222, 1.442695
        %v3278 = vpow.pop %v3277
        %v3279 = vmul.f32 %v3223, 1.442695
        %v3280 = vpow.pop %v3279
        %v3281 = vmul.f32 %v3224, 1.442695
        %v3282 = vpow.pop %v3281
        %v3283 = vmul.f32 %v3225, 1.442695
        %v3284 = vpow.pop %v3283
        %v3285 = vmul.f32 %v3226, 1.442695
        %v3286 = vpow.pop %v3285
        %v3287 = vmul.f32 %v3227, 1.442695
        %v3288 = vpow.pop %v3287
        %v3289 = vmul.f32 %v3228, 1.442695
        %v3290 = vpow.pop %v3289
        %v3291 = vmul.f32 %v3229, 1.442695
        %v3292 = vpow.pop %v3291
        %v3293 = vmul.f32 %v3230, 1.442695
        %v3294 = vpow.pop %v3293
        %v3295 = vsel %vm1549, %v3232, 0.0
        %3296 = vadd.xlane.f32.xlu0 %v3295
        %v3297 = vpop.xlane.xlu0 %3296
        %v3298 = vsel %vm1549, %v3234, 0.0
        %3299 = vadd.xlane.f32.xlu0 %v3298
        %v3300 = vpop.xlane.xlu0 %3299
        %v3301 = vsel %vm1549, %v3236, 0.0
        %3302 = vadd.xlane.f32.xlu0 %v3301
        %v3303 = vpop.xlane.xlu0 %3302
        %v3304 = vsel %vm1549, %v3238, 0.0
        %3305 = vadd.xlane.f32.xlu0 %v3304
        %v3306 = vpop.xlane.xlu0 %3305
        %v3307 = vsel %vm1549, %v3240, 0.0
        %3308 = vadd.xlane.f32.xlu0 %v3307
        %v3309 = vpop.xlane.xlu0 %3308
        %v3310 = vsel %vm1549, %v3242, 0.0
        %3311 = vadd.xlane.f32.xlu0 %v3310
        %v3312 = vpop.xlane.xlu0 %3311
        %v3313 = vsel %vm1549, %v3244, 0.0
        %3314 = vadd.xlane.f32.xlu0 %v3313
        %v3315 = vpop.xlane.xlu0 %3314
        %v3316 = vsel %vm1549, %v3246, 0.0
        %3317 = vadd.xlane.f32.xlu0 %v3316
        %v3318 = vpop.xlane.xlu0 %3317
        %v3319 = vsel %vm1549, %v3248, 0.0
        %3320 = vadd.xlane.f32.xlu0 %v3319
        %v3321 = vpop.xlane.xlu0 %3320
        %v3322 = vsel %vm1549, %v3250, 0.0
        %3323 = vadd.xlane.f32.xlu0 %v3322
        %v3324 = vpop.xlane.xlu0 %3323
        %v3325 = vsel %vm1549, %v3252, 0.0
        %3326 = vadd.xlane.f32.xlu0 %v3325
        %v3327 = vpop.xlane.xlu0 %3326
        %v3328 = vsel %vm1549, %v3254, 0.0
        %3329 = vadd.xlane.f32.xlu0 %v3328
        %v3330 = vpop.xlane.xlu0 %3329
        %v3331 = vsel %vm1549, %v3256, 0.0
        %3332 = vadd.xlane.f32.xlu0 %v3331
        %v3333 = vpop.xlane.xlu0 %3332
        %v3334 = vsel %vm1549, %v3258, 0.0
        %3335 = vadd.xlane.f32.xlu0 %v3334
        %v3336 = vpop.xlane.xlu0 %3335
        %v3337 = vsel %vm1549, %v3260, 0.0
        %3338 = vadd.xlane.f32.xlu0 %v3337
        %v3339 = vpop.xlane.xlu0 %3338
        %v3340 = vsel %vm1549, %v3262, 0.0
        %3341 = vadd.xlane.f32.xlu0 %v3340
        %v3342 = vpop.xlane.xlu0 %3341
        %v3343 = vsel %vm1549, %v3264, 0.0
        %3344 = vadd.xlane.f32.xlu0 %v3343
        %v3345 = vpop.xlane.xlu0 %3344
        %v3346 = vsel %vm1549, %v3266, 0.0
        %3347 = vadd.xlane.f32.xlu0 %v3346
        %v3348 = vpop.xlane.xlu0 %3347
        %v3349 = vsel %vm1549, %v3268, 0.0
        %3350 = vadd.xlane.f32.xlu0 %v3349
        %v3351 = vpop.xlane.xlu0 %3350
        %v3352 = vsel %vm1549, %v3270, 0.0
        %3353 = vadd.xlane.f32.xlu0 %v3352
        %v3354 = vpop.xlane.xlu0 %3353
        %v3355 = vsel %vm1549, %v3272, 0.0
        %3356 = vadd.xlane.f32.xlu0 %v3355
        %v3357 = vpop.xlane.xlu0 %3356
        %v3358 = vsel %vm1549, %v3274, 0.0
        %3359 = vadd.xlane.f32.xlu0 %v3358
        %v3360 = vpop.xlane.xlu0 %3359
        %v3361 = vsel %vm1549, %v3276, 0.0
        %3362 = vadd.xlane.f32.xlu0 %v3361
        %v3363 = vpop.xlane.xlu0 %3362
        %v3364 = vsel %vm1549, %v3278, 0.0
        %3365 = vadd.xlane.f32.xlu0 %v3364
        %v3366 = vpop.xlane.xlu0 %3365
        %v3367 = vsel %vm1549, %v3280, 0.0
        %3368 = vadd.xlane.f32.xlu0 %v3367
        %v3369 = vpop.xlane.xlu0 %3368
        %v3370 = vsel %vm1549, %v3282, 0.0
        %3371 = vadd.xlane.f32.xlu0 %v3370
        %v3372 = vpop.xlane.xlu0 %3371
        %v3373 = vsel %vm1549, %v3284, 0.0
        %3374 = vadd.xlane.f32.xlu0 %v3373
        %v3375 = vpop.xlane.xlu0 %3374
        %v3376 = vsel %vm1549, %v3286, 0.0
        %3377 = vadd.xlane.f32.xlu0 %v3376
        %v3378 = vpop.xlane.xlu0 %3377
        %v3379 = vsel %vm1549, %v3288, 0.0
        %3380 = vadd.xlane.f32.xlu0 %v3379
        %v3381 = vpop.xlane.xlu0 %3380
        %v3382 = vsel %vm1549, %v3290, 0.0
        %3383 = vadd.xlane.f32.xlu0 %v3382
        %v3384 = vpop.xlane.xlu0 %3383
        %v3385 = vsel %vm1549, %v3292, 0.0
        %3386 = vadd.xlane.f32.xlu0 %v3385
        %v3387 = vpop.xlane.xlu0 %3386
        %v3388 = vsel %vm1549, %v3294, 0.0
        %3389 = vadd.xlane.f32.xlu0 %v3388
        %v3390 = vpop.xlane.xlu0 %3389
        %v3391 = vrcp.pop %v3297
        %v3392 = vrcp.pop %v3300
        %v3393 = vrcp.pop %v3303
        %v3394 = vrcp.pop %v3306
        %v3395 = vrcp.pop %v3309
        %v3396 = vrcp.pop %v3312
        %v3397 = vrcp.pop %v3315
        %v3398 = vrcp.pop %v3318
        %v3399 = vrcp.pop %v3321
        %v3400 = vrcp.pop %v3324
        %v3401 = vrcp.pop %v3327
        %v3402 = vrcp.pop %v3330
        %v3403 = vrcp.pop %v3333
        %v3404 = vrcp.pop %v3336
        %v3405 = vrcp.pop %v3339
        %v3406 = vrcp.pop %v3342
        %v3407 = vrcp.pop %v3345
        %v3408 = vrcp.pop %v3348
        %v3409 = vrcp.pop %v3351
        %v3410 = vrcp.pop %v3354
        %v3411 = vrcp.pop %v3357
        %v3412 = vrcp.pop %v3360
        %v3413 = vrcp.pop %v3363
        %v3414 = vrcp.pop %v3366
        %v3415 = vrcp.pop %v3369
        %v3416 = vrcp.pop %v3372
        %v3417 = vrcp.pop %v3375
        %v3418 = vrcp.pop %v3378
        %v3419 = vrcp.pop %v3381
        %v3420 = vrcp.pop %v3384
        %v3421 = vrcp.pop %v3387
        %v3422 = vrcp.pop %v3390
        %v3423 = vmul.f32 %v3232, %v3391
        %v3424 = vmul.f32 %v3234, %v3392
        %v3425 = vmul.f32 %v3236, %v3393
        %v3426 = vmul.f32 %v3238, %v3394
        %v3427 = vmul.f32 %v3240, %v3395
        %v3428 = vmul.f32 %v3242, %v3396
        %v3429 = vmul.f32 %v3244, %v3397
        %v3430 = vmul.f32 %v3246, %v3398
        %v3431 = vmul.f32 %v3248, %v3399
        %v3432 = vmul.f32 %v3250, %v3400
        %v3433 = vmul.f32 %v3252, %v3401
        %v3434 = vmul.f32 %v3254, %v3402
        %v3435 = vmul.f32 %v3256, %v3403
        %v3436 = vmul.f32 %v3258, %v3404
        %v3437 = vmul.f32 %v3260, %v3405
        %v3438 = vmul.f32 %v3262, %v3406
        %v3439 = vmul.f32 %v3264, %v3407
        %v3440 = vmul.f32 %v3266, %v3408
        %v3441 = vmul.f32 %v3268, %v3409
        %v3442 = vmul.f32 %v3270, %v3410
        %v3443 = vmul.f32 %v3272, %v3411
        %v3444 = vmul.f32 %v3274, %v3412
        %v3445 = vmul.f32 %v3276, %v3413
        %v3446 = vmul.f32 %v3278, %v3414
        %v3447 = vmul.f32 %v3280, %v3415
        %v3448 = vmul.f32 %v3282, %v3416
        %v3449 = vmul.f32 %v3284, %v3417
        %v3450 = vmul.f32 %v3286, %v3418
        %v3451 = vmul.f32 %v3288, %v3419
        %v3452 = vmul.f32 %v3290, %v3420
        %v3453 = vmul.f32 %v3292, %v3421
        %v3454 = vmul.f32 %v3294, %v3422
        %3463 = vrot.lane.b32.xlu0 %v738, 96
        %v3464 = vpop.permute.xlu0 %3463
        %3465 = vrot.lane.b32.xlu0 %v743, 96
        %v3466 = vpop.permute.xlu0 %3465
        %3467 = vrot.lane.b32.xlu0 %v748, 96
        %v3468 = vpop.permute.xlu0 %3467
        %3469 = vrot.lane.b32.xlu0 %v753, 96
        %v3470 = vpop.permute.xlu0 %3469
        %3471 = vrot.lane.b32.xlu0 %v758, 96
        %v3472 = vpop.permute.xlu0 %3471
        %3473 = vrot.lane.b32.xlu0 %v763, 96
        %v3474 = vpop.permute.xlu0 %3473
        %3475 = vrot.lane.b32.xlu0 %v768, 96
        %v3476 = vpop.permute.xlu0 %3475
        %3477 = vrot.lane.b32.xlu0 %v773, 96
        %v3478 = vpop.permute.xlu0 %3477
        %v3488 = vsel %vm1549, %v3423, 0
        %v3491 = vsel %vm1549, %v3424, 0
        %v3494 = vsel %vm1549, %v3425, 0
        %v3497 = vsel %vm1549, %v3426, 0
        %v3500 = vsel %vm1549, %v3427, 0
        %v3503 = vsel %vm1549, %v3428, 0
        %v3506 = vsel %vm1549, %v3429, 0
        %v3509 = vsel %vm1549, %v3430, 0
        %3511 = vmatprep.subr.mxu0 0.0
        %3512 = vmatpush1.msra.mxu0 %v3464
        %3513 = vmatprep.subr.mxu0 0.0
        %3514 = vmatpush1.msra.mxu0 %v3466
        %3515 = vmatprep.subr.mxu0 0.0
        %3516 = vmatpush1.msra.mxu0 %v3468
        %3517 = vmatprep.subr.mxu0 0.0
        %3518 = vmatpush1.msra.mxu0 %v3470
        %3519 = vmatprep.subr.mxu0 0.0
        %3520 = vmatpush1.msra.mxu0 %v3472
        %3521 = vmatprep.subr.mxu0 0.0
        %3522 = vmatpush1.msra.mxu0 %v3474
        %3523 = vmatprep.subr.mxu0 0.0
        %3524 = vmatpush1.msra.mxu0 %v3476
        %3525 = vmatprep.subr.mxu0 0.0
        %3526 = vmatpush1.msra.mxu0 %v3478
        %3527 = vmatprep.subr.mxu0 0.0
        %3528 = vmatpush1.msra.mxu0 0.0
        %3529 = vmatprep.subr.mxu0 0.0
        %3530 = vmatpush1.msra.mxu0 0.0
        %3531 = vmatprep.subr.mxu0 0.0
        %3532 = vmatpush1.msra.mxu0 0.0
        %3533 = vmatprep.subr.mxu0 0.0
        %3534 = vmatpush1.msra.mxu0 0.0
        %3535 = vmatprep.subr.mxu0 0.0
        %3536 = vmatpush1.msra.mxu0 0.0
        %3537 = vmatprep.subr.mxu0 0.0
        %3538 = vmatpush1.msra.mxu0 0.0
        %3539 = vmatprep.subr.mxu0 0.0
        %3540 = vmatpush1.msra.mxu0 0.0
        %3541 = vmatprep.subr.mxu0 0.0
        %3542 = vmatpush1.msra.mxu0 0.0
        %3543 = vmatprep.subr.mxu0 0.0
        %3544 = vmatpush1.msra.mxu0 0.0
        %3545 = vmatprep.subr.mxu0 0.0
        %3546 = vmatpush1.msra.mxu0 0.0
        %3547 = vmatprep.subr.mxu0 0.0
        %3548 = vmatpush1.msra.mxu0 0.0
        %3549 = vmatprep.subr.mxu0 0.0
        %3550 = vmatpush1.msra.mxu0 0.0
        %3551 = vmatprep.subr.mxu0 0.0
        %3552 = vmatpush1.msra.mxu0 0.0
        %3553 = vmatprep.subr.mxu0 0.0
        %3554 = vmatpush1.msra.mxu0 0.0
        %3555 = vmatprep.subr.mxu0 0.0
        %3556 = vmatpush1.msra.mxu0 0.0
        %3557 = vmatprep.subr.mxu0 0.0
        %3558 = vmatpush1.msra.mxu0 0.0
        %3559 = vmatprep.subr.mxu0 0.0
        %3560 = vmatpush1.msra.mxu0 0.0
        %3561 = vmatprep.subr.mxu0 0.0
        %3562 = vmatpush1.msra.mxu0 0.0
        %3563 = vmatprep.subr.mxu0 0.0
        %3564 = vmatpush1.msra.mxu0 0.0
        %3565 = vmatprep.subr.mxu0 0.0
        %3566 = vmatpush1.msra.mxu0 0.0
        %3567 = vmatprep.subr.mxu0 0.0
        %3568 = vmatpush1.msra.mxu0 0.0
        %3569 = vmatprep.subr.mxu0 0.0
        %3570 = vmatpush1.msra.mxu0 0.0
        %3571 = vmatprep.subr.mxu0 0.0
        %3572 = vmatpush1.msra.mxu0 0.0
        %3573 = vmatprep.subr.mxu0 0.0
        %3574 = vmatpush1.msra.mxu0 0.0
        %3575 = vmatprep.mubr.f32.mxu0 0.0
        %3576 = vmatmul.mubr.f32.gmra.mrb[0].mxu0 %v3488
        %v3577 = vpop.f32.mrb[0].mxu0
        %v3578 = vadd.f32 0.0, %v3577
        %v3579 = vpop.f32.mrb[0].mxu0
        %3580 = vmatprep.mubr.f32.mxu0 0.0
        %3581 = vmatmul.mubr.f32.gmra.mrb[0].mxu0 %v3491
        %v3582 = vpop.f32.mrb[0].mxu0
        %v3583 = vadd.f32 0.0, %v3582
        %v3584 = vpop.f32.mrb[0].mxu0
        %3585 = vmatprep.mubr.f32.mxu0 0.0
        %3586 = vmatmul.mubr.f32.gmra.mrb[0].mxu0 %v3494
        %v3587 = vpop.f32.mrb[0].mxu0
        %v3588 = vadd.f32 0.0, %v3587
        %v3589 = vpop.f32.mrb[0].mxu0
        %3590 = vmatprep.mubr.f32.mxu0 0.0
        %3591 = vmatmul.mubr.f32.gmra.mrb[0].mxu0 %v3497
        %v3592 = vpop.f32.mrb[0].mxu0
        %v3593 = vadd.f32 0.0, %v3592
        %v3594 = vpop.f32.mrb[0].mxu0
        %3595 = vmatprep.mubr.f32.mxu0 0.0
        %3596 = vmatmul.mubr.f32.gmra.mrb[0].mxu0 %v3500
        %v3597 = vpop.f32.mrb[0].mxu0
        %v3598 = vadd.f32 0.0, %v3597
        %v3599 = vpop.f32.mrb[0].mxu0
        %3600 = vmatprep.mubr.f32.mxu0 0.0
        %3601 = vmatmul.mubr.f32.gmra.mrb[0].mxu0 %v3503
        %v3602 = vpop.f32.mrb[0].mxu0
        %v3603 = vadd.f32 0.0, %v3602
        %v3604 = vpop.f32.mrb[0].mxu0
        %3605 = vmatprep.mubr.f32.mxu0 0.0
        %3606 = vmatmul.mubr.f32.gmra.mrb[0].mxu0 %v3506
        %v3607 = vpop.f32.mrb[0].mxu0
        %v3608 = vadd.f32 0.0, %v3607
        %v3609 = vpop.f32.mrb[0].mxu0
        %3610 = vmatprep.mubr.f32.mxu0 0.0
        %3611 = vmatmul.mubr.f32.gmra.mrb[0].mxu0 %v3509
        %v3612 = vpop.f32.mrb[0].mxu0
        %v3613 = vadd.f32 0.0, %v3612
        %v3614 = vpop.f32.mrb[0].mxu0
        %3615 = vdwg.mxu0
        %3624 = vrot.lane.b32.xlu0 %v778, 96
        %v3625 = vpop.permute.xlu0 %3624
        %3626 = vrot.lane.b32.xlu0 %v783, 96
        %v3627 = vpop.permute.xlu0 %3626
        %3628 = vrot.lane.b32.xlu0 %v788, 96
        %v3629 = vpop.permute.xlu0 %3628
        %3630 = vrot.lane.b32.xlu0 %v793, 96
        %v3631 = vpop.permute.xlu0 %3630
        %3632 = vrot.lane.b32.xlu0 %v798, 96
        %v3633 = vpop.permute.xlu0 %3632
        %3634 = vrot.lane.b32.xlu0 %v803, 96
        %v3635 = vpop.permute.xlu0 %3634
        %3636 = vrot.lane.b32.xlu0 %v808, 96
        %v3637 = vpop.permute.xlu0 %3636
        %3638 = vrot.lane.b32.xlu0 %v813, 96
        %v3639 = vpop.permute.xlu0 %3638
        %v3649 = vsel %vm1549, %v3431, 0
        %v3652 = vsel %vm1549, %v3432, 0
        %v3655 = vsel %vm1549, %v3433, 0
        %v3658 = vsel %vm1549, %v3434, 0
        %v3661 = vsel %vm1549, %v3435, 0
        %v3664 = vsel %vm1549, %v3436, 0
        %v3667 = vsel %vm1549, %v3437, 0
        %v3670 = vsel %vm1549, %v3438, 0
        %3672 = vmatprep.subr.mxu0 0.0
        %3673 = vmatpush1.msra.mxu0 %v3625
        %3674 = vmatprep.subr.mxu0 0.0
        %3675 = vmatpush1.msra.mxu0 %v3627
        %3676 = vmatprep.subr.mxu0 0.0
        %3677 = vmatpush1.msra.mxu0 %v3629
        %3678 = vmatprep.subr.mxu0 0.0
        %3679 = vmatpush1.msra.mxu0 %v3631
        %3680 = vmatprep.subr.mxu0 0.0
        %3681 = vmatpush1.msra.mxu0 %v3633
        %3682 = vmatprep.subr.mxu0 0.0
        %3683 = vmatpush1.msra.mxu0 %v3635
        %3684 = vmatprep.subr.mxu0 0.0
        %3685 = vmatpush1.msra.mxu0 %v3637
        %3686 = vmatprep.subr.mxu0 0.0
        %3687 = vmatpush1.msra.mxu0 %v3639
        %3688 = vmatprep.subr.mxu0 0.0
        %3689 = vmatpush1.msra.mxu0 0.0
        %3690 = vmatprep.subr.mxu0 0.0
        %3691 = vmatpush1.msra.mxu0 0.0
        %3692 = vmatprep.subr.mxu0 0.0
        %3693 = vmatpush1.msra.mxu0 0.0
        %3694 = vmatprep.subr.mxu0 0.0
        %3695 = vmatpush1.msra.mxu0 0.0
        %3696 = vmatprep.subr.mxu0 0.0
        %3697 = vmatpush1.msra.mxu0 0.0
        %3698 = vmatprep.subr.mxu0 0.0
        %3699 = vmatpush1.msra.mxu0 0.0
        %3700 = vmatprep.subr.mxu0 0.0
        %3701 = vmatpush1.msra.mxu0 0.0
        %3702 = vmatprep.subr.mxu0 0.0
        %3703 = vmatpush1.msra.mxu0 0.0
        %3704 = vmatprep.subr.mxu0 0.0
        %3705 = vmatpush1.msra.mxu0 0.0
        %3706 = vmatprep.subr.mxu0 0.0
        %3707 = vmatpush1.msra.mxu0 0.0
        %3708 = vmatprep.subr.mxu0 0.0
        %3709 = vmatpush1.msra.mxu0 0.0
        %3710 = vmatprep.subr.mxu0 0.0
        %3711 = vmatpush1.msra.mxu0 0.0
        %3712 = vmatprep.subr.mxu0 0.0
        %3713 = vmatpush1.msra.mxu0 0.0
        %3714 = vmatprep.subr.mxu0 0.0
        %3715 = vmatpush1.msra.mxu0 0.0
        %3716 = vmatprep.subr.mxu0 0.0
        %3717 = vmatpush1.msra.mxu0 0.0
        %3718 = vmatprep.subr.mxu0 0.0
        %3719 = vmatpush1.msra.mxu0 0.0
        %3720 = vmatprep.subr.mxu0 0.0
        %3721 = vmatpush1.msra.mxu0 0.0
        %3722 = vmatprep.subr.mxu0 0.0
        %3723 = vmatpush1.msra.mxu0 0.0
        %3724 = vmatprep.subr.mxu0 0.0
        %3725 = vmatpush1.msra.mxu0 0.0
        %3726 = vmatprep.subr.mxu0 0.0
        %3727 = vmatpush1.msra.mxu0 0.0
        %3728 = vmatprep.subr.mxu0 0.0
        %3729 = vmatpush1.msra.mxu0 0.0
        %3730 = vmatprep.subr.mxu0 0.0
        %3731 = vmatpush1.msra.mxu0 0.0
        %3732 = vmatprep.subr.mxu0 0.0
        %3733 = vmatpush1.msra.mxu0 0.0
        %3734 = vmatprep.subr.mxu0 0.0
        %3735 = vmatpush1.msra.mxu0 0.0
        %3736 = vmatprep.mubr.f32.mxu0 0.0
        %3737 = vmatmul.mubr.f32.gmra.mrb[0].mxu0 %v3649
        %v3738 = vpop.f32.mrb[0].mxu0
        %v3739 = vadd.f32 0.0, %v3738
        %v3740 = vpop.f32.mrb[0].mxu0
        %3741 = vmatprep.mubr.f32.mxu0 0.0
        %3742 = vmatmul.mubr.f32.gmra.mrb[0].mxu0 %v3652
        %v3743 = vpop.f32.mrb[0].mxu0
        %v3744 = vadd.f32 0.0, %v3743
        %v3745 = vpop.f32.mrb[0].mxu0
        %3746 = vmatprep.mubr.f32.mxu0 0.0
        %3747 = vmatmul.mubr.f32.gmra.mrb[0].mxu0 %v3655
        %v3748 = vpop.f32.mrb[0].mxu0
        %v3749 = vadd.f32 0.0, %v3748
        %v3750 = vpop.f32.mrb[0].mxu0
        %3751 = vmatprep.mubr.f32.mxu0 0.0
        %3752 = vmatmul.mubr.f32.gmra.mrb[0].mxu0 %v3658
        %v3753 = vpop.f32.mrb[0].mxu0
        %v3754 = vadd.f32 0.0, %v3753
        %v3755 = vpop.f32.mrb[0].mxu0
        %3756 = vmatprep.mubr.f32.mxu0 0.0
        %3757 = vmatmul.mubr.f32.gmra.mrb[0].mxu0 %v3661
        %v3758 = vpop.f32.mrb[0].mxu0
        %v3759 = vadd.f32 0.0, %v3758
        %v3760 = vpop.f32.mrb[0].mxu0
        %3761 = vmatprep.mubr.f32.mxu0 0.0
        %3762 = vmatmul.mubr.f32.gmra.mrb[0].mxu0 %v3664
        %v3763 = vpop.f32.mrb[0].mxu0
        %v3764 = vadd.f32 0.0, %v3763
        %v3765 = vpop.f32.mrb[0].mxu0
        %3766 = vmatprep.mubr.f32.mxu0 0.0
        %3767 = vmatmul.mubr.f32.gmra.mrb[0].mxu0 %v3667
        %v3768 = vpop.f32.mrb[0].mxu0
        %v3769 = vadd.f32 0.0, %v3768
        %v3770 = vpop.f32.mrb[0].mxu0
        %3771 = vmatprep.mubr.f32.mxu0 0.0
        %3772 = vmatmul.mubr.f32.gmra.mrb[0].mxu0 %v3670
        %v3773 = vpop.f32.mrb[0].mxu0
        %v3774 = vadd.f32 0.0, %v3773
        %v3775 = vpop.f32.mrb[0].mxu0
        %3776 = vdwg.mxu0
        %3785 = vrot.lane.b32.xlu0 %v818, 96
        %v3786 = vpop.permute.xlu0 %3785
        %3787 = vrot.lane.b32.xlu0 %v823, 96
        %v3788 = vpop.permute.xlu0 %3787
        %3789 = vrot.lane.b32.xlu0 %v828, 96
        %v3790 = vpop.permute.xlu0 %3789
        %3791 = vrot.lane.b32.xlu0 %v833, 96
        %v3792 = vpop.permute.xlu0 %3791
        %3793 = vrot.lane.b32.xlu0 %v838, 96
        %v3794 = vpop.permute.xlu0 %3793
        %3795 = vrot.lane.b32.xlu0 %v843, 96
        %v3796 = vpop.permute.xlu0 %3795
        %3797 = vrot.lane.b32.xlu0 %v848, 96
        %v3798 = vpop.permute.xlu0 %3797
        %3799 = vrot.lane.b32.xlu0 %v853, 96
        %v3800 = vpop.permute.xlu0 %3799
        %v3810 = vsel %vm1549, %v3439, 0
        %v3813 = vsel %vm1549, %v3440, 0
        %v3816 = vsel %vm1549, %v3441, 0
        %v3819 = vsel %vm1549, %v3442, 0
        %v3822 = vsel %vm1549, %v3443, 0
        %v3825 = vsel %vm1549, %v3444, 0
        %v3828 = vsel %vm1549, %v3445, 0
        %v3831 = vsel %vm1549, %v3446, 0
        %3833 = vmatprep.subr.mxu0 0.0
        %3834 = vmatpush1.msra.mxu0 %v3786
        %3835 = vmatprep.subr.mxu0 0.0
        %3836 = vmatpush1.msra.mxu0 %v3788
        %3837 = vmatprep.subr.mxu0 0.0
        %3838 = vmatpush1.msra.mxu0 %v3790
        %3839 = vmatprep.subr.mxu0 0.0
        %3840 = vmatpush1.msra.mxu0 %v3792
        %3841 = vmatprep.subr.mxu0 0.0
        %3842 = vmatpush1.msra.mxu0 %v3794
        %3843 = vmatprep.subr.mxu0 0.0
        %3844 = vmatpush1.msra.mxu0 %v3796
        %3845 = vmatprep.subr.mxu0 0.0
        %3846 = vmatpush1.msra.mxu0 %v3798
        %3847 = vmatprep.subr.mxu0 0.0
        %3848 = vmatpush1.msra.mxu0 %v3800
        %3849 = vmatprep.subr.mxu0 0.0
        %3850 = vmatpush1.msra.mxu0 0.0
        %3851 = vmatprep.subr.mxu0 0.0
        %3852 = vmatpush1.msra.mxu0 0.0
        %3853 = vmatprep.subr.mxu0 0.0
        %3854 = vmatpush1.msra.mxu0 0.0
        %3855 = vmatprep.subr.mxu0 0.0
        %3856 = vmatpush1.msra.mxu0 0.0
        %3857 = vmatprep.subr.mxu0 0.0
        %3858 = vmatpush1.msra.mxu0 0.0
        %3859 = vmatprep.subr.mxu0 0.0
        %3860 = vmatpush1.msra.mxu0 0.0
        %3861 = vmatprep.subr.mxu0 0.0
        %3862 = vmatpush1.msra.mxu0 0.0
        %3863 = vmatprep.subr.mxu0 0.0
        %3864 = vmatpush1.msra.mxu0 0.0
        %3865 = vmatprep.subr.mxu0 0.0
        %3866 = vmatpush1.msra.mxu0 0.0
        %3867 = vmatprep.subr.mxu0 0.0
        %3868 = vmatpush1.msra.mxu0 0.0
        %3869 = vmatprep.subr.mxu0 0.0
        %3870 = vmatpush1.msra.mxu0 0.0
        %3871 = vmatprep.subr.mxu0 0.0
        %3872 = vmatpush1.msra.mxu0 0.0
        %3873 = vmatprep.subr.mxu0 0.0
        %3874 = vmatpush1.msra.mxu0 0.0
        %3875 = vmatprep.subr.mxu0 0.0
        %3876 = vmatpush1.msra.mxu0 0.0
        %3877 = vmatprep.subr.mxu0 0.0
        %3878 = vmatpush1.msra.mxu0 0.0
        %3879 = vmatprep.subr.mxu0 0.0
        %3880 = vmatpush1.msra.mxu0 0.0
        %3881 = vmatprep.subr.mxu0 0.0
        %3882 = vmatpush1.msra.mxu0 0.0
        %3883 = vmatprep.subr.mxu0 0.0
        %3884 = vmatpush1.msra.mxu0 0.0
        %3885 = vmatprep.subr.mxu0 0.0
        %3886 = vmatpush1.msra.mxu0 0.0
        %3887 = vmatprep.subr.mxu0 0.0
        %3888 = vmatpush1.msra.mxu0 0.0
        %3889 = vmatprep.subr.mxu0 0.0
        %3890 = vmatpush1.msra.mxu0 0.0
        %3891 = vmatprep.subr.mxu0 0.0
        %3892 = vmatpush1.msra.mxu0 0.0
        %3893 = vmatprep.subr.mxu0 0.0
        %3894 = vmatpush1.msra.mxu0 0.0
        %3895 = vmatprep.subr.mxu0 0.0
        %3896 = vmatpush1.msra.mxu0 0.0
        %3897 = vmatprep.mubr.f32.mxu0 0.0
        %3898 = vmatmul.mubr.f32.gmra.mrb[0].mxu0 %v3810
        %v3899 = vpop.f32.mrb[0].mxu0
        %v3900 = vadd.f32 0.0, %v3899
        %v3901 = vpop.f32.mrb[0].mxu0
        %3902 = vmatprep.mubr.f32.mxu0 0.0
        %3903 = vmatmul.mubr.f32.gmra.mrb[0].mxu0 %v3813
        %v3904 = vpop.f32.mrb[0].mxu0
        %v3905 = vadd.f32 0.0, %v3904
        %v3906 = vpop.f32.mrb[0].mxu0
        %3907 = vmatprep.mubr.f32.mxu0 0.0
        %3908 = vmatmul.mubr.f32.gmra.mrb[0].mxu0 %v3816
        %v3909 = vpop.f32.mrb[0].mxu0
        %v3910 = vadd.f32 0.0, %v3909
        %v3911 = vpop.f32.mrb[0].mxu0
        %3912 = vmatprep.mubr.f32.mxu0 0.0
        %3913 = vmatmul.mubr.f32.gmra.mrb[0].mxu0 %v3819
        %v3914 = vpop.f32.mrb[0].mxu0
        %v3915 = vadd.f32 0.0, %v3914
        %v3916 = vpop.f32.mrb[0].mxu0
        %3917 = vmatprep.mubr.f32.mxu0 0.0
        %3918 = vmatmul.mubr.f32.gmra.mrb[0].mxu0 %v3822
        %v3919 = vpop.f32.mrb[0].mxu0
        %v3920 = vadd.f32 0.0, %v3919
        %v3921 = vpop.f32.mrb[0].mxu0
        %3922 = vmatprep.mubr.f32.mxu0 0.0
        %3923 = vmatmul.mubr.f32.gmra.mrb[0].mxu0 %v3825
        %v3924 = vpop.f32.mrb[0].mxu0
        %v3925 = vadd.f32 0.0, %v3924
        %v3926 = vpop.f32.mrb[0].mxu0
        %3927 = vmatprep.mubr.f32.mxu0 0.0
        %3928 = vmatmul.mubr.f32.gmra.mrb[0].mxu0 %v3828
        %v3929 = vpop.f32.mrb[0].mxu0
        %v3930 = vadd.f32 0.0, %v3929
        %v3931 = vpop.f32.mrb[0].mxu0
        %3932 = vmatprep.mubr.f32.mxu0 0.0
        %3933 = vmatmul.mubr.f32.gmra.mrb[0].mxu0 %v3831
        %v3934 = vpop.f32.mrb[0].mxu0
        %v3935 = vadd.f32 0.0, %v3934
        %v3936 = vpop.f32.mrb[0].mxu0
        %3937 = vdwg.mxu0
        %3946 = vrot.lane.b32.xlu0 %v858, 96
        %v3947 = vpop.permute.xlu0 %3946
        %3948 = vrot.lane.b32.xlu0 %v863, 96
        %v3949 = vpop.permute.xlu0 %3948
        %3950 = vrot.lane.b32.xlu0 %v868, 96
        %v3951 = vpop.permute.xlu0 %3950
        %3952 = vrot.lane.b32.xlu0 %v873, 96
        %v3953 = vpop.permute.xlu0 %3952
        %3954 = vrot.lane.b32.xlu0 %v878, 96
        %v3955 = vpop.permute.xlu0 %3954
        %3956 = vrot.lane.b32.xlu0 %v883, 96
        %v3957 = vpop.permute.xlu0 %3956
        %3958 = vrot.lane.b32.xlu0 %v888, 96
        %v3959 = vpop.permute.xlu0 %3958
        %3960 = vrot.lane.b32.xlu0 %v893, 96
        %v3961 = vpop.permute.xlu0 %3960
        %v3971 = vsel %vm1549, %v3447, 0
        %v3974 = vsel %vm1549, %v3448, 0
        %v3977 = vsel %vm1549, %v3449, 0
        %v3980 = vsel %vm1549, %v3450, 0
        %v3983 = vsel %vm1549, %v3451, 0
        %v3986 = vsel %vm1549, %v3452, 0
        %v3989 = vsel %vm1549, %v3453, 0
        %v3992 = vsel %vm1549, %v3454, 0
        %3994 = vmatprep.subr.mxu0 0.0
        %3995 = vmatpush1.msra.mxu0 %v3947
        %3996 = vmatprep.subr.mxu0 0.0
        %3997 = vmatpush1.msra.mxu0 %v3949
        %3998 = vmatprep.subr.mxu0 0.0
        %3999 = vmatpush1.msra.mxu0 %v3951
        %4000 = vmatprep.subr.mxu0 0.0
        %4001 = vmatpush1.msra.mxu0 %v3953
        %4002 = vmatprep.subr.mxu0 0.0
        %4003 = vmatpush1.msra.mxu0 %v3955
        %4004 = vmatprep.subr.mxu0 0.0
        %4005 = vmatpush1.msra.mxu0 %v3957
        %4006 = vmatprep.subr.mxu0 0.0
        %4007 = vmatpush1.msra.mxu0 %v3959
        %4008 = vmatprep.subr.mxu0 0.0
        %4009 = vmatpush1.msra.mxu0 %v3961
        %4010 = vmatprep.subr.mxu0 0.0
        %4011 = vmatpush1.msra.mxu0 0.0
        %4012 = vmatprep.subr.mxu0 0.0
        %4013 = vmatpush1.msra.mxu0 0.0
        %4014 = vmatprep.subr.mxu0 0.0
        %4015 = vmatpush1.msra.mxu0 0.0
        %4016 = vmatprep.subr.mxu0 0.0
        %4017 = vmatpush1.msra.mxu0 0.0
        %4018 = vmatprep.subr.mxu0 0.0
        %4019 = vmatpush1.msra.mxu0 0.0
        %4020 = vmatprep.subr.mxu0 0.0
        %4021 = vmatpush1.msra.mxu0 0.0
        %4022 = vmatprep.subr.mxu0 0.0
        %4023 = vmatpush1.msra.mxu0 0.0
        %4024 = vmatprep.subr.mxu0 0.0
        %4025 = vmatpush1.msra.mxu0 0.0
        %4026 = vmatprep.subr.mxu0 0.0
        %4027 = vmatpush1.msra.mxu0 0.0
        %4028 = vmatprep.subr.mxu0 0.0
        %4029 = vmatpush1.msra.mxu0 0.0
        %4030 = vmatprep.subr.mxu0 0.0
        %4031 = vmatpush1.msra.mxu0 0.0
        %4032 = vmatprep.subr.mxu0 0.0
        %4033 = vmatpush1.msra.mxu0 0.0
        %4034 = vmatprep.subr.mxu0 0.0
        %4035 = vmatpush1.msra.mxu0 0.0
        %4036 = vmatprep.subr.mxu0 0.0
        %4037 = vmatpush1.msra.mxu0 0.0
        %4038 = vmatprep.subr.mxu0 0.0
        %4039 = vmatpush1.msra.mxu0 0.0
        %4040 = vmatprep.subr.mxu0 0.0
        %4041 = vmatpush1.msra.mxu0 0.0
        %4042 = vmatprep.subr.mxu0 0.0
        %4043 = vmatpush1.msra.mxu0 0.0
        %4044 = vmatprep.subr.mxu0 0.0
        %4045 = vmatpush1.msra.mxu0 0.0
        %4046 = vmatprep.subr.mxu0 0.0
        %4047 = vmatpush1.msra.mxu0 0.0
        %4048 = vmatprep.subr.mxu0 0.0
        %4049 = vmatpush1.msra.mxu0 0.0
        %4050 = vmatprep.subr.mxu0 0.0
        %4051 = vmatpush1.msra.mxu0 0.0
        %4052 = vmatprep.subr.mxu0 0.0
        %4053 = vmatpush1.msra.mxu0 0.0
        %4054 = vmatprep.subr.mxu0 0.0
        %4055 = vmatpush1.msra.mxu0 0.0
        %4056 = vmatprep.subr.mxu0 0.0
        %4057 = vmatpush1.msra.mxu0 0.0
        %4058 = vmatprep.mubr.f32.mxu0 0.0
        %4059 = vmatmul.mubr.f32.gmra.mrb[0].mxu0 %v3971
        %v4060 = vpop.f32.mrb[0].mxu0
        %v4061 = vadd.f32 0.0, %v4060
        %v4062 = vpop.f32.mrb[0].mxu0
        %4063 = vmatprep.mubr.f32.mxu0 0.0
        %4064 = vmatmul.mubr.f32.gmra.mrb[0].mxu0 %v3974
        %v4065 = vpop.f32.mrb[0].mxu0
        %v4066 = vadd.f32 0.0, %v4065
        %v4067 = vpop.f32.mrb[0].mxu0
        %4068 = vmatprep.mubr.f32.mxu0 0.0
        %4069 = vmatmul.mubr.f32.gmra.mrb[0].mxu0 %v3977
        %v4070 = vpop.f32.mrb[0].mxu0
        %v4071 = vadd.f32 0.0, %v4070
        %v4072 = vpop.f32.mrb[0].mxu0
        %4073 = vmatprep.mubr.f32.mxu0 0.0
        %4074 = vmatmul.mubr.f32.gmra.mrb[0].mxu0 %v3980
        %v4075 = vpop.f32.mrb[0].mxu0
        %v4076 = vadd.f32 0.0, %v4075
        %v4077 = vpop.f32.mrb[0].mxu0
        %4078 = vmatprep.mubr.f32.mxu0 0.0
        %4079 = vmatmul.mubr.f32.gmra.mrb[0].mxu0 %v3983
        %v4080 = vpop.f32.mrb[0].mxu0
        %v4081 = vadd.f32 0.0, %v4080
        %v4082 = vpop.f32.mrb[0].mxu0
        %4083 = vmatprep.mubr.f32.mxu0 0.0
        %4084 = vmatmul.mubr.f32.gmra.mrb[0].mxu0 %v3986
        %v4085 = vpop.f32.mrb[0].mxu0
        %v4086 = vadd.f32 0.0, %v4085
        %v4087 = vpop.f32.mrb[0].mxu0
        %4088 = vmatprep.mubr.f32.mxu0 0.0
        %4089 = vmatmul.mubr.f32.gmra.mrb[0].mxu0 %v3989
        %v4090 = vpop.f32.mrb[0].mxu0
        %v4091 = vadd.f32 0.0, %v4090
        %v4092 = vpop.f32.mrb[0].mxu0
        %4093 = vmatprep.mubr.f32.mxu0 0.0
        %4094 = vmatmul.mubr.f32.gmra.mrb[0].mxu0 %v3992
        %v4095 = vpop.f32.mrb[0].mxu0
        %v4096 = vadd.f32 0.0, %v4095
        %v4097 = vpop.f32.mrb[0].mxu0
        %4098 = vdwg.mxu0
        %s4099 = scalar_lea.vmem [#allocation7], 128
        %v4100 = vld [vmem:[%s4099] sm:$0xff]
        %v4101 = vld [vmem:[%s4099 + $0x8] sm:$0xff]
        %v4102 = vld [vmem:[%s4099 + $0x10] sm:$0xff]
        %v4103 = vld [vmem:[%s4099 + $0x18] sm:$0xff]
        %v4104 = vld [vmem:[%s4099 + $0x20] sm:$0xff]
        %v4105 = vld [vmem:[%s4099 + $0x28] sm:$0xff]
        %v4106 = vld [vmem:[%s4099 + $0x30] sm:$0xff]
        %v4107 = vld [vmem:[%s4099 + $0x38] sm:$0xff]
        %4108 = vrot.lane.b32.xlu0 %v896, 64
        %v4109 = vpop.permute.xlu0 %4108
        %4110 = vrot.lane.b32.xlu0 %v897, 64
        %v4111 = vpop.permute.xlu0 %4110
        %4112 = vrot.lane.b32.xlu0 %v898, 64
        %v4113 = vpop.permute.xlu0 %4112
        %4114 = vrot.lane.b32.xlu0 %v899, 64
        %v4115 = vpop.permute.xlu0 %4114
        %4116 = vrot.lane.b32.xlu0 %v900, 64
        %v4117 = vpop.permute.xlu0 %4116
        %4118 = vrot.lane.b32.xlu0 %v901, 64
        %v4119 = vpop.permute.xlu0 %4118
        %4120 = vrot.lane.b32.xlu0 %v902, 64
        %v4121 = vpop.permute.xlu0 %4120
        %4122 = vrot.lane.b32.xlu0 %v903, 64
        %v4123 = vpop.permute.xlu0 %4122
        %4124 = vrot.lane.b32.xlu0 %v483, 64
        %v4125 = vpop.permute.xlu0 %4124
        %4126 = vrot.lane.b32.xlu0 %v489, 64
        %v4127 = vpop.permute.xlu0 %4126
        %4128 = vrot.lane.b32.xlu0 %v495, 64
        %v4129 = vpop.permute.xlu0 %4128
        %4130 = vrot.lane.b32.xlu0 %v501, 64
        %v4131 = vpop.permute.xlu0 %4130
        %4132 = vrot.lane.b32.xlu0 %v507, 64
        %v4133 = vpop.permute.xlu0 %4132
        %4134 = vrot.lane.b32.xlu0 %v513, 64
        %v4135 = vpop.permute.xlu0 %4134
        %4136 = vrot.lane.b32.xlu0 %v519, 64
        %v4137 = vpop.permute.xlu0 %4136
        %4138 = vrot.lane.b32.xlu0 %v525, 64
        %v4139 = vpop.permute.xlu0 %4138
        %v4140 = vsel %vm936, %v4109, 0
        %v4142 = vsel %vm936, %v4111, 0
        %v4144 = vsel %vm936, %v4113, 0
        %v4146 = vsel %vm936, %v4115, 0
        %v4148 = vsel %vm936, %v4117, 0
        %v4150 = vsel %vm936, %v4119, 0
        %v4152 = vsel %vm936, %v4121, 0
        %v4154 = vsel %vm936, %v4123, 0
        %v4156 = vsel %vm936, %v4125, 0
        %v4158 = vsel %vm936, %v4127, 0
        %v4160 = vsel %vm936, %v4129, 0
        %v4162 = vsel %vm936, %v4131, 0
        %v4164 = vsel %vm936, %v4133, 0
        %v4166 = vsel %vm936, %v4135, 0
        %v4168 = vsel %vm936, %v4137, 0
        %v4170 = vsel %vm936, %v4139, 0
        %4172 = vmatprep.subr.mxu0 0.0
        %4173 = vmatpush1.xpose.msra.mxu0 %v4156
        %4174 = vmatprep.subr.mxu0 0.0
        %4175 = vmatpush1.xpose.msra.mxu0 %v4158
        %4176 = vmatprep.subr.mxu0 0.0
        %4177 = vmatpush1.xpose.msra.mxu0 %v4160
        %4178 = vmatprep.subr.mxu0 0.0
        %4179 = vmatpush1.xpose.msra.mxu0 %v4162
        %4180 = vmatprep.subr.mxu0 0.0
        %4181 = vmatpush1.xpose.msra.mxu0 %v4164
        %4182 = vmatprep.subr.mxu0 0.0
        %4183 = vmatpush1.xpose.msra.mxu0 %v4166
        %4184 = vmatprep.subr.mxu0 0.0
        %4185 = vmatpush1.xpose.msra.mxu0 %v4168
        %4186 = vmatprep.subr.mxu0 0.0
        %4187 = vmatpush1.xpose.msra.mxu0 %v4170
        %4188 = vmatprep.subr.mxu0 0.0
        %4189 = vmatpush1.xpose.msra.mxu0 0.0
        %4190 = vmatprep.subr.mxu0 0.0
        %4191 = vmatpush1.xpose.msra.mxu0 0.0
        %4192 = vmatprep.subr.mxu0 0.0
        %4193 = vmatpush1.xpose.msra.mxu0 0.0
        %4194 = vmatprep.subr.mxu0 0.0
        %4195 = vmatpush1.xpose.msra.mxu0 0.0
        %4196 = vmatprep.subr.mxu0 0.0
        %4197 = vmatpush1.xpose.msra.mxu0 0.0
        %4198 = vmatprep.subr.mxu0 0.0
        %4199 = vmatpush1.xpose.msra.mxu0 0.0
        %4200 = vmatprep.subr.mxu0 0.0
        %4201 = vmatpush1.xpose.msra.mxu0 0.0
        %4202 = vmatprep.subr.mxu0 0.0
        %4203 = vmatpush1.xpose.msra.mxu0 0.0
        %4204 = vmatprep.subr.mxu0 0.0
        %4205 = vmatpush1.xpose.msra.mxu0 0.0
        %4206 = vmatprep.subr.mxu0 0.0
        %4207 = vmatpush1.xpose.msra.mxu0 0.0
        %4208 = vmatprep.subr.mxu0 0.0
        %4209 = vmatpush1.xpose.msra.mxu0 0.0
        %4210 = vmatprep.subr.mxu0 0.0
        %4211 = vmatpush1.xpose.msra.mxu0 0.0
        %4212 = vmatprep.subr.mxu0 0.0
        %4213 = vmatpush1.xpose.msra.mxu0 0.0
        %4214 = vmatprep.subr.mxu0 0.0
        %4215 = vmatpush1.xpose.msra.mxu0 0.0
        %4216 = vmatprep.subr.mxu0 0.0
        %4217 = vmatpush1.xpose.msra.mxu0 0.0
        %4218 = vmatprep.subr.mxu0 0.0
        %4219 = vmatpush1.xpose.msra.mxu0 0.0
        %4220 = vmatprep.subr.mxu0 0.0
        %4221 = vmatpush1.xpose.msra.mxu0 0.0
        %4222 = vmatprep.subr.mxu0 0.0
        %4223 = vmatpush1.xpose.msra.mxu0 0.0
        %4224 = vmatprep.subr.mxu0 0.0
        %4225 = vmatpush1.xpose.msra.mxu0 0.0
        %4226 = vmatprep.subr.mxu0 0.0
        %4227 = vmatpush1.xpose.msra.mxu0 0.0
        %4228 = vmatprep.subr.mxu0 0.0
        %4229 = vmatpush1.xpose.msra.mxu0 0.0
        %4230 = vmatprep.subr.mxu0 0.0
        %4231 = vmatpush1.xpose.msra.mxu0 0.0
        %4232 = vmatprep.subr.mxu0 0.0
        %4233 = vmatpush1.xpose.msra.mxu0 0.0
        %4234 = vmatprep.subr.mxu0 0.0
        %4235 = vmatpush1.xpose.msra.mxu0 0.0
        %4236 = vmatprep.mubr.f32.mxu0 0.0
        %4237 = vmatmul.mubr.f32.gmra.mrb[0].mxu0 %v4140
        %v4238 = vpop.f32.mrb[0].mxu0
        %v4239 = vadd.f32 %v4100, %v4238
        %v4240 = vpop.f32.mrb[0].mxu0
        %4241 = vmatprep.mubr.f32.mxu0 0.0
        %4242 = vmatmul.mubr.f32.gmra.mrb[0].mxu0 %v4142
        %v4243 = vpop.f32.mrb[0].mxu0
        %v4244 = vadd.f32 %v4101, %v4243
        %v4245 = vpop.f32.mrb[0].mxu0
        %4246 = vmatprep.mubr.f32.mxu0 0.0
        %4247 = vmatmul.mubr.f32.gmra.mrb[0].mxu0 %v4144
        %v4248 = vpop.f32.mrb[0].mxu0
        %v4249 = vadd.f32 %v4102, %v4248
        %v4250 = vpop.f32.mrb[0].mxu0
        %4251 = vmatprep.mubr.f32.mxu0 0.0
        %4252 = vmatmul.mubr.f32.gmra.mrb[0].mxu0 %v4146
        %v4253 = vpop.f32.mrb[0].mxu0
        %v4254 = vadd.f32 %v4103, %v4253
        %v4255 = vpop.f32.mrb[0].mxu0
        %4256 = vmatprep.mubr.f32.mxu0 0.0
        %4257 = vmatmul.mubr.f32.gmra.mrb[0].mxu0 %v4148
        %v4258 = vpop.f32.mrb[0].mxu0
        %v4259 = vadd.f32 %v4104, %v4258
        %v4260 = vpop.f32.mrb[0].mxu0
        %4261 = vmatprep.mubr.f32.mxu0 0.0
        %4262 = vmatmul.mubr.f32.gmra.mrb[0].mxu0 %v4150
        %v4263 = vpop.f32.mrb[0].mxu0
        %v4264 = vadd.f32 %v4105, %v4263
        %v4265 = vpop.f32.mrb[0].mxu0
        %4266 = vmatprep.mubr.f32.mxu0 0.0
        %4267 = vmatmul.mubr.f32.gmra.mrb[0].mxu0 %v4152
        %v4268 = vpop.f32.mrb[0].mxu0
        %v4269 = vadd.f32 %v4106, %v4268
        %v4270 = vpop.f32.mrb[0].mxu0
        %4271 = vmatprep.mubr.f32.mxu0 0.0
        %4272 = vmatmul.mubr.f32.gmra.mrb[0].mxu0 %v4154
        %v4273 = vpop.f32.mrb[0].mxu0
        %v4274 = vadd.f32 %v4107, %v4273
        %v4275 = vpop.f32.mrb[0].mxu0
        %4276 = vdwg.mxu0
        %4277 = vrot.lane.b32.xlu0 %v904, 64
        %v4278 = vpop.permute.xlu0 %4277
        %4279 = vrot.lane.b32.xlu0 %v905, 64
        %v4280 = vpop.permute.xlu0 %4279
        %4281 = vrot.lane.b32.xlu0 %v906, 64
        %v4282 = vpop.permute.xlu0 %4281
        %4283 = vrot.lane.b32.xlu0 %v907, 64
        %v4284 = vpop.permute.xlu0 %4283
        %4285 = vrot.lane.b32.xlu0 %v908, 64
        %v4286 = vpop.permute.xlu0 %4285
        %4287 = vrot.lane.b32.xlu0 %v909, 64
        %v4288 = vpop.permute.xlu0 %4287
        %4289 = vrot.lane.b32.xlu0 %v910, 64
        %v4290 = vpop.permute.xlu0 %4289
        %4291 = vrot.lane.b32.xlu0 %v911, 64
        %v4292 = vpop.permute.xlu0 %4291
        %4293 = vrot.lane.b32.xlu0 %v531, 64
        %v4294 = vpop.permute.xlu0 %4293
        %4295 = vrot.lane.b32.xlu0 %v537, 64
        %v4296 = vpop.permute.xlu0 %4295
        %4297 = vrot.lane.b32.xlu0 %v543, 64
        %v4298 = vpop.permute.xlu0 %4297
        %4299 = vrot.lane.b32.xlu0 %v549, 64
        %v4300 = vpop.permute.xlu0 %4299
        %4301 = vrot.lane.b32.xlu0 %v555, 64
        %v4302 = vpop.permute.xlu0 %4301
        %4303 = vrot.lane.b32.xlu0 %v561, 64
        %v4304 = vpop.permute.xlu0 %4303
        %4305 = vrot.lane.b32.xlu0 %v567, 64
        %v4306 = vpop.permute.xlu0 %4305
        %4307 = vrot.lane.b32.xlu0 %v573, 64
        %v4308 = vpop.permute.xlu0 %4307
        %v4309 = vsel %vm936, %v4278, 0
        %v4311 = vsel %vm936, %v4280, 0
        %v4313 = vsel %vm936, %v4282, 0
        %v4315 = vsel %vm936, %v4284, 0
        %v4317 = vsel %vm936, %v4286, 0
        %v4319 = vsel %vm936, %v4288, 0
        %v4321 = vsel %vm936, %v4290, 0
        %v4323 = vsel %vm936, %v4292, 0
        %v4325 = vsel %vm936, %v4294, 0
        %v4327 = vsel %vm936, %v4296, 0
        %v4329 = vsel %vm936, %v4298, 0
        %v4331 = vsel %vm936, %v4300, 0
        %v4333 = vsel %vm936, %v4302, 0
        %v4335 = vsel %vm936, %v4304, 0
        %v4337 = vsel %vm936, %v4306, 0
        %v4339 = vsel %vm936, %v4308, 0
        %4341 = vmatprep.subr.mxu0 0.0
        %4342 = vmatpush1.xpose.msra.mxu0 %v4325
        %4343 = vmatprep.subr.mxu0 0.0
        %4344 = vmatpush1.xpose.msra.mxu0 %v4327
        %4345 = vmatprep.subr.mxu0 0.0
        %4346 = vmatpush1.xpose.msra.mxu0 %v4329
        %4347 = vmatprep.subr.mxu0 0.0
        %4348 = vmatpush1.xpose.msra.mxu0 %v4331
        %4349 = vmatprep.subr.mxu0 0.0
        %4350 = vmatpush1.xpose.msra.mxu0 %v4333
        %4351 = vmatprep.subr.mxu0 0.0
        %4352 = vmatpush1.xpose.msra.mxu0 %v4335
        %4353 = vmatprep.subr.mxu0 0.0
        %4354 = vmatpush1.xpose.msra.mxu0 %v4337
        %4355 = vmatprep.subr.mxu0 0.0
        %4356 = vmatpush1.xpose.msra.mxu0 %v4339
        %4357 = vmatprep.subr.mxu0 0.0
        %4358 = vmatpush1.xpose.msra.mxu0 0.0
        %4359 = vmatprep.subr.mxu0 0.0
        %4360 = vmatpush1.xpose.msra.mxu0 0.0
        %4361 = vmatprep.subr.mxu0 0.0
        %4362 = vmatpush1.xpose.msra.mxu0 0.0
        %4363 = vmatprep.subr.mxu0 0.0
        %4364 = vmatpush1.xpose.msra.mxu0 0.0
        %4365 = vmatprep.subr.mxu0 0.0
        %4366 = vmatpush1.xpose.msra.mxu0 0.0
        %4367 = vmatprep.subr.mxu0 0.0
        %4368 = vmatpush1.xpose.msra.mxu0 0.0
        %4369 = vmatprep.subr.mxu0 0.0
        %4370 = vmatpush1.xpose.msra.mxu0 0.0
        %4371 = vmatprep.subr.mxu0 0.0
        %4372 = vmatpush1.xpose.msra.mxu0 0.0
        %4373 = vmatprep.subr.mxu0 0.0
        %4374 = vmatpush1.xpose.msra.mxu0 0.0
        %4375 = vmatprep.subr.mxu0 0.0
        %4376 = vmatpush1.xpose.msra.mxu0 0.0
        %4377 = vmatprep.subr.mxu0 0.0
        %4378 = vmatpush1.xpose.msra.mxu0 0.0
        %4379 = vmatprep.subr.mxu0 0.0
        %4380 = vmatpush1.xpose.msra.mxu0 0.0
        %4381 = vmatprep.subr.mxu0 0.0
        %4382 = vmatpush1.xpose.msra.mxu0 0.0
        %4383 = vmatprep.subr.mxu0 0.0
        %4384 = vmatpush1.xpose.msra.mxu0 0.0
        %4385 = vmatprep.subr.mxu0 0.0
        %4386 = vmatpush1.xpose.msra.mxu0 0.0
        %4387 = vmatprep.subr.mxu0 0.0
        %4388 = vmatpush1.xpose.msra.mxu0 0.0
        %4389 = vmatprep.subr.mxu0 0.0
        %4390 = vmatpush1.xpose.msra.mxu0 0.0
        %4391 = vmatprep.subr.mxu0 0.0
        %4392 = vmatpush1.xpose.msra.mxu0 0.0
        %4393 = vmatprep.subr.mxu0 0.0
        %4394 = vmatpush1.xpose.msra.mxu0 0.0
        %4395 = vmatprep.subr.mxu0 0.0
        %4396 = vmatpush1.xpose.msra.mxu0 0.0
        %4397 = vmatprep.subr.mxu0 0.0
        %4398 = vmatpush1.xpose.msra.mxu0 0.0
        %4399 = vmatprep.subr.mxu0 0.0
        %4400 = vmatpush1.xpose.msra.mxu0 0.0
        %4401 = vmatprep.subr.mxu0 0.0
        %4402 = vmatpush1.xpose.msra.mxu0 0.0
        %4403 = vmatprep.subr.mxu0 0.0
        %4404 = vmatpush1.xpose.msra.mxu0 0.0
        %4405 = vmatprep.mubr.f32.mxu0 0.0
        %4406 = vmatmul.mubr.f32.gmra.mrb[0].mxu0 %v4309
        %v4407 = vpop.f32.mrb[0].mxu0
        %v4408 = vadd.f32 %v4100, %v4407
        %v4409 = vpop.f32.mrb[0].mxu0
        %4410 = vmatprep.mubr.f32.mxu0 0.0
        %4411 = vmatmul.mubr.f32.gmra.mrb[0].mxu0 %v4311
        %v4412 = vpop.f32.mrb[0].mxu0
        %v4413 = vadd.f32 %v4101, %v4412
        %v4414 = vpop.f32.mrb[0].mxu0
        %4415 = vmatprep.mubr.f32.mxu0 0.0
        %4416 = vmatmul.mubr.f32.gmra.mrb[0].mxu0 %v4313
        %v4417 = vpop.f32.mrb[0].mxu0
        %v4418 = vadd.f32 %v4102, %v4417
        %v4419 = vpop.f32.mrb[0].mxu0
        %4420 = vmatprep.mubr.f32.mxu0 0.0
        %4421 = vmatmul.mubr.f32.gmra.mrb[0].mxu0 %v4315
        %v4422 = vpop.f32.mrb[0].mxu0
        %v4423 = vadd.f32 %v4103, %v4422
        %v4424 = vpop.f32.mrb[0].mxu0
        %4425 = vmatprep.mubr.f32.mxu0 0.0
        %4426 = vmatmul.mubr.f32.gmra.mrb[0].mxu0 %v4317
        %v4427 = vpop.f32.mrb[0].mxu0
        %v4428 = vadd.f32 %v4104, %v4427
        %v4429 = vpop.f32.mrb[0].mxu0
        %4430 = vmatprep.mubr.f32.mxu0 0.0
        %4431 = vmatmul.mubr.f32.gmra.mrb[0].mxu0 %v4319
        %v4432 = vpop.f32.mrb[0].mxu0
        %v4433 = vadd.f32 %v4105, %v4432
        %v4434 = vpop.f32.mrb[0].mxu0
        %4435 = vmatprep.mubr.f32.mxu0 0.0
        %4436 = vmatmul.mubr.f32.gmra.mrb[0].mxu0 %v4321
        %v4437 = vpop.f32.mrb[0].mxu0
        %v4438 = vadd.f32 %v4106, %v4437
        %v4439 = vpop.f32.mrb[0].mxu0
        %4440 = vmatprep.mubr.f32.mxu0 0.0
        %4441 = vmatmul.mubr.f32.gmra.mrb[0].mxu0 %v4323
        %v4442 = vpop.f32.mrb[0].mxu0
        %v4443 = vadd.f32 %v4107, %v4442
        %v4444 = vpop.f32.mrb[0].mxu0
        %4445 = vdwg.mxu0
        %4446 = vrot.lane.b32.xlu0 %v912, 64
        %v4447 = vpop.permute.xlu0 %4446
        %4448 = vrot.lane.b32.xlu0 %v913, 64
        %v4449 = vpop.permute.xlu0 %4448
        %4450 = vrot.lane.b32.xlu0 %v914, 64
        %v4451 = vpop.permute.xlu0 %4450
        %4452 = vrot.lane.b32.xlu0 %v915, 64
        %v4453 = vpop.permute.xlu0 %4452
        %4454 = vrot.lane.b32.xlu0 %v916, 64
        %v4455 = vpop.permute.xlu0 %4454
        %4456 = vrot.lane.b32.xlu0 %v917, 64
        %v4457 = vpop.permute.xlu0 %4456
        %4458 = vrot.lane.b32.xlu0 %v918, 64
        %v4459 = vpop.permute.xlu0 %4458
        %4460 = vrot.lane.b32.xlu0 %v919, 64
        %v4461 = vpop.permute.xlu0 %4460
        %4462 = vrot.lane.b32.xlu0 %v579, 64
        %v4463 = vpop.permute.xlu0 %4462
        %4464 = vrot.lane.b32.xlu0 %v585, 64
        %v4465 = vpop.permute.xlu0 %4464
        %4466 = vrot.lane.b32.xlu0 %v591, 64
        %v4467 = vpop.permute.xlu0 %4466
        %4468 = vrot.lane.b32.xlu0 %v597, 64
        %v4469 = vpop.permute.xlu0 %4468
        %4470 = vrot.lane.b32.xlu0 %v603, 64
        %v4471 = vpop.permute.xlu0 %4470
        %4472 = vrot.lane.b32.xlu0 %v609, 64
        %v4473 = vpop.permute.xlu0 %4472
        %4474 = vrot.lane.b32.xlu0 %v615, 64
        %v4475 = vpop.permute.xlu0 %4474
        %4476 = vrot.lane.b32.xlu0 %v621, 64
        %v4477 = vpop.permute.xlu0 %4476
        %v4478 = vsel %vm936, %v4447, 0
        %v4480 = vsel %vm936, %v4449, 0
        %v4482 = vsel %vm936, %v4451, 0
        %v4484 = vsel %vm936, %v4453, 0
        %v4486 = vsel %vm936, %v4455, 0
        %v4488 = vsel %vm936, %v4457, 0
        %v4490 = vsel %vm936, %v4459, 0
        %v4492 = vsel %vm936, %v4461, 0
        %v4494 = vsel %vm936, %v4463, 0
        %v4496 = vsel %vm936, %v4465, 0
        %v4498 = vsel %vm936, %v4467, 0
        %v4500 = vsel %vm936, %v4469, 0
        %v4502 = vsel %vm936, %v4471, 0
        %v4504 = vsel %vm936, %v4473, 0
        %v4506 = vsel %vm936, %v4475, 0
        %v4508 = vsel %vm936, %v4477, 0
        %4510 = vmatprep.subr.mxu0 0.0
        %4511 = vmatpush1.xpose.msra.mxu0 %v4494
        %4512 = vmatprep.subr.mxu0 0.0
        %4513 = vmatpush1.xpose.msra.mxu0 %v4496
        %4514 = vmatprep.subr.mxu0 0.0
        %4515 = vmatpush1.xpose.msra.mxu0 %v4498
        %4516 = vmatprep.subr.mxu0 0.0
        %4517 = vmatpush1.xpose.msra.mxu0 %v4500
        %4518 = vmatprep.subr.mxu0 0.0
        %4519 = vmatpush1.xpose.msra.mxu0 %v4502
        %4520 = vmatprep.subr.mxu0 0.0
        %4521 = vmatpush1.xpose.msra.mxu0 %v4504
        %4522 = vmatprep.subr.mxu0 0.0
        %4523 = vmatpush1.xpose.msra.mxu0 %v4506
        %4524 = vmatprep.subr.mxu0 0.0
        %4525 = vmatpush1.xpose.msra.mxu0 %v4508
        %4526 = vmatprep.subr.mxu0 0.0
        %4527 = vmatpush1.xpose.msra.mxu0 0.0
        %4528 = vmatprep.subr.mxu0 0.0
        %4529 = vmatpush1.xpose.msra.mxu0 0.0
        %4530 = vmatprep.subr.mxu0 0.0
        %4531 = vmatpush1.xpose.msra.mxu0 0.0
        %4532 = vmatprep.subr.mxu0 0.0
        %4533 = vmatpush1.xpose.msra.mxu0 0.0
        %4534 = vmatprep.subr.mxu0 0.0
        %4535 = vmatpush1.xpose.msra.mxu0 0.0
        %4536 = vmatprep.subr.mxu0 0.0
        %4537 = vmatpush1.xpose.msra.mxu0 0.0
        %4538 = vmatprep.subr.mxu0 0.0
        %4539 = vmatpush1.xpose.msra.mxu0 0.0
        %4540 = vmatprep.subr.mxu0 0.0
        %4541 = vmatpush1.xpose.msra.mxu0 0.0
        %4542 = vmatprep.subr.mxu0 0.0
        %4543 = vmatpush1.xpose.msra.mxu0 0.0
        %4544 = vmatprep.subr.mxu0 0.0
        %4545 = vmatpush1.xpose.msra.mxu0 0.0
        %4546 = vmatprep.subr.mxu0 0.0
        %4547 = vmatpush1.xpose.msra.mxu0 0.0
        %4548 = vmatprep.subr.mxu0 0.0
        %4549 = vmatpush1.xpose.msra.mxu0 0.0
        %4550 = vmatprep.subr.mxu0 0.0
        %4551 = vmatpush1.xpose.msra.mxu0 0.0
        %4552 = vmatprep.subr.mxu0 0.0
        %4553 = vmatpush1.xpose.msra.mxu0 0.0
        %4554 = vmatprep.subr.mxu0 0.0
        %4555 = vmatpush1.xpose.msra.mxu0 0.0
        %4556 = vmatprep.subr.mxu0 0.0
        %4557 = vmatpush1.xpose.msra.mxu0 0.0
        %4558 = vmatprep.subr.mxu0 0.0
        %4559 = vmatpush1.xpose.msra.mxu0 0.0
        %4560 = vmatprep.subr.mxu0 0.0
        %4561 = vmatpush1.xpose.msra.mxu0 0.0
        %4562 = vmatprep.subr.mxu0 0.0
        %4563 = vmatpush1.xpose.msra.mxu0 0.0
        %4564 = vmatprep.subr.mxu0 0.0
        %4565 = vmatpush1.xpose.msra.mxu0 0.0
        %4566 = vmatprep.subr.mxu0 0.0
        %4567 = vmatpush1.xpose.msra.mxu0 0.0
        %4568 = vmatprep.subr.mxu0 0.0
        %4569 = vmatpush1.xpose.msra.mxu0 0.0
        %4570 = vmatprep.subr.mxu0 0.0
        %4571 = vmatpush1.xpose.msra.mxu0 0.0
        %4572 = vmatprep.subr.mxu0 0.0
        %4573 = vmatpush1.xpose.msra.mxu0 0.0
        %4574 = vmatprep.mubr.f32.mxu0 0.0
        %4575 = vmatmul.mubr.f32.gmra.mrb[0].mxu0 %v4478
        %v4576 = vpop.f32.mrb[0].mxu0
        %v4577 = vadd.f32 %v4100, %v4576
        %v4578 = vpop.f32.mrb[0].mxu0
        %4579 = vmatprep.mubr.f32.mxu0 0.0
        %4580 = vmatmul.mubr.f32.gmra.mrb[0].mxu0 %v4480
        %v4581 = vpop.f32.mrb[0].mxu0
        %v4582 = vadd.f32 %v4101, %v4581
        %v4583 = vpop.f32.mrb[0].mxu0
        %4584 = vmatprep.mubr.f32.mxu0 0.0
        %4585 = vmatmul.mubr.f32.gmra.mrb[0].mxu0 %v4482
        %v4586 = vpop.f32.mrb[0].mxu0
        %v4587 = vadd.f32 %v4102, %v4586
        %v4588 = vpop.f32.mrb[0].mxu0
        %4589 = vmatprep.mubr.f32.mxu0 0.0
        %4590 = vmatmul.mubr.f32.gmra.mrb[0].mxu0 %v4484
        %v4591 = vpop.f32.mrb[0].mxu0
        %v4592 = vadd.f32 %v4103, %v4591
        %v4593 = vpop.f32.mrb[0].mxu0
        %4594 = vmatprep.mubr.f32.mxu0 0.0
        %4595 = vmatmul.mubr.f32.gmra.mrb[0].mxu0 %v4486
        %v4596 = vpop.f32.mrb[0].mxu0
        %v4597 = vadd.f32 %v4104, %v4596
        %v4598 = vpop.f32.mrb[0].mxu0
        %4599 = vmatprep.mubr.f32.mxu0 0.0
        %4600 = vmatmul.mubr.f32.gmra.mrb[0].mxu0 %v4488
        %v4601 = vpop.f32.mrb[0].mxu0
        %v4602 = vadd.f32 %v4105, %v4601
        %v4603 = vpop.f32.mrb[0].mxu0
        %4604 = vmatprep.mubr.f32.mxu0 0.0
        %4605 = vmatmul.mubr.f32.gmra.mrb[0].mxu0 %v4490
        %v4606 = vpop.f32.mrb[0].mxu0
        %v4607 = vadd.f32 %v4106, %v4606
        %v4608 = vpop.f32.mrb[0].mxu0
        %4609 = vmatprep.mubr.f32.mxu0 0.0
        %4610 = vmatmul.mubr.f32.gmra.mrb[0].mxu0 %v4492
        %v4611 = vpop.f32.mrb[0].mxu0
        %v4612 = vadd.f32 %v4107, %v4611
        %v4613 = vpop.f32.mrb[0].mxu0
        %4614 = vdwg.mxu0
        %4615 = vrot.lane.b32.xlu0 %v920, 64
        %v4616 = vpop.permute.xlu0 %4615
        %4617 = vrot.lane.b32.xlu0 %v921, 64
        %v4618 = vpop.permute.xlu0 %4617
        %4619 = vrot.lane.b32.xlu0 %v922, 64
        %v4620 = vpop.permute.xlu0 %4619
        %4621 = vrot.lane.b32.xlu0 %v923, 64
        %v4622 = vpop.permute.xlu0 %4621
        %4623 = vrot.lane.b32.xlu0 %v924, 64
        %v4624 = vpop.permute.xlu0 %4623
        %4625 = vrot.lane.b32.xlu0 %v925, 64
        %v4626 = vpop.permute.xlu0 %4625
        %4627 = vrot.lane.b32.xlu0 %v926, 64
        %v4628 = vpop.permute.xlu0 %4627
        %4629 = vrot.lane.b32.xlu0 %v927, 64
        %v4630 = vpop.permute.xlu0 %4629
        %4631 = vrot.lane.b32.xlu0 %v627, 64
        %v4632 = vpop.permute.xlu0 %4631
        %4633 = vrot.lane.b32.xlu0 %v633, 64
        %v4634 = vpop.permute.xlu0 %4633
        %4635 = vrot.lane.b32.xlu0 %v639, 64
        %v4636 = vpop.permute.xlu0 %4635
        %4637 = vrot.lane.b32.xlu0 %v645, 64
        %v4638 = vpop.permute.xlu0 %4637
        %4639 = vrot.lane.b32.xlu0 %v651, 64
        %v4640 = vpop.permute.xlu0 %4639
        %4641 = vrot.lane.b32.xlu0 %v657, 64
        %v4642 = vpop.permute.xlu0 %4641
        %4643 = vrot.lane.b32.xlu0 %v663, 64
        %v4644 = vpop.permute.xlu0 %4643
        %4645 = vrot.lane.b32.xlu0 %v669, 64
        %v4646 = vpop.permute.xlu0 %4645
        %v4647 = vsel %vm936, %v4616, 0
        %v4649 = vsel %vm936, %v4618, 0
        %v4651 = vsel %vm936, %v4620, 0
        %v4653 = vsel %vm936, %v4622, 0
        %v4655 = vsel %vm936, %v4624, 0
        %v4657 = vsel %vm936, %v4626, 0
        %v4659 = vsel %vm936, %v4628, 0
        %v4661 = vsel %vm936, %v4630, 0
        %v4663 = vsel %vm936, %v4632, 0
        %v4665 = vsel %vm936, %v4634, 0
        %v4667 = vsel %vm936, %v4636, 0
        %v4669 = vsel %vm936, %v4638, 0
        %v4671 = vsel %vm936, %v4640, 0
        %v4673 = vsel %vm936, %v4642, 0
        %v4675 = vsel %vm936, %v4644, 0
        %v4677 = vsel %vm936, %v4646, 0
        %4679 = vmatprep.subr.mxu0 0.0
        %4680 = vmatpush1.xpose.msra.mxu0 %v4663
        %4681 = vmatprep.subr.mxu0 0.0
        %4682 = vmatpush1.xpose.msra.mxu0 %v4665
        %4683 = vmatprep.subr.mxu0 0.0
        %4684 = vmatpush1.xpose.msra.mxu0 %v4667
        %4685 = vmatprep.subr.mxu0 0.0
        %4686 = vmatpush1.xpose.msra.mxu0 %v4669
        %4687 = vmatprep.subr.mxu0 0.0
        %4688 = vmatpush1.xpose.msra.mxu0 %v4671
        %4689 = vmatprep.subr.mxu0 0.0
        %4690 = vmatpush1.xpose.msra.mxu0 %v4673
        %4691 = vmatprep.subr.mxu0 0.0
        %4692 = vmatpush1.xpose.msra.mxu0 %v4675
        %4693 = vmatprep.subr.mxu0 0.0
        %4694 = vmatpush1.xpose.msra.mxu0 %v4677
        %4695 = vmatprep.subr.mxu0 0.0
        %4696 = vmatpush1.xpose.msra.mxu0 0.0
        %4697 = vmatprep.subr.mxu0 0.0
        %4698 = vmatpush1.xpose.msra.mxu0 0.0
        %4699 = vmatprep.subr.mxu0 0.0
        %4700 = vmatpush1.xpose.msra.mxu0 0.0
        %4701 = vmatprep.subr.mxu0 0.0
        %4702 = vmatpush1.xpose.msra.mxu0 0.0
        %4703 = vmatprep.subr.mxu0 0.0
        %4704 = vmatpush1.xpose.msra.mxu0 0.0
        %4705 = vmatprep.subr.mxu0 0.0
        %4706 = vmatpush1.xpose.msra.mxu0 0.0
        %4707 = vmatprep.subr.mxu0 0.0
        %4708 = vmatpush1.xpose.msra.mxu0 0.0
        %4709 = vmatprep.subr.mxu0 0.0
        %4710 = vmatpush1.xpose.msra.mxu0 0.0
        %4711 = vmatprep.subr.mxu0 0.0
        %4712 = vmatpush1.xpose.msra.mxu0 0.0
        %4713 = vmatprep.subr.mxu0 0.0
        %4714 = vmatpush1.xpose.msra.mxu0 0.0
        %4715 = vmatprep.subr.mxu0 0.0
        %4716 = vmatpush1.xpose.msra.mxu0 0.0
        %4717 = vmatprep.subr.mxu0 0.0
        %4718 = vmatpush1.xpose.msra.mxu0 0.0
        %4719 = vmatprep.subr.mxu0 0.0
        %4720 = vmatpush1.xpose.msra.mxu0 0.0
        %4721 = vmatprep.subr.mxu0 0.0
        %4722 = vmatpush1.xpose.msra.mxu0 0.0
        %4723 = vmatprep.subr.mxu0 0.0
        %4724 = vmatpush1.xpose.msra.mxu0 0.0
        %4725 = vmatprep.subr.mxu0 0.0
        %4726 = vmatpush1.xpose.msra.mxu0 0.0
        %4727 = vmatprep.subr.mxu0 0.0
        %4728 = vmatpush1.xpose.msra.mxu0 0.0
        %4729 = vmatprep.subr.mxu0 0.0
        %4730 = vmatpush1.xpose.msra.mxu0 0.0
        %4731 = vmatprep.subr.mxu0 0.0
        %4732 = vmatpush1.xpose.msra.mxu0 0.0
        %4733 = vmatprep.subr.mxu0 0.0
        %4734 = vmatpush1.xpose.msra.mxu0 0.0
        %4735 = vmatprep.subr.mxu0 0.0
        %4736 = vmatpush1.xpose.msra.mxu0 0.0
        %4737 = vmatprep.subr.mxu0 0.0
        %4738 = vmatpush1.xpose.msra.mxu0 0.0
        %4739 = vmatprep.subr.mxu0 0.0
        %4740 = vmatpush1.xpose.msra.mxu0 0.0
        %4741 = vmatprep.subr.mxu0 0.0
        %4742 = vmatpush1.xpose.msra.mxu0 0.0
        %4743 = vmatprep.mubr.f32.mxu0 0.0
        %4744 = vmatmul.mubr.f32.gmra.mrb[0].mxu0 %v4647
        %v4745 = vpop.f32.mrb[0].mxu0
        %v4746 = vadd.f32 %v4100, %v4745
        %v4747 = vpop.f32.mrb[0].mxu0
        %4748 = vmatprep.mubr.f32.mxu0 0.0
        %4749 = vmatmul.mubr.f32.gmra.mrb[0].mxu0 %v4649
        %v4750 = vpop.f32.mrb[0].mxu0
        %v4751 = vadd.f32 %v4101, %v4750
        %v4752 = vpop.f32.mrb[0].mxu0
        %4753 = vmatprep.mubr.f32.mxu0 0.0
        %4754 = vmatmul.mubr.f32.gmra.mrb[0].mxu0 %v4651
        %v4755 = vpop.f32.mrb[0].mxu0
        %v4756 = vadd.f32 %v4102, %v4755
        %v4757 = vpop.f32.mrb[0].mxu0
        %4758 = vmatprep.mubr.f32.mxu0 0.0
        %4759 = vmatmul.mubr.f32.gmra.mrb[0].mxu0 %v4653
        %v4760 = vpop.f32.mrb[0].mxu0
        %v4761 = vadd.f32 %v4103, %v4760
        %v4762 = vpop.f32.mrb[0].mxu0
        %4763 = vmatprep.mubr.f32.mxu0 0.0
        %4764 = vmatmul.mubr.f32.gmra.mrb[0].mxu0 %v4655
        %v4765 = vpop.f32.mrb[0].mxu0
        %v4766 = vadd.f32 %v4104, %v4765
        %v4767 = vpop.f32.mrb[0].mxu0
        %4768 = vmatprep.mubr.f32.mxu0 0.0
        %4769 = vmatmul.mubr.f32.gmra.mrb[0].mxu0 %v4657
        %v4770 = vpop.f32.mrb[0].mxu0
        %v4771 = vadd.f32 %v4105, %v4770
        %v4772 = vpop.f32.mrb[0].mxu0
        %4773 = vmatprep.mubr.f32.mxu0 0.0
        %4774 = vmatmul.mubr.f32.gmra.mrb[0].mxu0 %v4659
        %v4775 = vpop.f32.mrb[0].mxu0
        %v4776 = vadd.f32 %v4106, %v4775
        %v4777 = vpop.f32.mrb[0].mxu0
        %4778 = vmatprep.mubr.f32.mxu0 0.0
        %4779 = vmatmul.mubr.f32.gmra.mrb[0].mxu0 %v4661
        %v4780 = vpop.f32.mrb[0].mxu0
        %v4781 = vadd.f32 %v4107, %v4780
        %v4782 = vpop.f32.mrb[0].mxu0
        %4783 = vdwg.mxu0
        %v4784 = vsel %vm1549, %v4239, -inf
        %4785 = vmax.xlane.f32.xlu0 %v4784
        %v4786 = vpop.xlane.xlu0 %4785
        %v4787 = vsel %vm1549, %v4244, -inf
        %4788 = vmax.xlane.f32.xlu0 %v4787
        %v4789 = vpop.xlane.xlu0 %4788
        %v4790 = vsel %vm1549, %v4249, -inf
        %4791 = vmax.xlane.f32.xlu0 %v4790
        %v4792 = vpop.xlane.xlu0 %4791
        %v4793 = vsel %vm1549, %v4254, -inf
        %4794 = vmax.xlane.f32.xlu0 %v4793
        %v4795 = vpop.xlane.xlu0 %4794
        %v4796 = vsel %vm1549, %v4259, -inf
        %4797 = vmax.xlane.f32.xlu0 %v4796
        %v4798 = vpop.xlane.xlu0 %4797
        %v4799 = vsel %vm1549, %v4264, -inf
        %4800 = vmax.xlane.f32.xlu0 %v4799
        %v4801 = vpop.xlane.xlu0 %4800
        %v4802 = vsel %vm1549, %v4269, -inf
        %4803 = vmax.xlane.f32.xlu0 %v4802
        %v4804 = vpop.xlane.xlu0 %4803
        %v4805 = vsel %vm1549, %v4274, -inf
        %4806 = vmax.xlane.f32.xlu0 %v4805
        %v4807 = vpop.xlane.xlu0 %4806
        %v4808 = vsel %vm1549, %v4408, -inf
        %4809 = vmax.xlane.f32.xlu0 %v4808
        %v4810 = vpop.xlane.xlu0 %4809
        %v4811 = vsel %vm1549, %v4413, -inf
        %4812 = vmax.xlane.f32.xlu0 %v4811
        %v4813 = vpop.xlane.xlu0 %4812
        %v4814 = vsel %vm1549, %v4418, -inf
        %4815 = vmax.xlane.f32.xlu0 %v4814
        %v4816 = vpop.xlane.xlu0 %4815
        %v4817 = vsel %vm1549, %v4423, -inf
        %4818 = vmax.xlane.f32.xlu0 %v4817
        %v4819 = vpop.xlane.xlu0 %4818
        %v4820 = vsel %vm1549, %v4428, -inf
        %4821 = vmax.xlane.f32.xlu0 %v4820
        %v4822 = vpop.xlane.xlu0 %4821
        %v4823 = vsel %vm1549, %v4433, -inf
        %4824 = vmax.xlane.f32.xlu0 %v4823
        %v4825 = vpop.xlane.xlu0 %4824
        %v4826 = vsel %vm1549, %v4438, -inf
        %4827 = vmax.xlane.f32.xlu0 %v4826
        %v4828 = vpop.xlane.xlu0 %4827
        %v4829 = vsel %vm1549, %v4443, -inf
        %4830 = vmax.xlane.f32.xlu0 %v4829
        %v4831 = vpop.xlane.xlu0 %4830
        %v4832 = vsel %vm1549, %v4577, -inf
        %4833 = vmax.xlane.f32.xlu0 %v4832
        %v4834 = vpop.xlane.xlu0 %4833
        %v4835 = vsel %vm1549, %v4582, -inf
        %4836 = vmax.xlane.f32.xlu0 %v4835
        %v4837 = vpop.xlane.xlu0 %4836
        %v4838 = vsel %vm1549, %v4587, -inf
        %4839 = vmax.xlane.f32.xlu0 %v4838
        %v4840 = vpop.xlane.xlu0 %4839
        %v4841 = vsel %vm1549, %v4592, -inf
        %4842 = vmax.xlane.f32.xlu0 %v4841
        %v4843 = vpop.xlane.xlu0 %4842
        %v4844 = vsel %vm1549, %v4597, -inf
        %4845 = vmax.xlane.f32.xlu0 %v4844
        %v4846 = vpop.xlane.xlu0 %4845
        %v4847 = vsel %vm1549, %v4602, -inf
        %4848 = vmax.xlane.f32.xlu0 %v4847
        %v4849 = vpop.xlane.xlu0 %4848
        %v4850 = vsel %vm1549, %v4607, -inf
        %4851 = vmax.xlane.f32.xlu0 %v4850
        %v4852 = vpop.xlane.xlu0 %4851
        %v4853 = vsel %vm1549, %v4612, -inf
        %4854 = vmax.xlane.f32.xlu0 %v4853
        %v4855 = vpop.xlane.xlu0 %4854
        %v4856 = vsel %vm1549, %v4746, -inf
        %4857 = vmax.xlane.f32.xlu0 %v4856
        %v4858 = vpop.xlane.xlu0 %4857
        %v4859 = vsel %vm1549, %v4751, -inf
        %4860 = vmax.xlane.f32.xlu0 %v4859
        %v4861 = vpop.xlane.xlu0 %4860
        %v4862 = vsel %vm1549, %v4756, -inf
        %4863 = vmax.xlane.f32.xlu0 %v4862
        %v4864 = vpop.xlane.xlu0 %4863
        %v4865 = vsel %vm1549, %v4761, -inf
        %4866 = vmax.xlane.f32.xlu0 %v4865
        %v4867 = vpop.xlane.xlu0 %4866
        %v4868 = vsel %vm1549, %v4766, -inf
        %4869 = vmax.xlane.f32.xlu0 %v4868
        %v4870 = vpop.xlane.xlu0 %4869
        %v4871 = vsel %vm1549, %v4771, -inf
        %4872 = vmax.xlane.f32.xlu0 %v4871
        %v4873 = vpop.xlane.xlu0 %4872
        %v4874 = vsel %vm1549, %v4776, -inf
        %4875 = vmax.xlane.f32.xlu0 %v4874
        %v4876 = vpop.xlane.xlu0 %4875
        %v4877 = vsel %vm1549, %v4781, -inf
        %4878 = vmax.xlane.f32.xlu0 %v4877
        %v4879 = vpop.xlane.xlu0 %4878
        %v4880 = vsub.f32 %v4239, %v4786
        %v4881 = vsub.f32 %v4244, %v4789
        %v4882 = vsub.f32 %v4249, %v4792
        %v4883 = vsub.f32 %v4254, %v4795
        %v4884 = vsub.f32 %v4259, %v4798
        %v4885 = vsub.f32 %v4264, %v4801
        %v4886 = vsub.f32 %v4269, %v4804
        %v4887 = vsub.f32 %v4274, %v4807
        %v4888 = vsub.f32 %v4408, %v4810
        %v4889 = vsub.f32 %v4413, %v4813
        %v4890 = vsub.f32 %v4418, %v4816
        %v4891 = vsub.f32 %v4423, %v4819
        %v4892 = vsub.f32 %v4428, %v4822
        %v4893 = vsub.f32 %v4433, %v4825
        %v4894 = vsub.f32 %v4438, %v4828
        %v4895 = vsub.f32 %v4443, %v4831
        %v4896 = vsub.f32 %v4577, %v4834
        %v4897 = vsub.f32 %v4582, %v4837
        %v4898 = vsub.f32 %v4587, %v4840
        %v4899 = vsub.f32 %v4592, %v4843
        %v4900 = vsub.f32 %v4597, %v4846
        %v4901 = vsub.f32 %v4602, %v4849
        %v4902 = vsub.f32 %v4607, %v4852
        %v4903 = vsub.f32 %v4612, %v4855
        %v4904 = vsub.f32 %v4746, %v4858
        %v4905 = vsub.f32 %v4751, %v4861
        %v4906 = vsub.f32 %v4756, %v4864
        %v4907 = vsub.f32 %v4761, %v4867
        %v4908 = vsub.f32 %v4766, %v4870
        %v4909 = vsub.f32 %v4771, %v4873
        %v4910 = vsub.f32 %v4776, %v4876
        %v4911 = vsub.f32 %v4781, %v4879
        %v4912 = vmul.f32 %v4880, 1.442695
        %v4913 = vpow.pop %v4912
        %v4914 = vmul.f32 %v4881, 1.442695
        %v4915 = vpow.pop %v4914
        %v4916 = vmul.f32 %v4882, 1.442695
        %v4917 = vpow.pop %v4916
        %v4918 = vmul.f32 %v4883, 1.442695
        %v4919 = vpow.pop %v4918
        %v4920 = vmul.f32 %v4884, 1.442695
        %v4921 = vpow.pop %v4920
        %v4922 = vmul.f32 %v4885, 1.442695
        %v4923 = vpow.pop %v4922
        %v4924 = vmul.f32 %v4886, 1.442695
        %v4925 = vpow.pop %v4924
        %v4926 = vmul.f32 %v4887, 1.442695
        %v4927 = vpow.pop %v4926
        %v4928 = vmul.f32 %v4888, 1.442695
        %v4929 = vpow.pop %v4928
        %v4930 = vmul.f32 %v4889, 1.442695
        %v4931 = vpow.pop %v4930
        %v4932 = vmul.f32 %v4890, 1.442695
        %v4933 = vpow.pop %v4932
        %v4934 = vmul.f32 %v4891, 1.442695
        %v4935 = vpow.pop %v4934
        %v4936 = vmul.f32 %v4892, 1.442695
        %v4937 = vpow.pop %v4936
        %v4938 = vmul.f32 %v4893, 1.442695
        %v4939 = vpow.pop %v4938
        %v4940 = vmul.f32 %v4894, 1.442695
        %v4941 = vpow.pop %v4940
        %v4942 = vmul.f32 %v4895, 1.442695
        %v4943 = vpow.pop %v4942
        %v4944 = vmul.f32 %v4896, 1.442695
        %v4945 = vpow.pop %v4944
        %v4946 = vmul.f32 %v4897, 1.442695
        %v4947 = vpow.pop %v4946
        %v4948 = vmul.f32 %v4898, 1.442695
        %v4949 = vpow.pop %v4948
        %v4950 = vmul.f32 %v4899, 1.442695
        %v4951 = vpow.pop %v4950
        %v4952 = vmul.f32 %v4900, 1.442695
        %v4953 = vpow.pop %v4952
        %v4954 = vmul.f32 %v4901, 1.442695
        %v4955 = vpow.pop %v4954
        %v4956 = vmul.f32 %v4902, 1.442695
        %v4957 = vpow.pop %v4956
        %v4958 = vmul.f32 %v4903, 1.442695
        %v4959 = vpow.pop %v4958
        %v4960 = vmul.f32 %v4904, 1.442695
        %v4961 = vpow.pop %v4960
        %v4962 = vmul.f32 %v4905, 1.442695
        %v4963 = vpow.pop %v4962
        %v4964 = vmul.f32 %v4906, 1.442695
        %v4965 = vpow.pop %v4964
        %v4966 = vmul.f32 %v4907, 1.442695
        %v4967 = vpow.pop %v4966
        %v4968 = vmul.f32 %v4908, 1.442695
        %v4969 = vpow.pop %v4968
        %v4970 = vmul.f32 %v4909, 1.442695
        %v4971 = vpow.pop %v4970
        %v4972 = vmul.f32 %v4910, 1.442695
        %v4973 = vpow.pop %v4972
        %v4974 = vmul.f32 %v4911, 1.442695
        %v4975 = vpow.pop %v4974
        %v4976 = vsel %vm1549, %v4913, 0.0
        %4977 = vadd.xlane.f32.xlu0 %v4976
        %v4978 = vpop.xlane.xlu0 %4977
        %v4979 = vsel %vm1549, %v4915, 0.0
        %4980 = vadd.xlane.f32.xlu0 %v4979
        %v4981 = vpop.xlane.xlu0 %4980
        %v4982 = vsel %vm1549, %v4917, 0.0
        %4983 = vadd.xlane.f32.xlu0 %v4982
        %v4984 = vpop.xlane.xlu0 %4983
        %v4985 = vsel %vm1549, %v4919, 0.0
        %4986 = vadd.xlane.f32.xlu0 %v4985
        %v4987 = vpop.xlane.xlu0 %4986
        %v4988 = vsel %vm1549, %v4921, 0.0
        %4989 = vadd.xlane.f32.xlu0 %v4988
        %v4990 = vpop.xlane.xlu0 %4989
        %v4991 = vsel %vm1549, %v4923, 0.0
        %4992 = vadd.xlane.f32.xlu0 %v4991
        %v4993 = vpop.xlane.xlu0 %4992
        %v4994 = vsel %vm1549, %v4925, 0.0
        %4995 = vadd.xlane.f32.xlu0 %v4994
        %v4996 = vpop.xlane.xlu0 %4995
        %v4997 = vsel %vm1549, %v4927, 0.0
        %4998 = vadd.xlane.f32.xlu0 %v4997
        %v4999 = vpop.xlane.xlu0 %4998
        %v5000 = vsel %vm1549, %v4929, 0.0
        %5001 = vadd.xlane.f32.xlu0 %v5000
        %v5002 = vpop.xlane.xlu0 %5001
        %v5003 = vsel %vm1549, %v4931, 0.0
        %5004 = vadd.xlane.f32.xlu0 %v5003
        %v5005 = vpop.xlane.xlu0 %5004
        %v5006 = vsel %vm1549, %v4933, 0.0
        %5007 = vadd.xlane.f32.xlu0 %v5006
        %v5008 = vpop.xlane.xlu0 %5007
        %v5009 = vsel %vm1549, %v4935, 0.0
        %5010 = vadd.xlane.f32.xlu0 %v5009
        %v5011 = vpop.xlane.xlu0 %5010
        %v5012 = vsel %vm1549, %v4937, 0.0
        %5013 = vadd.xlane.f32.xlu0 %v5012
        %v5014 = vpop.xlane.xlu0 %5013
        %v5015 = vsel %vm1549, %v4939, 0.0
        %5016 = vadd.xlane.f32.xlu0 %v5015
        %v5017 = vpop.xlane.xlu0 %5016
        %v5018 = vsel %vm1549, %v4941, 0.0
        %5019 = vadd.xlane.f32.xlu0 %v5018
        %v5020 = vpop.xlane.xlu0 %5019
        %v5021 = vsel %vm1549, %v4943, 0.0
        %5022 = vadd.xlane.f32.xlu0 %v5021
        %v5023 = vpop.xlane.xlu0 %5022
        %v5024 = vsel %vm1549, %v4945, 0.0
        %5025 = vadd.xlane.f32.xlu0 %v5024
        %v5026 = vpop.xlane.xlu0 %5025
        %v5027 = vsel %vm1549, %v4947, 0.0
        %5028 = vadd.xlane.f32.xlu0 %v5027
        %v5029 = vpop.xlane.xlu0 %5028
        %v5030 = vsel %vm1549, %v4949, 0.0
        %5031 = vadd.xlane.f32.xlu0 %v5030
        %v5032 = vpop.xlane.xlu0 %5031
        %v5033 = vsel %vm1549, %v4951, 0.0
        %5034 = vadd.xlane.f32.xlu0 %v5033
        %v5035 = vpop.xlane.xlu0 %5034
        %v5036 = vsel %vm1549, %v4953, 0.0
        %5037 = vadd.xlane.f32.xlu0 %v5036
        %v5038 = vpop.xlane.xlu0 %5037
        %v5039 = vsel %vm1549, %v4955, 0.0
        %5040 = vadd.xlane.f32.xlu0 %v5039
        %v5041 = vpop.xlane.xlu0 %5040
        %v5042 = vsel %vm1549, %v4957, 0.0
        %5043 = vadd.xlane.f32.xlu0 %v5042
        %v5044 = vpop.xlane.xlu0 %5043
        %v5045 = vsel %vm1549, %v4959, 0.0
        %5046 = vadd.xlane.f32.xlu0 %v5045
        %v5047 = vpop.xlane.xlu0 %5046
        %v5048 = vsel %vm1549, %v4961, 0.0
        %5049 = vadd.xlane.f32.xlu0 %v5048
        %v5050 = vpop.xlane.xlu0 %5049
        %v5051 = vsel %vm1549, %v4963, 0.0
        %5052 = vadd.xlane.f32.xlu0 %v5051
        %v5053 = vpop.xlane.xlu0 %5052
        %v5054 = vsel %vm1549, %v4965, 0.0
        %5055 = vadd.xlane.f32.xlu0 %v5054
        %v5056 = vpop.xlane.xlu0 %5055
        %v5057 = vsel %vm1549, %v4967, 0.0
        %5058 = vadd.xlane.f32.xlu0 %v5057
        %v5059 = vpop.xlane.xlu0 %5058
        %v5060 = vsel %vm1549, %v4969, 0.0
        %5061 = vadd.xlane.f32.xlu0 %v5060
        %v5062 = vpop.xlane.xlu0 %5061
        %v5063 = vsel %vm1549, %v4971, 0.0
        %5064 = vadd.xlane.f32.xlu0 %v5063
        %v5065 = vpop.xlane.xlu0 %5064
        %v5066 = vsel %vm1549, %v4973, 0.0
        %5067 = vadd.xlane.f32.xlu0 %v5066
        %v5068 = vpop.xlane.xlu0 %5067
        %v5069 = vsel %vm1549, %v4975, 0.0
        %5070 = vadd.xlane.f32.xlu0 %v5069
        %v5071 = vpop.xlane.xlu0 %5070
        %v5072 = vrcp.pop %v4978
        %v5073 = vrcp.pop %v4981
        %v5074 = vrcp.pop %v4984
        %v5075 = vrcp.pop %v4987
        %v5076 = vrcp.pop %v4990
        %v5077 = vrcp.pop %v4993
        %v5078 = vrcp.pop %v4996
        %v5079 = vrcp.pop %v4999
        %v5080 = vrcp.pop %v5002
        %v5081 = vrcp.pop %v5005
        %v5082 = vrcp.pop %v5008
        %v5083 = vrcp.pop %v5011
        %v5084 = vrcp.pop %v5014
        %v5085 = vrcp.pop %v5017
        %v5086 = vrcp.pop %v5020
        %v5087 = vrcp.pop %v5023
        %v5088 = vrcp.pop %v5026
        %v5089 = vrcp.pop %v5029
        %v5090 = vrcp.pop %v5032
        %v5091 = vrcp.pop %v5035
        %v5092 = vrcp.pop %v5038
        %v5093 = vrcp.pop %v5041
        %v5094 = vrcp.pop %v5044
        %v5095 = vrcp.pop %v5047
        %v5096 = vrcp.pop %v5050
        %v5097 = vrcp.pop %v5053
        %v5098 = vrcp.pop %v5056
        %v5099 = vrcp.pop %v5059
        %v5100 = vrcp.pop %v5062
        %v5101 = vrcp.pop %v5065
        %v5102 = vrcp.pop %v5068
        %v5103 = vrcp.pop %v5071
        %v5104 = vmul.f32 %v4913, %v5072
        %v5105 = vmul.f32 %v4915, %v5073
        %v5106 = vmul.f32 %v4917, %v5074
        %v5107 = vmul.f32 %v4919, %v5075
        %v5108 = vmul.f32 %v4921, %v5076
        %v5109 = vmul.f32 %v4923, %v5077
        %v5110 = vmul.f32 %v4925, %v5078
        %v5111 = vmul.f32 %v4927, %v5079
        %v5112 = vmul.f32 %v4929, %v5080
        %v5113 = vmul.f32 %v4931, %v5081
        %v5114 = vmul.f32 %v4933, %v5082
        %v5115 = vmul.f32 %v4935, %v5083
        %v5116 = vmul.f32 %v4937, %v5084
        %v5117 = vmul.f32 %v4939, %v5085
        %v5118 = vmul.f32 %v4941, %v5086
        %v5119 = vmul.f32 %v4943, %v5087
        %v5120 = vmul.f32 %v4945, %v5088
        %v5121 = vmul.f32 %v4947, %v5089
        %v5122 = vmul.f32 %v4949, %v5090
        %v5123 = vmul.f32 %v4951, %v5091
        %v5124 = vmul.f32 %v4953, %v5092
        %v5125 = vmul.f32 %v4955, %v5093
        %v5126 = vmul.f32 %v4957, %v5094
        %v5127 = vmul.f32 %v4959, %v5095
        %v5128 = vmul.f32 %v4961, %v5096
        %v5129 = vmul.f32 %v4963, %v5097
        %v5130 = vmul.f32 %v4965, %v5098
        %v5131 = vmul.f32 %v4967, %v5099
        %v5132 = vmul.f32 %v4969, %v5100
        %v5133 = vmul.f32 %v4971, %v5101
        %v5134 = vmul.f32 %v4973, %v5102
        %v5135 = vmul.f32 %v4975, %v5103
        %5136 = vrot.lane.b32.xlu0 %v738, 64
        %v5137 = vpop.permute.xlu0 %5136
        %5138 = vrot.lane.b32.xlu0 %v743, 64
        %v5139 = vpop.permute.xlu0 %5138
        %5140 = vrot.lane.b32.xlu0 %v748, 64
        %v5141 = vpop.permute.xlu0 %5140
        %5142 = vrot.lane.b32.xlu0 %v753, 64
        %v5143 = vpop.permute.xlu0 %5142
        %5144 = vrot.lane.b32.xlu0 %v758, 64
        %v5145 = vpop.permute.xlu0 %5144
        %5146 = vrot.lane.b32.xlu0 %v763, 64
        %v5147 = vpop.permute.xlu0 %5146
        %5148 = vrot.lane.b32.xlu0 %v768, 64
        %v5149 = vpop.permute.xlu0 %5148
        %5150 = vrot.lane.b32.xlu0 %v773, 64
        %v5151 = vpop.permute.xlu0 %5150
        %v5161 = vsel %vm1549, %v5104, 0
        %v5164 = vsel %vm1549, %v5105, 0
        %v5167 = vsel %vm1549, %v5106, 0
        %v5170 = vsel %vm1549, %v5107, 0
        %v5173 = vsel %vm1549, %v5108, 0
        %v5176 = vsel %vm1549, %v5109, 0
        %v5179 = vsel %vm1549, %v5110, 0
        %v5182 = vsel %vm1549, %v5111, 0
        %5184 = vmatprep.subr.mxu0 0.0
        %5185 = vmatpush1.msra.mxu0 %v5137
        %5186 = vmatprep.subr.mxu0 0.0
        %5187 = vmatpush1.msra.mxu0 %v5139
        %5188 = vmatprep.subr.mxu0 0.0
        %5189 = vmatpush1.msra.mxu0 %v5141
        %5190 = vmatprep.subr.mxu0 0.0
        %5191 = vmatpush1.msra.mxu0 %v5143
        %5192 = vmatprep.subr.mxu0 0.0
        %5193 = vmatpush1.msra.mxu0 %v5145
        %5194 = vmatprep.subr.mxu0 0.0
        %5195 = vmatpush1.msra.mxu0 %v5147
        %5196 = vmatprep.subr.mxu0 0.0
        %5197 = vmatpush1.msra.mxu0 %v5149
        %5198 = vmatprep.subr.mxu0 0.0
        %5199 = vmatpush1.msra.mxu0 %v5151
        %5200 = vmatprep.subr.mxu0 0.0
        %5201 = vmatpush1.msra.mxu0 0.0
        %5202 = vmatprep.subr.mxu0 0.0
        %5203 = vmatpush1.msra.mxu0 0.0
        %5204 = vmatprep.subr.mxu0 0.0
        %5205 = vmatpush1.msra.mxu0 0.0
        %5206 = vmatprep.subr.mxu0 0.0
        %5207 = vmatpush1.msra.mxu0 0.0
        %5208 = vmatprep.subr.mxu0 0.0
        %5209 = vmatpush1.msra.mxu0 0.0
        %5210 = vmatprep.subr.mxu0 0.0
        %5211 = vmatpush1.msra.mxu0 0.0
        %5212 = vmatprep.subr.mxu0 0.0
        %5213 = vmatpush1.msra.mxu0 0.0
        %5214 = vmatprep.subr.mxu0 0.0
        %5215 = vmatpush1.msra.mxu0 0.0
        %5216 = vmatprep.subr.mxu0 0.0
        %5217 = vmatpush1.msra.mxu0 0.0
        %5218 = vmatprep.subr.mxu0 0.0
        %5219 = vmatpush1.msra.mxu0 0.0
        %5220 = vmatprep.subr.mxu0 0.0
        %5221 = vmatpush1.msra.mxu0 0.0
        %5222 = vmatprep.subr.mxu0 0.0
        %5223 = vmatpush1.msra.mxu0 0.0
        %5224 = vmatprep.subr.mxu0 0.0
        %5225 = vmatpush1.msra.mxu0 0.0
        %5226 = vmatprep.subr.mxu0 0.0
        %5227 = vmatpush1.msra.mxu0 0.0
        %5228 = vmatprep.subr.mxu0 0.0
        %5229 = vmatpush1.msra.mxu0 0.0
        %5230 = vmatprep.subr.mxu0 0.0
        %5231 = vmatpush1.msra.mxu0 0.0
        %5232 = vmatprep.subr.mxu0 0.0
        %5233 = vmatpush1.msra.mxu0 0.0
        %5234 = vmatprep.subr.mxu0 0.0
        %5235 = vmatpush1.msra.mxu0 0.0
        %5236 = vmatprep.subr.mxu0 0.0
        %5237 = vmatpush1.msra.mxu0 0.0
        %5238 = vmatprep.subr.mxu0 0.0
        %5239 = vmatpush1.msra.mxu0 0.0
        %5240 = vmatprep.subr.mxu0 0.0
        %5241 = vmatpush1.msra.mxu0 0.0
        %5242 = vmatprep.subr.mxu0 0.0
        %5243 = vmatpush1.msra.mxu0 0.0
        %5244 = vmatprep.subr.mxu0 0.0
        %5245 = vmatpush1.msra.mxu0 0.0
        %5246 = vmatprep.subr.mxu0 0.0
        %5247 = vmatpush1.msra.mxu0 0.0
        %5248 = vmatprep.mubr.f32.mxu0 0.0
        %5249 = vmatmul.mubr.f32.gmra.mrb[0].mxu0 %v5161
        %v5250 = vpop.f32.mrb[0].mxu0
        %v5251 = vadd.f32 0.0, %v5250
        %v5252 = vpop.f32.mrb[0].mxu0
        %5253 = vmatprep.mubr.f32.mxu0 0.0
        %5254 = vmatmul.mubr.f32.gmra.mrb[0].mxu0 %v5164
        %v5255 = vpop.f32.mrb[0].mxu0
        %v5256 = vadd.f32 0.0, %v5255
        %v5257 = vpop.f32.mrb[0].mxu0
        %5258 = vmatprep.mubr.f32.mxu0 0.0
        %5259 = vmatmul.mubr.f32.gmra.mrb[0].mxu0 %v5167
        %v5260 = vpop.f32.mrb[0].mxu0
        %v5261 = vadd.f32 0.0, %v5260
        %v5262 = vpop.f32.mrb[0].mxu0
        %5263 = vmatprep.mubr.f32.mxu0 0.0
        %5264 = vmatmul.mubr.f32.gmra.mrb[0].mxu0 %v5170
        %v5265 = vpop.f32.mrb[0].mxu0
        %v5266 = vadd.f32 0.0, %v5265
        %v5267 = vpop.f32.mrb[0].mxu0
        %5268 = vmatprep.mubr.f32.mxu0 0.0
        %5269 = vmatmul.mubr.f32.gmra.mrb[0].mxu0 %v5173
        %v5270 = vpop.f32.mrb[0].mxu0
        %v5271 = vadd.f32 0.0, %v5270
        %v5272 = vpop.f32.mrb[0].mxu0
        %5273 = vmatprep.mubr.f32.mxu0 0.0
        %5274 = vmatmul.mubr.f32.gmra.mrb[0].mxu0 %v5176
        %v5275 = vpop.f32.mrb[0].mxu0
        %v5276 = vadd.f32 0.0, %v5275
        %v5277 = vpop.f32.mrb[0].mxu0
        %5278 = vmatprep.mubr.f32.mxu0 0.0
        %5279 = vmatmul.mubr.f32.gmra.mrb[0].mxu0 %v5179
        %v5280 = vpop.f32.mrb[0].mxu0
        %v5281 = vadd.f32 0.0, %v5280
        %v5282 = vpop.f32.mrb[0].mxu0
        %5283 = vmatprep.mubr.f32.mxu0 0.0
        %5284 = vmatmul.mubr.f32.gmra.mrb[0].mxu0 %v5182
        %v5285 = vpop.f32.mrb[0].mxu0
        %v5286 = vadd.f32 0.0, %v5285
        %v5287 = vpop.f32.mrb[0].mxu0
        %5288 = vdwg.mxu0
        %5289 = vrot.lane.b32.xlu0 %v778, 64
        %v5290 = vpop.permute.xlu0 %5289
        %5291 = vrot.lane.b32.xlu0 %v783, 64
        %v5292 = vpop.permute.xlu0 %5291
        %5293 = vrot.lane.b32.xlu0 %v788, 64
        %v5294 = vpop.permute.xlu0 %5293
        %5295 = vrot.lane.b32.xlu0 %v793, 64
        %v5296 = vpop.permute.xlu0 %5295
        %5297 = vrot.lane.b32.xlu0 %v798, 64
        %v5298 = vpop.permute.xlu0 %5297
        %5299 = vrot.lane.b32.xlu0 %v803, 64
        %v5300 = vpop.permute.xlu0 %5299
        %5301 = vrot.lane.b32.xlu0 %v808, 64
        %v5302 = vpop.permute.xlu0 %5301
        %5303 = vrot.lane.b32.xlu0 %v813, 64
        %v5304 = vpop.permute.xlu0 %5303
        %v5314 = vsel %vm1549, %v5112, 0
        %v5317 = vsel %vm1549, %v5113, 0
        %v5320 = vsel %vm1549, %v5114, 0
        %v5323 = vsel %vm1549, %v5115, 0
        %v5326 = vsel %vm1549, %v5116, 0
        %v5329 = vsel %vm1549, %v5117, 0
        %v5332 = vsel %vm1549, %v5118, 0
        %v5335 = vsel %vm1549, %v5119, 0
        %5337 = vmatprep.subr.mxu0 0.0
        %5338 = vmatpush1.msra.mxu0 %v5290
        %5339 = vmatprep.subr.mxu0 0.0
        %5340 = vmatpush1.msra.mxu0 %v5292
        %5341 = vmatprep.subr.mxu0 0.0
        %5342 = vmatpush1.msra.mxu0 %v5294
        %5343 = vmatprep.subr.mxu0 0.0
        %5344 = vmatpush1.msra.mxu0 %v5296
        %5345 = vmatprep.subr.mxu0 0.0
        %5346 = vmatpush1.msra.mxu0 %v5298
        %5347 = vmatprep.subr.mxu0 0.0
        %5348 = vmatpush1.msra.mxu0 %v5300
        %5349 = vmatprep.subr.mxu0 0.0
        %5350 = vmatpush1.msra.mxu0 %v5302
        %5351 = vmatprep.subr.mxu0 0.0
        %5352 = vmatpush1.msra.mxu0 %v5304
        %5353 = vmatprep.subr.mxu0 0.0
        %5354 = vmatpush1.msra.mxu0 0.0
        %5355 = vmatprep.subr.mxu0 0.0
        %5356 = vmatpush1.msra.mxu0 0.0
        %5357 = vmatprep.subr.mxu0 0.0
        %5358 = vmatpush1.msra.mxu0 0.0
        %5359 = vmatprep.subr.mxu0 0.0
        %5360 = vmatpush1.msra.mxu0 0.0
        %5361 = vmatprep.subr.mxu0 0.0
        %5362 = vmatpush1.msra.mxu0 0.0
        %5363 = vmatprep.subr.mxu0 0.0
        %5364 = vmatpush1.msra.mxu0 0.0
        %5365 = vmatprep.subr.mxu0 0.0
        %5366 = vmatpush1.msra.mxu0 0.0
        %5367 = vmatprep.subr.mxu0 0.0
        %5368 = vmatpush1.msra.mxu0 0.0
        %5369 = vmatprep.subr.mxu0 0.0
        %5370 = vmatpush1.msra.mxu0 0.0
        %5371 = vmatprep.subr.mxu0 0.0
        %5372 = vmatpush1.msra.mxu0 0.0
        %5373 = vmatprep.subr.mxu0 0.0
        %5374 = vmatpush1.msra.mxu0 0.0
        %5375 = vmatprep.subr.mxu0 0.0
        %5376 = vmatpush1.msra.mxu0 0.0
        %5377 = vmatprep.subr.mxu0 0.0
        %5378 = vmatpush1.msra.mxu0 0.0
        %5379 = vmatprep.subr.mxu0 0.0
        %5380 = vmatpush1.msra.mxu0 0.0
        %5381 = vmatprep.subr.mxu0 0.0
        %5382 = vmatpush1.msra.mxu0 0.0
        %5383 = vmatprep.subr.mxu0 0.0
        %5384 = vmatpush1.msra.mxu0 0.0
        %5385 = vmatprep.subr.mxu0 0.0
        %5386 = vmatpush1.msra.mxu0 0.0
        %5387 = vmatprep.subr.mxu0 0.0
        %5388 = vmatpush1.msra.mxu0 0.0
        %5389 = vmatprep.subr.mxu0 0.0
        %5390 = vmatpush1.msra.mxu0 0.0
        %5391 = vmatprep.subr.mxu0 0.0
        %5392 = vmatpush1.msra.mxu0 0.0
        %5393 = vmatprep.subr.mxu0 0.0
        %5394 = vmatpush1.msra.mxu0 0.0
        %5395 = vmatprep.subr.mxu0 0.0
        %5396 = vmatpush1.msra.mxu0 0.0
        %5397 = vmatprep.subr.mxu0 0.0
        %5398 = vmatpush1.msra.mxu0 0.0
        %5399 = vmatprep.subr.mxu0 0.0
        %5400 = vmatpush1.msra.mxu0 0.0
        %5401 = vmatprep.mubr.f32.mxu0 0.0
        %5402 = vmatmul.mubr.f32.gmra.mrb[0].mxu0 %v5314
        %v5403 = vpop.f32.mrb[0].mxu0
        %v5404 = vadd.f32 0.0, %v5403
        %v5405 = vpop.f32.mrb[0].mxu0
        %5406 = vmatprep.mubr.f32.mxu0 0.0
        %5407 = vmatmul.mubr.f32.gmra.mrb[0].mxu0 %v5317
        %v5408 = vpop.f32.mrb[0].mxu0
        %v5409 = vadd.f32 0.0, %v5408
        %v5410 = vpop.f32.mrb[0].mxu0
        %5411 = vmatprep.mubr.f32.mxu0 0.0
        %5412 = vmatmul.mubr.f32.gmra.mrb[0].mxu0 %v5320
        %v5413 = vpop.f32.mrb[0].mxu0
        %v5414 = vadd.f32 0.0, %v5413
        %v5415 = vpop.f32.mrb[0].mxu0
        %5416 = vmatprep.mubr.f32.mxu0 0.0
        %5417 = vmatmul.mubr.f32.gmra.mrb[0].mxu0 %v5323
        %v5418 = vpop.f32.mrb[0].mxu0
        %v5419 = vadd.f32 0.0, %v5418
        %v5420 = vpop.f32.mrb[0].mxu0
        %5421 = vmatprep.mubr.f32.mxu0 0.0
        %5422 = vmatmul.mubr.f32.gmra.mrb[0].mxu0 %v5326
        %v5423 = vpop.f32.mrb[0].mxu0
        %v5424 = vadd.f32 0.0, %v5423
        %v5425 = vpop.f32.mrb[0].mxu0
        %5426 = vmatprep.mubr.f32.mxu0 0.0
        %5427 = vmatmul.mubr.f32.gmra.mrb[0].mxu0 %v5329
        %v5428 = vpop.f32.mrb[0].mxu0
        %v5429 = vadd.f32 0.0, %v5428
        %v5430 = vpop.f32.mrb[0].mxu0
        %5431 = vmatprep.mubr.f32.mxu0 0.0
        %5432 = vmatmul.mubr.f32.gmra.mrb[0].mxu0 %v5332
        %v5433 = vpop.f32.mrb[0].mxu0
        %v5434 = vadd.f32 0.0, %v5433
        %v5435 = vpop.f32.mrb[0].mxu0
        %5436 = vmatprep.mubr.f32.mxu0 0.0
        %5437 = vmatmul.mubr.f32.gmra.mrb[0].mxu0 %v5335
        %v5438 = vpop.f32.mrb[0].mxu0
        %v5439 = vadd.f32 0.0, %v5438
        %v5440 = vpop.f32.mrb[0].mxu0
        %5441 = vdwg.mxu0
        %5442 = vrot.lane.b32.xlu0 %v818, 64
        %v5443 = vpop.permute.xlu0 %5442
        %5444 = vrot.lane.b32.xlu0 %v823, 64
        %v5445 = vpop.permute.xlu0 %5444
        %5446 = vrot.lane.b32.xlu0 %v828, 64
        %v5447 = vpop.permute.xlu0 %5446
        %5448 = vrot.lane.b32.xlu0 %v833, 64
        %v5449 = vpop.permute.xlu0 %5448
        %5450 = vrot.lane.b32.xlu0 %v838, 64
        %v5451 = vpop.permute.xlu0 %5450
        %5452 = vrot.lane.b32.xlu0 %v843, 64
        %v5453 = vpop.permute.xlu0 %5452
        %5454 = vrot.lane.b32.xlu0 %v848, 64
        %v5455 = vpop.permute.xlu0 %5454
        %5456 = vrot.lane.b32.xlu0 %v853, 64
        %v5457 = vpop.permute.xlu0 %5456
        %v5467 = vsel %vm1549, %v5120, 0
        %v5470 = vsel %vm1549, %v5121, 0
        %v5473 = vsel %vm1549, %v5122, 0
        %v5476 = vsel %vm1549, %v5123, 0
        %v5479 = vsel %vm1549, %v5124, 0
        %v5482 = vsel %vm1549, %v5125, 0
        %v5485 = vsel %vm1549, %v5126, 0
        %v5488 = vsel %vm1549, %v5127, 0
        %5490 = vmatprep.subr.mxu0 0.0
        %5491 = vmatpush1.msra.mxu0 %v5443
        %5492 = vmatprep.subr.mxu0 0.0
        %5493 = vmatpush1.msra.mxu0 %v5445
        %5494 = vmatprep.subr.mxu0 0.0
        %5495 = vmatpush1.msra.mxu0 %v5447
        %5496 = vmatprep.subr.mxu0 0.0
        %5497 = vmatpush1.msra.mxu0 %v5449
        %5498 = vmatprep.subr.mxu0 0.0
        %5499 = vmatpush1.msra.mxu0 %v5451
        %5500 = vmatprep.subr.mxu0 0.0
        %5501 = vmatpush1.msra.mxu0 %v5453
        %5502 = vmatprep.subr.mxu0 0.0
        %5503 = vmatpush1.msra.mxu0 %v5455
        %5504 = vmatprep.subr.mxu0 0.0
        %5505 = vmatpush1.msra.mxu0 %v5457
        %5506 = vmatprep.subr.mxu0 0.0
        %5507 = vmatpush1.msra.mxu0 0.0
        %5508 = vmatprep.subr.mxu0 0.0
        %5509 = vmatpush1.msra.mxu0 0.0
        %5510 = vmatprep.subr.mxu0 0.0
        %5511 = vmatpush1.msra.mxu0 0.0
        %5512 = vmatprep.subr.mxu0 0.0
        %5513 = vmatpush1.msra.mxu0 0.0
        %5514 = vmatprep.subr.mxu0 0.0
        %5515 = vmatpush1.msra.mxu0 0.0
        %5516 = vmatprep.subr.mxu0 0.0
        %5517 = vmatpush1.msra.mxu0 0.0
        %5518 = vmatprep.subr.mxu0 0.0
        %5519 = vmatpush1.msra.mxu0 0.0
        %5520 = vmatprep.subr.mxu0 0.0
        %5521 = vmatpush1.msra.mxu0 0.0
        %5522 = vmatprep.subr.mxu0 0.0
        %5523 = vmatpush1.msra.mxu0 0.0
        %5524 = vmatprep.subr.mxu0 0.0
        %5525 = vmatpush1.msra.mxu0 0.0
        %5526 = vmatprep.subr.mxu0 0.0
        %5527 = vmatpush1.msra.mxu0 0.0
        %5528 = vmatprep.subr.mxu0 0.0
        %5529 = vmatpush1.msra.mxu0 0.0
        %5530 = vmatprep.subr.mxu0 0.0
        %5531 = vmatpush1.msra.mxu0 0.0
        %5532 = vmatprep.subr.mxu0 0.0
        %5533 = vmatpush1.msra.mxu0 0.0
        %5534 = vmatprep.subr.mxu0 0.0
        %5535 = vmatpush1.msra.mxu0 0.0
        %5536 = vmatprep.subr.mxu0 0.0
        %5537 = vmatpush1.msra.mxu0 0.0
        %5538 = vmatprep.subr.mxu0 0.0
        %5539 = vmatpush1.msra.mxu0 0.0
        %5540 = vmatprep.subr.mxu0 0.0
        %5541 = vmatpush1.msra.mxu0 0.0
        %5542 = vmatprep.subr.mxu0 0.0
        %5543 = vmatpush1.msra.mxu0 0.0
        %5544 = vmatprep.subr.mxu0 0.0
        %5545 = vmatpush1.msra.mxu0 0.0
        %5546 = vmatprep.subr.mxu0 0.0
        %5547 = vmatpush1.msra.mxu0 0.0
        %5548 = vmatprep.subr.mxu0 0.0
        %5549 = vmatpush1.msra.mxu0 0.0
        %5550 = vmatprep.subr.mxu0 0.0
        %5551 = vmatpush1.msra.mxu0 0.0
        %5552 = vmatprep.subr.mxu0 0.0
        %5553 = vmatpush1.msra.mxu0 0.0
        %5554 = vmatprep.mubr.f32.mxu0 0.0
        %5555 = vmatmul.mubr.f32.gmra.mrb[0].mxu0 %v5467
        %v5556 = vpop.f32.mrb[0].mxu0
        %v5557 = vadd.f32 0.0, %v5556
        %v5558 = vpop.f32.mrb[0].mxu0
        %5559 = vmatprep.mubr.f32.mxu0 0.0
        %5560 = vmatmul.mubr.f32.gmra.mrb[0].mxu0 %v5470
        %v5561 = vpop.f32.mrb[0].mxu0
        %v5562 = vadd.f32 0.0, %v5561
        %v5563 = vpop.f32.mrb[0].mxu0
        %5564 = vmatprep.mubr.f32.mxu0 0.0
        %5565 = vmatmul.mubr.f32.gmra.mrb[0].mxu0 %v5473
        %v5566 = vpop.f32.mrb[0].mxu0
        %v5567 = vadd.f32 0.0, %v5566
        %v5568 = vpop.f32.mrb[0].mxu0
        %5569 = vmatprep.mubr.f32.mxu0 0.0
        %5570 = vmatmul.mubr.f32.gmra.mrb[0].mxu0 %v5476
        %v5571 = vpop.f32.mrb[0].mxu0
        %v5572 = vadd.f32 0.0, %v5571
        %v5573 = vpop.f32.mrb[0].mxu0
        %5574 = vmatprep.mubr.f32.mxu0 0.0
        %5575 = vmatmul.mubr.f32.gmra.mrb[0].mxu0 %v5479
        %v5576 = vpop.f32.mrb[0].mxu0
        %v5577 = vadd.f32 0.0, %v5576
        %v5578 = vpop.f32.mrb[0].mxu0
        %5579 = vmatprep.mubr.f32.mxu0 0.0
        %5580 = vmatmul.mubr.f32.gmra.mrb[0].mxu0 %v5482
        %v5581 = vpop.f32.mrb[0].mxu0
        %v5582 = vadd.f32 0.0, %v5581
        %v5583 = vpop.f32.mrb[0].mxu0
        %5584 = vmatprep.mubr.f32.mxu0 0.0
        %5585 = vmatmul.mubr.f32.gmra.mrb[0].mxu0 %v5485
        %v5586 = vpop.f32.mrb[0].mxu0
        %v5587 = vadd.f32 0.0, %v5586
        %v5588 = vpop.f32.mrb[0].mxu0
        %5589 = vmatprep.mubr.f32.mxu0 0.0
        %5590 = vmatmul.mubr.f32.gmra.mrb[0].mxu0 %v5488
        %v5591 = vpop.f32.mrb[0].mxu0
        %v5592 = vadd.f32 0.0, %v5591
        %v5593 = vpop.f32.mrb[0].mxu0
        %5594 = vdwg.mxu0
        %5595 = vrot.lane.b32.xlu0 %v858, 64
        %v5596 = vpop.permute.xlu0 %5595
        %5597 = vrot.lane.b32.xlu0 %v863, 64
        %v5598 = vpop.permute.xlu0 %5597
        %5599 = vrot.lane.b32.xlu0 %v868, 64
        %v5600 = vpop.permute.xlu0 %5599
        %5601 = vrot.lane.b32.xlu0 %v873, 64
        %v5602 = vpop.permute.xlu0 %5601
        %5603 = vrot.lane.b32.xlu0 %v878, 64
        %v5604 = vpop.permute.xlu0 %5603
        %5605 = vrot.lane.b32.xlu0 %v883, 64
        %v5606 = vpop.permute.xlu0 %5605
        %5607 = vrot.lane.b32.xlu0 %v888, 64
        %v5608 = vpop.permute.xlu0 %5607
        %5609 = vrot.lane.b32.xlu0 %v893, 64
        %v5610 = vpop.permute.xlu0 %5609
        %v5620 = vsel %vm1549, %v5128, 0
        %v5623 = vsel %vm1549, %v5129, 0
        %v5626 = vsel %vm1549, %v5130, 0
        %v5629 = vsel %vm1549, %v5131, 0
        %v5632 = vsel %vm1549, %v5132, 0
        %v5635 = vsel %vm1549, %v5133, 0
        %v5638 = vsel %vm1549, %v5134, 0
        %v5641 = vsel %vm1549, %v5135, 0
        %5643 = vmatprep.subr.mxu0 0.0
        %5644 = vmatpush1.msra.mxu0 %v5596
        %5645 = vmatprep.subr.mxu0 0.0
        %5646 = vmatpush1.msra.mxu0 %v5598
        %5647 = vmatprep.subr.mxu0 0.0
        %5648 = vmatpush1.msra.mxu0 %v5600
        %5649 = vmatprep.subr.mxu0 0.0
        %5650 = vmatpush1.msra.mxu0 %v5602
        %5651 = vmatprep.subr.mxu0 0.0
        %5652 = vmatpush1.msra.mxu0 %v5604
        %5653 = vmatprep.subr.mxu0 0.0
        %5654 = vmatpush1.msra.mxu0 %v5606
        %5655 = vmatprep.subr.mxu0 0.0
        %5656 = vmatpush1.msra.mxu0 %v5608
        %5657 = vmatprep.subr.mxu0 0.0
        %5658 = vmatpush1.msra.mxu0 %v5610
        %5659 = vmatprep.subr.mxu0 0.0
        %5660 = vmatpush1.msra.mxu0 0.0
        %5661 = vmatprep.subr.mxu0 0.0
        %5662 = vmatpush1.msra.mxu0 0.0
        %5663 = vmatprep.subr.mxu0 0.0
        %5664 = vmatpush1.msra.mxu0 0.0
        %5665 = vmatprep.subr.mxu0 0.0
        %5666 = vmatpush1.msra.mxu0 0.0
        %5667 = vmatprep.subr.mxu0 0.0
        %5668 = vmatpush1.msra.mxu0 0.0
        %5669 = vmatprep.subr.mxu0 0.0
        %5670 = vmatpush1.msra.mxu0 0.0
        %5671 = vmatprep.subr.mxu0 0.0
        %5672 = vmatpush1.msra.mxu0 0.0
        %5673 = vmatprep.subr.mxu0 0.0
        %5674 = vmatpush1.msra.mxu0 0.0
        %5675 = vmatprep.subr.mxu0 0.0
        %5676 = vmatpush1.msra.mxu0 0.0
        %5677 = vmatprep.subr.mxu0 0.0
        %5678 = vmatpush1.msra.mxu0 0.0
        %5679 = vmatprep.subr.mxu0 0.0
        %5680 = vmatpush1.msra.mxu0 0.0
        %5681 = vmatprep.subr.mxu0 0.0
        %5682 = vmatpush1.msra.mxu0 0.0
        %5683 = vmatprep.subr.mxu0 0.0
        %5684 = vmatpush1.msra.mxu0 0.0
        %5685 = vmatprep.subr.mxu0 0.0
        %5686 = vmatpush1.msra.mxu0 0.0
        %5687 = vmatprep.subr.mxu0 0.0
        %5688 = vmatpush1.msra.mxu0 0.0
        %5689 = vmatprep.subr.mxu0 0.0
        %5690 = vmatpush1.msra.mxu0 0.0
        %5691 = vmatprep.subr.mxu0 0.0
        %5692 = vmatpush1.msra.mxu0 0.0
        %5693 = vmatprep.subr.mxu0 0.0
        %5694 = vmatpush1.msra.mxu0 0.0
        %5695 = vmatprep.subr.mxu0 0.0
        %5696 = vmatpush1.msra.mxu0 0.0
        %5697 = vmatprep.subr.mxu0 0.0
        %5698 = vmatpush1.msra.mxu0 0.0
        %5699 = vmatprep.subr.mxu0 0.0
        %5700 = vmatpush1.msra.mxu0 0.0
        %5701 = vmatprep.subr.mxu0 0.0
        %5702 = vmatpush1.msra.mxu0 0.0
        %5703 = vmatprep.subr.mxu0 0.0
        %5704 = vmatpush1.msra.mxu0 0.0
        %5705 = vmatprep.subr.mxu0 0.0
        %5706 = vmatpush1.msra.mxu0 0.0
        %5707 = vmatprep.mubr.f32.mxu0 0.0
        %5708 = vmatmul.mubr.f32.gmra.mrb[0].mxu0 %v5620
        %v5709 = vpop.f32.mrb[0].mxu0
        %v5710 = vadd.f32 0.0, %v5709
        %v5711 = vpop.f32.mrb[0].mxu0
        %5712 = vmatprep.mubr.f32.mxu0 0.0
        %5713 = vmatmul.mubr.f32.gmra.mrb[0].mxu0 %v5623
        %v5714 = vpop.f32.mrb[0].mxu0
        %v5715 = vadd.f32 0.0, %v5714
        %v5716 = vpop.f32.mrb[0].mxu0
        %5717 = vmatprep.mubr.f32.mxu0 0.0
        %5718 = vmatmul.mubr.f32.gmra.mrb[0].mxu0 %v5626
        %v5719 = vpop.f32.mrb[0].mxu0
        %v5720 = vadd.f32 0.0, %v5719
        %v5721 = vpop.f32.mrb[0].mxu0
        %5722 = vmatprep.mubr.f32.mxu0 0.0
        %5723 = vmatmul.mubr.f32.gmra.mrb[0].mxu0 %v5629
        %v5724 = vpop.f32.mrb[0].mxu0
        %v5725 = vadd.f32 0.0, %v5724
        %v5726 = vpop.f32.mrb[0].mxu0
        %5727 = vmatprep.mubr.f32.mxu0 0.0
        %5728 = vmatmul.mubr.f32.gmra.mrb[0].mxu0 %v5632
        %v5729 = vpop.f32.mrb[0].mxu0
        %v5730 = vadd.f32 0.0, %v5729
        %v5731 = vpop.f32.mrb[0].mxu0
        %5732 = vmatprep.mubr.f32.mxu0 0.0
        %5733 = vmatmul.mubr.f32.gmra.mrb[0].mxu0 %v5635
        %v5734 = vpop.f32.mrb[0].mxu0
        %v5735 = vadd.f32 0.0, %v5734
        %v5736 = vpop.f32.mrb[0].mxu0
        %5737 = vmatprep.mubr.f32.mxu0 0.0
        %5738 = vmatmul.mubr.f32.gmra.mrb[0].mxu0 %v5638
        %v5739 = vpop.f32.mrb[0].mxu0
        %v5740 = vadd.f32 0.0, %v5739
        %v5741 = vpop.f32.mrb[0].mxu0
        %5742 = vmatprep.mubr.f32.mxu0 0.0
        %5743 = vmatmul.mubr.f32.gmra.mrb[0].mxu0 %v5641
        %v5744 = vpop.f32.mrb[0].mxu0
        %v5745 = vadd.f32 0.0, %v5744
        %v5746 = vpop.f32.mrb[0].mxu0
        %5747 = vdwg.mxu0
        %s5748 = scalar_lea.vmem [#allocation7], 192
        %v5749 = vld [vmem:[%s5748] sm:$0xff]
        %v5750 = vld [vmem:[%s5748 + $0x8] sm:$0xff]
        %v5751 = vld [vmem:[%s5748 + $0x10] sm:$0xff]
        %v5752 = vld [vmem:[%s5748 + $0x18] sm:$0xff]
        %v5753 = vld [vmem:[%s5748 + $0x20] sm:$0xff]
        %v5754 = vld [vmem:[%s5748 + $0x28] sm:$0xff]
        %v5755 = vld [vmem:[%s5748 + $0x30] sm:$0xff]
        %v5756 = vld [vmem:[%s5748 + $0x38] sm:$0xff]
        %5757 = vrot.lane.b32.xlu0 %v896, 32
        %v5758 = vpop.permute.xlu0 %5757
        %5759 = vrot.lane.b32.xlu0 %v897, 32
        %v5760 = vpop.permute.xlu0 %5759
        %5761 = vrot.lane.b32.xlu0 %v898, 32
        %v5762 = vpop.permute.xlu0 %5761
        %5763 = vrot.lane.b32.xlu0 %v899, 32
        %v5764 = vpop.permute.xlu0 %5763
        %5765 = vrot.lane.b32.xlu0 %v900, 32
        %v5766 = vpop.permute.xlu0 %5765
        %5767 = vrot.lane.b32.xlu0 %v901, 32
        %v5768 = vpop.permute.xlu0 %5767
        %5769 = vrot.lane.b32.xlu0 %v902, 32
        %v5770 = vpop.permute.xlu0 %5769
        %5771 = vrot.lane.b32.xlu0 %v903, 32
        %v5772 = vpop.permute.xlu0 %5771
        %5773 = vrot.lane.b32.xlu0 %v483, 32
        %v5774 = vpop.permute.xlu0 %5773
        %5775 = vrot.lane.b32.xlu0 %v489, 32
        %v5776 = vpop.permute.xlu0 %5775
        %5777 = vrot.lane.b32.xlu0 %v495, 32
        %v5778 = vpop.permute.xlu0 %5777
        %5779 = vrot.lane.b32.xlu0 %v501, 32
        %v5780 = vpop.permute.xlu0 %5779
        %5781 = vrot.lane.b32.xlu0 %v507, 32
        %v5782 = vpop.permute.xlu0 %5781
        %5783 = vrot.lane.b32.xlu0 %v513, 32
        %v5784 = vpop.permute.xlu0 %5783
        %5785 = vrot.lane.b32.xlu0 %v519, 32
        %v5786 = vpop.permute.xlu0 %5785
        %5787 = vrot.lane.b32.xlu0 %v525, 32
        %v5788 = vpop.permute.xlu0 %5787
        %v5789 = vsel %vm936, %v5758, 0
        %v5791 = vsel %vm936, %v5760, 0
        %v5793 = vsel %vm936, %v5762, 0
        %v5795 = vsel %vm936, %v5764, 0
        %v5797 = vsel %vm936, %v5766, 0
        %v5799 = vsel %vm936, %v5768, 0
        %v5801 = vsel %vm936, %v5770, 0
        %v5803 = vsel %vm936, %v5772, 0
        %v5805 = vsel %vm936, %v5774, 0
        %v5807 = vsel %vm936, %v5776, 0
        %v5809 = vsel %vm936, %v5778, 0
        %v5811 = vsel %vm936, %v5780, 0
        %v5813 = vsel %vm936, %v5782, 0
        %v5815 = vsel %vm936, %v5784, 0
        %v5817 = vsel %vm936, %v5786, 0
        %v5819 = vsel %vm936, %v5788, 0
        %5821 = vmatprep.subr.mxu0 0.0
        %5822 = vmatpush1.xpose.msra.mxu0 %v5805
        %5823 = vmatprep.subr.mxu0 0.0
        %5824 = vmatpush1.xpose.msra.mxu0 %v5807
        %5825 = vmatprep.subr.mxu0 0.0
        %5826 = vmatpush1.xpose.msra.mxu0 %v5809
        %5827 = vmatprep.subr.mxu0 0.0
        %5828 = vmatpush1.xpose.msra.mxu0 %v5811
        %5829 = vmatprep.subr.mxu0 0.0
        %5830 = vmatpush1.xpose.msra.mxu0 %v5813
        %5831 = vmatprep.subr.mxu0 0.0
        %5832 = vmatpush1.xpose.msra.mxu0 %v5815
        %5833 = vmatprep.subr.mxu0 0.0
        %5834 = vmatpush1.xpose.msra.mxu0 %v5817
        %5835 = vmatprep.subr.mxu0 0.0
        %5836 = vmatpush1.xpose.msra.mxu0 %v5819
        %5837 = vmatprep.subr.mxu0 0.0
        %5838 = vmatpush1.xpose.msra.mxu0 0.0
        %5839 = vmatprep.subr.mxu0 0.0
        %5840 = vmatpush1.xpose.msra.mxu0 0.0
        %5841 = vmatprep.subr.mxu0 0.0
        %5842 = vmatpush1.xpose.msra.mxu0 0.0
        %5843 = vmatprep.subr.mxu0 0.0
        %5844 = vmatpush1.xpose.msra.mxu0 0.0
        %5845 = vmatprep.subr.mxu0 0.0
        %5846 = vmatpush1.xpose.msra.mxu0 0.0
        %5847 = vmatprep.subr.mxu0 0.0
        %5848 = vmatpush1.xpose.msra.mxu0 0.0
        %5849 = vmatprep.subr.mxu0 0.0
        %5850 = vmatpush1.xpose.msra.mxu0 0.0
        %5851 = vmatprep.subr.mxu0 0.0
        %5852 = vmatpush1.xpose.msra.mxu0 0.0
        %5853 = vmatprep.subr.mxu0 0.0
        %5854 = vmatpush1.xpose.msra.mxu0 0.0
        %5855 = vmatprep.subr.mxu0 0.0
        %5856 = vmatpush1.xpose.msra.mxu0 0.0
        %5857 = vmatprep.subr.mxu0 0.0
        %5858 = vmatpush1.xpose.msra.mxu0 0.0
        %5859 = vmatprep.subr.mxu0 0.0
        %5860 = vmatpush1.xpose.msra.mxu0 0.0
        %5861 = vmatprep.subr.mxu0 0.0
        %5862 = vmatpush1.xpose.msra.mxu0 0.0
        %5863 = vmatprep.subr.mxu0 0.0
        %5864 = vmatpush1.xpose.msra.mxu0 0.0
        %5865 = vmatprep.subr.mxu0 0.0
        %5866 = vmatpush1.xpose.msra.mxu0 0.0
        %5867 = vmatprep.subr.mxu0 0.0
        %5868 = vmatpush1.xpose.msra.mxu0 0.0
        %5869 = vmatprep.subr.mxu0 0.0
        %5870 = vmatpush1.xpose.msra.mxu0 0.0
        %5871 = vmatprep.subr.mxu0 0.0
        %5872 = vmatpush1.xpose.msra.mxu0 0.0
        %5873 = vmatprep.subr.mxu0 0.0
        %5874 = vmatpush1.xpose.msra.mxu0 0.0
        %5875 = vmatprep.subr.mxu0 0.0
        %5876 = vmatpush1.xpose.msra.mxu0 0.0
        %5877 = vmatprep.subr.mxu0 0.0
        %5878 = vmatpush1.xpose.msra.mxu0 0.0
        %5879 = vmatprep.subr.mxu0 0.0
        %5880 = vmatpush1.xpose.msra.mxu0 0.0
        %5881 = vmatprep.subr.mxu0 0.0
        %5882 = vmatpush1.xpose.msra.mxu0 0.0
        %5883 = vmatprep.subr.mxu0 0.0
        %5884 = vmatpush1.xpose.msra.mxu0 0.0
        %5885 = vmatprep.mubr.f32.mxu0 0.0
        %5886 = vmatmul.mubr.f32.gmra.mrb[0].mxu0 %v5789
        %v5887 = vpop.f32.mrb[0].mxu0
        %v5888 = vadd.f32 %v5749, %v5887
        %v5889 = vpop.f32.mrb[0].mxu0
        %5890 = vmatprep.mubr.f32.mxu0 0.0
        %5891 = vmatmul.mubr.f32.gmra.mrb[0].mxu0 %v5791
        %v5892 = vpop.f32.mrb[0].mxu0
        %v5893 = vadd.f32 %v5750, %v5892
        %v5894 = vpop.f32.mrb[0].mxu0
        %5895 = vmatprep.mubr.f32.mxu0 0.0
        %5896 = vmatmul.mubr.f32.gmra.mrb[0].mxu0 %v5793
        %v5897 = vpop.f32.mrb[0].mxu0
        %v5898 = vadd.f32 %v5751, %v5897
        %v5899 = vpop.f32.mrb[0].mxu0
        %5900 = vmatprep.mubr.f32.mxu0 0.0
        %5901 = vmatmul.mubr.f32.gmra.mrb[0].mxu0 %v5795
        %v5902 = vpop.f32.mrb[0].mxu0
        %v5903 = vadd.f32 %v5752, %v5902
        %v5904 = vpop.f32.mrb[0].mxu0
        %5905 = vmatprep.mubr.f32.mxu0 0.0
        %5906 = vmatmul.mubr.f32.gmra.mrb[0].mxu0 %v5797
        %v5907 = vpop.f32.mrb[0].mxu0
        %v5908 = vadd.f32 %v5753, %v5907
        %v5909 = vpop.f32.mrb[0].mxu0
        %5910 = vmatprep.mubr.f32.mxu0 0.0
        %5911 = vmatmul.mubr.f32.gmra.mrb[0].mxu0 %v5799
        %v5912 = vpop.f32.mrb[0].mxu0
        %v5913 = vadd.f32 %v5754, %v5912
        %v5914 = vpop.f32.mrb[0].mxu0
        %5915 = vmatprep.mubr.f32.mxu0 0.0
        %5916 = vmatmul.mubr.f32.gmra.mrb[0].mxu0 %v5801
        %v5917 = vpop.f32.mrb[0].mxu0
        %v5918 = vadd.f32 %v5755, %v5917
        %v5919 = vpop.f32.mrb[0].mxu0
        %5920 = vmatprep.mubr.f32.mxu0 0.0
        %5921 = vmatmul.mubr.f32.gmra.mrb[0].mxu0 %v5803
        %v5922 = vpop.f32.mrb[0].mxu0
        %v5923 = vadd.f32 %v5756, %v5922
        %v5924 = vpop.f32.mrb[0].mxu0
        %5925 = vdwg.mxu0
        %5926 = vrot.lane.b32.xlu0 %v904, 32
        %v5927 = vpop.permute.xlu0 %5926
        %5928 = vrot.lane.b32.xlu0 %v905, 32
        %v5929 = vpop.permute.xlu0 %5928
        %5930 = vrot.lane.b32.xlu0 %v906, 32
        %v5931 = vpop.permute.xlu0 %5930
        %5932 = vrot.lane.b32.xlu0 %v907, 32
        %v5933 = vpop.permute.xlu0 %5932
        %5934 = vrot.lane.b32.xlu0 %v908, 32
        %v5935 = vpop.permute.xlu0 %5934
        %5936 = vrot.lane.b32.xlu0 %v909, 32
        %v5937 = vpop.permute.xlu0 %5936
        %5938 = vrot.lane.b32.xlu0 %v910, 32
        %v5939 = vpop.permute.xlu0 %5938
        %5940 = vrot.lane.b32.xlu0 %v911, 32
        %v5941 = vpop.permute.xlu0 %5940
        %5942 = vrot.lane.b32.xlu0 %v531, 32
        %v5943 = vpop.permute.xlu0 %5942
        %5944 = vrot.lane.b32.xlu0 %v537, 32
        %v5945 = vpop.permute.xlu0 %5944
        %5946 = vrot.lane.b32.xlu0 %v543, 32
        %v5947 = vpop.permute.xlu0 %5946
        %5948 = vrot.lane.b32.xlu0 %v549, 32
        %v5949 = vpop.permute.xlu0 %5948
        %5950 = vrot.lane.b32.xlu0 %v555, 32
        %v5951 = vpop.permute.xlu0 %5950
        %5952 = vrot.lane.b32.xlu0 %v561, 32
        %v5953 = vpop.permute.xlu0 %5952
        %5954 = vrot.lane.b32.xlu0 %v567, 32
        %v5955 = vpop.permute.xlu0 %5954
        %5956 = vrot.lane.b32.xlu0 %v573, 32
        %v5957 = vpop.permute.xlu0 %5956
        %v5958 = vsel %vm936, %v5927, 0
        %v5960 = vsel %vm936, %v5929, 0
        %v5962 = vsel %vm936, %v5931, 0
        %v5964 = vsel %vm936, %v5933, 0
        %v5966 = vsel %vm936, %v5935, 0
        %v5968 = vsel %vm936, %v5937, 0
        %v5970 = vsel %vm936, %v5939, 0
        %v5972 = vsel %vm936, %v5941, 0
        %v5974 = vsel %vm936, %v5943, 0
        %v5976 = vsel %vm936, %v5945, 0
        %v5978 = vsel %vm936, %v5947, 0
        %v5980 = vsel %vm936, %v5949, 0
        %v5982 = vsel %vm936, %v5951, 0
        %v5984 = vsel %vm936, %v5953, 0
        %v5986 = vsel %vm936, %v5955, 0
        %v5988 = vsel %vm936, %v5957, 0
        %5990 = vmatprep.subr.mxu0 0.0
        %5991 = vmatpush1.xpose.msra.mxu0 %v5974
        %5992 = vmatprep.subr.mxu0 0.0
        %5993 = vmatpush1.xpose.msra.mxu0 %v5976
        %5994 = vmatprep.subr.mxu0 0.0
        %5995 = vmatpush1.xpose.msra.mxu0 %v5978
        %5996 = vmatprep.subr.mxu0 0.0
        %5997 = vmatpush1.xpose.msra.mxu0 %v5980
        %5998 = vmatprep.subr.mxu0 0.0
        %5999 = vmatpush1.xpose.msra.mxu0 %v5982
        %6000 = vmatprep.subr.mxu0 0.0
        %6001 = vmatpush1.xpose.msra.mxu0 %v5984
        %6002 = vmatprep.subr.mxu0 0.0
        %6003 = vmatpush1.xpose.msra.mxu0 %v5986
        %6004 = vmatprep.subr.mxu0 0.0
        %6005 = vmatpush1.xpose.msra.mxu0 %v5988
        %6006 = vmatprep.subr.mxu0 0.0
        %6007 = vmatpush1.xpose.msra.mxu0 0.0
        %6008 = vmatprep.subr.mxu0 0.0
        %6009 = vmatpush1.xpose.msra.mxu0 0.0
        %6010 = vmatprep.subr.mxu0 0.0
        %6011 = vmatpush1.xpose.msra.mxu0 0.0
        %6012 = vmatprep.subr.mxu0 0.0
        %6013 = vmatpush1.xpose.msra.mxu0 0.0
        %6014 = vmatprep.subr.mxu0 0.0
        %6015 = vmatpush1.xpose.msra.mxu0 0.0
        %6016 = vmatprep.subr.mxu0 0.0
        %6017 = vmatpush1.xpose.msra.mxu0 0.0
        %6018 = vmatprep.subr.mxu0 0.0
        %6019 = vmatpush1.xpose.msra.mxu0 0.0
        %6020 = vmatprep.subr.mxu0 0.0
        %6021 = vmatpush1.xpose.msra.mxu0 0.0
        %6022 = vmatprep.subr.mxu0 0.0
        %6023 = vmatpush1.xpose.msra.mxu0 0.0
        %6024 = vmatprep.subr.mxu0 0.0
        %6025 = vmatpush1.xpose.msra.mxu0 0.0
        %6026 = vmatprep.subr.mxu0 0.0
        %6027 = vmatpush1.xpose.msra.mxu0 0.0
        %6028 = vmatprep.subr.mxu0 0.0
        %6029 = vmatpush1.xpose.msra.mxu0 0.0
        %6030 = vmatprep.subr.mxu0 0.0
        %6031 = vmatpush1.xpose.msra.mxu0 0.0
        %6032 = vmatprep.subr.mxu0 0.0
        %6033 = vmatpush1.xpose.msra.mxu0 0.0
        %6034 = vmatprep.subr.mxu0 0.0
        %6035 = vmatpush1.xpose.msra.mxu0 0.0
        %6036 = vmatprep.subr.mxu0 0.0
        %6037 = vmatpush1.xpose.msra.mxu0 0.0
        %6038 = vmatprep.subr.mxu0 0.0
        %6039 = vmatpush1.xpose.msra.mxu0 0.0
        %6040 = vmatprep.subr.mxu0 0.0
        %6041 = vmatpush1.xpose.msra.mxu0 0.0
        %6042 = vmatprep.subr.mxu0 0.0
        %6043 = vmatpush1.xpose.msra.mxu0 0.0
        %6044 = vmatprep.subr.mxu0 0.0
        %6045 = vmatpush1.xpose.msra.mxu0 0.0
        %6046 = vmatprep.subr.mxu0 0.0
        %6047 = vmatpush1.xpose.msra.mxu0 0.0
        %6048 = vmatprep.subr.mxu0 0.0
        %6049 = vmatpush1.xpose.msra.mxu0 0.0
        %6050 = vmatprep.subr.mxu0 0.0
        %6051 = vmatpush1.xpose.msra.mxu0 0.0
        %6052 = vmatprep.subr.mxu0 0.0
        %6053 = vmatpush1.xpose.msra.mxu0 0.0
        %6054 = vmatprep.mubr.f32.mxu0 0.0
        %6055 = vmatmul.mubr.f32.gmra.mrb[0].mxu0 %v5958
        %v6056 = vpop.f32.mrb[0].mxu0
        %v6057 = vadd.f32 %v5749, %v6056
        %v6058 = vpop.f32.mrb[0].mxu0
        %6059 = vmatprep.mubr.f32.mxu0 0.0
        %6060 = vmatmul.mubr.f32.gmra.mrb[0].mxu0 %v5960
        %v6061 = vpop.f32.mrb[0].mxu0
        %v6062 = vadd.f32 %v5750, %v6061
        %v6063 = vpop.f32.mrb[0].mxu0
        %6064 = vmatprep.mubr.f32.mxu0 0.0
        %6065 = vmatmul.mubr.f32.gmra.mrb[0].mxu0 %v5962
        %v6066 = vpop.f32.mrb[0].mxu0
        %v6067 = vadd.f32 %v5751, %v6066
        %v6068 = vpop.f32.mrb[0].mxu0
        %6069 = vmatprep.mubr.f32.mxu0 0.0
        %6070 = vmatmul.mubr.f32.gmra.mrb[0].mxu0 %v5964
        %v6071 = vpop.f32.mrb[0].mxu0
        %v6072 = vadd.f32 %v5752, %v6071
        %v6073 = vpop.f32.mrb[0].mxu0
        %6074 = vmatprep.mubr.f32.mxu0 0.0
        %6075 = vmatmul.mubr.f32.gmra.mrb[0].mxu0 %v5966
        %v6076 = vpop.f32.mrb[0].mxu0
        %v6077 = vadd.f32 %v5753, %v6076
        %v6078 = vpop.f32.mrb[0].mxu0
        %6079 = vmatprep.mubr.f32.mxu0 0.0
        %6080 = vmatmul.mubr.f32.gmra.mrb[0].mxu0 %v5968
        %v6081 = vpop.f32.mrb[0].mxu0
        %v6082 = vadd.f32 %v5754, %v6081
        %v6083 = vpop.f32.mrb[0].mxu0
        %6084 = vmatprep.mubr.f32.mxu0 0.0
        %6085 = vmatmul.mubr.f32.gmra.mrb[0].mxu0 %v5970
        %v6086 = vpop.f32.mrb[0].mxu0
        %v6087 = vadd.f32 %v5755, %v6086
        %v6088 = vpop.f32.mrb[0].mxu0
        %6089 = vmatprep.mubr.f32.mxu0 0.0
        %6090 = vmatmul.mubr.f32.gmra.mrb[0].mxu0 %v5972
        %v6091 = vpop.f32.mrb[0].mxu0
        %v6092 = vadd.f32 %v5756, %v6091
        %v6093 = vpop.f32.mrb[0].mxu0
        %6094 = vdwg.mxu0
        %6095 = vrot.lane.b32.xlu0 %v912, 32
        %v6096 = vpop.permute.xlu0 %6095
        %6097 = vrot.lane.b32.xlu0 %v913, 32
        %v6098 = vpop.permute.xlu0 %6097
        %6099 = vrot.lane.b32.xlu0 %v914, 32
        %v6100 = vpop.permute.xlu0 %6099
        %6101 = vrot.lane.b32.xlu0 %v915, 32
        %v6102 = vpop.permute.xlu0 %6101
        %6103 = vrot.lane.b32.xlu0 %v916, 32
        %v6104 = vpop.permute.xlu0 %6103
        %6105 = vrot.lane.b32.xlu0 %v917, 32
        %v6106 = vpop.permute.xlu0 %6105
        %6107 = vrot.lane.b32.xlu0 %v918, 32
        %v6108 = vpop.permute.xlu0 %6107
        %6109 = vrot.lane.b32.xlu0 %v919, 32
        %v6110 = vpop.permute.xlu0 %6109
        %6111 = vrot.lane.b32.xlu0 %v579, 32
        %v6112 = vpop.permute.xlu0 %6111
        %6113 = vrot.lane.b32.xlu0 %v585, 32
        %v6114 = vpop.permute.xlu0 %6113
        %6115 = vrot.lane.b32.xlu0 %v591, 32
        %v6116 = vpop.permute.xlu0 %6115
        %6117 = vrot.lane.b32.xlu0 %v597, 32
        %v6118 = vpop.permute.xlu0 %6117
        %6119 = vrot.lane.b32.xlu0 %v603, 32
        %v6120 = vpop.permute.xlu0 %6119
        %6121 = vrot.lane.b32.xlu0 %v609, 32
        %v6122 = vpop.permute.xlu0 %6121
        %6123 = vrot.lane.b32.xlu0 %v615, 32
        %v6124 = vpop.permute.xlu0 %6123
        %6125 = vrot.lane.b32.xlu0 %v621, 32
        %v6126 = vpop.permute.xlu0 %6125
        %v6127 = vsel %vm936, %v6096, 0
        %v6129 = vsel %vm936, %v6098, 0
        %v6131 = vsel %vm936, %v6100, 0
        %v6133 = vsel %vm936, %v6102, 0
        %v6135 = vsel %vm936, %v6104, 0
        %v6137 = vsel %vm936, %v6106, 0
        %v6139 = vsel %vm936, %v6108, 0
        %v6141 = vsel %vm936, %v6110, 0
        %v6143 = vsel %vm936, %v6112, 0
        %v6145 = vsel %vm936, %v6114, 0
        %v6147 = vsel %vm936, %v6116, 0
        %v6149 = vsel %vm936, %v6118, 0
        %v6151 = vsel %vm936, %v6120, 0
        %v6153 = vsel %vm936, %v6122, 0
        %v6155 = vsel %vm936, %v6124, 0
        %v6157 = vsel %vm936, %v6126, 0
        %6159 = vmatprep.subr.mxu0 0.0
        %6160 = vmatpush1.xpose.msra.mxu0 %v6143
        %6161 = vmatprep.subr.mxu0 0.0
        %6162 = vmatpush1.xpose.msra.mxu0 %v6145
        %6163 = vmatprep.subr.mxu0 0.0
        %6164 = vmatpush1.xpose.msra.mxu0 %v6147
        %6165 = vmatprep.subr.mxu0 0.0
        %6166 = vmatpush1.xpose.msra.mxu0 %v6149
        %6167 = vmatprep.subr.mxu0 0.0
        %6168 = vmatpush1.xpose.msra.mxu0 %v6151
        %6169 = vmatprep.subr.mxu0 0.0
        %6170 = vmatpush1.xpose.msra.mxu0 %v6153
        %6171 = vmatprep.subr.mxu0 0.0
        %6172 = vmatpush1.xpose.msra.mxu0 %v6155
        %6173 = vmatprep.subr.mxu0 0.0
        %6174 = vmatpush1.xpose.msra.mxu0 %v6157
        %6175 = vmatprep.subr.mxu0 0.0
        %6176 = vmatpush1.xpose.msra.mxu0 0.0
        %6177 = vmatprep.subr.mxu0 0.0
        %6178 = vmatpush1.xpose.msra.mxu0 0.0
        %6179 = vmatprep.subr.mxu0 0.0
        %6180 = vmatpush1.xpose.msra.mxu0 0.0
        %6181 = vmatprep.subr.mxu0 0.0
        %6182 = vmatpush1.xpose.msra.mxu0 0.0
        %6183 = vmatprep.subr.mxu0 0.0
        %6184 = vmatpush1.xpose.msra.mxu0 0.0
        %6185 = vmatprep.subr.mxu0 0.0
        %6186 = vmatpush1.xpose.msra.mxu0 0.0
        %6187 = vmatprep.subr.mxu0 0.0
        %6188 = vmatpush1.xpose.msra.mxu0 0.0
        %6189 = vmatprep.subr.mxu0 0.0
        %6190 = vmatpush1.xpose.msra.mxu0 0.0
        %6191 = vmatprep.subr.mxu0 0.0
        %6192 = vmatpush1.xpose.msra.mxu0 0.0
        %6193 = vmatprep.subr.mxu0 0.0
        %6194 = vmatpush1.xpose.msra.mxu0 0.0
        %6195 = vmatprep.subr.mxu0 0.0
        %6196 = vmatpush1.xpose.msra.mxu0 0.0
        %6197 = vmatprep.subr.mxu0 0.0
        %6198 = vmatpush1.xpose.msra.mxu0 0.0
        %6199 = vmatprep.subr.mxu0 0.0
        %6200 = vmatpush1.xpose.msra.mxu0 0.0
        %6201 = vmatprep.subr.mxu0 0.0
        %6202 = vmatpush1.xpose.msra.mxu0 0.0
        %6203 = vmatprep.subr.mxu0 0.0
        %6204 = vmatpush1.xpose.msra.mxu0 0.0
        %6205 = vmatprep.subr.mxu0 0.0
        %6206 = vmatpush1.xpose.msra.mxu0 0.0
        %6207 = vmatprep.subr.mxu0 0.0
        %6208 = vmatpush1.xpose.msra.mxu0 0.0
        %6209 = vmatprep.subr.mxu0 0.0
        %6210 = vmatpush1.xpose.msra.mxu0 0.0
        %6211 = vmatprep.subr.mxu0 0.0
        %6212 = vmatpush1.xpose.msra.mxu0 0.0
        %6213 = vmatprep.subr.mxu0 0.0
        %6214 = vmatpush1.xpose.msra.mxu0 0.0
        %6215 = vmatprep.subr.mxu0 0.0
        %6216 = vmatpush1.xpose.msra.mxu0 0.0
        %6217 = vmatprep.subr.mxu0 0.0
        %6218 = vmatpush1.xpose.msra.mxu0 0.0
        %6219 = vmatprep.subr.mxu0 0.0
        %6220 = vmatpush1.xpose.msra.mxu0 0.0
        %6221 = vmatprep.subr.mxu0 0.0
        %6222 = vmatpush1.xpose.msra.mxu0 0.0
        %6223 = vmatprep.mubr.f32.mxu0 0.0
        %6224 = vmatmul.mubr.f32.gmra.mrb[0].mxu0 %v6127
        %v6225 = vpop.f32.mrb[0].mxu0
        %v6226 = vadd.f32 %v5749, %v6225
        %v6227 = vpop.f32.mrb[0].mxu0
        %6228 = vmatprep.mubr.f32.mxu0 0.0
        %6229 = vmatmul.mubr.f32.gmra.mrb[0].mxu0 %v6129
        %v6230 = vpop.f32.mrb[0].mxu0
        %v6231 = vadd.f32 %v5750, %v6230
        %v6232 = vpop.f32.mrb[0].mxu0
        %6233 = vmatprep.mubr.f32.mxu0 0.0
        %6234 = vmatmul.mubr.f32.gmra.mrb[0].mxu0 %v6131
        %v6235 = vpop.f32.mrb[0].mxu0
        %v6236 = vadd.f32 %v5751, %v6235
        %v6237 = vpop.f32.mrb[0].mxu0
        %6238 = vmatprep.mubr.f32.mxu0 0.0
        %6239 = vmatmul.mubr.f32.gmra.mrb[0].mxu0 %v6133
        %v6240 = vpop.f32.mrb[0].mxu0
        %v6241 = vadd.f32 %v5752, %v6240
        %v6242 = vpop.f32.mrb[0].mxu0
        %6243 = vmatprep.mubr.f32.mxu0 0.0
        %6244 = vmatmul.mubr.f32.gmra.mrb[0].mxu0 %v6135
        %v6245 = vpop.f32.mrb[0].mxu0
        %v6246 = vadd.f32 %v5753, %v6245
        %v6247 = vpop.f32.mrb[0].mxu0
        %6248 = vmatprep.mubr.f32.mxu0 0.0
        %6249 = vmatmul.mubr.f32.gmra.mrb[0].mxu0 %v6137
        %v6250 = vpop.f32.mrb[0].mxu0
        %v6251 = vadd.f32 %v5754, %v6250
        %v6252 = vpop.f32.mrb[0].mxu0
        %6253 = vmatprep.mubr.f32.mxu0 0.0
        %6254 = vmatmul.mubr.f32.gmra.mrb[0].mxu0 %v6139
        %v6255 = vpop.f32.mrb[0].mxu0
        %v6256 = vadd.f32 %v5755, %v6255
        %v6257 = vpop.f32.mrb[0].mxu0
        %6258 = vmatprep.mubr.f32.mxu0 0.0
        %6259 = vmatmul.mubr.f32.gmra.mrb[0].mxu0 %v6141
        %v6260 = vpop.f32.mrb[0].mxu0
        %v6261 = vadd.f32 %v5756, %v6260
        %v6262 = vpop.f32.mrb[0].mxu0
        %6263 = vdwg.mxu0
        %6264 = vrot.lane.b32.xlu0 %v920, 32
        %v6265 = vpop.permute.xlu0 %6264
        %6266 = vrot.lane.b32.xlu0 %v921, 32
        %v6267 = vpop.permute.xlu0 %6266
        %6268 = vrot.lane.b32.xlu0 %v922, 32
        %v6269 = vpop.permute.xlu0 %6268
        %6270 = vrot.lane.b32.xlu0 %v923, 32
        %v6271 = vpop.permute.xlu0 %6270
        %6272 = vrot.lane.b32.xlu0 %v924, 32
        %v6273 = vpop.permute.xlu0 %6272
        %6274 = vrot.lane.b32.xlu0 %v925, 32
        %v6275 = vpop.permute.xlu0 %6274
        %6276 = vrot.lane.b32.xlu0 %v926, 32
        %v6277 = vpop.permute.xlu0 %6276
        %6278 = vrot.lane.b32.xlu0 %v927, 32
        %v6279 = vpop.permute.xlu0 %6278
        %6280 = vrot.lane.b32.xlu0 %v627, 32
        %v6281 = vpop.permute.xlu0 %6280
        %6282 = vrot.lane.b32.xlu0 %v633, 32
        %v6283 = vpop.permute.xlu0 %6282
        %6284 = vrot.lane.b32.xlu0 %v639, 32
        %v6285 = vpop.permute.xlu0 %6284
        %6286 = vrot.lane.b32.xlu0 %v645, 32
        %v6287 = vpop.permute.xlu0 %6286
        %6288 = vrot.lane.b32.xlu0 %v651, 32
        %v6289 = vpop.permute.xlu0 %6288
        %6290 = vrot.lane.b32.xlu0 %v657, 32
        %v6291 = vpop.permute.xlu0 %6290
        %6292 = vrot.lane.b32.xlu0 %v663, 32
        %v6293 = vpop.permute.xlu0 %6292
        %6294 = vrot.lane.b32.xlu0 %v669, 32
        %v6295 = vpop.permute.xlu0 %6294
        %v6296 = vsel %vm936, %v6265, 0
        %v6298 = vsel %vm936, %v6267, 0
        %v6300 = vsel %vm936, %v6269, 0
        %v6302 = vsel %vm936, %v6271, 0
        %v6304 = vsel %vm936, %v6273, 0
        %v6306 = vsel %vm936, %v6275, 0
        %v6308 = vsel %vm936, %v6277, 0
        %v6310 = vsel %vm936, %v6279, 0
        %v6312 = vsel %vm936, %v6281, 0
        %v6314 = vsel %vm936, %v6283, 0
        %v6316 = vsel %vm936, %v6285, 0
        %v6318 = vsel %vm936, %v6287, 0
        %v6320 = vsel %vm936, %v6289, 0
        %v6322 = vsel %vm936, %v6291, 0
        %v6324 = vsel %vm936, %v6293, 0
        %v6326 = vsel %vm936, %v6295, 0
        %6328 = vmatprep.subr.mxu0 0.0
        %6329 = vmatpush1.xpose.msra.mxu0 %v6312
        %6330 = vmatprep.subr.mxu0 0.0
        %6331 = vmatpush1.xpose.msra.mxu0 %v6314
        %6332 = vmatprep.subr.mxu0 0.0
        %6333 = vmatpush1.xpose.msra.mxu0 %v6316
        %6334 = vmatprep.subr.mxu0 0.0
        %6335 = vmatpush1.xpose.msra.mxu0 %v6318
        %6336 = vmatprep.subr.mxu0 0.0
        %6337 = vmatpush1.xpose.msra.mxu0 %v6320
        %6338 = vmatprep.subr.mxu0 0.0
        %6339 = vmatpush1.xpose.msra.mxu0 %v6322
        %6340 = vmatprep.subr.mxu0 0.0
        %6341 = vmatpush1.xpose.msra.mxu0 %v6324
        %6342 = vmatprep.subr.mxu0 0.0
        %6343 = vmatpush1.xpose.msra.mxu0 %v6326
        %6344 = vmatprep.subr.mxu0 0.0
        %6345 = vmatpush1.xpose.msra.mxu0 0.0
        %6346 = vmatprep.subr.mxu0 0.0
        %6347 = vmatpush1.xpose.msra.mxu0 0.0
        %6348 = vmatprep.subr.mxu0 0.0
        %6349 = vmatpush1.xpose.msra.mxu0 0.0
        %6350 = vmatprep.subr.mxu0 0.0
        %6351 = vmatpush1.xpose.msra.mxu0 0.0
        %6352 = vmatprep.subr.mxu0 0.0
        %6353 = vmatpush1.xpose.msra.mxu0 0.0
        %6354 = vmatprep.subr.mxu0 0.0
        %6355 = vmatpush1.xpose.msra.mxu0 0.0
        %6356 = vmatprep.subr.mxu0 0.0
        %6357 = vmatpush1.xpose.msra.mxu0 0.0
        %6358 = vmatprep.subr.mxu0 0.0
        %6359 = vmatpush1.xpose.msra.mxu0 0.0
        %6360 = vmatprep.subr.mxu0 0.0
        %6361 = vmatpush1.xpose.msra.mxu0 0.0
        %6362 = vmatprep.subr.mxu0 0.0
        %6363 = vmatpush1.xpose.msra.mxu0 0.0
        %6364 = vmatprep.subr.mxu0 0.0
        %6365 = vmatpush1.xpose.msra.mxu0 0.0
        %6366 = vmatprep.subr.mxu0 0.0
        %6367 = vmatpush1.xpose.msra.mxu0 0.0
        %6368 = vmatprep.subr.mxu0 0.0
        %6369 = vmatpush1.xpose.msra.mxu0 0.0
        %6370 = vmatprep.subr.mxu0 0.0
        %6371 = vmatpush1.xpose.msra.mxu0 0.0
        %6372 = vmatprep.subr.mxu0 0.0
        %6373 = vmatpush1.xpose.msra.mxu0 0.0
        %6374 = vmatprep.subr.mxu0 0.0
        %6375 = vmatpush1.xpose.msra.mxu0 0.0
        %6376 = vmatprep.subr.mxu0 0.0
        %6377 = vmatpush1.xpose.msra.mxu0 0.0
        %6378 = vmatprep.subr.mxu0 0.0
        %6379 = vmatpush1.xpose.msra.mxu0 0.0
        %6380 = vmatprep.subr.mxu0 0.0
        %6381 = vmatpush1.xpose.msra.mxu0 0.0
        %6382 = vmatprep.subr.mxu0 0.0
        %6383 = vmatpush1.xpose.msra.mxu0 0.0
        %6384 = vmatprep.subr.mxu0 0.0
        %6385 = vmatpush1.xpose.msra.mxu0 0.0
        %6386 = vmatprep.subr.mxu0 0.0
        %6387 = vmatpush1.xpose.msra.mxu0 0.0
        %6388 = vmatprep.subr.mxu0 0.0
        %6389 = vmatpush1.xpose.msra.mxu0 0.0
        %6390 = vmatprep.subr.mxu0 0.0
        %6391 = vmatpush1.xpose.msra.mxu0 0.0
        %6392 = vmatprep.mubr.f32.mxu0 0.0
        %6393 = vmatmul.mubr.f32.gmra.mrb[0].mxu0 %v6296
        %v6394 = vpop.f32.mrb[0].mxu0
        %v6395 = vadd.f32 %v5749, %v6394
        %v6396 = vpop.f32.mrb[0].mxu0
        %6397 = vmatprep.mubr.f32.mxu0 0.0
        %6398 = vmatmul.mubr.f32.gmra.mrb[0].mxu0 %v6298
        %v6399 = vpop.f32.mrb[0].mxu0
        %v6400 = vadd.f32 %v5750, %v6399
        %v6401 = vpop.f32.mrb[0].mxu0
        %6402 = vmatprep.mubr.f32.mxu0 0.0
        %6403 = vmatmul.mubr.f32.gmra.mrb[0].mxu0 %v6300
        %v6404 = vpop.f32.mrb[0].mxu0
        %v6405 = vadd.f32 %v5751, %v6404
        %v6406 = vpop.f32.mrb[0].mxu0
        %6407 = vmatprep.mubr.f32.mxu0 0.0
        %6408 = vmatmul.mubr.f32.gmra.mrb[0].mxu0 %v6302
        %v6409 = vpop.f32.mrb[0].mxu0
        %v6410 = vadd.f32 %v5752, %v6409
        %v6411 = vpop.f32.mrb[0].mxu0
        %6412 = vmatprep.mubr.f32.mxu0 0.0
        %6413 = vmatmul.mubr.f32.gmra.mrb[0].mxu0 %v6304
        %v6414 = vpop.f32.mrb[0].mxu0
        %v6415 = vadd.f32 %v5753, %v6414
        %v6416 = vpop.f32.mrb[0].mxu0
        %6417 = vmatprep.mubr.f32.mxu0 0.0
        %6418 = vmatmul.mubr.f32.gmra.mrb[0].mxu0 %v6306
        %v6419 = vpop.f32.mrb[0].mxu0
        %v6420 = vadd.f32 %v5754, %v6419
        %v6421 = vpop.f32.mrb[0].mxu0
        %6422 = vmatprep.mubr.f32.mxu0 0.0
        %6423 = vmatmul.mubr.f32.gmra.mrb[0].mxu0 %v6308
        %v6424 = vpop.f32.mrb[0].mxu0
        %v6425 = vadd.f32 %v5755, %v6424
        %v6426 = vpop.f32.mrb[0].mxu0
        %6427 = vmatprep.mubr.f32.mxu0 0.0
        %6428 = vmatmul.mubr.f32.gmra.mrb[0].mxu0 %v6310
        %v6429 = vpop.f32.mrb[0].mxu0
        %v6430 = vadd.f32 %v5756, %v6429
        %v6431 = vpop.f32.mrb[0].mxu0
        %6432 = vdwg.mxu0
        %v6433 = vsel %vm1549, %v5888, -inf
        %6434 = vmax.xlane.f32.xlu0 %v6433
        %v6435 = vpop.xlane.xlu0 %6434
        %v6436 = vsel %vm1549, %v5893, -inf
        %6437 = vmax.xlane.f32.xlu0 %v6436
        %v6438 = vpop.xlane.xlu0 %6437
        %v6439 = vsel %vm1549, %v5898, -inf
        %6440 = vmax.xlane.f32.xlu0 %v6439
        %v6441 = vpop.xlane.xlu0 %6440
        %v6442 = vsel %vm1549, %v5903, -inf
        %6443 = vmax.xlane.f32.xlu0 %v6442
        %v6444 = vpop.xlane.xlu0 %6443
        %v6445 = vsel %vm1549, %v5908, -inf
        %6446 = vmax.xlane.f32.xlu0 %v6445
        %v6447 = vpop.xlane.xlu0 %6446
        %v6448 = vsel %vm1549, %v5913, -inf
        %6449 = vmax.xlane.f32.xlu0 %v6448
        %v6450 = vpop.xlane.xlu0 %6449
        %v6451 = vsel %vm1549, %v5918, -inf
        %6452 = vmax.xlane.f32.xlu0 %v6451
        %v6453 = vpop.xlane.xlu0 %6452
        %v6454 = vsel %vm1549, %v5923, -inf
        %6455 = vmax.xlane.f32.xlu0 %v6454
        %v6456 = vpop.xlane.xlu0 %6455
        %v6457 = vsel %vm1549, %v6057, -inf
        %6458 = vmax.xlane.f32.xlu0 %v6457
        %v6459 = vpop.xlane.xlu0 %6458
        %v6460 = vsel %vm1549, %v6062, -inf
        %6461 = vmax.xlane.f32.xlu0 %v6460
        %v6462 = vpop.xlane.xlu0 %6461
        %v6463 = vsel %vm1549, %v6067, -inf
        %6464 = vmax.xlane.f32.xlu0 %v6463
        %v6465 = vpop.xlane.xlu0 %6464
        %v6466 = vsel %vm1549, %v6072, -inf
        %6467 = vmax.xlane.f32.xlu0 %v6466
        %v6468 = vpop.xlane.xlu0 %6467
        %v6469 = vsel %vm1549, %v6077, -inf
        %6470 = vmax.xlane.f32.xlu0 %v6469
        %v6471 = vpop.xlane.xlu0 %6470
        %v6472 = vsel %vm1549, %v6082, -inf
        %6473 = vmax.xlane.f32.xlu0 %v6472
        %v6474 = vpop.xlane.xlu0 %6473
        %v6475 = vsel %vm1549, %v6087, -inf
        %6476 = vmax.xlane.f32.xlu0 %v6475
        %v6477 = vpop.xlane.xlu0 %6476
        %v6478 = vsel %vm1549, %v6092, -inf
        %6479 = vmax.xlane.f32.xlu0 %v6478
        %v6480 = vpop.xlane.xlu0 %6479
        %v6481 = vsel %vm1549, %v6226, -inf
        %6482 = vmax.xlane.f32.xlu0 %v6481
        %v6483 = vpop.xlane.xlu0 %6482
        %v6484 = vsel %vm1549, %v6231, -inf
        %6485 = vmax.xlane.f32.xlu0 %v6484
        %v6486 = vpop.xlane.xlu0 %6485
        %v6487 = vsel %vm1549, %v6236, -inf
        %6488 = vmax.xlane.f32.xlu0 %v6487
        %v6489 = vpop.xlane.xlu0 %6488
        %v6490 = vsel %vm1549, %v6241, -inf
        %6491 = vmax.xlane.f32.xlu0 %v6490
        %v6492 = vpop.xlane.xlu0 %6491
        %v6493 = vsel %vm1549, %v6246, -inf
        %6494 = vmax.xlane.f32.xlu0 %v6493
        %v6495 = vpop.xlane.xlu0 %6494
        %v6496 = vsel %vm1549, %v6251, -inf
        %6497 = vmax.xlane.f32.xlu0 %v6496
        %v6498 = vpop.xlane.xlu0 %6497
        %v6499 = vsel %vm1549, %v6256, -inf
        %6500 = vmax.xlane.f32.xlu0 %v6499
        %v6501 = vpop.xlane.xlu0 %6500
        %v6502 = vsel %vm1549, %v6261, -inf
        %6503 = vmax.xlane.f32.xlu0 %v6502
        %v6504 = vpop.xlane.xlu0 %6503
        %v6505 = vsel %vm1549, %v6395, -inf
        %6506 = vmax.xlane.f32.xlu0 %v6505
        %v6507 = vpop.xlane.xlu0 %6506
        %v6508 = vsel %vm1549, %v6400, -inf
        %6509 = vmax.xlane.f32.xlu0 %v6508
        %v6510 = vpop.xlane.xlu0 %6509
        %v6511 = vsel %vm1549, %v6405, -inf
        %6512 = vmax.xlane.f32.xlu0 %v6511
        %v6513 = vpop.xlane.xlu0 %6512
        %v6514 = vsel %vm1549, %v6410, -inf
        %6515 = vmax.xlane.f32.xlu0 %v6514
        %v6516 = vpop.xlane.xlu0 %6515
        %v6517 = vsel %vm1549, %v6415, -inf
        %6518 = vmax.xlane.f32.xlu0 %v6517
        %v6519 = vpop.xlane.xlu0 %6518
        %v6520 = vsel %vm1549, %v6420, -inf
        %6521 = vmax.xlane.f32.xlu0 %v6520
        %v6522 = vpop.xlane.xlu0 %6521
        %v6523 = vsel %vm1549, %v6425, -inf
        %6524 = vmax.xlane.f32.xlu0 %v6523
        %v6525 = vpop.xlane.xlu0 %6524
        %v6526 = vsel %vm1549, %v6430, -inf
        %6527 = vmax.xlane.f32.xlu0 %v6526
        %v6528 = vpop.xlane.xlu0 %6527
        %v6529 = vsub.f32 %v5888, %v6435
        %v6530 = vsub.f32 %v5893, %v6438
        %v6531 = vsub.f32 %v5898, %v6441
        %v6532 = vsub.f32 %v5903, %v6444
        %v6533 = vsub.f32 %v5908, %v6447
        %v6534 = vsub.f32 %v5913, %v6450
        %v6535 = vsub.f32 %v5918, %v6453
        %v6536 = vsub.f32 %v5923, %v6456
        %v6537 = vsub.f32 %v6057, %v6459
        %v6538 = vsub.f32 %v6062, %v6462
        %v6539 = vsub.f32 %v6067, %v6465
        %v6540 = vsub.f32 %v6072, %v6468
        %v6541 = vsub.f32 %v6077, %v6471
        %v6542 = vsub.f32 %v6082, %v6474
        %v6543 = vsub.f32 %v6087, %v6477
        %v6544 = vsub.f32 %v6092, %v6480
        %v6545 = vsub.f32 %v6226, %v6483
        %v6546 = vsub.f32 %v6231, %v6486
        %v6547 = vsub.f32 %v6236, %v6489
        %v6548 = vsub.f32 %v6241, %v6492
        %v6549 = vsub.f32 %v6246, %v6495
        %v6550 = vsub.f32 %v6251, %v6498
        %v6551 = vsub.f32 %v6256, %v6501
        %v6552 = vsub.f32 %v6261, %v6504
        %v6553 = vsub.f32 %v6395, %v6507
        %v6554 = vsub.f32 %v6400, %v6510
        %v6555 = vsub.f32 %v6405, %v6513
        %v6556 = vsub.f32 %v6410, %v6516
        %v6557 = vsub.f32 %v6415, %v6519
        %v6558 = vsub.f32 %v6420, %v6522
        %v6559 = vsub.f32 %v6425, %v6525
        %v6560 = vsub.f32 %v6430, %v6528
        %v6561 = vmul.f32 %v6529, 1.442695
        %v6562 = vpow.pop %v6561
        %v6563 = vmul.f32 %v6530, 1.442695
        %v6564 = vpow.pop %v6563
        %v6565 = vmul.f32 %v6531, 1.442695
        %v6566 = vpow.pop %v6565
        %v6567 = vmul.f32 %v6532, 1.442695
        %v6568 = vpow.pop %v6567
        %v6569 = vmul.f32 %v6533, 1.442695
        %v6570 = vpow.pop %v6569
        %v6571 = vmul.f32 %v6534, 1.442695
        %v6572 = vpow.pop %v6571
        %v6573 = vmul.f32 %v6535, 1.442695
        %v6574 = vpow.pop %v6573
        %v6575 = vmul.f32 %v6536, 1.442695
        %v6576 = vpow.pop %v6575
        %v6577 = vmul.f32 %v6537, 1.442695
        %v6578 = vpow.pop %v6577
        %v6579 = vmul.f32 %v6538, 1.442695
        %v6580 = vpow.pop %v6579
        %v6581 = vmul.f32 %v6539, 1.442695
        %v6582 = vpow.pop %v6581
        %v6583 = vmul.f32 %v6540, 1.442695
        %v6584 = vpow.pop %v6583
        %v6585 = vmul.f32 %v6541, 1.442695
        %v6586 = vpow.pop %v6585
        %v6587 = vmul.f32 %v6542, 1.442695
        %v6588 = vpow.pop %v6587
        %v6589 = vmul.f32 %v6543, 1.442695
        %v6590 = vpow.pop %v6589
        %v6591 = vmul.f32 %v6544, 1.442695
        %v6592 = vpow.pop %v6591
        %v6593 = vmul.f32 %v6545, 1.442695
        %v6594 = vpow.pop %v6593
        %v6595 = vmul.f32 %v6546, 1.442695
        %v6596 = vpow.pop %v6595
        %v6597 = vmul.f32 %v6547, 1.442695
        %v6598 = vpow.pop %v6597
        %v6599 = vmul.f32 %v6548, 1.442695
        %v6600 = vpow.pop %v6599
        %v6601 = vmul.f32 %v6549, 1.442695
        %v6602 = vpow.pop %v6601
        %v6603 = vmul.f32 %v6550, 1.442695
        %v6604 = vpow.pop %v6603
        %v6605 = vmul.f32 %v6551, 1.442695
        %v6606 = vpow.pop %v6605
        %v6607 = vmul.f32 %v6552, 1.442695
        %v6608 = vpow.pop %v6607
        %v6609 = vmul.f32 %v6553, 1.442695
        %v6610 = vpow.pop %v6609
        %v6611 = vmul.f32 %v6554, 1.442695
        %v6612 = vpow.pop %v6611
        %v6613 = vmul.f32 %v6555, 1.442695
        %v6614 = vpow.pop %v6613
        %v6615 = vmul.f32 %v6556, 1.442695
        %v6616 = vpow.pop %v6615
        %v6617 = vmul.f32 %v6557, 1.442695
        %v6618 = vpow.pop %v6617
        %v6619 = vmul.f32 %v6558, 1.442695
        %v6620 = vpow.pop %v6619
        %v6621 = vmul.f32 %v6559, 1.442695
        %v6622 = vpow.pop %v6621
        %v6623 = vmul.f32 %v6560, 1.442695
        %v6624 = vpow.pop %v6623
        %v6625 = vsel %vm1549, %v6562, 0.0
        %6626 = vadd.xlane.f32.xlu0 %v6625
        %v6627 = vpop.xlane.xlu0 %6626
        %v6628 = vsel %vm1549, %v6564, 0.0
        %6629 = vadd.xlane.f32.xlu0 %v6628
        %v6630 = vpop.xlane.xlu0 %6629
        %v6631 = vsel %vm1549, %v6566, 0.0
        %6632 = vadd.xlane.f32.xlu0 %v6631
        %v6633 = vpop.xlane.xlu0 %6632
        %v6634 = vsel %vm1549, %v6568, 0.0
        %6635 = vadd.xlane.f32.xlu0 %v6634
        %v6636 = vpop.xlane.xlu0 %6635
        %v6637 = vsel %vm1549, %v6570, 0.0
        %6638 = vadd.xlane.f32.xlu0 %v6637
        %v6639 = vpop.xlane.xlu0 %6638
        %v6640 = vsel %vm1549, %v6572, 0.0
        %6641 = vadd.xlane.f32.xlu0 %v6640
        %v6642 = vpop.xlane.xlu0 %6641
        %v6643 = vsel %vm1549, %v6574, 0.0
        %6644 = vadd.xlane.f32.xlu0 %v6643
        %v6645 = vpop.xlane.xlu0 %6644
        %v6646 = vsel %vm1549, %v6576, 0.0
        %6647 = vadd.xlane.f32.xlu0 %v6646
        %v6648 = vpop.xlane.xlu0 %6647
        %v6649 = vsel %vm1549, %v6578, 0.0
        %6650 = vadd.xlane.f32.xlu0 %v6649
        %v6651 = vpop.xlane.xlu0 %6650
        %v6652 = vsel %vm1549, %v6580, 0.0
        %6653 = vadd.xlane.f32.xlu0 %v6652
        %v6654 = vpop.xlane.xlu0 %6653
        %v6655 = vsel %vm1549, %v6582, 0.0
        %6656 = vadd.xlane.f32.xlu0 %v6655
        %v6657 = vpop.xlane.xlu0 %6656
        %v6658 = vsel %vm1549, %v6584, 0.0
        %6659 = vadd.xlane.f32.xlu0 %v6658
        %v6660 = vpop.xlane.xlu0 %6659
        %v6661 = vsel %vm1549, %v6586, 0.0
        %6662 = vadd.xlane.f32.xlu0 %v6661
        %v6663 = vpop.xlane.xlu0 %6662
        %v6664 = vsel %vm1549, %v6588, 0.0
        %6665 = vadd.xlane.f32.xlu0 %v6664
        %v6666 = vpop.xlane.xlu0 %6665
        %v6667 = vsel %vm1549, %v6590, 0.0
        %6668 = vadd.xlane.f32.xlu0 %v6667
        %v6669 = vpop.xlane.xlu0 %6668
        %v6670 = vsel %vm1549, %v6592, 0.0
        %6671 = vadd.xlane.f32.xlu0 %v6670
        %v6672 = vpop.xlane.xlu0 %6671
        %v6673 = vsel %vm1549, %v6594, 0.0
        %6674 = vadd.xlane.f32.xlu0 %v6673
        %v6675 = vpop.xlane.xlu0 %6674
        %v6676 = vsel %vm1549, %v6596, 0.0
        %6677 = vadd.xlane.f32.xlu0 %v6676
        %v6678 = vpop.xlane.xlu0 %6677
        %v6679 = vsel %vm1549, %v6598, 0.0
        %6680 = vadd.xlane.f32.xlu0 %v6679
        %v6681 = vpop.xlane.xlu0 %6680
        %v6682 = vsel %vm1549, %v6600, 0.0
        %6683 = vadd.xlane.f32.xlu0 %v6682
        %v6684 = vpop.xlane.xlu0 %6683
        %v6685 = vsel %vm1549, %v6602, 0.0
        %6686 = vadd.xlane.f32.xlu0 %v6685
        %v6687 = vpop.xlane.xlu0 %6686
        %v6688 = vsel %vm1549, %v6604, 0.0
        %6689 = vadd.xlane.f32.xlu0 %v6688
        %v6690 = vpop.xlane.xlu0 %6689
        %v6691 = vsel %vm1549, %v6606, 0.0
        %6692 = vadd.xlane.f32.xlu0 %v6691
        %v6693 = vpop.xlane.xlu0 %6692
        %v6694 = vsel %vm1549, %v6608, 0.0
        %6695 = vadd.xlane.f32.xlu0 %v6694
        %v6696 = vpop.xlane.xlu0 %6695
        %v6697 = vsel %vm1549, %v6610, 0.0
        %6698 = vadd.xlane.f32.xlu0 %v6697
        %v6699 = vpop.xlane.xlu0 %6698
        %v6700 = vsel %vm1549, %v6612, 0.0
        %6701 = vadd.xlane.f32.xlu0 %v6700
        %v6702 = vpop.xlane.xlu0 %6701
        %v6703 = vsel %vm1549, %v6614, 0.0
        %6704 = vadd.xlane.f32.xlu0 %v6703
        %v6705 = vpop.xlane.xlu0 %6704
        %v6706 = vsel %vm1549, %v6616, 0.0
        %6707 = vadd.xlane.f32.xlu0 %v6706
        %v6708 = vpop.xlane.xlu0 %6707
        %v6709 = vsel %vm1549, %v6618, 0.0
        %6710 = vadd.xlane.f32.xlu0 %v6709
        %v6711 = vpop.xlane.xlu0 %6710
        %v6712 = vsel %vm1549, %v6620, 0.0
        %6713 = vadd.xlane.f32.xlu0 %v6712
        %v6714 = vpop.xlane.xlu0 %6713
        %v6715 = vsel %vm1549, %v6622, 0.0
        %6716 = vadd.xlane.f32.xlu0 %v6715
        %v6717 = vpop.xlane.xlu0 %6716
        %v6718 = vsel %vm1549, %v6624, 0.0
        %6719 = vadd.xlane.f32.xlu0 %v6718
        %v6720 = vpop.xlane.xlu0 %6719
        %v6721 = vrcp.pop %v6627
        %v6722 = vrcp.pop %v6630
        %v6723 = vrcp.pop %v6633
        %v6724 = vrcp.pop %v6636
        %v6725 = vrcp.pop %v6639
        %v6726 = vrcp.pop %v6642
        %v6727 = vrcp.pop %v6645
        %v6728 = vrcp.pop %v6648
        %v6729 = vrcp.pop %v6651
        %v6730 = vrcp.pop %v6654
        %v6731 = vrcp.pop %v6657
        %v6732 = vrcp.pop %v6660
        %v6733 = vrcp.pop %v6663
        %v6734 = vrcp.pop %v6666
        %v6735 = vrcp.pop %v6669
        %v6736 = vrcp.pop %v6672
        %v6737 = vrcp.pop %v6675
        %v6738 = vrcp.pop %v6678
        %v6739 = vrcp.pop %v6681
        %v6740 = vrcp.pop %v6684
        %v6741 = vrcp.pop %v6687
        %v6742 = vrcp.pop %v6690
        %v6743 = vrcp.pop %v6693
        %v6744 = vrcp.pop %v6696
        %v6745 = vrcp.pop %v6699
        %v6746 = vrcp.pop %v6702
        %v6747 = vrcp.pop %v6705
        %v6748 = vrcp.pop %v6708
        %v6749 = vrcp.pop %v6711
        %v6750 = vrcp.pop %v6714
        %v6751 = vrcp.pop %v6717
        %v6752 = vrcp.pop %v6720
        %v6753 = vmul.f32 %v6562, %v6721
        %v6754 = vmul.f32 %v6564, %v6722
        %v6755 = vmul.f32 %v6566, %v6723
        %v6756 = vmul.f32 %v6568, %v6724
        %v6757 = vmul.f32 %v6570, %v6725
        %v6758 = vmul.f32 %v6572, %v6726
        %v6759 = vmul.f32 %v6574, %v6727
        %v6760 = vmul.f32 %v6576, %v6728
        %v6761 = vmul.f32 %v6578, %v6729
        %v6762 = vmul.f32 %v6580, %v6730
        %v6763 = vmul.f32 %v6582, %v6731
        %v6764 = vmul.f32 %v6584, %v6732
        %v6765 = vmul.f32 %v6586, %v6733
        %v6766 = vmul.f32 %v6588, %v6734
        %v6767 = vmul.f32 %v6590, %v6735
        %v6768 = vmul.f32 %v6592, %v6736
        %v6769 = vmul.f32 %v6594, %v6737
        %v6770 = vmul.f32 %v6596, %v6738
        %v6771 = vmul.f32 %v6598, %v6739
        %v6772 = vmul.f32 %v6600, %v6740
        %v6773 = vmul.f32 %v6602, %v6741
        %v6774 = vmul.f32 %v6604, %v6742
        %v6775 = vmul.f32 %v6606, %v6743
        %v6776 = vmul.f32 %v6608, %v6744
        %v6777 = vmul.f32 %v6610, %v6745
        %v6778 = vmul.f32 %v6612, %v6746
        %v6779 = vmul.f32 %v6614, %v6747
        %v6780 = vmul.f32 %v6616, %v6748
        %v6781 = vmul.f32 %v6618, %v6749
        %v6782 = vmul.f32 %v6620, %v6750
        %v6783 = vmul.f32 %v6622, %v6751
        %v6784 = vmul.f32 %v6624, %v6752
        %6785 = vrot.lane.b32.xlu0 %v738, 32
        %v6786 = vpop.permute.xlu0 %6785
        %6787 = vrot.lane.b32.xlu0 %v743, 32
        %v6788 = vpop.permute.xlu0 %6787
        %6789 = vrot.lane.b32.xlu0 %v748, 32
        %v6790 = vpop.permute.xlu0 %6789
        %6791 = vrot.lane.b32.xlu0 %v753, 32
        %v6792 = vpop.permute.xlu0 %6791
        %6793 = vrot.lane.b32.xlu0 %v758, 32
        %v6794 = vpop.permute.xlu0 %6793
        %6795 = vrot.lane.b32.xlu0 %v763, 32
        %v6796 = vpop.permute.xlu0 %6795
        %6797 = vrot.lane.b32.xlu0 %v768, 32
        %v6798 = vpop.permute.xlu0 %6797
        %6799 = vrot.lane.b32.xlu0 %v773, 32
        %v6800 = vpop.permute.xlu0 %6799
        %v6810 = vsel %vm1549, %v6753, 0
        %v6813 = vsel %vm1549, %v6754, 0
        %v6816 = vsel %vm1549, %v6755, 0
        %v6819 = vsel %vm1549, %v6756, 0
        %v6822 = vsel %vm1549, %v6757, 0
        %v6825 = vsel %vm1549, %v6758, 0
        %v6828 = vsel %vm1549, %v6759, 0
        %v6831 = vsel %vm1549, %v6760, 0
        %6833 = vmatprep.subr.mxu0 0.0
        %6834 = vmatpush1.msra.mxu0 %v6786
        %6835 = vmatprep.subr.mxu0 0.0
        %6836 = vmatpush1.msra.mxu0 %v6788
        %6837 = vmatprep.subr.mxu0 0.0
        %6838 = vmatpush1.msra.mxu0 %v6790
        %6839 = vmatprep.subr.mxu0 0.0
        %6840 = vmatpush1.msra.mxu0 %v6792
        %6841 = vmatprep.subr.mxu0 0.0
        %6842 = vmatpush1.msra.mxu0 %v6794
        %6843 = vmatprep.subr.mxu0 0.0
        %6844 = vmatpush1.msra.mxu0 %v6796
        %6845 = vmatprep.subr.mxu0 0.0
        %6846 = vmatpush1.msra.mxu0 %v6798
        %6847 = vmatprep.subr.mxu0 0.0
        %6848 = vmatpush1.msra.mxu0 %v6800
        %6849 = vmatprep.subr.mxu0 0.0
        %6850 = vmatpush1.msra.mxu0 0.0
        %6851 = vmatprep.subr.mxu0 0.0
        %6852 = vmatpush1.msra.mxu0 0.0
        %6853 = vmatprep.subr.mxu0 0.0
        %6854 = vmatpush1.msra.mxu0 0.0
        %6855 = vmatprep.subr.mxu0 0.0
        %6856 = vmatpush1.msra.mxu0 0.0
        %6857 = vmatprep.subr.mxu0 0.0
        %6858 = vmatpush1.msra.mxu0 0.0
        %6859 = vmatprep.subr.mxu0 0.0
        %6860 = vmatpush1.msra.mxu0 0.0
        %6861 = vmatprep.subr.mxu0 0.0
        %6862 = vmatpush1.msra.mxu0 0.0
        %6863 = vmatprep.subr.mxu0 0.0
        %6864 = vmatpush1.msra.mxu0 0.0
        %6865 = vmatprep.subr.mxu0 0.0
        %6866 = vmatpush1.msra.mxu0 0.0
        %6867 = vmatprep.subr.mxu0 0.0
        %6868 = vmatpush1.msra.mxu0 0.0
        %6869 = vmatprep.subr.mxu0 0.0
        %6870 = vmatpush1.msra.mxu0 0.0
        %6871 = vmatprep.subr.mxu0 0.0
        %6872 = vmatpush1.msra.mxu0 0.0
        %6873 = vmatprep.subr.mxu0 0.0
        %6874 = vmatpush1.msra.mxu0 0.0
        %6875 = vmatprep.subr.mxu0 0.0
        %6876 = vmatpush1.msra.mxu0 0.0
        %6877 = vmatprep.subr.mxu0 0.0
        %6878 = vmatpush1.msra.mxu0 0.0
        %6879 = vmatprep.subr.mxu0 0.0
        %6880 = vmatpush1.msra.mxu0 0.0
        %6881 = vmatprep.subr.mxu0 0.0
        %6882 = vmatpush1.msra.mxu0 0.0
        %6883 = vmatprep.subr.mxu0 0.0
        %6884 = vmatpush1.msra.mxu0 0.0
        %6885 = vmatprep.subr.mxu0 0.0
        %6886 = vmatpush1.msra.mxu0 0.0
        %6887 = vmatprep.subr.mxu0 0.0
        %6888 = vmatpush1.msra.mxu0 0.0
        %6889 = vmatprep.subr.mxu0 0.0
        %6890 = vmatpush1.msra.mxu0 0.0
        %6891 = vmatprep.subr.mxu0 0.0
        %6892 = vmatpush1.msra.mxu0 0.0
        %6893 = vmatprep.subr.mxu0 0.0
        %6894 = vmatpush1.msra.mxu0 0.0
        %6895 = vmatprep.subr.mxu0 0.0
        %6896 = vmatpush1.msra.mxu0 0.0
        %6897 = vmatprep.mubr.f32.mxu0 0.0
        %6898 = vmatmul.mubr.f32.gmra.mrb[0].mxu0 %v6810
        %v6899 = vpop.f32.mrb[0].mxu0
        %v6900 = vadd.f32 0.0, %v6899
        %v6901 = vpop.f32.mrb[0].mxu0
        %6902 = vmatprep.mubr.f32.mxu0 0.0
        %6903 = vmatmul.mubr.f32.gmra.mrb[0].mxu0 %v6813
        %v6904 = vpop.f32.mrb[0].mxu0
        %v6905 = vadd.f32 0.0, %v6904
        %v6906 = vpop.f32.mrb[0].mxu0
        %6907 = vmatprep.mubr.f32.mxu0 0.0
        %6908 = vmatmul.mubr.f32.gmra.mrb[0].mxu0 %v6816
        %v6909 = vpop.f32.mrb[0].mxu0
        %v6910 = vadd.f32 0.0, %v6909
        %v6911 = vpop.f32.mrb[0].mxu0
        %6912 = vmatprep.mubr.f32.mxu0 0.0
        %6913 = vmatmul.mubr.f32.gmra.mrb[0].mxu0 %v6819
        %v6914 = vpop.f32.mrb[0].mxu0
        %v6915 = vadd.f32 0.0, %v6914
        %v6916 = vpop.f32.mrb[0].mxu0
        %6917 = vmatprep.mubr.f32.mxu0 0.0
        %6918 = vmatmul.mubr.f32.gmra.mrb[0].mxu0 %v6822
        %v6919 = vpop.f32.mrb[0].mxu0
        %v6920 = vadd.f32 0.0, %v6919
        %v6921 = vpop.f32.mrb[0].mxu0
        %6922 = vmatprep.mubr.f32.mxu0 0.0
        %6923 = vmatmul.mubr.f32.gmra.mrb[0].mxu0 %v6825
        %v6924 = vpop.f32.mrb[0].mxu0
        %v6925 = vadd.f32 0.0, %v6924
        %v6926 = vpop.f32.mrb[0].mxu0
        %6927 = vmatprep.mubr.f32.mxu0 0.0
        %6928 = vmatmul.mubr.f32.gmra.mrb[0].mxu0 %v6828
        %v6929 = vpop.f32.mrb[0].mxu0
        %v6930 = vadd.f32 0.0, %v6929
        %v6931 = vpop.f32.mrb[0].mxu0
        %6932 = vmatprep.mubr.f32.mxu0 0.0
        %6933 = vmatmul.mubr.f32.gmra.mrb[0].mxu0 %v6831
        %v6934 = vpop.f32.mrb[0].mxu0
        %v6935 = vadd.f32 0.0, %v6934
        %v6936 = vpop.f32.mrb[0].mxu0
        %6937 = vdwg.mxu0
        %6938 = vrot.lane.b32.xlu0 %v778, 32
        %v6939 = vpop.permute.xlu0 %6938
        %6940 = vrot.lane.b32.xlu0 %v783, 32
        %v6941 = vpop.permute.xlu0 %6940
        %6942 = vrot.lane.b32.xlu0 %v788, 32
        %v6943 = vpop.permute.xlu0 %6942
        %6944 = vrot.lane.b32.xlu0 %v793, 32
        %v6945 = vpop.permute.xlu0 %6944
        %6946 = vrot.lane.b32.xlu0 %v798, 32
        %v6947 = vpop.permute.xlu0 %6946
        %6948 = vrot.lane.b32.xlu0 %v803, 32
        %v6949 = vpop.permute.xlu0 %6948
        %6950 = vrot.lane.b32.xlu0 %v808, 32
        %v6951 = vpop.permute.xlu0 %6950
        %6952 = vrot.lane.b32.xlu0 %v813, 32
        %v6953 = vpop.permute.xlu0 %6952
        %v6963 = vsel %vm1549, %v6761, 0
        %v6966 = vsel %vm1549, %v6762, 0
        %v6969 = vsel %vm1549, %v6763, 0
        %v6972 = vsel %vm1549, %v6764, 0
        %v6975 = vsel %vm1549, %v6765, 0
        %v6978 = vsel %vm1549, %v6766, 0
        %v6981 = vsel %vm1549, %v6767, 0
        %v6984 = vsel %vm1549, %v6768, 0
        %6986 = vmatprep.subr.mxu0 0.0
        %6987 = vmatpush1.msra.mxu0 %v6939
        %6988 = vmatprep.subr.mxu0 0.0
        %6989 = vmatpush1.msra.mxu0 %v6941
        %6990 = vmatprep.subr.mxu0 0.0
        %6991 = vmatpush1.msra.mxu0 %v6943
        %6992 = vmatprep.subr.mxu0 0.0
        %6993 = vmatpush1.msra.mxu0 %v6945
        %6994 = vmatprep.subr.mxu0 0.0
        %6995 = vmatpush1.msra.mxu0 %v6947
        %6996 = vmatprep.subr.mxu0 0.0
        %6997 = vmatpush1.msra.mxu0 %v6949
        %6998 = vmatprep.subr.mxu0 0.0
        %6999 = vmatpush1.msra.mxu0 %v6951
        %7000 = vmatprep.subr.mxu0 0.0
        %7001 = vmatpush1.msra.mxu0 %v6953
        %7002 = vmatprep.subr.mxu0 0.0
        %7003 = vmatpush1.msra.mxu0 0.0
        %7004 = vmatprep.subr.mxu0 0.0
        %7005 = vmatpush1.msra.mxu0 0.0
        %7006 = vmatprep.subr.mxu0 0.0
        %7007 = vmatpush1.msra.mxu0 0.0
        %7008 = vmatprep.subr.mxu0 0.0
        %7009 = vmatpush1.msra.mxu0 0.0
        %7010 = vmatprep.subr.mxu0 0.0
        %7011 = vmatpush1.msra.mxu0 0.0
        %7012 = vmatprep.subr.mxu0 0.0
        %7013 = vmatpush1.msra.mxu0 0.0
        %7014 = vmatprep.subr.mxu0 0.0
        %7015 = vmatpush1.msra.mxu0 0.0
        %7016 = vmatprep.subr.mxu0 0.0
        %7017 = vmatpush1.msra.mxu0 0.0
        %7018 = vmatprep.subr.mxu0 0.0
        %7019 = vmatpush1.msra.mxu0 0.0
        %7020 = vmatprep.subr.mxu0 0.0
        %7021 = vmatpush1.msra.mxu0 0.0
        %7022 = vmatprep.subr.mxu0 0.0
        %7023 = vmatpush1.msra.mxu0 0.0
        %7024 = vmatprep.subr.mxu0 0.0
        %7025 = vmatpush1.msra.mxu0 0.0
        %7026 = vmatprep.subr.mxu0 0.0
        %7027 = vmatpush1.msra.mxu0 0.0
        %7028 = vmatprep.subr.mxu0 0.0
        %7029 = vmatpush1.msra.mxu0 0.0
        %7030 = vmatprep.subr.mxu0 0.0
        %7031 = vmatpush1.msra.mxu0 0.0
        %7032 = vmatprep.subr.mxu0 0.0
        %7033 = vmatpush1.msra.mxu0 0.0
        %7034 = vmatprep.subr.mxu0 0.0
        %7035 = vmatpush1.msra.mxu0 0.0
        %7036 = vmatprep.subr.mxu0 0.0
        %7037 = vmatpush1.msra.mxu0 0.0
        %7038 = vmatprep.subr.mxu0 0.0
        %7039 = vmatpush1.msra.mxu0 0.0
        %7040 = vmatprep.subr.mxu0 0.0
        %7041 = vmatpush1.msra.mxu0 0.0
        %7042 = vmatprep.subr.mxu0 0.0
        %7043 = vmatpush1.msra.mxu0 0.0
        %7044 = vmatprep.subr.mxu0 0.0
        %7045 = vmatpush1.msra.mxu0 0.0
        %7046 = vmatprep.subr.mxu0 0.0
        %7047 = vmatpush1.msra.mxu0 0.0
        %7048 = vmatprep.subr.mxu0 0.0
        %7049 = vmatpush1.msra.mxu0 0.0
        %7050 = vmatprep.mubr.f32.mxu0 0.0
        %7051 = vmatmul.mubr.f32.gmra.mrb[0].mxu0 %v6963
        %v7052 = vpop.f32.mrb[0].mxu0
        %v7053 = vadd.f32 0.0, %v7052
        %v7054 = vpop.f32.mrb[0].mxu0
        %7055 = vmatprep.mubr.f32.mxu0 0.0
        %7056 = vmatmul.mubr.f32.gmra.mrb[0].mxu0 %v6966
        %v7057 = vpop.f32.mrb[0].mxu0
        %v7058 = vadd.f32 0.0, %v7057
        %v7059 = vpop.f32.mrb[0].mxu0
        %7060 = vmatprep.mubr.f32.mxu0 0.0
        %7061 = vmatmul.mubr.f32.gmra.mrb[0].mxu0 %v6969
        %v7062 = vpop.f32.mrb[0].mxu0
        %v7063 = vadd.f32 0.0, %v7062
        %v7064 = vpop.f32.mrb[0].mxu0
        %7065 = vmatprep.mubr.f32.mxu0 0.0
        %7066 = vmatmul.mubr.f32.gmra.mrb[0].mxu0 %v6972
        %v7067 = vpop.f32.mrb[0].mxu0
        %v7068 = vadd.f32 0.0, %v7067
        %v7069 = vpop.f32.mrb[0].mxu0
        %7070 = vmatprep.mubr.f32.mxu0 0.0
        %7071 = vmatmul.mubr.f32.gmra.mrb[0].mxu0 %v6975
        %v7072 = vpop.f32.mrb[0].mxu0
        %v7073 = vadd.f32 0.0, %v7072
        %v7074 = vpop.f32.mrb[0].mxu0
        %7075 = vmatprep.mubr.f32.mxu0 0.0
        %7076 = vmatmul.mubr.f32.gmra.mrb[0].mxu0 %v6978
        %v7077 = vpop.f32.mrb[0].mxu0
        %v7078 = vadd.f32 0.0, %v7077
        %v7079 = vpop.f32.mrb[0].mxu0
        %7080 = vmatprep.mubr.f32.mxu0 0.0
        %7081 = vmatmul.mubr.f32.gmra.mrb[0].mxu0 %v6981
        %v7082 = vpop.f32.mrb[0].mxu0
        %v7083 = vadd.f32 0.0, %v7082
        %v7084 = vpop.f32.mrb[0].mxu0
        %7085 = vmatprep.mubr.f32.mxu0 0.0
        %7086 = vmatmul.mubr.f32.gmra.mrb[0].mxu0 %v6984
        %v7087 = vpop.f32.mrb[0].mxu0
        %v7088 = vadd.f32 0.0, %v7087
        %v7089 = vpop.f32.mrb[0].mxu0
        %7090 = vdwg.mxu0
        %7091 = vrot.lane.b32.xlu0 %v818, 32
        %v7092 = vpop.permute.xlu0 %7091
        %7093 = vrot.lane.b32.xlu0 %v823, 32
        %v7094 = vpop.permute.xlu0 %7093
        %7095 = vrot.lane.b32.xlu0 %v828, 32
        %v7096 = vpop.permute.xlu0 %7095
        %7097 = vrot.lane.b32.xlu0 %v833, 32
        %v7098 = vpop.permute.xlu0 %7097
        %7099 = vrot.lane.b32.xlu0 %v838, 32
        %v7100 = vpop.permute.xlu0 %7099
        %7101 = vrot.lane.b32.xlu0 %v843, 32
        %v7102 = vpop.permute.xlu0 %7101
        %7103 = vrot.lane.b32.xlu0 %v848, 32
        %v7104 = vpop.permute.xlu0 %7103
        %7105 = vrot.lane.b32.xlu0 %v853, 32
        %v7106 = vpop.permute.xlu0 %7105
        %v7116 = vsel %vm1549, %v6769, 0
        %v7119 = vsel %vm1549, %v6770, 0
        %v7122 = vsel %vm1549, %v6771, 0
        %v7125 = vsel %vm1549, %v6772, 0
        %v7128 = vsel %vm1549, %v6773, 0
        %v7131 = vsel %vm1549, %v6774, 0
        %v7134 = vsel %vm1549, %v6775, 0
        %v7137 = vsel %vm1549, %v6776, 0
        %7139 = vmatprep.subr.mxu0 0.0
        %7140 = vmatpush1.msra.mxu0 %v7092
        %7141 = vmatprep.subr.mxu0 0.0
        %7142 = vmatpush1.msra.mxu0 %v7094
        %7143 = vmatprep.subr.mxu0 0.0
        %7144 = vmatpush1.msra.mxu0 %v7096
        %7145 = vmatprep.subr.mxu0 0.0
        %7146 = vmatpush1.msra.mxu0 %v7098
        %7147 = vmatprep.subr.mxu0 0.0
        %7148 = vmatpush1.msra.mxu0 %v7100
        %7149 = vmatprep.subr.mxu0 0.0
        %7150 = vmatpush1.msra.mxu0 %v7102
        %7151 = vmatprep.subr.mxu0 0.0
        %7152 = vmatpush1.msra.mxu0 %v7104
        %7153 = vmatprep.subr.mxu0 0.0
        %7154 = vmatpush1.msra.mxu0 %v7106
        %7155 = vmatprep.subr.mxu0 0.0
        %7156 = vmatpush1.msra.mxu0 0.0
        %7157 = vmatprep.subr.mxu0 0.0
        %7158 = vmatpush1.msra.mxu0 0.0
        %7159 = vmatprep.subr.mxu0 0.0
        %7160 = vmatpush1.msra.mxu0 0.0
        %7161 = vmatprep.subr.mxu0 0.0
        %7162 = vmatpush1.msra.mxu0 0.0
        %7163 = vmatprep.subr.mxu0 0.0
        %7164 = vmatpush1.msra.mxu0 0.0
        %7165 = vmatprep.subr.mxu0 0.0
        %7166 = vmatpush1.msra.mxu0 0.0
        %7167 = vmatprep.subr.mxu0 0.0
        %7168 = vmatpush1.msra.mxu0 0.0
        %7169 = vmatprep.subr.mxu0 0.0
        %7170 = vmatpush1.msra.mxu0 0.0
        %7171 = vmatprep.subr.mxu0 0.0
        %7172 = vmatpush1.msra.mxu0 0.0
        %7173 = vmatprep.subr.mxu0 0.0
        %7174 = vmatpush1.msra.mxu0 0.0
        %7175 = vmatprep.subr.mxu0 0.0
        %7176 = vmatpush1.msra.mxu0 0.0
        %7177 = vmatprep.subr.mxu0 0.0
        %7178 = vmatpush1.msra.mxu0 0.0
        %7179 = vmatprep.subr.mxu0 0.0
        %7180 = vmatpush1.msra.mxu0 0.0
        %7181 = vmatprep.subr.mxu0 0.0
        %7182 = vmatpush1.msra.mxu0 0.0
        %7183 = vmatprep.subr.mxu0 0.0
        %7184 = vmatpush1.msra.mxu0 0.0
        %7185 = vmatprep.subr.mxu0 0.0
        %7186 = vmatpush1.msra.mxu0 0.0
        %7187 = vmatprep.subr.mxu0 0.0
        %7188 = vmatpush1.msra.mxu0 0.0
        %7189 = vmatprep.subr.mxu0 0.0
        %7190 = vmatpush1.msra.mxu0 0.0
        %7191 = vmatprep.subr.mxu0 0.0
        %7192 = vmatpush1.msra.mxu0 0.0
        %7193 = vmatprep.subr.mxu0 0.0
        %7194 = vmatpush1.msra.mxu0 0.0
        %7195 = vmatprep.subr.mxu0 0.0
        %7196 = vmatpush1.msra.mxu0 0.0
        %7197 = vmatprep.subr.mxu0 0.0
        %7198 = vmatpush1.msra.mxu0 0.0
        %7199 = vmatprep.subr.mxu0 0.0
        %7200 = vmatpush1.msra.mxu0 0.0
        %7201 = vmatprep.subr.mxu0 0.0
        %7202 = vmatpush1.msra.mxu0 0.0
        %7203 = vmatprep.mubr.f32.mxu0 0.0
        %7204 = vmatmul.mubr.f32.gmra.mrb[0].mxu0 %v7116
        %v7205 = vpop.f32.mrb[0].mxu0
        %v7206 = vadd.f32 0.0, %v7205
        %v7207 = vpop.f32.mrb[0].mxu0
        %7208 = vmatprep.mubr.f32.mxu0 0.0
        %7209 = vmatmul.mubr.f32.gmra.mrb[0].mxu0 %v7119
        %v7210 = vpop.f32.mrb[0].mxu0
        %v7211 = vadd.f32 0.0, %v7210
        %v7212 = vpop.f32.mrb[0].mxu0
        %7213 = vmatprep.mubr.f32.mxu0 0.0
        %7214 = vmatmul.mubr.f32.gmra.mrb[0].mxu0 %v7122
        %v7215 = vpop.f32.mrb[0].mxu0
        %v7216 = vadd.f32 0.0, %v7215
        %v7217 = vpop.f32.mrb[0].mxu0
        %7218 = vmatprep.mubr.f32.mxu0 0.0
        %7219 = vmatmul.mubr.f32.gmra.mrb[0].mxu0 %v7125
        %v7220 = vpop.f32.mrb[0].mxu0
        %v7221 = vadd.f32 0.0, %v7220
        %v7222 = vpop.f32.mrb[0].mxu0
        %7223 = vmatprep.mubr.f32.mxu0 0.0
        %7224 = vmatmul.mubr.f32.gmra.mrb[0].mxu0 %v7128
        %v7225 = vpop.f32.mrb[0].mxu0
        %v7226 = vadd.f32 0.0, %v7225
        %v7227 = vpop.f32.mrb[0].mxu0
        %7228 = vmatprep.mubr.f32.mxu0 0.0
        %7229 = vmatmul.mubr.f32.gmra.mrb[0].mxu0 %v7131
        %v7230 = vpop.f32.mrb[0].mxu0
        %v7231 = vadd.f32 0.0, %v7230
        %v7232 = vpop.f32.mrb[0].mxu0
        %7233 = vmatprep.mubr.f32.mxu0 0.0
        %7234 = vmatmul.mubr.f32.gmra.mrb[0].mxu0 %v7134
        %v7235 = vpop.f32.mrb[0].mxu0
        %v7236 = vadd.f32 0.0, %v7235
        %v7237 = vpop.f32.mrb[0].mxu0
        %7238 = vmatprep.mubr.f32.mxu0 0.0
        %7239 = vmatmul.mubr.f32.gmra.mrb[0].mxu0 %v7137
        %v7240 = vpop.f32.mrb[0].mxu0
        %v7241 = vadd.f32 0.0, %v7240
        %v7242 = vpop.f32.mrb[0].mxu0
        %7243 = vdwg.mxu0
        %7244 = vrot.lane.b32.xlu0 %v858, 32
        %v7245 = vpop.permute.xlu0 %7244
        %7246 = vrot.lane.b32.xlu0 %v863, 32
        %v7247 = vpop.permute.xlu0 %7246
        %7248 = vrot.lane.b32.xlu0 %v868, 32
        %v7249 = vpop.permute.xlu0 %7248
        %7250 = vrot.lane.b32.xlu0 %v873, 32
        %v7251 = vpop.permute.xlu0 %7250
        %7252 = vrot.lane.b32.xlu0 %v878, 32
        %v7253 = vpop.permute.xlu0 %7252
        %7254 = vrot.lane.b32.xlu0 %v883, 32
        %v7255 = vpop.permute.xlu0 %7254
        %7256 = vrot.lane.b32.xlu0 %v888, 32
        %v7257 = vpop.permute.xlu0 %7256
        %7258 = vrot.lane.b32.xlu0 %v893, 32
        %v7259 = vpop.permute.xlu0 %7258
        %v7269 = vsel %vm1549, %v6777, 0
        %v7272 = vsel %vm1549, %v6778, 0
        %v7275 = vsel %vm1549, %v6779, 0
        %v7278 = vsel %vm1549, %v6780, 0
        %v7281 = vsel %vm1549, %v6781, 0
        %v7284 = vsel %vm1549, %v6782, 0
        %v7287 = vsel %vm1549, %v6783, 0
        %v7290 = vsel %vm1549, %v6784, 0
        %7292 = vmatprep.subr.mxu0 0.0
        %7293 = vmatpush1.msra.mxu0 %v7245
        %7294 = vmatprep.subr.mxu0 0.0
        %7295 = vmatpush1.msra.mxu0 %v7247
        %7296 = vmatprep.subr.mxu0 0.0
        %7297 = vmatpush1.msra.mxu0 %v7249
        %7298 = vmatprep.subr.mxu0 0.0
        %7299 = vmatpush1.msra.mxu0 %v7251
        %7300 = vmatprep.subr.mxu0 0.0
        %7301 = vmatpush1.msra.mxu0 %v7253
        %7302 = vmatprep.subr.mxu0 0.0
        %7303 = vmatpush1.msra.mxu0 %v7255
        %7304 = vmatprep.subr.mxu0 0.0
        %7305 = vmatpush1.msra.mxu0 %v7257
        %7306 = vmatprep.subr.mxu0 0.0
        %7307 = vmatpush1.msra.mxu0 %v7259
        %7308 = vmatprep.subr.mxu0 0.0
        %7309 = vmatpush1.msra.mxu0 0.0
        %7310 = vmatprep.subr.mxu0 0.0
        %7311 = vmatpush1.msra.mxu0 0.0
        %7312 = vmatprep.subr.mxu0 0.0
        %7313 = vmatpush1.msra.mxu0 0.0
        %7314 = vmatprep.subr.mxu0 0.0
        %7315 = vmatpush1.msra.mxu0 0.0
        %7316 = vmatprep.subr.mxu0 0.0
        %7317 = vmatpush1.msra.mxu0 0.0
        %7318 = vmatprep.subr.mxu0 0.0
        %7319 = vmatpush1.msra.mxu0 0.0
        %7320 = vmatprep.subr.mxu0 0.0
        %7321 = vmatpush1.msra.mxu0 0.0
        %7322 = vmatprep.subr.mxu0 0.0
        %7323 = vmatpush1.msra.mxu0 0.0
        %7324 = vmatprep.subr.mxu0 0.0
        %7325 = vmatpush1.msra.mxu0 0.0
        %7326 = vmatprep.subr.mxu0 0.0
        %7327 = vmatpush1.msra.mxu0 0.0
        %7328 = vmatprep.subr.mxu0 0.0
        %7329 = vmatpush1.msra.mxu0 0.0
        %7330 = vmatprep.subr.mxu0 0.0
        %7331 = vmatpush1.msra.mxu0 0.0
        %7332 = vmatprep.subr.mxu0 0.0
        %7333 = vmatpush1.msra.mxu0 0.0
        %7334 = vmatprep.subr.mxu0 0.0
        %7335 = vmatpush1.msra.mxu0 0.0
        %7336 = vmatprep.subr.mxu0 0.0
        %7337 = vmatpush1.msra.mxu0 0.0
        %7338 = vmatprep.subr.mxu0 0.0
        %7339 = vmatpush1.msra.mxu0 0.0
        %7340 = vmatprep.subr.mxu0 0.0
        %7341 = vmatpush1.msra.mxu0 0.0
        %7342 = vmatprep.subr.mxu0 0.0
        %7343 = vmatpush1.msra.mxu0 0.0
        %7344 = vmatprep.subr.mxu0 0.0
        %7345 = vmatpush1.msra.mxu0 0.0
        %7346 = vmatprep.subr.mxu0 0.0
        %7347 = vmatpush1.msra.mxu0 0.0
        %7348 = vmatprep.subr.mxu0 0.0
        %7349 = vmatpush1.msra.mxu0 0.0
        %7350 = vmatprep.subr.mxu0 0.0
        %7351 = vmatpush1.msra.mxu0 0.0
        %7352 = vmatprep.subr.mxu0 0.0
        %7353 = vmatpush1.msra.mxu0 0.0
        %7354 = vmatprep.subr.mxu0 0.0
        %7355 = vmatpush1.msra.mxu0 0.0
        %7356 = vmatprep.mubr.f32.mxu0 0.0
        %7357 = vmatmul.mubr.f32.gmra.mrb[0].mxu0 %v7269
        %v7358 = vpop.f32.mrb[0].mxu0
        %v7359 = vadd.f32 0.0, %v7358
        %v7360 = vpop.f32.mrb[0].mxu0
        %7361 = vmatprep.mubr.f32.mxu0 0.0
        %7362 = vmatmul.mubr.f32.gmra.mrb[0].mxu0 %v7272
        %v7363 = vpop.f32.mrb[0].mxu0
        %v7364 = vadd.f32 0.0, %v7363
        %v7365 = vpop.f32.mrb[0].mxu0
        %7366 = vmatprep.mubr.f32.mxu0 0.0
        %7367 = vmatmul.mubr.f32.gmra.mrb[0].mxu0 %v7275
        %v7368 = vpop.f32.mrb[0].mxu0
        %v7369 = vadd.f32 0.0, %v7368
        %v7370 = vpop.f32.mrb[0].mxu0
        %7371 = vmatprep.mubr.f32.mxu0 0.0
        %7372 = vmatmul.mubr.f32.gmra.mrb[0].mxu0 %v7278
        %v7373 = vpop.f32.mrb[0].mxu0
        %v7374 = vadd.f32 0.0, %v7373
        %v7375 = vpop.f32.mrb[0].mxu0
        %7376 = vmatprep.mubr.f32.mxu0 0.0
        %7377 = vmatmul.mubr.f32.gmra.mrb[0].mxu0 %v7281
        %v7378 = vpop.f32.mrb[0].mxu0
        %v7379 = vadd.f32 0.0, %v7378
        %v7380 = vpop.f32.mrb[0].mxu0
        %7381 = vmatprep.mubr.f32.mxu0 0.0
        %7382 = vmatmul.mubr.f32.gmra.mrb[0].mxu0 %v7284
        %v7383 = vpop.f32.mrb[0].mxu0
        %v7384 = vadd.f32 0.0, %v7383
        %v7385 = vpop.f32.mrb[0].mxu0
        %7386 = vmatprep.mubr.f32.mxu0 0.0
        %7387 = vmatmul.mubr.f32.gmra.mrb[0].mxu0 %v7287
        %v7388 = vpop.f32.mrb[0].mxu0
        %v7389 = vadd.f32 0.0, %v7388
        %v7390 = vpop.f32.mrb[0].mxu0
        %7391 = vmatprep.mubr.f32.mxu0 0.0
        %7392 = vmatmul.mubr.f32.gmra.mrb[0].mxu0 %v7290
        %v7393 = vpop.f32.mrb[0].mxu0
        %v7394 = vadd.f32 0.0, %v7393
        %v7395 = vpop.f32.mrb[0].mxu0
        %7396 = vdwg.mxu0
        %7429 = vrot.lane.b32.xlu0 %v3578, 32
        %v7430 = vpop.permute.xlu0 %7429
        %7431 = vrot.lane.b32.xlu0 %v3583, 32
        %v7432 = vpop.permute.xlu0 %7431
        %7433 = vrot.lane.b32.xlu0 %v3588, 32
        %v7434 = vpop.permute.xlu0 %7433
        %7435 = vrot.lane.b32.xlu0 %v3593, 32
        %v7436 = vpop.permute.xlu0 %7435
        %7437 = vrot.lane.b32.xlu0 %v3598, 32
        %v7438 = vpop.permute.xlu0 %7437
        %7439 = vrot.lane.b32.xlu0 %v3603, 32
        %v7440 = vpop.permute.xlu0 %7439
        %7441 = vrot.lane.b32.xlu0 %v3608, 32
        %v7442 = vpop.permute.xlu0 %7441
        %7443 = vrot.lane.b32.xlu0 %v3613, 32
        %v7444 = vpop.permute.xlu0 %7443
        %7445 = vrot.lane.b32.xlu0 %v3739, 32
        %v7446 = vpop.permute.xlu0 %7445
        %7447 = vrot.lane.b32.xlu0 %v3744, 32
        %v7448 = vpop.permute.xlu0 %7447
        %7449 = vrot.lane.b32.xlu0 %v3749, 32
        %v7450 = vpop.permute.xlu0 %7449
        %7451 = vrot.lane.b32.xlu0 %v3754, 32
        %v7452 = vpop.permute.xlu0 %7451
        %7453 = vrot.lane.b32.xlu0 %v3759, 32
        %v7454 = vpop.permute.xlu0 %7453
        %7455 = vrot.lane.b32.xlu0 %v3764, 32
        %v7456 = vpop.permute.xlu0 %7455
        %7457 = vrot.lane.b32.xlu0 %v3769, 32
        %v7458 = vpop.permute.xlu0 %7457
        %7459 = vrot.lane.b32.xlu0 %v3774, 32
        %v7460 = vpop.permute.xlu0 %7459
        %7461 = vrot.lane.b32.xlu0 %v3900, 32
        %v7462 = vpop.permute.xlu0 %7461
        %7463 = vrot.lane.b32.xlu0 %v3905, 32
        %v7464 = vpop.permute.xlu0 %7463
        %7465 = vrot.lane.b32.xlu0 %v3910, 32
        %v7466 = vpop.permute.xlu0 %7465
        %7467 = vrot.lane.b32.xlu0 %v3915, 32
        %v7468 = vpop.permute.xlu0 %7467
        %7469 = vrot.lane.b32.xlu0 %v3920, 32
        %v7470 = vpop.permute.xlu0 %7469
        %7471 = vrot.lane.b32.xlu0 %v3925, 32
        %v7472 = vpop.permute.xlu0 %7471
        %7473 = vrot.lane.b32.xlu0 %v3930, 32
        %v7474 = vpop.permute.xlu0 %7473
        %7475 = vrot.lane.b32.xlu0 %v3935, 32
        %v7476 = vpop.permute.xlu0 %7475
        %7477 = vrot.lane.b32.xlu0 %v4061, 32
        %v7478 = vpop.permute.xlu0 %7477
        %7479 = vrot.lane.b32.xlu0 %v4066, 32
        %v7480 = vpop.permute.xlu0 %7479
        %7481 = vrot.lane.b32.xlu0 %v4071, 32
        %v7482 = vpop.permute.xlu0 %7481
        %7483 = vrot.lane.b32.xlu0 %v4076, 32
        %v7484 = vpop.permute.xlu0 %7483
        %7485 = vrot.lane.b32.xlu0 %v4081, 32
        %v7486 = vpop.permute.xlu0 %7485
        %7487 = vrot.lane.b32.xlu0 %v4086, 32
        %v7488 = vpop.permute.xlu0 %7487
        %7489 = vrot.lane.b32.xlu0 %v4091, 32
        %v7490 = vpop.permute.xlu0 %7489
        %7491 = vrot.lane.b32.xlu0 %v4096, 32
        %v7492 = vpop.permute.xlu0 %7491
        %7557 = vrot.lane.b32.xlu0 %v5251, 64
        %v7558 = vpop.permute.xlu0 %7557
        %7559 = vrot.lane.b32.xlu0 %v5256, 64
        %v7560 = vpop.permute.xlu0 %7559
        %7561 = vrot.lane.b32.xlu0 %v5261, 64
        %v7562 = vpop.permute.xlu0 %7561
        %7563 = vrot.lane.b32.xlu0 %v5266, 64
        %v7564 = vpop.permute.xlu0 %7563
        %7565 = vrot.lane.b32.xlu0 %v5271, 64
        %v7566 = vpop.permute.xlu0 %7565
        %7567 = vrot.lane.b32.xlu0 %v5276, 64
        %v7568 = vpop.permute.xlu0 %7567
        %7569 = vrot.lane.b32.xlu0 %v5281, 64
        %v7570 = vpop.permute.xlu0 %7569
        %7571 = vrot.lane.b32.xlu0 %v5286, 64
        %v7572 = vpop.permute.xlu0 %7571
        %7573 = vrot.lane.b32.xlu0 %v5404, 64
        %v7574 = vpop.permute.xlu0 %7573
        %7575 = vrot.lane.b32.xlu0 %v5409, 64
        %v7576 = vpop.permute.xlu0 %7575
        %7577 = vrot.lane.b32.xlu0 %v5414, 64
        %v7578 = vpop.permute.xlu0 %7577
        %7579 = vrot.lane.b32.xlu0 %v5419, 64
        %v7580 = vpop.permute.xlu0 %7579
        %7581 = vrot.lane.b32.xlu0 %v5424, 64
        %v7582 = vpop.permute.xlu0 %7581
        %7583 = vrot.lane.b32.xlu0 %v5429, 64
        %v7584 = vpop.permute.xlu0 %7583
        %7585 = vrot.lane.b32.xlu0 %v5434, 64
        %v7586 = vpop.permute.xlu0 %7585
        %7587 = vrot.lane.b32.xlu0 %v5439, 64
        %v7588 = vpop.permute.xlu0 %7587
        %7589 = vrot.lane.b32.xlu0 %v5557, 64
        %v7590 = vpop.permute.xlu0 %7589
        %7591 = vrot.lane.b32.xlu0 %v5562, 64
        %v7592 = vpop.permute.xlu0 %7591
        %7593 = vrot.lane.b32.xlu0 %v5567, 64
        %v7594 = vpop.permute.xlu0 %7593
        %7595 = vrot.lane.b32.xlu0 %v5572, 64
        %v7596 = vpop.permute.xlu0 %7595
        %7597 = vrot.lane.b32.xlu0 %v5577, 64
        %v7598 = vpop.permute.xlu0 %7597
        %7599 = vrot.lane.b32.xlu0 %v5582, 64
        %v7600 = vpop.permute.xlu0 %7599
        %7601 = vrot.lane.b32.xlu0 %v5587, 64
        %v7602 = vpop.permute.xlu0 %7601
        %7603 = vrot.lane.b32.xlu0 %v5592, 64
        %v7604 = vpop.permute.xlu0 %7603
        %7605 = vrot.lane.b32.xlu0 %v5710, 64
        %v7606 = vpop.permute.xlu0 %7605
        %7607 = vrot.lane.b32.xlu0 %v5715, 64
        %v7608 = vpop.permute.xlu0 %7607
        %7609 = vrot.lane.b32.xlu0 %v5720, 64
        %v7610 = vpop.permute.xlu0 %7609
        %7611 = vrot.lane.b32.xlu0 %v5725, 64
        %v7612 = vpop.permute.xlu0 %7611
        %7613 = vrot.lane.b32.xlu0 %v5730, 64
        %v7614 = vpop.permute.xlu0 %7613
        %7615 = vrot.lane.b32.xlu0 %v5735, 64
        %v7616 = vpop.permute.xlu0 %7615
        %7617 = vrot.lane.b32.xlu0 %v5740, 64
        %v7618 = vpop.permute.xlu0 %7617
        %7619 = vrot.lane.b32.xlu0 %v5745, 64
        %v7620 = vpop.permute.xlu0 %7619
        %7685 = vrot.lane.b32.xlu0 %v6900, 96
        %v7686 = vpop.permute.xlu0 %7685
        %7687 = vrot.lane.b32.xlu0 %v6905, 96
        %v7688 = vpop.permute.xlu0 %7687
        %7689 = vrot.lane.b32.xlu0 %v6910, 96
        %v7690 = vpop.permute.xlu0 %7689
        %7691 = vrot.lane.b32.xlu0 %v6915, 96
        %v7692 = vpop.permute.xlu0 %7691
        %7693 = vrot.lane.b32.xlu0 %v6920, 96
        %v7694 = vpop.permute.xlu0 %7693
        %7695 = vrot.lane.b32.xlu0 %v6925, 96
        %v7696 = vpop.permute.xlu0 %7695
        %7697 = vrot.lane.b32.xlu0 %v6930, 96
        %v7698 = vpop.permute.xlu0 %7697
        %7699 = vrot.lane.b32.xlu0 %v6935, 96
        %v7700 = vpop.permute.xlu0 %7699
        %7701 = vrot.lane.b32.xlu0 %v7053, 96
        %v7702 = vpop.permute.xlu0 %7701
        %7703 = vrot.lane.b32.xlu0 %v7058, 96
        %v7704 = vpop.permute.xlu0 %7703
        %7705 = vrot.lane.b32.xlu0 %v7063, 96
        %v7706 = vpop.permute.xlu0 %7705
        %7707 = vrot.lane.b32.xlu0 %v7068, 96
        %v7708 = vpop.permute.xlu0 %7707
        %7709 = vrot.lane.b32.xlu0 %v7073, 96
        %v7710 = vpop.permute.xlu0 %7709
        %7711 = vrot.lane.b32.xlu0 %v7078, 96
        %v7712 = vpop.permute.xlu0 %7711
        %7713 = vrot.lane.b32.xlu0 %v7083, 96
        %v7714 = vpop.permute.xlu0 %7713
        %7715 = vrot.lane.b32.xlu0 %v7088, 96
        %v7716 = vpop.permute.xlu0 %7715
        %7717 = vrot.lane.b32.xlu0 %v7206, 96
        %v7718 = vpop.permute.xlu0 %7717
        %7719 = vrot.lane.b32.xlu0 %v7211, 96
        %v7720 = vpop.permute.xlu0 %7719
        %7721 = vrot.lane.b32.xlu0 %v7216, 96
        %v7722 = vpop.permute.xlu0 %7721
        %7723 = vrot.lane.b32.xlu0 %v7221, 96
        %v7724 = vpop.permute.xlu0 %7723
        %7725 = vrot.lane.b32.xlu0 %v7226, 96
        %v7726 = vpop.permute.xlu0 %7725
        %7727 = vrot.lane.b32.xlu0 %v7231, 96
        %v7728 = vpop.permute.xlu0 %7727
        %7729 = vrot.lane.b32.xlu0 %v7236, 96
        %v7730 = vpop.permute.xlu0 %7729
        %7731 = vrot.lane.b32.xlu0 %v7241, 96
        %v7732 = vpop.permute.xlu0 %7731
        %7733 = vrot.lane.b32.xlu0 %v7359, 96
        %v7734 = vpop.permute.xlu0 %7733
        %7735 = vrot.lane.b32.xlu0 %v7364, 96
        %v7736 = vpop.permute.xlu0 %7735
        %7737 = vrot.lane.b32.xlu0 %v7369, 96
        %v7738 = vpop.permute.xlu0 %7737
        %7739 = vrot.lane.b32.xlu0 %v7374, 96
        %v7740 = vpop.permute.xlu0 %7739
        %7741 = vrot.lane.b32.xlu0 %v7379, 96
        %v7742 = vpop.permute.xlu0 %7741
        %7743 = vrot.lane.b32.xlu0 %v7384, 96
        %v7744 = vpop.permute.xlu0 %7743
        %7745 = vrot.lane.b32.xlu0 %v7389, 96
        %v7746 = vpop.permute.xlu0 %7745
        %7747 = vrot.lane.b32.xlu0 %v7394, 96
        %v7748 = vpop.permute.xlu0 %7747
        %v7781 = vsel %vm936, %v1993, %v7430
        %v7782 = vsel %vm936, %v1998, %v7432
        %v7783 = vsel %vm936, %v2003, %v7434
        %v7784 = vsel %vm936, %v2008, %v7436
        %v7785 = vsel %vm936, %v2013, %v7438
        %v7786 = vsel %vm936, %v2018, %v7440
        %v7787 = vsel %vm936, %v2023, %v7442
        %v7788 = vsel %vm936, %v2028, %v7444
        %v7789 = vsel %vm936, %v2122, %v7446
        %v7790 = vsel %vm936, %v2127, %v7448
        %v7791 = vsel %vm936, %v2132, %v7450
        %v7792 = vsel %vm936, %v2137, %v7452
        %v7793 = vsel %vm936, %v2142, %v7454
        %v7794 = vsel %vm936, %v2147, %v7456
        %v7795 = vsel %vm936, %v2152, %v7458
        %v7796 = vsel %vm936, %v2157, %v7460
        %v7797 = vsel %vm936, %v2251, %v7462
        %v7798 = vsel %vm936, %v2256, %v7464
        %v7799 = vsel %vm936, %v2261, %v7466
        %v7800 = vsel %vm936, %v2266, %v7468
        %v7801 = vsel %vm936, %v2271, %v7470
        %v7802 = vsel %vm936, %v2276, %v7472
        %v7803 = vsel %vm936, %v2281, %v7474
        %v7804 = vsel %vm936, %v2286, %v7476
        %v7805 = vsel %vm936, %v2380, %v7478
        %v7806 = vsel %vm936, %v2385, %v7480
        %v7807 = vsel %vm936, %v2390, %v7482
        %v7808 = vsel %vm936, %v2395, %v7484
        %v7809 = vsel %vm936, %v2400, %v7486
        %v7810 = vsel %vm936, %v2405, %v7488
        %v7811 = vsel %vm936, %v2410, %v7490
        %v7812 = vsel %vm936, %v2415, %v7492
        %v7813 = vsel %vm1549, %v7781, %v7558
        %v7814 = vsel %vm1549, %v7782, %v7560
        %v7815 = vsel %vm1549, %v7783, %v7562
        %v7816 = vsel %vm1549, %v7784, %v7564
        %v7817 = vsel %vm1549, %v7785, %v7566
        %v7818 = vsel %vm1549, %v7786, %v7568
        %v7819 = vsel %vm1549, %v7787, %v7570
        %v7820 = vsel %vm1549, %v7788, %v7572
        %v7821 = vsel %vm1549, %v7789, %v7574
        %v7822 = vsel %vm1549, %v7790, %v7576
        %v7823 = vsel %vm1549, %v7791, %v7578
        %v7824 = vsel %vm1549, %v7792, %v7580
        %v7825 = vsel %vm1549, %v7793, %v7582
        %v7826 = vsel %vm1549, %v7794, %v7584
        %v7827 = vsel %vm1549, %v7795, %v7586
        %v7828 = vsel %vm1549, %v7796, %v7588
        %v7829 = vsel %vm1549, %v7797, %v7590
        %v7830 = vsel %vm1549, %v7798, %v7592
        %v7831 = vsel %vm1549, %v7799, %v7594
        %v7832 = vsel %vm1549, %v7800, %v7596
        %v7833 = vsel %vm1549, %v7801, %v7598
        %v7834 = vsel %vm1549, %v7802, %v7600
        %v7835 = vsel %vm1549, %v7803, %v7602
        %v7836 = vsel %vm1549, %v7804, %v7604
        %v7837 = vsel %vm1549, %v7805, %v7606
        %v7838 = vsel %vm1549, %v7806, %v7608
        %v7839 = vsel %vm1549, %v7807, %v7610
        %v7840 = vsel %vm1549, %v7808, %v7612
        %v7841 = vsel %vm1549, %v7809, %v7614
        %v7842 = vsel %vm1549, %v7810, %v7616
        %v7843 = vsel %vm1549, %v7811, %v7618
        %v7844 = vsel %vm1549, %v7812, %v7620
        %vm7845 = vcmask 785408
        %v7846 = vsel %vm7845, %v7813, %v7686
        %v7847 = vsel %vm7845, %v7814, %v7688
        %v7848 = vsel %vm7845, %v7815, %v7690
        %v7849 = vsel %vm7845, %v7816, %v7692
        %v7850 = vsel %vm7845, %v7817, %v7694
        %v7851 = vsel %vm7845, %v7818, %v7696
        %v7852 = vsel %vm7845, %v7819, %v7698
        %v7853 = vsel %vm7845, %v7820, %v7700
        %v7854 = vsel %vm7845, %v7821, %v7702
        %v7855 = vsel %vm7845, %v7822, %v7704
        %v7856 = vsel %vm7845, %v7823, %v7706
        %v7857 = vsel %vm7845, %v7824, %v7708
        %v7858 = vsel %vm7845, %v7825, %v7710
        %v7859 = vsel %vm7845, %v7826, %v7712
        %v7860 = vsel %vm7845, %v7827, %v7714
        %v7861 = vsel %vm7845, %v7828, %v7716
        %v7862 = vsel %vm7845, %v7829, %v7718
        %v7863 = vsel %vm7845, %v7830, %v7720
        %v7864 = vsel %vm7845, %v7831, %v7722
        %v7865 = vsel %vm7845, %v7832, %v7724
        %v7866 = vsel %vm7845, %v7833, %v7726
        %v7867 = vsel %vm7845, %v7834, %v7728
        %v7868 = vsel %vm7845, %v7835, %v7730
        %v7869 = vsel %vm7845, %v7836, %v7732
        %v7870 = vsel %vm7845, %v7837, %v7734
        %v7871 = vsel %vm7845, %v7838, %v7736
        %v7872 = vsel %vm7845, %v7839, %v7738
        %v7873 = vsel %vm7845, %v7840, %v7740
        %v7874 = vsel %vm7845, %v7841, %v7742
        %v7875 = vsel %vm7845, %v7842, %v7744
        %v7876 = vsel %vm7845, %v7843, %v7746
        %v7877 = vsel %vm7845, %v7844, %v7748
        %v7878 = vld [vmem:[#allocation8] sm:$0xff]
        %v7879 = vld [vmem:[#allocation8 + $0x8] sm:$0xff]
        %v7880 = vld [vmem:[#allocation8 + $0x10] sm:$0xff]
        %v7881 = vld [vmem:[#allocation8 + $0x18] sm:$0xff]
        %v7882 = vld [vmem:[#allocation8 + $0x20] sm:$0xff]
        %v7883 = vld [vmem:[#allocation8 + $0x28] sm:$0xff]
        %v7884 = vld [vmem:[#allocation8 + $0x30] sm:$0xff]
        %v7885 = vld [vmem:[#allocation8 + $0x38] sm:$0xff]
        %v7886 = vld [vmem:[#allocation8 + $0x40] sm:$0xff]
        %v7887 = vld [vmem:[#allocation8 + $0x48] sm:$0xff]
        %v7888 = vld [vmem:[#allocation8 + $0x50] sm:$0xff]
        %v7889 = vld [vmem:[#allocation8 + $0x58] sm:$0xff]
        %v7890 = vld [vmem:[#allocation8 + $0x60] sm:$0xff]
        %v7891 = vld [vmem:[#allocation8 + $0x68] sm:$0xff]
        %v7892 = vld [vmem:[#allocation8 + $0x70] sm:$0xff]
        %v7893 = vld [vmem:[#allocation8 + $0x78] sm:$0xff]
        %v7894 = vld [vmem:[%s5] sm:$0x1]
        %v7896 = vlaneseq
        %v7897 = vshrl.u32 %v7896, 7
        %v7898 = vsub.s32 0, %v7897
        %v7899 = vrot.slane %v7894, %v7898
        %7901 = vmatprep.subr.mxu0 0.0
        %7902 = vmatpush1.msra.mxu0 %v7878
        %7903 = vmatprep.subr.mxu0 0.0
        %7904 = vmatpush1.msra.mxu0 %v7879
        %7905 = vmatprep.subr.mxu0 0.0
        %7906 = vmatpush1.msra.mxu0 %v7880
        %7907 = vmatprep.subr.mxu0 0.0
        %7908 = vmatpush1.msra.mxu0 %v7881
        %7909 = vmatprep.subr.mxu0 0.0
        %7910 = vmatpush1.msra.mxu0 %v7882
        %7911 = vmatprep.subr.mxu0 0.0
        %7912 = vmatpush1.msra.mxu0 %v7883
        %7913 = vmatprep.subr.mxu0 0.0
        %7914 = vmatpush1.msra.mxu0 %v7884
        %7915 = vmatprep.subr.mxu0 0.0
        %7916 = vmatpush1.msra.mxu0 %v7885
        %7917 = vmatprep.subr.mxu0 0.0
        %7918 = vmatpush1.msra.mxu0 %v7886
        %7919 = vmatprep.subr.mxu0 0.0
        %7920 = vmatpush1.msra.mxu0 %v7887
        %7921 = vmatprep.subr.mxu0 0.0
        %7922 = vmatpush1.msra.mxu0 %v7888
        %7923 = vmatprep.subr.mxu0 0.0
        %7924 = vmatpush1.msra.mxu0 %v7889
        %7925 = vmatprep.subr.mxu0 0.0
        %7926 = vmatpush1.msra.mxu0 %v7890
        %7927 = vmatprep.subr.mxu0 0.0
        %7928 = vmatpush1.msra.mxu0 %v7891
        %7929 = vmatprep.subr.mxu0 0.0
        %7930 = vmatpush1.msra.mxu0 %v7892
        %7931 = vmatprep.subr.mxu0 0.0
        %7932 = vmatpush1.msra.mxu0 %v7893
        %7933 = vmatprep.subr.mxu0 0.0
        %7934 = vmatpush1.msra.mxu0 0.0
        %7935 = vmatprep.subr.mxu0 0.0
        %7936 = vmatpush1.msra.mxu0 0.0
        %7937 = vmatprep.subr.mxu0 0.0
        %7938 = vmatpush1.msra.mxu0 0.0
        %7939 = vmatprep.subr.mxu0 0.0
        %7940 = vmatpush1.msra.mxu0 0.0
        %7941 = vmatprep.subr.mxu0 0.0
        %7942 = vmatpush1.msra.mxu0 0.0
        %7943 = vmatprep.subr.mxu0 0.0
        %7944 = vmatpush1.msra.mxu0 0.0
        %7945 = vmatprep.subr.mxu0 0.0
        %7946 = vmatpush1.msra.mxu0 0.0
        %7947 = vmatprep.subr.mxu0 0.0
        %7948 = vmatpush1.msra.mxu0 0.0
        %7949 = vmatprep.subr.mxu0 0.0
        %7950 = vmatpush1.msra.mxu0 0.0
        %7951 = vmatprep.subr.mxu0 0.0
        %7952 = vmatpush1.msra.mxu0 0.0
        %7953 = vmatprep.subr.mxu0 0.0
        %7954 = vmatpush1.msra.mxu0 0.0
        %7955 = vmatprep.subr.mxu0 0.0
        %7956 = vmatpush1.msra.mxu0 0.0
        %7957 = vmatprep.subr.mxu0 0.0
        %7958 = vmatpush1.msra.mxu0 0.0
        %7959 = vmatprep.subr.mxu0 0.0
        %7960 = vmatpush1.msra.mxu0 0.0
        %7961 = vmatprep.subr.mxu0 0.0
        %7962 = vmatpush1.msra.mxu0 0.0
        %7963 = vmatprep.subr.mxu0 0.0
        %7964 = vmatpush1.msra.mxu0 0.0
        %7965 = vmatprep.mubr.f32.mxu0 0.0
        %7966 = vmatmul.mubr.f32.gmra.mrb[0].mxu0 %v7846
        %v7967 = vpop.f32.mrb[0].mxu0
        %v7968 = vadd.f32 %v7899, %v7967
        %v7969 = vpop.f32.mrb[0].mxu0
        %7970 = vmatprep.mubr.f32.mxu0 0.0
        %7971 = vmatmul.mubr.f32.gmra.mrb[0].mxu0 %v7847
        %v7972 = vpop.f32.mrb[0].mxu0
        %v7973 = vadd.f32 %v7899, %v7972
        %v7974 = vpop.f32.mrb[0].mxu0
        %7975 = vmatprep.mubr.f32.mxu0 0.0
        %7976 = vmatmul.mubr.f32.gmra.mrb[0].mxu0 %v7848
        %v7977 = vpop.f32.mrb[0].mxu0
        %v7978 = vadd.f32 %v7899, %v7977
        %v7979 = vpop.f32.mrb[0].mxu0
        %7980 = vmatprep.mubr.f32.mxu0 0.0
        %7981 = vmatmul.mubr.f32.gmra.mrb[0].mxu0 %v7849
        %v7982 = vpop.f32.mrb[0].mxu0
        %v7983 = vadd.f32 %v7899, %v7982
        %v7984 = vpop.f32.mrb[0].mxu0
        %7985 = vmatprep.mubr.f32.mxu0 0.0
        %7986 = vmatmul.mubr.f32.gmra.mrb[0].mxu0 %v7850
        %v7987 = vpop.f32.mrb[0].mxu0
        %v7988 = vadd.f32 %v7899, %v7987
        %v7989 = vpop.f32.mrb[0].mxu0
        %7990 = vmatprep.mubr.f32.mxu0 0.0
        %7991 = vmatmul.mubr.f32.gmra.mrb[0].mxu0 %v7851
        %v7992 = vpop.f32.mrb[0].mxu0
        %v7993 = vadd.f32 %v7899, %v7992
        %v7994 = vpop.f32.mrb[0].mxu0
        %7995 = vmatprep.mubr.f32.mxu0 0.0
        %7996 = vmatmul.mubr.f32.gmra.mrb[0].mxu0 %v7852
        %v7997 = vpop.f32.mrb[0].mxu0
        %v7998 = vadd.f32 %v7899, %v7997
        %v7999 = vpop.f32.mrb[0].mxu0
        %8000 = vmatprep.mubr.f32.mxu0 0.0
        %8001 = vmatmul.mubr.f32.gmra.mrb[0].mxu0 %v7853
        %v8002 = vpop.f32.mrb[0].mxu0
        %v8003 = vadd.f32 %v7899, %v8002
        %v8004 = vpop.f32.mrb[0].mxu0
        %8005 = vmatprep.mubr.f32.mxu0 0.0
        %8006 = vmatmul.mubr.f32.gmra.mrb[0].mxu0 %v7854
        %v8007 = vpop.f32.mrb[0].mxu0
        %v8008 = vadd.f32 %v7899, %v8007
        %v8009 = vpop.f32.mrb[0].mxu0
        %8010 = vmatprep.mubr.f32.mxu0 0.0
        %8011 = vmatmul.mubr.f32.gmra.mrb[0].mxu0 %v7855
        %v8012 = vpop.f32.mrb[0].mxu0
        %v8013 = vadd.f32 %v7899, %v8012
        %v8014 = vpop.f32.mrb[0].mxu0
        %8015 = vmatprep.mubr.f32.mxu0 0.0
        %8016 = vmatmul.mubr.f32.gmra.mrb[0].mxu0 %v7856
        %v8017 = vpop.f32.mrb[0].mxu0
        %v8018 = vadd.f32 %v7899, %v8017
        %v8019 = vpop.f32.mrb[0].mxu0
        %8020 = vmatprep.mubr.f32.mxu0 0.0
        %8021 = vmatmul.mubr.f32.gmra.mrb[0].mxu0 %v7857
        %v8022 = vpop.f32.mrb[0].mxu0
        %v8023 = vadd.f32 %v7899, %v8022
        %v8024 = vpop.f32.mrb[0].mxu0
        %8025 = vmatprep.mubr.f32.mxu0 0.0
        %8026 = vmatmul.mubr.f32.gmra.mrb[0].mxu0 %v7858
        %v8027 = vpop.f32.mrb[0].mxu0
        %v8028 = vadd.f32 %v7899, %v8027
        %v8029 = vpop.f32.mrb[0].mxu0
        %8030 = vmatprep.mubr.f32.mxu0 0.0
        %8031 = vmatmul.mubr.f32.gmra.mrb[0].mxu0 %v7859
        %v8032 = vpop.f32.mrb[0].mxu0
        %v8033 = vadd.f32 %v7899, %v8032
        %v8034 = vpop.f32.mrb[0].mxu0
        %8035 = vmatprep.mubr.f32.mxu0 0.0
        %8036 = vmatmul.mubr.f32.gmra.mrb[0].mxu0 %v7860
        %v8037 = vpop.f32.mrb[0].mxu0
        %v8038 = vadd.f32 %v7899, %v8037
        %v8039 = vpop.f32.mrb[0].mxu0
        %8040 = vmatprep.mubr.f32.mxu0 0.0
        %8041 = vmatmul.mubr.f32.gmra.mrb[0].mxu0 %v7861
        %v8042 = vpop.f32.mrb[0].mxu0
        %v8043 = vadd.f32 %v7899, %v8042
        %v8044 = vpop.f32.mrb[0].mxu0
        %8045 = vmatprep.mubr.f32.mxu0 0.0
        %8046 = vmatmul.mubr.f32.gmra.mrb[0].mxu0 %v7862
        %v8047 = vpop.f32.mrb[0].mxu0
        %v8048 = vadd.f32 %v7899, %v8047
        %v8049 = vpop.f32.mrb[0].mxu0
        %8050 = vmatprep.mubr.f32.mxu0 0.0
        %8051 = vmatmul.mubr.f32.gmra.mrb[0].mxu0 %v7863
        %v8052 = vpop.f32.mrb[0].mxu0
        %v8053 = vadd.f32 %v7899, %v8052
        %v8054 = vpop.f32.mrb[0].mxu0
        %8055 = vmatprep.mubr.f32.mxu0 0.0
        %8056 = vmatmul.mubr.f32.gmra.mrb[0].mxu0 %v7864
        %v8057 = vpop.f32.mrb[0].mxu0
        %v8058 = vadd.f32 %v7899, %v8057
        %v8059 = vpop.f32.mrb[0].mxu0
        %8060 = vmatprep.mubr.f32.mxu0 0.0
        %8061 = vmatmul.mubr.f32.gmra.mrb[0].mxu0 %v7865
        %v8062 = vpop.f32.mrb[0].mxu0
        %v8063 = vadd.f32 %v7899, %v8062
        %v8064 = vpop.f32.mrb[0].mxu0
        %8065 = vmatprep.mubr.f32.mxu0 0.0
        %8066 = vmatmul.mubr.f32.gmra.mrb[0].mxu0 %v7866
        %v8067 = vpop.f32.mrb[0].mxu0
        %v8068 = vadd.f32 %v7899, %v8067
        %v8069 = vpop.f32.mrb[0].mxu0
        %8070 = vmatprep.mubr.f32.mxu0 0.0
        %8071 = vmatmul.mubr.f32.gmra.mrb[0].mxu0 %v7867
        %v8072 = vpop.f32.mrb[0].mxu0
        %v8073 = vadd.f32 %v7899, %v8072
        %v8074 = vpop.f32.mrb[0].mxu0
        %8075 = vmatprep.mubr.f32.mxu0 0.0
        %8076 = vmatmul.mubr.f32.gmra.mrb[0].mxu0 %v7868
        %v8077 = vpop.f32.mrb[0].mxu0
        %v8078 = vadd.f32 %v7899, %v8077
        %v8079 = vpop.f32.mrb[0].mxu0
        %8080 = vmatprep.mubr.f32.mxu0 0.0
        %8081 = vmatmul.mubr.f32.gmra.mrb[0].mxu0 %v7869
        %v8082 = vpop.f32.mrb[0].mxu0
        %v8083 = vadd.f32 %v7899, %v8082
        %v8084 = vpop.f32.mrb[0].mxu0
        %8085 = vmatprep.mubr.f32.mxu0 0.0
        %8086 = vmatmul.mubr.f32.gmra.mrb[0].mxu0 %v7870
        %v8087 = vpop.f32.mrb[0].mxu0
        %v8088 = vadd.f32 %v7899, %v8087
        %v8089 = vpop.f32.mrb[0].mxu0
        %8090 = vmatprep.mubr.f32.mxu0 0.0
        %8091 = vmatmul.mubr.f32.gmra.mrb[0].mxu0 %v7871
        %v8092 = vpop.f32.mrb[0].mxu0
        %v8093 = vadd.f32 %v7899, %v8092
        %v8094 = vpop.f32.mrb[0].mxu0
        %8095 = vmatprep.mubr.f32.mxu0 0.0
        %8096 = vmatmul.mubr.f32.gmra.mrb[0].mxu0 %v7872
        %v8097 = vpop.f32.mrb[0].mxu0
        %v8098 = vadd.f32 %v7899, %v8097
        %v8099 = vpop.f32.mrb[0].mxu0
        %8100 = vmatprep.mubr.f32.mxu0 0.0
        %8101 = vmatmul.mubr.f32.gmra.mrb[0].mxu0 %v7873
        %v8102 = vpop.f32.mrb[0].mxu0
        %v8103 = vadd.f32 %v7899, %v8102
        %v8104 = vpop.f32.mrb[0].mxu0
        %8105 = vmatprep.mubr.f32.mxu0 0.0
        %8106 = vmatmul.mubr.f32.gmra.mrb[0].mxu0 %v7874
        %v8107 = vpop.f32.mrb[0].mxu0
        %v8108 = vadd.f32 %v7899, %v8107
        %v8109 = vpop.f32.mrb[0].mxu0
        %8110 = vmatprep.mubr.f32.mxu0 0.0
        %8111 = vmatmul.mubr.f32.gmra.mrb[0].mxu0 %v7875
        %v8112 = vpop.f32.mrb[0].mxu0
        %v8113 = vadd.f32 %v7899, %v8112
        %v8114 = vpop.f32.mrb[0].mxu0
        %8115 = vmatprep.mubr.f32.mxu0 0.0
        %8116 = vmatmul.mubr.f32.gmra.mrb[0].mxu0 %v7876
        %v8117 = vpop.f32.mrb[0].mxu0
        %v8118 = vadd.f32 %v7899, %v8117
        %v8119 = vpop.f32.mrb[0].mxu0
        %8120 = vmatprep.mubr.f32.mxu0 0.0
        %8121 = vmatmul.mubr.f32.gmra.mrb[0].mxu0 %v7877
        %v8122 = vpop.f32.mrb[0].mxu0
        %v8123 = vadd.f32 %v7899, %v8122
        %v8124 = vpop.f32.mrb[0].mxu0
        %8125 = vdwg.mxu0
        %8126 = vst [vmem:[%s314] sm:$0xff] %v7968
        %8127 = vst [vmem:[%s314 + $0x8] sm:$0xff] %v7973
        %8128 = vst [vmem:[%s314 + $0x10] sm:$0xff] %v7978
        %8129 = vst [vmem:[%s314 + $0x18] sm:$0xff] %v7983
        %8130 = vst [vmem:[%s314 + $0x20] sm:$0xff] %v7988
        %8131 = vst [vmem:[%s314 + $0x28] sm:$0xff] %v7993
        %8132 = vst [vmem:[%s314 + $0x30] sm:$0xff] %v7998
        %8133 = vst [vmem:[%s314 + $0x38] sm:$0xff] %v8003
        %8134 = vst [vmem:[%s314 + $0x40] sm:$0xff] %v8008
        %8135 = vst [vmem:[%s314 + $0x48] sm:$0xff] %v8013
        %8136 = vst [vmem:[%s314 + $0x50] sm:$0xff] %v8018
        %8137 = vst [vmem:[%s314 + $0x58] sm:$0xff] %v8023
        %8138 = vst [vmem:[%s314 + $0x60] sm:$0xff] %v8028
        %8139 = vst [vmem:[%s314 + $0x68] sm:$0xff] %v8033
        %8140 = vst [vmem:[%s314 + $0x70] sm:$0xff] %v8038
        %8141 = vst [vmem:[%s314 + $0x78] sm:$0xff] %v8043
        %8142 = vst [vmem:[%s314 + $0x80] sm:$0xff] %v8048
        %8143 = vst [vmem:[%s314 + $0x88] sm:$0xff] %v8053
        %8144 = vst [vmem:[%s314 + $0x90] sm:$0xff] %v8058
        %8145 = vst [vmem:[%s314 + $0x98] sm:$0xff] %v8063
        %8146 = vst [vmem:[%s314 + $0xa0] sm:$0xff] %v8068
        %8147 = vst [vmem:[%s314 + $0xa8] sm:$0xff] %v8073
        %8148 = vst [vmem:[%s314 + $0xb0] sm:$0xff] %v8078
        %8149 = vst [vmem:[%s314 + $0xb8] sm:$0xff] %v8083
        %8150 = vst [vmem:[%s314 + $0xc0] sm:$0xff] %v8088
        %8151 = vst [vmem:[%s314 + $0xc8] sm:$0xff] %v8093
        %8152 = vst [vmem:[%s314 + $0xd0] sm:$0xff] %v8098
        %8153 = vst [vmem:[%s314 + $0xd8] sm:$0xff] %v8103
        %8154 = vst [vmem:[%s314 + $0xe0] sm:$0xff] %v8108
        %8155 = vst [vmem:[%s314 + $0xe8] sm:$0xff] %v8113
        %8156 = vst [vmem:[%s314 + $0xf0] sm:$0xff] %v8118
        %8157 = vst [vmem:[%s314 + $0xf8] sm:$0xff] %v8123
        %s8158 = sand.u32 %s164, 1
        %s8159 = scalar_lea.sflag [#allocation4], %s8158
        %s8160 = sand.u32 %s164, 1
        %s8161 = smul.addr %s8160, 256
        %s8162 = scalar_lea.vmem [#allocation10], %s8161
        // Predicated region
        $region61: #{tpu_custom_call.1} parent=43 // pred_check
          %p8163 = pneg %p174
        $region62: #{tpu_custom_call.1} parent=43 // pred_check_branch
          %8165 = sbr.rel (%p8163) target = $region64
        $region63: #{tpu_custom_call.1} parent=43 // pred_region
          %s8166 = smul.u32 4, %s25
          %s8168 = ssub.s32 4096, 4096
          %8169 = vsyncadd %s8159, %s8168
          %s8170 = smul.addr %s8166, 8
          %s8171 = smul.addr %s8170, 128
          %s8172 = scalar_lea.hbm %s6, %s8171
          %s8173 = sshll.u32 %s8162, 4
          %s8174 = int_to_ptr.vmem [resolvable:$true] %s8173
          %8179 = dma.vmem_to_hbm [thread:$0]  %s8174, 4096, %s8172, %s8159, 128, 128, 8
        $region64: #{tpu_custom_call.1} parent=43 // pred_fallthru
          _
      $region44: #{tpu_custom_call.1} parent=5 // pred_fallthru
        _
      %p8180 = scmp.le.s32.totalorder 2, %s20
      // Predicated region
      $region65: #{tpu_custom_call.1} parent=5 // pred_check
        %p8181 = pneg %p8180
      $region66: #{tpu_custom_call.1} parent=5 // pred_check_branch
        %8183 = sbr.rel (%p8181) target = $region68
      $region67: #{tpu_custom_call.1} parent=5 // pred_region
        %s8184 = ssub.s32 %s20, 2
        // Predicated region
        $region69: #{tpu_custom_call.1} parent=67 // pred_check
          %p8185 = pneg %p180
        $region70: #{tpu_custom_call.1} parent=67 // pred_check_branch
          %8187 = sbr.rel (%p8185) target = $region72
        $region71: #{tpu_custom_call.1} parent=67 // pred_region
          %s8188 = sand.u32 %s165, 1
          %s8189 = scalar_lea.sflag [#allocation4], %s8188
          %s8190 = sand.u32 %s165, 1
          %s8191 = smul.addr %s8190, 256
          %s8192 = scalar_lea.vmem [#allocation10], %s8191
          %8193 = dma.done %s8189, 4096
        $region72: #{tpu_custom_call.1} parent=67 // pred_fallthru
          _
      $region68: #{tpu_custom_call.1} parent=5 // pred_fallthru
        _
    $region6: #{tpu_custom_call.1} parent=1 // loop_footer
      %s24 = sadd.s32 1, %s20
    $region7: #{tpu_custom_call.1} parent=1 // loop_footer_branch
      %19 = sbr.rel target = $region3
    $region8: #{tpu_custom_call.1} parent=1 // loop_exit
      _
    %8194 = vsyncpa [#allocation3], 1
    %s8195 = scalar_lea.sflag [#allocation3], 1
    %8196 = vsyncpa %s8195, 1
    %8197 = vsyncpa [#allocation6], 1
    %8198 = vsyncpa [#allocation9], 1
    %8199 = vsyncpa [#allocation4], 1
    %s8200 = scalar_lea.sflag [#allocation4], 1
    %8201 = vsyncpa %s8200, 1

</llo_original>
